<compile_context>
chip_gen: v5e
topology: v5e:2x2
jax: 0.10.0
libtpu: 0.0.40
codegen_flags: <defaults>
</compile_context>

<pallas_src>
import functools

import jax
import jax.numpy as jnp
import numpy as np
from jax.experimental import pallas as pl
from jax.experimental.pallas import tpu as pltpu

_LP = 8  # left halo pad inside the scratch buffers (sublane-aligned store offset)


# ---------------------------------------------------------------------------
# Fused kernel: one program = one batch element, all blocks + both residuals.
# ---------------------------------------------------------------------------
def _fused_kernel(x_ref, ln_w_ref, ln_b_ref, wh_ref, bh_ref, ww_ref, bw_ref,
                  wtap_ref, wc_ref, bc_ref, w1_ref, b1_ref, w2_ref, b2_ref,
                  wpj_ref, bpj_ref, o_ref, xnpad_ref, hwpad_ref, patch_ref,
                  *, K, PKS, T, NB, eps=1e-5):
    _, H, W, C = o_ref.shape
    HW = H * W
    pk = K // 2
    pp = (PKS - 1) // 2

    # Zero the halo scratch once per program; the interior is rewritten every
    # block, the borders are never written and stay zero.
    xnpad_ref[...] = jnp.zeros(xnpad_ref.shape, xnpad_ref.dtype)
    hwpad_ref[...] = jnp.zeros(hwpad_ref.shape, hwpad_ref.dtype)

    x0 = x_ref[...].astype(jnp.float32)                          # (1, H, W, C)
    res = x0
    ch_ge_T = jax.lax.broadcasted_iota(jnp.int32, (HW, C), 1) >= T

    for blk in range(NB):                                        # NB small -> unrolled
        # ---- LayerNorm4D over channels (lane axis) ----
        u = jnp.mean(res, axis=-1, keepdims=True)
        xc = res - u
        s = jnp.mean(xc * xc, axis=-1, keepdims=True)
        xn = xc * jax.lax.rsqrt(s + eps) * ln_w_ref[blk] + ln_b_ref[blk]

        # ---- depthwise (K,1) and (1,K) mixers, halos from VMEM scratch ----
        xnpad_ref[:, pk:pk + H, _LP:_LP + W, :] = xn             # aligned interior store
        whb = wh_ref[blk]                                        # (K, C)
        wwb = ww_ref[blk]
        hm = jnp.zeros((1, H, W, C), jnp.float32)
        wm = jnp.zeros((1, H, W, C), jnp.float32)
        for t in range(K):
            hm = hm + xnpad_ref[:, t:t + H, _LP:_LP + W, :] * whb[t:t + 1, :]
            wm = wm + xnpad_ref[:, pk:pk + H,
                                _LP + t - pk:_LP + t - pk + W, :] * wwb[t:t + 1, :]
        hm = hm + bh_ref[blk]
        wm = wm + bw_ref[blk]
        hw = xn + hm * wm                                        # _hw = x + hmix * wmix

        # ---- PConv: one im2col MXU dot over the first T channels ----
        hwpad_ref[:, pp:pp + H, _LP:_LP + W, :] = hw[:, :, :, :T]
        for i in range(PKS):
            for j in range(PKS):
                idx = i * PKS + j
                patch_ref[:, idx * T:(idx + 1) * T] = (
                    hwpad_ref[:, i:i + H, _LP + j - pp:_LP + j - pp + W, :]
                    .reshape(HW, T))
        conv = jnp.dot(patch_ref[...], wtap_ref[blk],
                       preferred_element_type=jnp.float32)       # (HW, C); cols >= T are 0
        hwm = conv + jnp.where(ch_ge_T, hw.reshape(HW, C), 0.0)  # splice untouched channels

        # ---- c_mixer, channel attention, fuse, proj, TransLayer residual ----
        chw1 = jnp.dot(hwm, wc_ref[blk],
                       preferred_element_type=jnp.float32) + bc_ref[blk]
        # TODO(synk): CALayer is not defined in the provided source; the standard
        # RCAN-style channel attention (global avg-pool -> 1x1 -> ReLU -> 1x1 ->
        # sigmoid -> channel scale, reduction=16) is assumed here.
        pooled = jnp.mean(hwm, axis=0, keepdims=True)            # (1, C)
        z = jnp.dot(pooled, w1_ref[blk],
                    preferred_element_type=jnp.float32) + b1_ref[blk]
        z = jnp.maximum(z, 0.0)
        z = jnp.dot(z, w2_ref[blk],
                    preferred_element_type=jnp.float32) + b2_ref[blk]
        att = jax.nn.sigmoid(z)                                  # (1, C)
        chw = hwm + chw1 * (hwm * att)
        out = jnp.dot(chw, wpj_ref[blk],
                      preferred_element_type=jnp.float32) + bpj_ref[blk]
        res = res + out.reshape(1, H, W, C)                      # TransLayer: x + sg(norm1(x))

    # Outer TransLayermul residual fused in: res += x
    o_ref[...] = (res + x0).astype(o_ref.dtype)


# ---------------------------------------------------------------------------
# Wrapper (single pallas_call for the whole module)
# ---------------------------------------------------------------------------
_PARAM_ORDER = ('ln_w', 'ln_b', 'wh', 'bh', 'ww', 'bw', 'wtap',
                'wc', 'bc', 'w1', 'b1', 'w2', 'b2', 'wpj', 'bpj')


def trans_layermul(x_nchw, params, *, K, PKS, T):
    """TransLayermul forward. x_nchw: (B, C, H, W); params: stacked per-block dict."""
    x = jnp.transpose(x_nchw, (0, 2, 3, 1))                      # NCHW -> NHWC (glue)
    B, H, W, C = x.shape
    NB = params['ln_w'].shape[0]
    pk = K // 2
    pp = (PKS - 1) // 2
    assert pk <= _LP and pp <= _LP

    kern = functools.partial(_fused_kernel, K=K, PKS=PKS, T=T, NB=NB)
    args = [x] + [params[k] for k in _PARAM_ORDER]
    in_specs = [pl.BlockSpec((1, H, W, C), lambda b: (b, 0, 0, 0))]
    for a in args[1:]:
        in_specs.append(pl.BlockSpec(a.shape, lambda b, nd=a.ndim: (0,) * nd))

    out = pl.pallas_call(
        kern,
        out_shape=jax.ShapeDtypeStruct((B, H, W, C), x.dtype),
        grid=(B,),
        in_specs=in_specs,
        out_specs=pl.BlockSpec((1, H, W, C), lambda b: (b, 0, 0, 0)),
        scratch_shapes=[
            pltpu.VMEM((1, H + 2 * pk, W + 2 * _LP, C), jnp.float32),   # xn halo
            pltpu.VMEM((1, H + 2 * pp, W + 2 * _LP, T), jnp.float32),   # pconv halo
            pltpu.VMEM((H * W, PKS * PKS * T), jnp.float32),            # im2col patches
        ],
        compiler_params=pltpu.CompilerParams(dimension_semantics=("parallel",)),
    )(*args)
    return jnp.transpose(out, (0, 3, 1, 2))                      # NHWC -> NCHW


# ---------------------------------------------------------------------------
# Deterministic parameter construction (shapes from the module __init__),
# stacked over blocks so the whole module is one kernel.
# ---------------------------------------------------------------------------
def init_params(key, NB, C, K, PKS, T, R):
    ks = jax.random.split(key, 13)
    s = 0.1

    def rnd(i, shape):
        return jax.random.normal(ks[i], shape, jnp.float32) * s

    # PConv weight as im2col matrix: wtap[b, (i*PKS+j)*T + cin, cout] = w[cout, cin, i, j]
    # for cout < T; zero columns for the untouched output channels.
    wtap = jnp.pad(rnd(4, (NB, PKS * PKS * T, T)), ((0, 0), (0, 0), (0, C - T)))
    return dict(
        ln_w=jnp.ones((NB, 1, C), jnp.float32),      # LayerNorm4D weight
        ln_b=jnp.zeros((NB, 1, C), jnp.float32),     # LayerNorm4D bias
        wh=rnd(0, (NB, K, C)), bh=rnd(1, (NB, 1, C)),      # h_mixer (K,1) depthwise
        ww=rnd(2, (NB, K, C)), bw=rnd(3, (NB, 1, C)),      # w_mixer (1,K) depthwise
        wtap=wtap,
        wc=rnd(5, (NB, C, C)), bc=rnd(6, (NB, 1, C)),      # c_mixer 1x1
        w1=rnd(7, (NB, C, R)), b1=rnd(8, (NB, 1, R)),      # CALayer squeeze
        w2=rnd(9, (NB, R, C)), b2=rnd(10, (NB, 1, C)),     # CALayer excite
        wpj=rnd(11, (NB, C, C)), bpj=rnd(12, (NB, 1, C)),  # proj 1x1
    )


# ---------------------------------------------------------------------------
# Pure-JAX reference (NHWC) for a correctness check
# ---------------------------------------------------------------------------
def _reference(x, p, *, K, PKS, T):
    B, H, W, C = x.shape
    NB = p['ln_w'].shape[0]
    pk, pp = K // 2, (PKS - 1) // 2
    res = x.astype(jnp.float32)
    for blk in range(NB):
        u = res.mean(-1, keepdims=True)
        s = ((res - u) ** 2).mean(-1, keepdims=True)
        xn = (res - u) / jnp.sqrt(s + 1e-5) * p['ln_w'][blk] + p['ln_b'][blk]
        xph = jnp.pad(xn, ((0, 0), (pk, pk), (0, 0), (0, 0)))
        xpw = jnp.pad(xn, ((0, 0), (0, 0), (pk, pk), (0, 0)))
        hm = sum(xph[:, t:t + H] * p['wh'][blk, t] for t in range(K)) + p['bh'][blk]
        wm = sum(xpw[:, :, t:t + W] * p['ww'][blk, t] for t in range(K)) + p['bw'][blk]
        hw = xn + hm * wm
        hwp = jnp.pad(hw[..., :T], ((0, 0), (pp, pp), (pp, pp), (0, 0)))
        conv = jnp.zeros((B, H, W, T), jnp.float32)
        for i in range(PKS):
            for j in range(PKS):
                w_ij = p['wtap'][blk, (i * PKS + j) * T:(i * PKS + j + 1) * T, :T]
                conv = conv + jnp.einsum('bhwc,co->bhwo', hwp[:, i:i + H, j:j + W], w_ij)
        hw = jnp.concatenate([conv, hw[..., T:]], axis=-1)
        hwm = hw.reshape(B, H * W, C)
        chw1 = hwm @ p['wc'][blk] + p['bc'][blk]
        pooled = hwm.mean(axis=1, keepdims=True)
        z = jnp.maximum(pooled @ p['w1'][blk] + p['b1'][blk], 0.0)
        att = jax.nn.sigmoid(z @ p['w2'][blk] + p['b2'][blk])
        chw = hwm + chw1 * (hwm * att)
        out = chw @ p['wpj'][blk] + p['bpj'][blk]
        res = res + out.reshape(B, H, W, C)
    return res + x


if __name__ == "__main__":
    # TransLayermul(planes=32, b_blocks=2, kernel_size=3, pks1=3, pratio1=4)
    B, C, H, W = 2, 32, 16, 16
    b_blocks, K, PKS, pratio1, reduction = 2, 3, 3, 4, 16
    T = C // pratio1                    # PConv touched channels
    R = C // reduction                  # CALayer bottleneck (reduction=16)

    key = jax.random.PRNGKey(0)
    kx, kp = jax.random.split(key)
    x = jax.random.normal(kx, (B, C, H, W), jnp.float32)         # NCHW, as in PyTorch
    params = init_params(kp, b_blocks, C, K, PKS, T, R)

    fn = jax.jit(functools.partial(trans_layermul, K=K, PKS=PKS, T=T))
    out = fn(x, params)
    jax.block_until_ready(out)
    assert out.shape == (B, C, H, W) and out.dtype == jnp.float32

    # Correctness check against the pure-JAX reference (tolerance covers matmul
    # precision differences between the Pallas MXU path and XLA's default).
    ref = jnp.transpose(
        _reference(jnp.transpose(x, (0, 2, 3, 1)), params, K=K, PKS=PKS, T=T),
        (0, 3, 1, 2))
    np.testing.assert_allclose(np.asarray(out), np.asarray(ref), rtol=5e-2, atol=5e-2)
    print("KERNEL_OK")
</pallas_src>

<mosaic_0001>
module attributes {stable_mosaic.version = 11 : i64} {
  func.func @_fused_kernel(%arg0: i32, %arg1: memref<1x16x16x32xf32, #tpu.memory_space<vmem>>, %arg2: memref<2x1x32xf32, #tpu.memory_space<vmem>>, %arg3: memref<2x1x32xf32, #tpu.memory_space<vmem>>, %arg4: memref<2x3x32xf32, #tpu.memory_space<vmem>>, %arg5: memref<2x1x32xf32, #tpu.memory_space<vmem>>, %arg6: memref<2x3x32xf32, #tpu.memory_space<vmem>>, %arg7: memref<2x1x32xf32, #tpu.memory_space<vmem>>, %arg8: memref<2x72x32xf32, #tpu.memory_space<vmem>>, %arg9: memref<2x32x32xf32, #tpu.memory_space<vmem>>, %arg10: memref<2x1x32xf32, #tpu.memory_space<vmem>>, %arg11: memref<2x32x2xf32, #tpu.memory_space<vmem>>, %arg12: memref<2x1x2xf32, #tpu.memory_space<vmem>>, %arg13: memref<2x2x32xf32, #tpu.memory_space<vmem>>, %arg14: memref<2x1x32xf32, #tpu.memory_space<vmem>>, %arg15: memref<2x32x32xf32, #tpu.memory_space<vmem>>, %arg16: memref<2x1x32xf32, #tpu.memory_space<vmem>>, %arg17: memref<1x16x16x32xf32, #tpu.memory_space<vmem>>, %arg18: memref<1x18x32x32xf32, #tpu.memory_space<vmem>>, %arg19: memref<1x18x32x8xf32, #tpu.memory_space<vmem>>, %arg20: memref<256x72xf32, #tpu.memory_space<vmem>>) attributes {dimension_semantics = [#tpu.dimension_semantics<parallel>], iteration_bounds = array<i64: 2>, scalar_prefetch = 0 : i64, scratch_operands = 3 : i64, tpu.core_type = #tpu.core_type<tc>, window_params = [{transform_indices = @transform_0, window_bounds = array<i64: 1, 16, 16, 32>}, {pipeline_mode = #tpu.pipeline_mode<synchronous>, transform_indices = @transform_1, window_bounds = array<i64: 2, 1, 32>}, {pipeline_mode = #tpu.pipeline_mode<synchronous>, transform_indices = @transform_2, window_bounds = array<i64: 2, 1, 32>}, {pipeline_mode = #tpu.pipeline_mode<synchronous>, transform_indices = @transform_3, window_bounds = array<i64: 2, 3, 32>}, {pipeline_mode = #tpu.pipeline_mode<synchronous>, transform_indices = @transform_4, window_bounds = array<i64: 2, 1, 32>}, {pipeline_mode = #tpu.pipeline_mode<synchronous>, transform_indices = @transform_5, window_bounds = array<i64: 2, 3, 32>}, {pipeline_mode = #tpu.pipeline_mode<synchronous>, transform_indices = @transform_6, window_bounds = array<i64: 2, 1, 32>}, {pipeline_mode = #tpu.pipeline_mode<synchronous>, transform_indices = @transform_7, window_bounds = array<i64: 2, 72, 32>}, {pipeline_mode = #tpu.pipeline_mode<synchronous>, transform_indices = @transform_8, window_bounds = array<i64: 2, 32, 32>}, {pipeline_mode = #tpu.pipeline_mode<synchronous>, transform_indices = @transform_9, window_bounds = array<i64: 2, 1, 32>}, {pipeline_mode = #tpu.pipeline_mode<synchronous>, transform_indices = @transform_10, window_bounds = array<i64: 2, 32, 2>}, {pipeline_mode = #tpu.pipeline_mode<synchronous>, transform_indices = @transform_11, window_bounds = array<i64: 2, 1, 2>}, {pipeline_mode = #tpu.pipeline_mode<synchronous>, transform_indices = @transform_12, window_bounds = array<i64: 2, 2, 32>}, {pipeline_mode = #tpu.pipeline_mode<synchronous>, transform_indices = @transform_13, window_bounds = array<i64: 2, 1, 32>}, {pipeline_mode = #tpu.pipeline_mode<synchronous>, transform_indices = @transform_14, window_bounds = array<i64: 2, 32, 32>}, {pipeline_mode = #tpu.pipeline_mode<synchronous>, transform_indices = @transform_15, window_bounds = array<i64: 2, 1, 32>}, {transform_indices = @transform_16, window_bounds = array<i64: 1, 16, 16, 32>}]} {
    %cst = arith.constant 0.000000e+00 : f32
    %0 = vector.broadcast %cst : f32 to vector<1x18x32x32xf32>
    %c0 = arith.constant 0 : index
    %c0_0 = arith.constant 0 : index
    %c0_1 = arith.constant 0 : index
    %c0_2 = arith.constant 0 : index
    %1 = vector.load %arg18[%c0, %c0_0, %c0_1, %c0_2] : memref<1x18x32x32xf32, #tpu.memory_space<vmem>>, vector<1x18x32x32xf32>
    tpu.vector_store %arg18[%c0, %c0_0, %c0_1, %c0_2], %0 {strides = array<i32>} : memref<1x18x32x32xf32, #tpu.memory_space<vmem>>, vector<1x18x32x32xf32>,
    %cst_3 = arith.constant 0.000000e+00 : f32
    %2 = vector.broadcast %cst_3 : f32 to vector<1x18x32x8xf32>
    %c0_4 = arith.constant 0 : index
    %c0_5 = arith.constant 0 : index
    %c0_6 = arith.constant 0 : index
    %c0_7 = arith.constant 0 : index
    %3 = vector.load %arg19[%c0_4, %c0_5, %c0_6, %c0_7] : memref<1x18x32x8xf32, #tpu.memory_space<vmem>>, vector<1x18x32x8xf32>
    tpu.vector_store %arg19[%c0_4, %c0_5, %c0_6, %c0_7], %2 {strides = array<i32>} : memref<1x18x32x8xf32, #tpu.memory_space<vmem>>, vector<1x18x32x8xf32>,
    %c0_8 = arith.constant 0 : index
    %c0_9 = arith.constant 0 : index
    %c0_10 = arith.constant 0 : index
    %c0_11 = arith.constant 0 : index
    %4 = vector.load %arg1[%c0_8, %c0_9, %c0_10, %c0_11] : memref<1x16x16x32xf32, #tpu.memory_space<vmem>>, vector<1x16x16x32xf32>
    %5 = tpu.iota {dimensions = array<i32: 1>} : vector<256x32xi32>
    %c8_i32 = arith.constant 8 : i32
    %6 = vector.broadcast %c8_i32 : i32 to vector<256x32xi32>
    %7 = arith.cmpi sge, %5, %6 : vector<256x32xi32>
    %cst_12 = arith.constant dense<0.000000e+00> : vector<1x16x16xf32>
    %8 = vector.multi_reduction <add>, %4, %cst_12 [3] : vector<1x16x16x32xf32> to vector<1x16x16xf32>
    %9 = vector.shape_cast %8 : vector<1x16x16xf32> to vector<1x16x16x1xf32>
    %cst_13 = arith.constant 3.200000e+01 : f32
    %10 = vector.broadcast %cst_13 : f32 to vector<1x16x16x1xf32>
    %11 = arith.divf %9, %10 : vector<1x16x16x1xf32>
    %12 = vector.broadcast %11 : vector<1x16x16x1xf32> to vector<1x16x16x32xf32>
    %13 = arith.subf %4, %12 : vector<1x16x16x32xf32>
    %14 = arith.mulf %13, %13 : vector<1x16x16x32xf32>
    %cst_14 = arith.constant dense<0.000000e+00> : vector<1x16x16xf32>
    %15 = vector.multi_reduction <add>, %14, %cst_14 [3] : vector<1x16x16x32xf32> to vector<1x16x16xf32>
    %16 = vector.shape_cast %15 : vector<1x16x16xf32> to vector<1x16x16x1xf32>
    %cst_15 = arith.constant 3.200000e+01 : f32
    %17 = vector.broadcast %cst_15 : f32 to vector<1x16x16x1xf32>
    %18 = arith.divf %16, %17 : vector<1x16x16x1xf32>
    %cst_16 = arith.constant 9.99999974E-6 : f32
    %19 = vector.broadcast %cst_16 : f32 to vector<1x16x16x1xf32>
    %20 = arith.addf %18, %19 : vector<1x16x16x1xf32>
    %21 = math.rsqrt %20 : vector<1x16x16x1xf32>
    %22 = vector.broadcast %21 : vector<1x16x16x1xf32> to vector<1x16x16x32xf32>
    %23 = arith.mulf %13, %22 : vector<1x16x16x32xf32>
    %c0_17 = arith.constant 0 : index
    %c0_18 = arith.constant 0 : index
    %c0_19 = arith.constant 0 : index
    %24 = vector.load %arg2[%c0_17, %c0_18, %c0_19] : memref<2x1x32xf32, #tpu.memory_space<vmem>>, vector<1x1x32xf32>
    %25 = vector.shape_cast %24 : vector<1x1x32xf32> to vector<1x32xf32>
    %26 = vector.shape_cast %25 : vector<1x32xf32> to vector<1x1x1x32xf32>
    %27 = vector.broadcast %26 : vector<1x1x1x32xf32> to vector<1x16x16x32xf32>
    %28 = arith.mulf %23, %27 : vector<1x16x16x32xf32>
    %c0_20 = arith.constant 0 : index
    %c0_21 = arith.constant 0 : index
    %c0_22 = arith.constant 0 : index
    %29 = vector.load %arg3[%c0_20, %c0_21, %c0_22] : memref<2x1x32xf32, #tpu.memory_space<vmem>>, vector<1x1x32xf32>
    %30 = vector.shape_cast %29 : vector<1x1x32xf32> to vector<1x32xf32>
    %31 = vector.shape_cast %30 : vector<1x32xf32> to vector<1x1x1x32xf32>
    %32 = vector.broadcast %31 : vector<1x1x1x32xf32> to vector<1x16x16x32xf32>
    %33 = arith.addf %28, %32 : vector<1x16x16x32xf32>
    %c0_23 = arith.constant 0 : index
    %c1 = arith.constant 1 : index
    %c8 = arith.constant 8 : index
    %c0_24 = arith.constant 0 : index
    %34 = vector.load %arg18[%c0_23, %c1, %c8, %c0_24] : memref<1x18x32x32xf32, #tpu.memory_space<vmem>>, vector<1x16x16x32xf32>
    tpu.vector_store %arg18[%c0_23, %c1, %c8, %c0_24], %33 {strides = array<i32>} : memref<1x18x32x32xf32, #tpu.memory_space<vmem>>, vector<1x16x16x32xf32>,
    %c0_25 = arith.constant 0 : index
    %c0_26 = arith.constant 0 : index
    %c0_27 = arith.constant 0 : index
    %35 = vector.load %arg4[%c0_25, %c0_26, %c0_27] : memref<2x3x32xf32, #tpu.memory_space<vmem>>, vector<1x3x32xf32>
    %36 = vector.shape_cast %35 : vector<1x3x32xf32> to vector<3x32xf32>
    %c0_28 = arith.constant 0 : index
    %c0_29 = arith.constant 0 : index
    %c0_30 = arith.constant 0 : index
    %37 = vector.load %arg6[%c0_28, %c0_29, %c0_30] : memref<2x3x32xf32, #tpu.memory_space<vmem>>, vector<1x3x32xf32>
    %38 = vector.shape_cast %37 : vector<1x3x32xf32> to vector<3x32xf32>
    %cst_31 = arith.constant 0.000000e+00 : f32
    %39 = vector.broadcast %cst_31 : f32 to vector<1x16x16x32xf32>
    %cst_32 = arith.constant 0.000000e+00 : f32
    %40 = vector.broadcast %cst_32 : f32 to vector<1x16x16x32xf32>
    %c0_33 = arith.constant 0 : index
    %c0_34 = arith.constant 0 : index
    %c8_35 = arith.constant 8 : index
    %c0_36 = arith.constant 0 : index
    %41 = vector.load %arg18[%c0_33, %c0_34, %c8_35, %c0_36] : memref<1x18x32x32xf32, #tpu.memory_space<vmem>>, vector<1x16x16x32xf32>
    %42 = vector.extract_strided_slice %36 {offsets = [0, 0], sizes = [1, 32], strides = [1, 1]} : vector<3x32xf32> to vector<1x32xf32>
    %43 = vector.shape_cast %42 : vector<1x32xf32> to vector<1x1x1x32xf32>
    %44 = vector.broadcast %43 : vector<1x1x1x32xf32> to vector<1x16x16x32xf32>
    %45 = arith.mulf %41, %44 : vector<1x16x16x32xf32>
    %46 = arith.addf %39, %45 : vector<1x16x16x32xf32>
    %c0_37 = arith.constant 0 : index
    %c1_38 = arith.constant 1 : index
    %c7 = arith.constant 7 : index
    %c0_39 = arith.constant 0 : index
    %47 = vector.load %arg18[%c0_37, %c1_38, %c7, %c0_39] : memref<1x18x32x32xf32, #tpu.memory_space<vmem>>, vector<1x16x16x32xf32>
    %48 = vector.extract_strided_slice %38 {offsets = [0, 0], sizes = [1, 32], strides = [1, 1]} : vector<3x32xf32> to vector<1x32xf32>
    %49 = vector.shape_cast %48 : vector<1x32xf32> to vector<1x1x1x32xf32>
    %50 = vector.broadcast %49 : vector<1x1x1x32xf32> to vector<1x16x16x32xf32>
    %51 = arith.mulf %47, %50 : vector<1x16x16x32xf32>
    %52 = arith.addf %40, %51 : vector<1x16x16x32xf32>
    %c0_40 = arith.constant 0 : index
    %c1_41 = arith.constant 1 : index
    %c8_42 = arith.constant 8 : index
    %c0_43 = arith.constant 0 : index
    %53 = vector.load %arg18[%c0_40, %c1_41, %c8_42, %c0_43] : memref<1x18x32x32xf32, #tpu.memory_space<vmem>>, vector<1x16x16x32xf32>
    %54 = vector.extract_strided_slice %36 {offsets = [1, 0], sizes = [1, 32], strides = [1, 1]} : vector<3x32xf32> to vector<1x32xf32>
    %55 = vector.shape_cast %54 : vector<1x32xf32> to vector<1x1x1x32xf32>
    %56 = vector.broadcast %55 : vector<1x1x1x32xf32> to vector<1x16x16x32xf32>
    %57 = arith.mulf %53, %56 : vector<1x16x16x32xf32>
    %58 = arith.addf %46, %57 : vector<1x16x16x32xf32>
    %c0_44 = arith.constant 0 : index
    %c1_45 = arith.constant 1 : index
    %c8_46 = arith.constant 8 : index
    %c0_47 = arith.constant 0 : index
    %59 = vector.load %arg18[%c0_44, %c1_45, %c8_46, %c0_47] : memref<1x18x32x32xf32, #tpu.memory_space<vmem>>, vector<1x16x16x32xf32>
    %60 = vector.extract_strided_slice %38 {offsets = [1, 0], sizes = [1, 32], strides = [1, 1]} : vector<3x32xf32> to vector<1x32xf32>
    %61 = vector.shape_cast %60 : vector<1x32xf32> to vector<1x1x1x32xf32>
    %62 = vector.broadcast %61 : vector<1x1x1x32xf32> to vector<1x16x16x32xf32>
    %63 = arith.mulf %59, %62 : vector<1x16x16x32xf32>
    %64 = arith.addf %52, %63 : vector<1x16x16x32xf32>
    %c0_48 = arith.constant 0 : index
    %c2 = arith.constant 2 : index
    %c8_49 = arith.constant 8 : index
    %c0_50 = arith.constant 0 : index
    %65 = vector.load %arg18[%c0_48, %c2, %c8_49, %c0_50] : memref<1x18x32x32xf32, #tpu.memory_space<vmem>>, vector<1x16x16x32xf32>
    %66 = vector.extract_strided_slice %36 {offsets = [2, 0], sizes = [1, 32], strides = [1, 1]} : vector<3x32xf32> to vector<1x32xf32>
    %67 = vector.shape_cast %66 : vector<1x32xf32> to vector<1x1x1x32xf32>
    %68 = vector.broadcast %67 : vector<1x1x1x32xf32> to vector<1x16x16x32xf32>
    %69 = arith.mulf %65, %68 : vector<1x16x16x32xf32>
    %70 = arith.addf %58, %69 : vector<1x16x16x32xf32>
    %c0_51 = arith.constant 0 : index
    %c1_52 = arith.constant 1 : index
    %c9 = arith.constant 9 : index
    %c0_53 = arith.constant 0 : index
    %71 = vector.load %arg18[%c0_51, %c1_52, %c9, %c0_53] : memref<1x18x32x32xf32, #tpu.memory_space<vmem>>, vector<1x16x16x32xf32>
    %72 = vector.extract_strided_slice %38 {offsets = [2, 0], sizes = [1, 32], strides = [1, 1]} : vector<3x32xf32> to vector<1x32xf32>
    %73 = vector.shape_cast %72 : vector<1x32xf32> to vector<1x1x1x32xf32>
    %74 = vector.broadcast %73 : vector<1x1x1x32xf32> to vector<1x16x16x32xf32>
    %75 = arith.mulf %71, %74 : vector<1x16x16x32xf32>
    %76 = arith.addf %64, %75 : vector<1x16x16x32xf32>
    %c0_54 = arith.constant 0 : index
    %c0_55 = arith.constant 0 : index
    %c0_56 = arith.constant 0 : index
    %77 = vector.load %arg5[%c0_54, %c0_55, %c0_56] : memref<2x1x32xf32, #tpu.memory_space<vmem>>, vector<1x1x32xf32>
    %78 = vector.shape_cast %77 : vector<1x1x32xf32> to vector<1x32xf32>
    %79 = vector.shape_cast %78 : vector<1x32xf32> to vector<1x1x1x32xf32>
    %80 = vector.broadcast %79 : vector<1x1x1x32xf32> to vector<1x16x16x32xf32>
    %81 = arith.addf %70, %80 : vector<1x16x16x32xf32>
    %c0_57 = arith.constant 0 : index
    %c0_58 = arith.constant 0 : index
    %c0_59 = arith.constant 0 : index
    %82 = vector.load %arg7[%c0_57, %c0_58, %c0_59] : memref<2x1x32xf32, #tpu.memory_space<vmem>>, vector<1x1x32xf32>
    %83 = vector.shape_cast %82 : vector<1x1x32xf32> to vector<1x32xf32>
    %84 = vector.shape_cast %83 : vector<1x32xf32> to vector<1x1x1x32xf32>
    %85 = vector.broadcast %84 : vector<1x1x1x32xf32> to vector<1x16x16x32xf32>
    %86 = arith.addf %76, %85 : vector<1x16x16x32xf32>
    %87 = arith.mulf %81, %86 : vector<1x16x16x32xf32>
    %88 = arith.addf %33, %87 : vector<1x16x16x32xf32>
    %89 = vector.extract_strided_slice %88 {offsets = [0, 0, 0, 0], sizes = [1, 16, 16, 8], strides = [1, 1, 1, 1]} : vector<1x16x16x32xf32> to vector<1x16x16x8xf32>
    %c0_60 = arith.constant 0 : index
    %c1_61 = arith.constant 1 : index
    %c8_62 = arith.constant 8 : index
    %c0_63 = arith.constant 0 : index
    %90 = vector.load %arg19[%c0_60, %c1_61, %c8_62, %c0_63] : memref<1x18x32x8xf32, #tpu.memory_space<vmem>>, vector<1x16x16x8xf32>
    tpu.vector_store %arg19[%c0_60, %c1_61, %c8_62, %c0_63], %89 {strides = array<i32>} : memref<1x18x32x8xf32, #tpu.memory_space<vmem>>, vector<1x16x16x8xf32>,
    %c0_64 = arith.constant 0 : index
    %c0_65 = arith.constant 0 : index
    %c7_66 = arith.constant 7 : index
    %c0_67 = arith.constant 0 : index
    %91 = vector.load %arg19[%c0_64, %c0_65, %c7_66, %c0_67] : memref<1x18x32x8xf32, #tpu.memory_space<vmem>>, vector<1x16x16x8xf32>
    %92 = vector.shape_cast %91 : vector<1x16x16x8xf32> to vector<256x8xf32>
    %c0_68 = arith.constant 0 : index
    %c0_69 = arith.constant 0 : index
    %93 = vector.load %arg20[%c0_68, %c0_69] : memref<256x72xf32, #tpu.memory_space<vmem>>, vector<256x8xf32>
    tpu.vector_store %arg20[%c0_68, %c0_69], %92 {strides = array<i32>} : memref<256x72xf32, #tpu.memory_space<vmem>>, vector<256x8xf32>,
    %c0_70 = arith.constant 0 : index
    %c0_71 = arith.constant 0 : index
    %c8_72 = arith.constant 8 : index
    %c0_73 = arith.constant 0 : index
    %94 = vector.load %arg19[%c0_70, %c0_71, %c8_72, %c0_73] : memref<1x18x32x8xf32, #tpu.memory_space<vmem>>, vector<1x16x16x8xf32>
    %95 = vector.shape_cast %94 : vector<1x16x16x8xf32> to vector<256x8xf32>
    %c0_74 = arith.constant 0 : index
    %c8_75 = arith.constant 8 : index
    %96 = vector.load %arg20[%c0_74, %c8_75] : memref<256x72xf32, #tpu.memory_space<vmem>>, vector<256x8xf32>
    tpu.vector_store %arg20[%c0_74, %c8_75], %95 {strides = array<i32>} : memref<256x72xf32, #tpu.memory_space<vmem>>, vector<256x8xf32>,
    %c0_76 = arith.constant 0 : index
    %c0_77 = arith.constant 0 : index
    %c9_78 = arith.constant 9 : index
    %c0_79 = arith.constant 0 : index
    %97 = vector.load %arg19[%c0_76, %c0_77, %c9_78, %c0_79] : memref<1x18x32x8xf32, #tpu.memory_space<vmem>>, vector<1x16x16x8xf32>
    %98 = vector.shape_cast %97 : vector<1x16x16x8xf32> to vector<256x8xf32>
    %c0_80 = arith.constant 0 : index
    %c16 = arith.constant 16 : index
    %99 = vector.load %arg20[%c0_80, %c16] : memref<256x72xf32, #tpu.memory_space<vmem>>, vector<256x8xf32>
    tpu.vector_store %arg20[%c0_80, %c16], %98 {strides = array<i32>} : memref<256x72xf32, #tpu.memory_space<vmem>>, vector<256x8xf32>,
    %c0_81 = arith.constant 0 : index
    %c1_82 = arith.constant 1 : index
    %c7_83 = arith.constant 7 : index
    %c0_84 = arith.constant 0 : index
    %100 = vector.load %arg19[%c0_81, %c1_82, %c7_83, %c0_84] : memref<1x18x32x8xf32, #tpu.memory_space<vmem>>, vector<1x16x16x8xf32>
    %101 = vector.shape_cast %100 : vector<1x16x16x8xf32> to vector<256x8xf32>
    %c0_85 = arith.constant 0 : index
    %c24 = arith.constant 24 : index
    %102 = vector.load %arg20[%c0_85, %c24] : memref<256x72xf32, #tpu.memory_space<vmem>>, vector<256x8xf32>
    tpu.vector_store %arg20[%c0_85, %c24], %101 {strides = array<i32>} : memref<256x72xf32, #tpu.memory_space<vmem>>, vector<256x8xf32>,
    %c0_86 = arith.constant 0 : index
    %c1_87 = arith.constant 1 : index
    %c8_88 = arith.constant 8 : index
    %c0_89 = arith.constant 0 : index
    %103 = vector.load %arg19[%c0_86, %c1_87, %c8_88, %c0_89] : memref<1x18x32x8xf32, #tpu.memory_space<vmem>>, vector<1x16x16x8xf32>
    %104 = vector.shape_cast %103 : vector<1x16x16x8xf32> to vector<256x8xf32>
    %c0_90 = arith.constant 0 : index
    %c32 = arith.constant 32 : index
    %105 = vector.load %arg20[%c0_90, %c32] : memref<256x72xf32, #tpu.memory_space<vmem>>, vector<256x8xf32>
    tpu.vector_store %arg20[%c0_90, %c32], %104 {strides = array<i32>} : memref<256x72xf32, #tpu.memory_space<vmem>>, vector<256x8xf32>,
    %c0_91 = arith.constant 0 : index
    %c1_92 = arith.constant 1 : index
    %c9_93 = arith.constant 9 : index
    %c0_94 = arith.constant 0 : index
    %106 = vector.load %arg19[%c0_91, %c1_92, %c9_93, %c0_94] : memref<1x18x32x8xf32, #tpu.memory_space<vmem>>, vector<1x16x16x8xf32>
    %107 = vector.shape_cast %106 : vector<1x16x16x8xf32> to vector<256x8xf32>
    %c0_95 = arith.constant 0 : index
    %c40 = arith.constant 40 : index
    %108 = vector.load %arg20[%c0_95, %c40] : memref<256x72xf32, #tpu.memory_space<vmem>>, vector<256x8xf32>
    tpu.vector_store %arg20[%c0_95, %c40], %107 {strides = array<i32>} : memref<256x72xf32, #tpu.memory_space<vmem>>, vector<256x8xf32>,
    %c0_96 = arith.constant 0 : index
    %c2_97 = arith.constant 2 : index
    %c7_98 = arith.constant 7 : index
    %c0_99 = arith.constant 0 : index
    %109 = vector.load %arg19[%c0_96, %c2_97, %c7_98, %c0_99] : memref<1x18x32x8xf32, #tpu.memory_space<vmem>>, vector<1x16x16x8xf32>
    %110 = vector.shape_cast %109 : vector<1x16x16x8xf32> to vector<256x8xf32>
    %c0_100 = arith.constant 0 : index
    %c48 = arith.constant 48 : index
    %111 = vector.load %arg20[%c0_100, %c48] : memref<256x72xf32, #tpu.memory_space<vmem>>, vector<256x8xf32>
    tpu.vector_store %arg20[%c0_100, %c48], %110 {strides = array<i32>} : memref<256x72xf32, #tpu.memory_space<vmem>>, vector<256x8xf32>,
    %c0_101 = arith.constant 0 : index
    %c2_102 = arith.constant 2 : index
    %c8_103 = arith.constant 8 : index
    %c0_104 = arith.constant 0 : index
    %112 = vector.load %arg19[%c0_101, %c2_102, %c8_103, %c0_104] : memref<1x18x32x8xf32, #tpu.memory_space<vmem>>, vector<1x16x16x8xf32>
    %113 = vector.shape_cast %112 : vector<1x16x16x8xf32> to vector<256x8xf32>
    %c0_105 = arith.constant 0 : index
    %c56 = arith.constant 56 : index
    %114 = vector.load %arg20[%c0_105, %c56] : memref<256x72xf32, #tpu.memory_space<vmem>>, vector<256x8xf32>
    tpu.vector_store %arg20[%c0_105, %c56], %113 {strides = array<i32>} : memref<256x72xf32, #tpu.memory_space<vmem>>, vector<256x8xf32>,
    %c0_106 = arith.constant 0 : index
    %c2_107 = arith.constant 2 : index
    %c9_108 = arith.constant 9 : index
    %c0_109 = arith.constant 0 : index
    %115 = vector.load %arg19[%c0_106, %c2_107, %c9_108, %c0_109] : memref<1x18x32x8xf32, #tpu.memory_space<vmem>>, vector<1x16x16x8xf32>
    %116 = vector.shape_cast %115 : vector<1x16x16x8xf32> to vector<256x8xf32>
    %c0_110 = arith.constant 0 : index
    %c64 = arith.constant 64 : index
    %117 = vector.load %arg20[%c0_110, %c64] : memref<256x72xf32, #tpu.memory_space<vmem>>, vector<256x8xf32>
    tpu.vector_store %arg20[%c0_110, %c64], %116 {strides = array<i32>} : memref<256x72xf32, #tpu.memory_space<vmem>>, vector<256x8xf32>,
    %c0_111 = arith.constant 0 : index
    %c0_112 = arith.constant 0 : index
    %118 = vector.load %arg20[%c0_111, %c0_112] : memref<256x72xf32, #tpu.memory_space<vmem>>, vector<256x72xf32>
    %c0_113 = arith.constant 0 : index
    %c0_114 = arith.constant 0 : index
    %c0_115 = arith.constant 0 : index
    %119 = vector.load %arg8[%c0_113, %c0_114, %c0_115] : memref<2x72x32xf32, #tpu.memory_space<vmem>>, vector<1x72x32xf32>
    %120 = vector.shape_cast %119 : vector<1x72x32xf32> to vector<72x32xf32>
    %cst_116 = arith.constant dense<0.000000e+00> : vector<256x32xf32>
    %121 = tpu.matmul %118, %120, %cst_116 {dimension_numbers = #tpu.dot_dimension_numbers<[1], [0], [0], [1], [0, 0, 1, 1], [], []>} : vector<256x72xf32>, vector<72x32xf32>, vector<256x32xf32> -> vector<256x32xf32>
    %122 = vector.shape_cast %88 : vector<1x16x16x32xf32> to vector<256x32xf32>
    %cst_117 = arith.constant 0.000000e+00 : f32
    %123 = vector.broadcast %cst_117 : f32 to vector<256x32xf32>
    %124 = arith.select %7, %122, %123 : vector<256x32xi1>, vector<256x32xf32>
    %125 = arith.addf %121, %124 : vector<256x32xf32>
    %c0_118 = arith.constant 0 : index
    %c0_119 = arith.constant 0 : index
    %c0_120 = arith.constant 0 : index
    %126 = vector.load %arg9[%c0_118, %c0_119, %c0_120] : memref<2x32x32xf32, #tpu.memory_space<vmem>>, vector<1x32x32xf32>
    %127 = vector.shape_cast %126 : vector<1x32x32xf32> to vector<32x32xf32>
    %cst_121 = arith.constant dense<0.000000e+00> : vector<256x32xf32>
    %128 = tpu.matmul %125, %127, %cst_121 {dimension_numbers = #tpu.dot_dimension_numbers<[1], [0], [0], [1], [0, 0, 1, 1], [], []>} : vector<256x32xf32>, vector<32x32xf32>, vector<256x32xf32> -> vector<256x32xf32>
    %c0_122 = arith.constant 0 : index
    %c0_123 = arith.constant 0 : index
    %c0_124 = arith.constant 0 : index
    %129 = vector.load %arg10[%c0_122, %c0_123, %c0_124] : memref<2x1x32xf32, #tpu.memory_space<vmem>>, vector<1x1x32xf32>
    %130 = vector.shape_cast %129 : vector<1x1x32xf32> to vector<1x32xf32>
    %131 = vector.broadcast %130 : vector<1x32xf32> to vector<256x32xf32>
    %132 = arith.addf %128, %131 : vector<256x32xf32>
    %cst_125 = arith.constant dense<0.000000e+00> : vector<32xf32>
    %133 = vector.multi_reduction <add>, %125, %cst_125 [0] : vector<256x32xf32> to vector<32xf32>
    %134 = vector.shape_cast %133 : vector<32xf32> to vector<1x32xf32>
    %cst_126 = arith.constant 2.560000e+02 : f32
    %135 = vector.broadcast %cst_126 : f32 to vector<1x32xf32>
    %136 = arith.divf %134, %135 : vector<1x32xf32>
    %c0_127 = arith.constant 0 : index
    %c0_128 = arith.constant 0 : index
    %c0_129 = arith.constant 0 : index
    %137 = vector.load %arg11[%c0_127, %c0_128, %c0_129] : memref<2x32x2xf32, #tpu.memory_space<vmem>>, vector<1x32x2xf32>
    %138 = vector.shape_cast %137 : vector<1x32x2xf32> to vector<32x2xf32>
    %cst_130 = arith.constant dense<0.000000e+00> : vector<1x2xf32>
    %139 = tpu.matmul %136, %138, %cst_130 {dimension_numbers = #tpu.dot_dimension_numbers<[1], [0], [0], [1], [0, 0, 1, 1], [], []>} : vector<1x32xf32>, vector<32x2xf32>, vector<1x2xf32> -> vector<1x2xf32>
    %c0_131 = arith.constant 0 : index
    %c0_132 = arith.constant 0 : index
    %c0_133 = arith.constant 0 : index
    %140 = vector.load %arg12[%c0_131, %c0_132, %c0_133] : memref<2x1x2xf32, #tpu.memory_space<vmem>>, vector<1x1x2xf32>
    %141 = vector.shape_cast %140 : vector<1x1x2xf32> to vector<1x2xf32>
    %142 = arith.addf %139, %141 : vector<1x2xf32>
    %cst_134 = arith.constant 0.000000e+00 : f32
    %143 = vector.broadcast %cst_134 : f32 to vector<1x2xf32>
    %144 = arith.maximumf %142, %143 : vector<1x2xf32>
    %c0_135 = arith.constant 0 : index
    %c0_136 = arith.constant 0 : index
    %c0_137 = arith.constant 0 : index
    %145 = vector.load %arg13[%c0_135, %c0_136, %c0_137] : memref<2x2x32xf32, #tpu.memory_space<vmem>>, vector<1x2x32xf32>
    %146 = vector.shape_cast %145 : vector<1x2x32xf32> to vector<2x32xf32>
    %cst_138 = arith.constant dense<0.000000e+00> : vector<1x32xf32>
    %147 = tpu.matmul %144, %146, %cst_138 {dimension_numbers = #tpu.dot_dimension_numbers<[1], [0], [0], [1], [0, 0, 1, 1], [], []>} : vector<1x2xf32>, vector<2x32xf32>, vector<1x32xf32> -> vector<1x32xf32>
    %c0_139 = arith.constant 0 : index
    %c0_140 = arith.constant 0 : index
    %c0_141 = arith.constant 0 : index
    %148 = vector.load %arg14[%c0_139, %c0_140, %c0_141] : memref<2x1x32xf32, #tpu.memory_space<vmem>>, vector<1x1x32xf32>
    %149 = vector.shape_cast %148 : vector<1x1x32xf32> to vector<1x32xf32>
    %150 = arith.addf %147, %149 : vector<1x32xf32>
    %151 = arith.negf %150 : vector<1x32xf32>
    %152 = math.exp %151 : vector<1x32xf32>
    %cst_142 = arith.constant 1.000000e+00 : f32
    %153 = vector.broadcast %cst_142 : f32 to vector<1x32xf32>
    %154 = arith.addf %153, %152 : vector<1x32xf32>
    %155 = arith.divf %153, %154 : vector<1x32xf32>
    %156 = vector.broadcast %155 : vector<1x32xf32> to vector<256x32xf32>
    %157 = arith.mulf %125, %156 : vector<256x32xf32>
    %158 = arith.mulf %132, %157 : vector<256x32xf32>
    %159 = arith.addf %125, %158 : vector<256x32xf32>
    %c0_143 = arith.constant 0 : index
    %c0_144 = arith.constant 0 : index
    %c0_145 = arith.constant 0 : index
    %160 = vector.load %arg15[%c0_143, %c0_144, %c0_145] : memref<2x32x32xf32, #tpu.memory_space<vmem>>, vector<1x32x32xf32>
    %161 = vector.shape_cast %160 : vector<1x32x32xf32> to vector<32x32xf32>
    %cst_146 = arith.constant dense<0.000000e+00> : vector<256x32xf32>
    %162 = tpu.matmul %159, %161, %cst_146 {dimension_numbers = #tpu.dot_dimension_numbers<[1], [0], [0], [1], [0, 0, 1, 1], [], []>} : vector<256x32xf32>, vector<32x32xf32>, vector<256x32xf32> -> vector<256x32xf32>
    %c0_147 = arith.constant 0 : index
    %c0_148 = arith.constant 0 : index
    %c0_149 = arith.constant 0 : index
    %163 = vector.load %arg16[%c0_147, %c0_148, %c0_149] : memref<2x1x32xf32, #tpu.memory_space<vmem>>, vector<1x1x32xf32>
    %164 = vector.shape_cast %163 : vector<1x1x32xf32> to vector<1x32xf32>
    %165 = vector.broadcast %164 : vector<1x32xf32> to vector<256x32xf32>
    %166 = arith.addf %162, %165 : vector<256x32xf32>
    %167 = vector.shape_cast %166 : vector<256x32xf32> to vector<1x16x16x32xf32>
    %168 = arith.addf %4, %167 : vector<1x16x16x32xf32>
    %cst_150 = arith.constant dense<0.000000e+00> : vector<1x16x16xf32>
    %169 = vector.multi_reduction <add>, %168, %cst_150 [3] : vector<1x16x16x32xf32> to vector<1x16x16xf32>
    %170 = vector.shape_cast %169 : vector<1x16x16xf32> to vector<1x16x16x1xf32>
    %cst_151 = arith.constant 3.200000e+01 : f32
    %171 = vector.broadcast %cst_151 : f32 to vector<1x16x16x1xf32>
    %172 = arith.divf %170, %171 : vector<1x16x16x1xf32>
    %173 = vector.broadcast %172 : vector<1x16x16x1xf32> to vector<1x16x16x32xf32>
    %174 = arith.subf %168, %173 : vector<1x16x16x32xf32>
    %175 = arith.mulf %174, %174 : vector<1x16x16x32xf32>
    %cst_152 = arith.constant dense<0.000000e+00> : vector<1x16x16xf32>
    %176 = vector.multi_reduction <add>, %175, %cst_152 [3] : vector<1x16x16x32xf32> to vector<1x16x16xf32>
    %177 = vector.shape_cast %176 : vector<1x16x16xf32> to vector<1x16x16x1xf32>
    %cst_153 = arith.constant 3.200000e+01 : f32
    %178 = vector.broadcast %cst_153 : f32 to vector<1x16x16x1xf32>
    %179 = arith.divf %177, %178 : vector<1x16x16x1xf32>
    %cst_154 = arith.constant 9.99999974E-6 : f32
    %180 = vector.broadcast %cst_154 : f32 to vector<1x16x16x1xf32>
    %181 = arith.addf %179, %180 : vector<1x16x16x1xf32>
    %182 = math.rsqrt %181 : vector<1x16x16x1xf32>
    %183 = vector.broadcast %182 : vector<1x16x16x1xf32> to vector<1x16x16x32xf32>
    %184 = arith.mulf %174, %183 : vector<1x16x16x32xf32>
    %c1_155 = arith.constant 1 : index
    %c0_156 = arith.constant 0 : index
    %c0_157 = arith.constant 0 : index
    %185 = vector.load %arg2[%c1_155, %c0_156, %c0_157] : memref<2x1x32xf32, #tpu.memory_space<vmem>>, vector<1x1x32xf32>
    %186 = vector.shape_cast %185 : vector<1x1x32xf32> to vector<1x32xf32>
    %187 = vector.shape_cast %186 : vector<1x32xf32> to vector<1x1x1x32xf32>
    %188 = vector.broadcast %187 : vector<1x1x1x32xf32> to vector<1x16x16x32xf32>
    %189 = arith.mulf %184, %188 : vector<1x16x16x32xf32>
    %c1_158 = arith.constant 1 : index
    %c0_159 = arith.constant 0 : index
    %c0_160 = arith.constant 0 : index
    %190 = vector.load %arg3[%c1_158, %c0_159, %c0_160] : memref<2x1x32xf32, #tpu.memory_space<vmem>>, vector<1x1x32xf32>
    %191 = vector.shape_cast %190 : vector<1x1x32xf32> to vector<1x32xf32>
    %192 = vector.shape_cast %191 : vector<1x32xf32> to vector<1x1x1x32xf32>
    %193 = vector.broadcast %192 : vector<1x1x1x32xf32> to vector<1x16x16x32xf32>
    %194 = arith.addf %189, %193 : vector<1x16x16x32xf32>
    %c0_161 = arith.constant 0 : index
    %c1_162 = arith.constant 1 : index
    %c8_163 = arith.constant 8 : index
    %c0_164 = arith.constant 0 : index
    %195 = vector.load %arg18[%c0_161, %c1_162, %c8_163, %c0_164] : memref<1x18x32x32xf32, #tpu.memory_space<vmem>>, vector<1x16x16x32xf32>
    tpu.vector_store %arg18[%c0_161, %c1_162, %c8_163, %c0_164], %194 {strides = array<i32>} : memref<1x18x32x32xf32, #tpu.memory_space<vmem>>, vector<1x16x16x32xf32>,
    %c1_165 = arith.constant 1 : index
    %c0_166 = arith.constant 0 : index
    %c0_167 = arith.constant 0 : index
    %196 = vector.load %arg4[%c1_165, %c0_166, %c0_167] : memref<2x3x32xf32, #tpu.memory_space<vmem>>, vector<1x3x32xf32>
    %197 = vector.shape_cast %196 : vector<1x3x32xf32> to vector<3x32xf32>
    %c1_168 = arith.constant 1 : index
    %c0_169 = arith.constant 0 : index
    %c0_170 = arith.constant 0 : index
    %198 = vector.load %arg6[%c1_168, %c0_169, %c0_170] : memref<2x3x32xf32, #tpu.memory_space<vmem>>, vector<1x3x32xf32>
    %199 = vector.shape_cast %198 : vector<1x3x32xf32> to vector<3x32xf32>
    %cst_171 = arith.constant 0.000000e+00 : f32
    %200 = vector.broadcast %cst_171 : f32 to vector<1x16x16x32xf32>
    %cst_172 = arith.constant 0.000000e+00 : f32
    %201 = vector.broadcast %cst_172 : f32 to vector<1x16x16x32xf32>
    %c0_173 = arith.constant 0 : index
    %c0_174 = arith.constant 0 : index
    %c8_175 = arith.constant 8 : index
    %c0_176 = arith.constant 0 : index
    %202 = vector.load %arg18[%c0_173, %c0_174, %c8_175, %c0_176] : memref<1x18x32x32xf32, #tpu.memory_space<vmem>>, vector<1x16x16x32xf32>
    %203 = vector.extract_strided_slice %197 {offsets = [0, 0], sizes = [1, 32], strides = [1, 1]} : vector<3x32xf32> to vector<1x32xf32>
    %204 = vector.shape_cast %203 : vector<1x32xf32> to vector<1x1x1x32xf32>
    %205 = vector.broadcast %204 : vector<1x1x1x32xf32> to vector<1x16x16x32xf32>
    %206 = arith.mulf %202, %205 : vector<1x16x16x32xf32>
    %207 = arith.addf %200, %206 : vector<1x16x16x32xf32>
    %c0_177 = arith.constant 0 : index
    %c1_178 = arith.constant 1 : index
    %c7_179 = arith.constant 7 : index
    %c0_180 = arith.constant 0 : index
    %208 = vector.load %arg18[%c0_177, %c1_178, %c7_179, %c0_180] : memref<1x18x32x32xf32, #tpu.memory_space<vmem>>, vector<1x16x16x32xf32>
    %209 = vector.extract_strided_slice %199 {offsets = [0, 0], sizes = [1, 32], strides = [1, 1]} : vector<3x32xf32> to vector<1x32xf32>
    %210 = vector.shape_cast %209 : vector<1x32xf32> to vector<1x1x1x32xf32>
    %211 = vector.broadcast %210 : vector<1x1x1x32xf32> to vector<1x16x16x32xf32>
    %212 = arith.mulf %208, %211 : vector<1x16x16x32xf32>
    %213 = arith.addf %201, %212 : vector<1x16x16x32xf32>
    %c0_181 = arith.constant 0 : index
    %c1_182 = arith.constant 1 : index
    %c8_183 = arith.constant 8 : index
    %c0_184 = arith.constant 0 : index
    %214 = vector.load %arg18[%c0_181, %c1_182, %c8_183, %c0_184] : memref<1x18x32x32xf32, #tpu.memory_space<vmem>>, vector<1x16x16x32xf32>
    %215 = vector.extract_strided_slice %197 {offsets = [1, 0], sizes = [1, 32], strides = [1, 1]} : vector<3x32xf32> to vector<1x32xf32>
    %216 = vector.shape_cast %215 : vector<1x32xf32> to vector<1x1x1x32xf32>
    %217 = vector.broadcast %216 : vector<1x1x1x32xf32> to vector<1x16x16x32xf32>
    %218 = arith.mulf %214, %217 : vector<1x16x16x32xf32>
    %219 = arith.addf %207, %218 : vector<1x16x16x32xf32>
    %c0_185 = arith.constant 0 : index
    %c1_186 = arith.constant 1 : index
    %c8_187 = arith.constant 8 : index
    %c0_188 = arith.constant 0 : index
    %220 = vector.load %arg18[%c0_185, %c1_186, %c8_187, %c0_188] : memref<1x18x32x32xf32, #tpu.memory_space<vmem>>, vector<1x16x16x32xf32>
    %221 = vector.extract_strided_slice %199 {offsets = [1, 0], sizes = [1, 32], strides = [1, 1]} : vector<3x32xf32> to vector<1x32xf32>
    %222 = vector.shape_cast %221 : vector<1x32xf32> to vector<1x1x1x32xf32>
    %223 = vector.broadcast %222 : vector<1x1x1x32xf32> to vector<1x16x16x32xf32>
    %224 = arith.mulf %220, %223 : vector<1x16x16x32xf32>
    %225 = arith.addf %213, %224 : vector<1x16x16x32xf32>
    %c0_189 = arith.constant 0 : index
    %c2_190 = arith.constant 2 : index
    %c8_191 = arith.constant 8 : index
    %c0_192 = arith.constant 0 : index
    %226 = vector.load %arg18[%c0_189, %c2_190, %c8_191, %c0_192] : memref<1x18x32x32xf32, #tpu.memory_space<vmem>>, vector<1x16x16x32xf32>
    %227 = vector.extract_strided_slice %197 {offsets = [2, 0], sizes = [1, 32], strides = [1, 1]} : vector<3x32xf32> to vector<1x32xf32>
    %228 = vector.shape_cast %227 : vector<1x32xf32> to vector<1x1x1x32xf32>
    %229 = vector.broadcast %228 : vector<1x1x1x32xf32> to vector<1x16x16x32xf32>
    %230 = arith.mulf %226, %229 : vector<1x16x16x32xf32>
    %231 = arith.addf %219, %230 : vector<1x16x16x32xf32>
    %c0_193 = arith.constant 0 : index
    %c1_194 = arith.constant 1 : index
    %c9_195 = arith.constant 9 : index
    %c0_196 = arith.constant 0 : index
    %232 = vector.load %arg18[%c0_193, %c1_194, %c9_195, %c0_196] : memref<1x18x32x32xf32, #tpu.memory_space<vmem>>, vector<1x16x16x32xf32>
    %233 = vector.extract_strided_slice %199 {offsets = [2, 0], sizes = [1, 32], strides = [1, 1]} : vector<3x32xf32> to vector<1x32xf32>
    %234 = vector.shape_cast %233 : vector<1x32xf32> to vector<1x1x1x32xf32>
    %235 = vector.broadcast %234 : vector<1x1x1x32xf32> to vector<1x16x16x32xf32>
    %236 = arith.mulf %232, %235 : vector<1x16x16x32xf32>
    %237 = arith.addf %225, %236 : vector<1x16x16x32xf32>
    %c1_197 = arith.constant 1 : index
    %c0_198 = arith.constant 0 : index
    %c0_199 = arith.constant 0 : index
    %238 = vector.load %arg5[%c1_197, %c0_198, %c0_199] : memref<2x1x32xf32, #tpu.memory_space<vmem>>, vector<1x1x32xf32>
    %239 = vector.shape_cast %238 : vector<1x1x32xf32> to vector<1x32xf32>
    %240 = vector.shape_cast %239 : vector<1x32xf32> to vector<1x1x1x32xf32>
    %241 = vector.broadcast %240 : vector<1x1x1x32xf32> to vector<1x16x16x32xf32>
    %242 = arith.addf %231, %241 : vector<1x16x16x32xf32>
    %c1_200 = arith.constant 1 : index
    %c0_201 = arith.constant 0 : index
    %c0_202 = arith.constant 0 : index
    %243 = vector.load %arg7[%c1_200, %c0_201, %c0_202] : memref<2x1x32xf32, #tpu.memory_space<vmem>>, vector<1x1x32xf32>
    %244 = vector.shape_cast %243 : vector<1x1x32xf32> to vector<1x32xf32>
    %245 = vector.shape_cast %244 : vector<1x32xf32> to vector<1x1x1x32xf32>
    %246 = vector.broadcast %245 : vector<1x1x1x32xf32> to vector<1x16x16x32xf32>
    %247 = arith.addf %237, %246 : vector<1x16x16x32xf32>
    %248 = arith.mulf %242, %247 : vector<1x16x16x32xf32>
    %249 = arith.addf %194, %248 : vector<1x16x16x32xf32>
    %250 = vector.extract_strided_slice %249 {offsets = [0, 0, 0, 0], sizes = [1, 16, 16, 8], strides = [1, 1, 1, 1]} : vector<1x16x16x32xf32> to vector<1x16x16x8xf32>
    %c0_203 = arith.constant 0 : index
    %c1_204 = arith.constant 1 : index
    %c8_205 = arith.constant 8 : index
    %c0_206 = arith.constant 0 : index
    %251 = vector.load %arg19[%c0_203, %c1_204, %c8_205, %c0_206] : memref<1x18x32x8xf32, #tpu.memory_space<vmem>>, vector<1x16x16x8xf32>
    tpu.vector_store %arg19[%c0_203, %c1_204, %c8_205, %c0_206], %250 {strides = array<i32>} : memref<1x18x32x8xf32, #tpu.memory_space<vmem>>, vector<1x16x16x8xf32>,
    %c0_207 = arith.constant 0 : index
    %c0_208 = arith.constant 0 : index
    %c7_209 = arith.constant 7 : index
    %c0_210 = arith.constant 0 : index
    %252 = vector.load %arg19[%c0_207, %c0_208, %c7_209, %c0_210] : memref<1x18x32x8xf32, #tpu.memory_space<vmem>>, vector<1x16x16x8xf32>
    %253 = vector.shape_cast %252 : vector<1x16x16x8xf32> to vector<256x8xf32>
    %c0_211 = arith.constant 0 : index
    %c0_212 = arith.constant 0 : index
    %254 = vector.load %arg20[%c0_211, %c0_212] : memref<256x72xf32, #tpu.memory_space<vmem>>, vector<256x8xf32>
    tpu.vector_store %arg20[%c0_211, %c0_212], %253 {strides = array<i32>} : memref<256x72xf32, #tpu.memory_space<vmem>>, vector<256x8xf32>,
    %c0_213 = arith.constant 0 : index
    %c0_214 = arith.constant 0 : index
    %c8_215 = arith.constant 8 : index
    %c0_216 = arith.constant 0 : index
    %255 = vector.load %arg19[%c0_213, %c0_214, %c8_215, %c0_216] : memref<1x18x32x8xf32, #tpu.memory_space<vmem>>, vector<1x16x16x8xf32>
    %256 = vector.shape_cast %255 : vector<1x16x16x8xf32> to vector<256x8xf32>
    %c0_217 = arith.constant 0 : index
    %c8_218 = arith.constant 8 : index
    %257 = vector.load %arg20[%c0_217, %c8_218] : memref<256x72xf32, #tpu.memory_space<vmem>>, vector<256x8xf32>
    tpu.vector_store %arg20[%c0_217, %c8_218], %256 {strides = array<i32>} : memref<256x72xf32, #tpu.memory_space<vmem>>, vector<256x8xf32>,
    %c0_219 = arith.constant 0 : index
    %c0_220 = arith.constant 0 : index
    %c9_221 = arith.constant 9 : index
    %c0_222 = arith.constant 0 : index
    %258 = vector.load %arg19[%c0_219, %c0_220, %c9_221, %c0_222] : memref<1x18x32x8xf32, #tpu.memory_space<vmem>>, vector<1x16x16x8xf32>
    %259 = vector.shape_cast %258 : vector<1x16x16x8xf32> to vector<256x8xf32>
    %c0_223 = arith.constant 0 : index
    %c16_224 = arith.constant 16 : index
    %260 = vector.load %arg20[%c0_223, %c16_224] : memref<256x72xf32, #tpu.memory_space<vmem>>, vector<256x8xf32>
    tpu.vector_store %arg20[%c0_223, %c16_224], %259 {strides = array<i32>} : memref<256x72xf32, #tpu.memory_space<vmem>>, vector<256x8xf32>,
    %c0_225 = arith.constant 0 : index
    %c1_226 = arith.constant 1 : index
    %c7_227 = arith.constant 7 : index
    %c0_228 = arith.constant 0 : index
    %261 = vector.load %arg19[%c0_225, %c1_226, %c7_227, %c0_228] : memref<1x18x32x8xf32, #tpu.memory_space<vmem>>, vector<1x16x16x8xf32>
    %262 = vector.shape_cast %261 : vector<1x16x16x8xf32> to vector<256x8xf32>
    %c0_229 = arith.constant 0 : index
    %c24_230 = arith.constant 24 : index
    %263 = vector.load %arg20[%c0_229, %c24_230] : memref<256x72xf32, #tpu.memory_space<vmem>>, vector<256x8xf32>
    tpu.vector_store %arg20[%c0_229, %c24_230], %262 {strides = array<i32>} : memref<256x72xf32, #tpu.memory_space<vmem>>, vector<256x8xf32>,
    %c0_231 = arith.constant 0 : index
    %c1_232 = arith.constant 1 : index
    %c8_233 = arith.constant 8 : index
    %c0_234 = arith.constant 0 : index
    %264 = vector.load %arg19[%c0_231, %c1_232, %c8_233, %c0_234] : memref<1x18x32x8xf32, #tpu.memory_space<vmem>>, vector<1x16x16x8xf32>
    %265 = vector.shape_cast %264 : vector<1x16x16x8xf32> to vector<256x8xf32>
    %c0_235 = arith.constant 0 : index
    %c32_236 = arith.constant 32 : index
    %266 = vector.load %arg20[%c0_235, %c32_236] : memref<256x72xf32, #tpu.memory_space<vmem>>, vector<256x8xf32>
    tpu.vector_store %arg20[%c0_235, %c32_236], %265 {strides = array<i32>} : memref<256x72xf32, #tpu.memory_space<vmem>>, vector<256x8xf32>,
    %c0_237 = arith.constant 0 : index
    %c1_238 = arith.constant 1 : index
    %c9_239 = arith.constant 9 : index
    %c0_240 = arith.constant 0 : index
    %267 = vector.load %arg19[%c0_237, %c1_238, %c9_239, %c0_240] : memref<1x18x32x8xf32, #tpu.memory_space<vmem>>, vector<1x16x16x8xf32>
    %268 = vector.shape_cast %267 : vector<1x16x16x8xf32> to vector<256x8xf32>
    %c0_241 = arith.constant 0 : index
    %c40_242 = arith.constant 40 : index
    %269 = vector.load %arg20[%c0_241, %c40_242] : memref<256x72xf32, #tpu.memory_space<vmem>>, vector<256x8xf32>
    tpu.vector_store %arg20[%c0_241, %c40_242], %268 {strides = array<i32>} : memref<256x72xf32, #tpu.memory_space<vmem>>, vector<256x8xf32>,
    %c0_243 = arith.constant 0 : index
    %c2_244 = arith.constant 2 : index
    %c7_245 = arith.constant 7 : index
    %c0_246 = arith.constant 0 : index
    %270 = vector.load %arg19[%c0_243, %c2_244, %c7_245, %c0_246] : memref<1x18x32x8xf32, #tpu.memory_space<vmem>>, vector<1x16x16x8xf32>
    %271 = vector.shape_cast %270 : vector<1x16x16x8xf32> to vector<256x8xf32>
    %c0_247 = arith.constant 0 : index
    %c48_248 = arith.constant 48 : index
    %272 = vector.load %arg20[%c0_247, %c48_248] : memref<256x72xf32, #tpu.memory_space<vmem>>, vector<256x8xf32>
    tpu.vector_store %arg20[%c0_247, %c48_248], %271 {strides = array<i32>} : memref<256x72xf32, #tpu.memory_space<vmem>>, vector<256x8xf32>,
    %c0_249 = arith.constant 0 : index
    %c2_250 = arith.constant 2 : index
    %c8_251 = arith.constant 8 : index
    %c0_252 = arith.constant 0 : index
    %273 = vector.load %arg19[%c0_249, %c2_250, %c8_251, %c0_252] : memref<1x18x32x8xf32, #tpu.memory_space<vmem>>, vector<1x16x16x8xf32>
    %274 = vector.shape_cast %273 : vector<1x16x16x8xf32> to vector<256x8xf32>
    %c0_253 = arith.constant 0 : index
    %c56_254 = arith.constant 56 : index
    %275 = vector.load %arg20[%c0_253, %c56_254] : memref<256x72xf32, #tpu.memory_space<vmem>>, vector<256x8xf32>
    tpu.vector_store %arg20[%c0_253, %c56_254], %274 {strides = array<i32>} : memref<256x72xf32, #tpu.memory_space<vmem>>, vector<256x8xf32>,
    %c0_255 = arith.constant 0 : index
    %c2_256 = arith.constant 2 : index
    %c9_257 = arith.constant 9 : index
    %c0_258 = arith.constant 0 : index
    %276 = vector.load %arg19[%c0_255, %c2_256, %c9_257, %c0_258] : memref<1x18x32x8xf32, #tpu.memory_space<vmem>>, vector<1x16x16x8xf32>
    %277 = vector.shape_cast %276 : vector<1x16x16x8xf32> to vector<256x8xf32>
    %c0_259 = arith.constant 0 : index
    %c64_260 = arith.constant 64 : index
    %278 = vector.load %arg20[%c0_259, %c64_260] : memref<256x72xf32, #tpu.memory_space<vmem>>, vector<256x8xf32>
    tpu.vector_store %arg20[%c0_259, %c64_260], %277 {strides = array<i32>} : memref<256x72xf32, #tpu.memory_space<vmem>>, vector<256x8xf32>,
    %c0_261 = arith.constant 0 : index
    %c0_262 = arith.constant 0 : index
    %279 = vector.load %arg20[%c0_261, %c0_262] : memref<256x72xf32, #tpu.memory_space<vmem>>, vector<256x72xf32>
    %c1_263 = arith.constant 1 : index
    %c0_264 = arith.constant 0 : index
    %c0_265 = arith.constant 0 : index
    %280 = vector.load %arg8[%c1_263, %c0_264, %c0_265] : memref<2x72x32xf32, #tpu.memory_space<vmem>>, vector<1x72x32xf32>
    %281 = vector.shape_cast %280 : vector<1x72x32xf32> to vector<72x32xf32>
    %cst_266 = arith.constant dense<0.000000e+00> : vector<256x32xf32>
    %282 = tpu.matmul %279, %281, %cst_266 {dimension_numbers = #tpu.dot_dimension_numbers<[1], [0], [0], [1], [0, 0, 1, 1], [], []>} : vector<256x72xf32>, vector<72x32xf32>, vector<256x32xf32> -> vector<256x32xf32>
    %283 = vector.shape_cast %249 : vector<1x16x16x32xf32> to vector<256x32xf32>
    %cst_267 = arith.constant 0.000000e+00 : f32
    %284 = vector.broadcast %cst_267 : f32 to vector<256x32xf32>
    %285 = arith.select %7, %283, %284 : vector<256x32xi1>, vector<256x32xf32>
    %286 = arith.addf %282, %285 : vector<256x32xf32>
    %c1_268 = arith.constant 1 : index
    %c0_269 = arith.constant 0 : index
    %c0_270 = arith.constant 0 : index
    %287 = vector.load %arg9[%c1_268, %c0_269, %c0_270] : memref<2x32x32xf32, #tpu.memory_space<vmem>>, vector<1x32x32xf32>
    %288 = vector.shape_cast %287 : vector<1x32x32xf32> to vector<32x32xf32>
    %cst_271 = arith.constant dense<0.000000e+00> : vector<256x32xf32>
    %289 = tpu.matmul %286, %288, %cst_271 {dimension_numbers = #tpu.dot_dimension_numbers<[1], [0], [0], [1], [0, 0, 1, 1], [], []>} : vector<256x32xf32>, vector<32x32xf32>, vector<256x32xf32> -> vector<256x32xf32>
    %c1_272 = arith.constant 1 : index
    %c0_273 = arith.constant 0 : index
    %c0_274 = arith.constant 0 : index
    %290 = vector.load %arg10[%c1_272, %c0_273, %c0_274] : memref<2x1x32xf32, #tpu.memory_space<vmem>>, vector<1x1x32xf32>
    %291 = vector.shape_cast %290 : vector<1x1x32xf32> to vector<1x32xf32>
    %292 = vector.broadcast %291 : vector<1x32xf32> to vector<256x32xf32>
    %293 = arith.addf %289, %292 : vector<256x32xf32>
    %cst_275 = arith.constant dense<0.000000e+00> : vector<32xf32>
    %294 = vector.multi_reduction <add>, %286, %cst_275 [0] : vector<256x32xf32> to vector<32xf32>
    %295 = vector.shape_cast %294 : vector<32xf32> to vector<1x32xf32>
    %cst_276 = arith.constant 2.560000e+02 : f32
    %296 = vector.broadcast %cst_276 : f32 to vector<1x32xf32>
    %297 = arith.divf %295, %296 : vector<1x32xf32>
    %c1_277 = arith.constant 1 : index
    %c0_278 = arith.constant 0 : index
    %c0_279 = arith.constant 0 : index
    %298 = vector.load %arg11[%c1_277, %c0_278, %c0_279] : memref<2x32x2xf32, #tpu.memory_space<vmem>>, vector<1x32x2xf32>
    %299 = vector.shape_cast %298 : vector<1x32x2xf32> to vector<32x2xf32>
    %cst_280 = arith.constant dense<0.000000e+00> : vector<1x2xf32>
    %300 = tpu.matmul %297, %299, %cst_280 {dimension_numbers = #tpu.dot_dimension_numbers<[1], [0], [0], [1], [0, 0, 1, 1], [], []>} : vector<1x32xf32>, vector<32x2xf32>, vector<1x2xf32> -> vector<1x2xf32>
    %c1_281 = arith.constant 1 : index
    %c0_282 = arith.constant 0 : index
    %c0_283 = arith.constant 0 : index
    %301 = vector.load %arg12[%c1_281, %c0_282, %c0_283] : memref<2x1x2xf32, #tpu.memory_space<vmem>>, vector<1x1x2xf32>
    %302 = vector.shape_cast %301 : vector<1x1x2xf32> to vector<1x2xf32>
    %303 = arith.addf %300, %302 : vector<1x2xf32>
    %cst_284 = arith.constant 0.000000e+00 : f32
    %304 = vector.broadcast %cst_284 : f32 to vector<1x2xf32>
    %305 = arith.maximumf %303, %304 : vector<1x2xf32>
    %c1_285 = arith.constant 1 : index
    %c0_286 = arith.constant 0 : index
    %c0_287 = arith.constant 0 : index
    %306 = vector.load %arg13[%c1_285, %c0_286, %c0_287] : memref<2x2x32xf32, #tpu.memory_space<vmem>>, vector<1x2x32xf32>
    %307 = vector.shape_cast %306 : vector<1x2x32xf32> to vector<2x32xf32>
    %cst_288 = arith.constant dense<0.000000e+00> : vector<1x32xf32>
    %308 = tpu.matmul %305, %307, %cst_288 {dimension_numbers = #tpu.dot_dimension_numbers<[1], [0], [0], [1], [0, 0, 1, 1], [], []>} : vector<1x2xf32>, vector<2x32xf32>, vector<1x32xf32> -> vector<1x32xf32>
    %c1_289 = arith.constant 1 : index
    %c0_290 = arith.constant 0 : index
    %c0_291 = arith.constant 0 : index
    %309 = vector.load %arg14[%c1_289, %c0_290, %c0_291] : memref<2x1x32xf32, #tpu.memory_space<vmem>>, vector<1x1x32xf32>
    %310 = vector.shape_cast %309 : vector<1x1x32xf32> to vector<1x32xf32>
    %311 = arith.addf %308, %310 : vector<1x32xf32>
    %312 = arith.negf %311 : vector<1x32xf32>
    %313 = math.exp %312 : vector<1x32xf32>
    %cst_292 = arith.constant 1.000000e+00 : f32
    %314 = vector.broadcast %cst_292 : f32 to vector<1x32xf32>
    %315 = arith.addf %314, %313 : vector<1x32xf32>
    %316 = arith.divf %314, %315 : vector<1x32xf32>
    %317 = vector.broadcast %316 : vector<1x32xf32> to vector<256x32xf32>
    %318 = arith.mulf %286, %317 : vector<256x32xf32>
    %319 = arith.mulf %293, %318 : vector<256x32xf32>
    %320 = arith.addf %286, %319 : vector<256x32xf32>
    %c1_293 = arith.constant 1 : index
    %c0_294 = arith.constant 0 : index
    %c0_295 = arith.constant 0 : index
    %321 = vector.load %arg15[%c1_293, %c0_294, %c0_295] : memref<2x32x32xf32, #tpu.memory_space<vmem>>, vector<1x32x32xf32>
    %322 = vector.shape_cast %321 : vector<1x32x32xf32> to vector<32x32xf32>
    %cst_296 = arith.constant dense<0.000000e+00> : vector<256x32xf32>
    %323 = tpu.matmul %320, %322, %cst_296 {dimension_numbers = #tpu.dot_dimension_numbers<[1], [0], [0], [1], [0, 0, 1, 1], [], []>} : vector<256x32xf32>, vector<32x32xf32>, vector<256x32xf32> -> vector<256x32xf32>
    %c1_297 = arith.constant 1 : index
    %c0_298 = arith.constant 0 : index
    %c0_299 = arith.constant 0 : index
    %324 = vector.load %arg16[%c1_297, %c0_298, %c0_299] : memref<2x1x32xf32, #tpu.memory_space<vmem>>, vector<1x1x32xf32>
    %325 = vector.shape_cast %324 : vector<1x1x32xf32> to vector<1x32xf32>
    %326 = vector.broadcast %325 : vector<1x32xf32> to vector<256x32xf32>
    %327 = arith.addf %323, %326 : vector<256x32xf32>
    %328 = vector.shape_cast %327 : vector<256x32xf32> to vector<1x16x16x32xf32>
    %329 = arith.addf %168, %328 : vector<1x16x16x32xf32>
    %330 = arith.addf %329, %4 : vector<1x16x16x32xf32>
    %c0_300 = arith.constant 0 : index
    %c0_301 = arith.constant 0 : index
    %c0_302 = arith.constant 0 : index
    %c0_303 = arith.constant 0 : index
    %331 = vector.load %arg17[%c0_300, %c0_301, %c0_302, %c0_303] : memref<1x16x16x32xf32, #tpu.memory_space<vmem>>, vector<1x16x16x32xf32>
    tpu.vector_store %arg17[%c0_300, %c0_301, %c0_302, %c0_303], %330 {strides = array<i32>} : memref<1x16x16x32xf32, #tpu.memory_space<vmem>>, vector<1x16x16x32xf32>,
    return
  }
  func.func @transform_0(%arg0: i32) -> (i32, i32, i32, i32) {
    %c0_i32 = arith.constant 0 : i32
    %c0_i32_0 = arith.constant 0 : i32
    %c0_i32_1 = arith.constant 0 : i32
    %c0_i32_2 = arith.constant 0 : i32
    return %arg0, %c0_i32, %c0_i32_0, %c0_i32_1 : i32, i32, i32, i32
  }
  func.func @transform_1(%arg0: i32) -> (i32, i32, i32) {
    %c0_i32 = arith.constant 0 : i32
    %c0_i32_0 = arith.constant 0 : i32
    %c0_i32_1 = arith.constant 0 : i32
    %c0_i32_2 = arith.constant 0 : i32
    return %c0_i32, %c0_i32_0, %c0_i32_1 : i32, i32, i32
  }
  func.func @transform_2(%arg0: i32) -> (i32, i32, i32) {
    %c0_i32 = arith.constant 0 : i32
    %c0_i32_0 = arith.constant 0 : i32
    %c0_i32_1 = arith.constant 0 : i32
    %c0_i32_2 = arith.constant 0 : i32
    return %c0_i32, %c0_i32_0, %c0_i32_1 : i32, i32, i32
  }
  func.func @transform_3(%arg0: i32) -> (i32, i32, i32) {
    %c0_i32 = arith.constant 0 : i32
    %c0_i32_0 = arith.constant 0 : i32
    %c0_i32_1 = arith.constant 0 : i32
    %c0_i32_2 = arith.constant 0 : i32
    return %c0_i32, %c0_i32_0, %c0_i32_1 : i32, i32, i32
  }
  func.func @transform_4(%arg0: i32) -> (i32, i32, i32) {
    %c0_i32 = arith.constant 0 : i32
    %c0_i32_0 = arith.constant 0 : i32
    %c0_i32_1 = arith.constant 0 : i32
    %c0_i32_2 = arith.constant 0 : i32
    return %c0_i32, %c0_i32_0, %c0_i32_1 : i32, i32, i32
  }
  func.func @transform_5(%arg0: i32) -> (i32, i32, i32) {
    %c0_i32 = arith.constant 0 : i32
    %c0_i32_0 = arith.constant 0 : i32
    %c0_i32_1 = arith.constant 0 : i32
    %c0_i32_2 = arith.constant 0 : i32
    return %c0_i32, %c0_i32_0, %c0_i32_1 : i32, i32, i32
  }
  func.func @transform_6(%arg0: i32) -> (i32, i32, i32) {
    %c0_i32 = arith.constant 0 : i32
    %c0_i32_0 = arith.constant 0 : i32
    %c0_i32_1 = arith.constant 0 : i32
    %c0_i32_2 = arith.constant 0 : i32
    return %c0_i32, %c0_i32_0, %c0_i32_1 : i32, i32, i32
  }
  func.func @transform_7(%arg0: i32) -> (i32, i32, i32) {
    %c0_i32 = arith.constant 0 : i32
    %c0_i32_0 = arith.constant 0 : i32
    %c0_i32_1 = arith.constant 0 : i32
    %c0_i32_2 = arith.constant 0 : i32
    return %c0_i32, %c0_i32_0, %c0_i32_1 : i32, i32, i32
  }
  func.func @transform_8(%arg0: i32) -> (i32, i32, i32) {
    %c0_i32 = arith.constant 0 : i32
    %c0_i32_0 = arith.constant 0 : i32
    %c0_i32_1 = arith.constant 0 : i32
    %c0_i32_2 = arith.constant 0 : i32
    return %c0_i32, %c0_i32_0, %c0_i32_1 : i32, i32, i32
  }
  func.func @transform_9(%arg0: i32) -> (i32, i32, i32) {
    %c0_i32 = arith.constant 0 : i32
    %c0_i32_0 = arith.constant 0 : i32
    %c0_i32_1 = arith.constant 0 : i32
    %c0_i32_2 = arith.constant 0 : i32
    return %c0_i32, %c0_i32_0, %c0_i32_1 : i32, i32, i32
  }
  func.func @transform_10(%arg0: i32) -> (i32, i32, i32) {
    %c0_i32 = arith.constant 0 : i32
    %c0_i32_0 = arith.constant 0 : i32
    %c0_i32_1 = arith.constant 0 : i32
    %c0_i32_2 = arith.constant 0 : i32
    return %c0_i32, %c0_i32_0, %c0_i32_1 : i32, i32, i32
  }
  func.func @transform_11(%arg0: i32) -> (i32, i32, i32) {
    %c0_i32 = arith.constant 0 : i32
    %c0_i32_0 = arith.constant 0 : i32
    %c0_i32_1 = arith.constant 0 : i32
    %c0_i32_2 = arith.constant 0 : i32
    return %c0_i32, %c0_i32_0, %c0_i32_1 : i32, i32, i32
  }
  func.func @transform_12(%arg0: i32) -> (i32, i32, i32) {
    %c0_i32 = arith.constant 0 : i32
    %c0_i32_0 = arith.constant 0 : i32
    %c0_i32_1 = arith.constant 0 : i32
    %c0_i32_2 = arith.constant 0 : i32
    return %c0_i32, %c0_i32_0, %c0_i32_1 : i32, i32, i32
  }
  func.func @transform_13(%arg0: i32) -> (i32, i32, i32) {
    %c0_i32 = arith.constant 0 : i32
    %c0_i32_0 = arith.constant 0 : i32
    %c0_i32_1 = arith.constant 0 : i32
    %c0_i32_2 = arith.constant 0 : i32
    return %c0_i32, %c0_i32_0, %c0_i32_1 : i32, i32, i32
  }
  func.func @transform_14(%arg0: i32) -> (i32, i32, i32) {
    %c0_i32 = arith.constant 0 : i32
    %c0_i32_0 = arith.constant 0 : i32
    %c0_i32_1 = arith.constant 0 : i32
    %c0_i32_2 = arith.constant 0 : i32
    return %c0_i32, %c0_i32_0, %c0_i32_1 : i32, i32, i32
  }
  func.func @transform_15(%arg0: i32) -> (i32, i32, i32) {
    %c0_i32 = arith.constant 0 : i32
    %c0_i32_0 = arith.constant 0 : i32
    %c0_i32_1 = arith.constant 0 : i32
    %c0_i32_2 = arith.constant 0 : i32
    return %c0_i32, %c0_i32_0, %c0_i32_1 : i32, i32, i32
  }
  func.func @transform_16(%arg0: i32) -> (i32, i32, i32, i32) {
    %c0_i32 = arith.constant 0 : i32
    %c0_i32_0 = arith.constant 0 : i32
    %c0_i32_1 = arith.constant 0 : i32
    %c0_i32_2 = arith.constant 0 : i32
    return %arg0, %c0_i32, %c0_i32_0, %c0_i32_1 : i32, i32, i32, i32
  }
}

</mosaic_0001>

<llo_original>
// kernel: trans_layermul.1
$region0: #{trans_layermul.1}
  #allocation0 [shape = 'u32[]', space=smem, size = 0x4, offset = 0x4, fixed_abs, tag = 'smem constant byte address 0x4 - core index']
  #allocation1 [shape = 'u32[72,128]{1,0:T(1,128)}', space=vmem, size = 0x9000, scoped, tag = 'internal scratch']
  #allocation2 [shape = 'f32[1,18,32,32]{3,2,1,0:T(8,128)}', space=vmem, size = 0x48000, scoped, tag = 'scratch operand']
  #allocation3 [shape = 'f32[1,18,32,8]{3,2,1,0:T(8,128)}', space=vmem, size = 0x48000, scoped, tag = 'scratch operand']
  #allocation4 [shape = 'f32[256,72]{1,0:T(8,128)}', space=vmem, size = 0x20000, scoped, tag = 'scratch operand']
  %s0 = inlined_call_operand.hbm [shape: f32[2,16,16,32], index: 0, kind: input, shape index: {}]
  %s1 = inlined_call_operand.vmem [shape: f32[2,1,32], index: 1, kind: input, shape index: {}]
  %s2 = inlined_call_operand.vmem [shape: f32[2,1,32], index: 2, kind: input, shape index: {}]
  %s3 = inlined_call_operand.vmem [shape: f32[2,3,32], index: 3, kind: input, shape index: {}]
  %s4 = inlined_call_operand.vmem [shape: f32[2,1,32], index: 4, kind: input, shape index: {}]
  %s5 = inlined_call_operand.vmem [shape: f32[2,3,32], index: 5, kind: input, shape index: {}]
  %s6 = inlined_call_operand.vmem [shape: f32[2,1,32], index: 6, kind: input, shape index: {}]
  %s7 = inlined_call_operand.vmem [shape: f32[2,72,32], index: 7, kind: input, shape index: {}]
  %s8 = inlined_call_operand.vmem [shape: f32[2,32,32], index: 8, kind: input, shape index: {}]
  %s9 = inlined_call_operand.vmem [shape: f32[2,1,32], index: 9, kind: input, shape index: {}]
  %s10 = inlined_call_operand.vmem [shape: f32[2,32,2], index: 10, kind: input, shape index: {}]
  %s11 = inlined_call_operand.vmem [shape: f32[2,1,2], index: 11, kind: input, shape index: {}]
  %s12 = inlined_call_operand.vmem [shape: f32[2,2,32], index: 12, kind: input, shape index: {}]
  %s13 = inlined_call_operand.vmem [shape: f32[2,1,32], index: 13, kind: input, shape index: {}]
  %s14 = inlined_call_operand.vmem [shape: f32[2,32,32], index: 14, kind: input, shape index: {}]
  %s15 = inlined_call_operand.vmem [shape: f32[2,1,32], index: 15, kind: input, shape index: {}]
  %s16 = inlined_call_operand.hbm [shape: f32[2,16,16,32], index: 16, kind: output, shape index: {}]
  %s17 = sld [smem:[#allocation0]]
  $region101: #{trans_layermul.1} parent=0
    _
  %s19 = ssub.s32 1, %s17
  %s20 = scalar_select 0, %s19, %s17
  $region1: #{trans_layermul.1} parent=0
    #allocation5 [shape = 'u8[262144]{0}', space=vmem, size = 0x40000, scoped, tag = 'input window, operand 0']
    #allocation6 [shape = 's32[2]{0}', space=sflag, size = 0x8, scoped, tag = 'scoped memory for trans_layermul.1']
    #allocation7 [shape = 's32[2]{0}', space=sflag, size = 0x8, scoped, tag = 'scoped memory for trans_layermul.1']
    #allocation8 [shape = 'u8[262144]{0}', space=vmem, size = 0x40000, scoped, tag = 'output window, operand 0']
    %21 = vsyncpa [#allocation6], 0
    %s22 = scalar_lea.sflag [#allocation6], 1
    %23 = vsyncpa %s22, 0
    %24 = vsyncpa [#allocation7], 0
    %s25 = scalar_lea.sflag [#allocation7], 1
    %26 = vsyncpa %s25, 0
    loop: start=0, step=1, limit=4
    $region2: #{trans_layermul.1} parent=1 // loop_pre_header
      _
    $region3: #{trans_layermul.1} parent=1 // loop_header
      %s28 = sphi 0, %s32
      %p29 = scmp.ge.s32.totalorder %s28, 4
      %s38 = sphi 0, %s40
      %s41 = sphi 0, %s38
      %s42 = sphi 0, %s41
      %s58 = sphi 0, %s42
      %s62 = sphi 0, %s62
      %s64 = sphi 0, %s62
      %s65 = sphi 0, %s64
      %s79 = sphi 0, %s65
      %s83 = sphi 0, %s83
      %s85 = sphi 0, %s83
      %s86 = sphi 0, %s85
      %s100 = sphi 0, %s86
      %s104 = sphi 0, %s104
      %s106 = sphi 0, %s104
      %s107 = sphi 0, %s106
      %s121 = sphi 0, %s107
      %s125 = sphi 0, %s125
      %s127 = sphi 0, %s125
      %s128 = sphi 0, %s127
      %s142 = sphi 0, %s128
      %s146 = sphi 0, %s146
      %s148 = sphi 0, %s146
      %s149 = sphi 0, %s148
      %s163 = sphi 0, %s149
      %s167 = sphi 0, %s167
      %s169 = sphi 0, %s167
      %s170 = sphi 0, %s169
      %s184 = sphi 0, %s170
      %s188 = sphi 0, %s188
      %s190 = sphi 0, %s188
      %s191 = sphi 0, %s190
      %s205 = sphi 0, %s191
      %s209 = sphi 0, %s209
      %s211 = sphi 0, %s209
      %s212 = sphi 0, %s211
      %s226 = sphi 0, %s212
      %s230 = sphi 0, %s230
      %s232 = sphi 0, %s230
      %s233 = sphi 0, %s232
      %s247 = sphi 0, %s233
      %s251 = sphi 0, %s251
      %s253 = sphi 0, %s251
      %s254 = sphi 0, %s253
      %s268 = sphi 0, %s254
      %s272 = sphi 0, %s272
      %s274 = sphi 0, %s272
      %s275 = sphi 0, %s274
      %s289 = sphi 0, %s275
      %s293 = sphi 0, %s293
      %s295 = sphi 0, %s293
      %s296 = sphi 0, %s295
      %s310 = sphi 0, %s296
      %s314 = sphi 0, %s314
      %s316 = sphi 0, %s314
      %s317 = sphi 0, %s316
      %s331 = sphi 0, %s317
      %s335 = sphi 0, %s335
      %s337 = sphi 0, %s335
      %s338 = sphi 0, %s337
      %s352 = sphi 0, %s338
      %s356 = sphi 0, %s356
      %s358 = sphi 0, %s356
      %s359 = sphi 0, %s358
      %s373 = sphi 0, %s359
      %s379 = sphi 0, %s381
      %s382 = sphi 0, %s379
      %s383 = sphi 0, %s382
      %s399 = sphi 0, %s383
    $region4: #{trans_layermul.1} parent=1 // loop_header_branch
      %31 = sbr.rel (%p29) target = $region8
    $region5: #{trans_layermul.1} parent=1 // loop_body
      %s33 = ssub.s32 %s28, 1
      %s34 = ssub.s32 %s28, 2
      %s35 = sadd.s32 %s28, 1
      %s36 = ssub.s32 %s28, %s35
      %p37 = scmp.eq.s32.totalorder %s36, 0
      %s39 = sadd.s32 %s38, 1
      %s40 = scalar_select %p37, %s38, %s39
      %p43 = pneg %p37
      %p44 = scmp.eq.s32.totalorder %s28, 1
      %p45 = por %p43, %p44
      %p46 = scmp.ne.s32.totalorder %s38, %s41
      %p47 = scmp.eq.s32.totalorder %s28, 0
      %p48 = por %p46, %p47
      %p49 = scmp.ne.s32.totalorder %s38, %s41
      %p50 = scmp.eq.s32.totalorder %s33, 1
      %p51 = por %p49, %p50
      %p52 = scmp.ne.s32.totalorder %s41, %s42
      %p53 = scmp.eq.s32.totalorder %s33, 0
      %p54 = por %p52, %p53
      %p55 = scmp.ne.s32.totalorder %s41, %s42
      %p56 = scmp.eq.s32.totalorder %s34, 1
      %p57 = por %p55, %p56
      %p59 = scmp.ne.s32.totalorder %s42, %s58
      %p60 = scmp.eq.s32.totalorder %s34, 0
      %p61 = por %p59, %p60
      %s63 = sadd.s32 %s62, 1
      %p66 = scmp.eq.s32.totalorder %s28, 1
      %p67 = scmp.ne.s32.totalorder %s62, %s64
      %p68 = scmp.eq.s32.totalorder %s28, 0
      %p69 = por %p67, %p68
      %p70 = scmp.ne.s32.totalorder %s62, %s64
      %p71 = scmp.eq.s32.totalorder %s33, 1
      %p72 = por %p70, %p71
      %p73 = scmp.ne.s32.totalorder %s64, %s65
      %p74 = scmp.eq.s32.totalorder %s33, 0
      %p75 = por %p73, %p74
      %p76 = scmp.ne.s32.totalorder %s64, %s65
      %p77 = scmp.eq.s32.totalorder %s34, 1
      %p78 = por %p76, %p77
      %p80 = scmp.ne.s32.totalorder %s65, %s79
      %p81 = scmp.eq.s32.totalorder %s34, 0
      %p82 = por %p80, %p81
      %s84 = sadd.s32 %s83, 1
      %p87 = scmp.eq.s32.totalorder %s28, 1
      %p88 = scmp.ne.s32.totalorder %s83, %s85
      %p89 = scmp.eq.s32.totalorder %s28, 0
      %p90 = por %p88, %p89
      %p91 = scmp.ne.s32.totalorder %s83, %s85
      %p92 = scmp.eq.s32.totalorder %s33, 1
      %p93 = por %p91, %p92
      %p94 = scmp.ne.s32.totalorder %s85, %s86
      %p95 = scmp.eq.s32.totalorder %s33, 0
      %p96 = por %p94, %p95
      %p97 = scmp.ne.s32.totalorder %s85, %s86
      %p98 = scmp.eq.s32.totalorder %s34, 1
      %p99 = por %p97, %p98
      %p101 = scmp.ne.s32.totalorder %s86, %s100
      %p102 = scmp.eq.s32.totalorder %s34, 0
      %p103 = por %p101, %p102
      %s105 = sadd.s32 %s104, 1
      %p108 = scmp.eq.s32.totalorder %s28, 1
      %p109 = scmp.ne.s32.totalorder %s104, %s106
      %p110 = scmp.eq.s32.totalorder %s28, 0
      %p111 = por %p109, %p110
      %p112 = scmp.ne.s32.totalorder %s104, %s106
      %p113 = scmp.eq.s32.totalorder %s33, 1
      %p114 = por %p112, %p113
      %p115 = scmp.ne.s32.totalorder %s106, %s107
      %p116 = scmp.eq.s32.totalorder %s33, 0
      %p117 = por %p115, %p116
      %p118 = scmp.ne.s32.totalorder %s106, %s107
      %p119 = scmp.eq.s32.totalorder %s34, 1
      %p120 = por %p118, %p119
      %p122 = scmp.ne.s32.totalorder %s107, %s121
      %p123 = scmp.eq.s32.totalorder %s34, 0
      %p124 = por %p122, %p123
      %s126 = sadd.s32 %s125, 1
      %p129 = scmp.eq.s32.totalorder %s28, 1
      %p130 = scmp.ne.s32.totalorder %s125, %s127
      %p131 = scmp.eq.s32.totalorder %s28, 0
      %p132 = por %p130, %p131
      %p133 = scmp.ne.s32.totalorder %s125, %s127
      %p134 = scmp.eq.s32.totalorder %s33, 1
      %p135 = por %p133, %p134
      %p136 = scmp.ne.s32.totalorder %s127, %s128
      %p137 = scmp.eq.s32.totalorder %s33, 0
      %p138 = por %p136, %p137
      %p139 = scmp.ne.s32.totalorder %s127, %s128
      %p140 = scmp.eq.s32.totalorder %s34, 1
      %p141 = por %p139, %p140
      %p143 = scmp.ne.s32.totalorder %s128, %s142
      %p144 = scmp.eq.s32.totalorder %s34, 0
      %p145 = por %p143, %p144
      %s147 = sadd.s32 %s146, 1
      %p150 = scmp.eq.s32.totalorder %s28, 1
      %p151 = scmp.ne.s32.totalorder %s146, %s148
      %p152 = scmp.eq.s32.totalorder %s28, 0
      %p153 = por %p151, %p152
      %p154 = scmp.ne.s32.totalorder %s146, %s148
      %p155 = scmp.eq.s32.totalorder %s33, 1
      %p156 = por %p154, %p155
      %p157 = scmp.ne.s32.totalorder %s148, %s149
      %p158 = scmp.eq.s32.totalorder %s33, 0
      %p159 = por %p157, %p158
      %p160 = scmp.ne.s32.totalorder %s148, %s149
      %p161 = scmp.eq.s32.totalorder %s34, 1
      %p162 = por %p160, %p161
      %p164 = scmp.ne.s32.totalorder %s149, %s163
      %p165 = scmp.eq.s32.totalorder %s34, 0
      %p166 = por %p164, %p165
      %s168 = sadd.s32 %s167, 1
      %p171 = scmp.eq.s32.totalorder %s28, 1
      %p172 = scmp.ne.s32.totalorder %s167, %s169
      %p173 = scmp.eq.s32.totalorder %s28, 0
      %p174 = por %p172, %p173
      %p175 = scmp.ne.s32.totalorder %s167, %s169
      %p176 = scmp.eq.s32.totalorder %s33, 1
      %p177 = por %p175, %p176
      %p178 = scmp.ne.s32.totalorder %s169, %s170
      %p179 = scmp.eq.s32.totalorder %s33, 0
      %p180 = por %p178, %p179
      %p181 = scmp.ne.s32.totalorder %s169, %s170
      %p182 = scmp.eq.s32.totalorder %s34, 1
      %p183 = por %p181, %p182
      %p185 = scmp.ne.s32.totalorder %s170, %s184
      %p186 = scmp.eq.s32.totalorder %s34, 0
      %p187 = por %p185, %p186
      %s189 = sadd.s32 %s188, 1
      %p192 = scmp.eq.s32.totalorder %s28, 1
      %p193 = scmp.ne.s32.totalorder %s188, %s190
      %p194 = scmp.eq.s32.totalorder %s28, 0
      %p195 = por %p193, %p194
      %p196 = scmp.ne.s32.totalorder %s188, %s190
      %p197 = scmp.eq.s32.totalorder %s33, 1
      %p198 = por %p196, %p197
      %p199 = scmp.ne.s32.totalorder %s190, %s191
      %p200 = scmp.eq.s32.totalorder %s33, 0
      %p201 = por %p199, %p200
      %p202 = scmp.ne.s32.totalorder %s190, %s191
      %p203 = scmp.eq.s32.totalorder %s34, 1
      %p204 = por %p202, %p203
      %p206 = scmp.ne.s32.totalorder %s191, %s205
      %p207 = scmp.eq.s32.totalorder %s34, 0
      %p208 = por %p206, %p207
      %s210 = sadd.s32 %s209, 1
      %p213 = scmp.eq.s32.totalorder %s28, 1
      %p214 = scmp.ne.s32.totalorder %s209, %s211
      %p215 = scmp.eq.s32.totalorder %s28, 0
      %p216 = por %p214, %p215
      %p217 = scmp.ne.s32.totalorder %s209, %s211
      %p218 = scmp.eq.s32.totalorder %s33, 1
      %p219 = por %p217, %p218
      %p220 = scmp.ne.s32.totalorder %s211, %s212
      %p221 = scmp.eq.s32.totalorder %s33, 0
      %p222 = por %p220, %p221
      %p223 = scmp.ne.s32.totalorder %s211, %s212
      %p224 = scmp.eq.s32.totalorder %s34, 1
      %p225 = por %p223, %p224
      %p227 = scmp.ne.s32.totalorder %s212, %s226
      %p228 = scmp.eq.s32.totalorder %s34, 0
      %p229 = por %p227, %p228
      %s231 = sadd.s32 %s230, 1
      %p234 = scmp.eq.s32.totalorder %s28, 1
      %p235 = scmp.ne.s32.totalorder %s230, %s232
      %p236 = scmp.eq.s32.totalorder %s28, 0
      %p237 = por %p235, %p236
      %p238 = scmp.ne.s32.totalorder %s230, %s232
      %p239 = scmp.eq.s32.totalorder %s33, 1
      %p240 = por %p238, %p239
      %p241 = scmp.ne.s32.totalorder %s232, %s233
      %p242 = scmp.eq.s32.totalorder %s33, 0
      %p243 = por %p241, %p242
      %p244 = scmp.ne.s32.totalorder %s232, %s233
      %p245 = scmp.eq.s32.totalorder %s34, 1
      %p246 = por %p244, %p245
      %p248 = scmp.ne.s32.totalorder %s233, %s247
      %p249 = scmp.eq.s32.totalorder %s34, 0
      %p250 = por %p248, %p249
      %s252 = sadd.s32 %s251, 1
      %p255 = scmp.eq.s32.totalorder %s28, 1
      %p256 = scmp.ne.s32.totalorder %s251, %s253
      %p257 = scmp.eq.s32.totalorder %s28, 0
      %p258 = por %p256, %p257
      %p259 = scmp.ne.s32.totalorder %s251, %s253
      %p260 = scmp.eq.s32.totalorder %s33, 1
      %p261 = por %p259, %p260
      %p262 = scmp.ne.s32.totalorder %s253, %s254
      %p263 = scmp.eq.s32.totalorder %s33, 0
      %p264 = por %p262, %p263
      %p265 = scmp.ne.s32.totalorder %s253, %s254
      %p266 = scmp.eq.s32.totalorder %s34, 1
      %p267 = por %p265, %p266
      %p269 = scmp.ne.s32.totalorder %s254, %s268
      %p270 = scmp.eq.s32.totalorder %s34, 0
      %p271 = por %p269, %p270
      %s273 = sadd.s32 %s272, 1
      %p276 = scmp.eq.s32.totalorder %s28, 1
      %p277 = scmp.ne.s32.totalorder %s272, %s274
      %p278 = scmp.eq.s32.totalorder %s28, 0
      %p279 = por %p277, %p278
      %p280 = scmp.ne.s32.totalorder %s272, %s274
      %p281 = scmp.eq.s32.totalorder %s33, 1
      %p282 = por %p280, %p281
      %p283 = scmp.ne.s32.totalorder %s274, %s275
      %p284 = scmp.eq.s32.totalorder %s33, 0
      %p285 = por %p283, %p284
      %p286 = scmp.ne.s32.totalorder %s274, %s275
      %p287 = scmp.eq.s32.totalorder %s34, 1
      %p288 = por %p286, %p287
      %p290 = scmp.ne.s32.totalorder %s275, %s289
      %p291 = scmp.eq.s32.totalorder %s34, 0
      %p292 = por %p290, %p291
      %s294 = sadd.s32 %s293, 1
      %p297 = scmp.eq.s32.totalorder %s28, 1
      %p298 = scmp.ne.s32.totalorder %s293, %s295
      %p299 = scmp.eq.s32.totalorder %s28, 0
      %p300 = por %p298, %p299
      %p301 = scmp.ne.s32.totalorder %s293, %s295
      %p302 = scmp.eq.s32.totalorder %s33, 1
      %p303 = por %p301, %p302
      %p304 = scmp.ne.s32.totalorder %s295, %s296
      %p305 = scmp.eq.s32.totalorder %s33, 0
      %p306 = por %p304, %p305
      %p307 = scmp.ne.s32.totalorder %s295, %s296
      %p308 = scmp.eq.s32.totalorder %s34, 1
      %p309 = por %p307, %p308
      %p311 = scmp.ne.s32.totalorder %s296, %s310
      %p312 = scmp.eq.s32.totalorder %s34, 0
      %p313 = por %p311, %p312
      %s315 = sadd.s32 %s314, 1
      %p318 = scmp.eq.s32.totalorder %s28, 1
      %p319 = scmp.ne.s32.totalorder %s314, %s316
      %p320 = scmp.eq.s32.totalorder %s28, 0
      %p321 = por %p319, %p320
      %p322 = scmp.ne.s32.totalorder %s314, %s316
      %p323 = scmp.eq.s32.totalorder %s33, 1
      %p324 = por %p322, %p323
      %p325 = scmp.ne.s32.totalorder %s316, %s317
      %p326 = scmp.eq.s32.totalorder %s33, 0
      %p327 = por %p325, %p326
      %p328 = scmp.ne.s32.totalorder %s316, %s317
      %p329 = scmp.eq.s32.totalorder %s34, 1
      %p330 = por %p328, %p329
      %p332 = scmp.ne.s32.totalorder %s317, %s331
      %p333 = scmp.eq.s32.totalorder %s34, 0
      %p334 = por %p332, %p333
      %s336 = sadd.s32 %s335, 1
      %p339 = scmp.eq.s32.totalorder %s28, 1
      %p340 = scmp.ne.s32.totalorder %s335, %s337
      %p341 = scmp.eq.s32.totalorder %s28, 0
      %p342 = por %p340, %p341
      %p343 = scmp.ne.s32.totalorder %s335, %s337
      %p344 = scmp.eq.s32.totalorder %s33, 1
      %p345 = por %p343, %p344
      %p346 = scmp.ne.s32.totalorder %s337, %s338
      %p347 = scmp.eq.s32.totalorder %s33, 0
      %p348 = por %p346, %p347
      %p349 = scmp.ne.s32.totalorder %s337, %s338
      %p350 = scmp.eq.s32.totalorder %s34, 1
      %p351 = por %p349, %p350
      %p353 = scmp.ne.s32.totalorder %s338, %s352
      %p354 = scmp.eq.s32.totalorder %s34, 0
      %p355 = por %p353, %p354
      %s357 = sadd.s32 %s356, 1
      %p360 = scmp.eq.s32.totalorder %s28, 1
      %p361 = scmp.ne.s32.totalorder %s356, %s358
      %p362 = scmp.eq.s32.totalorder %s28, 0
      %p363 = por %p361, %p362
      %p364 = scmp.ne.s32.totalorder %s356, %s358
      %p365 = scmp.eq.s32.totalorder %s33, 1
      %p366 = por %p364, %p365
      %p367 = scmp.ne.s32.totalorder %s358, %s359
      %p368 = scmp.eq.s32.totalorder %s33, 0
      %p369 = por %p367, %p368
      %p370 = scmp.ne.s32.totalorder %s358, %s359
      %p371 = scmp.eq.s32.totalorder %s34, 1
      %p372 = por %p370, %p371
      %p374 = scmp.ne.s32.totalorder %s359, %s373
      %p375 = scmp.eq.s32.totalorder %s34, 0
      %p376 = por %p374, %p375
      %s377 = ssub.s32 %s28, %s35
      %p378 = scmp.eq.s32.totalorder %s377, 0
      %s380 = sadd.s32 %s379, 1
      %s381 = scalar_select %p378, %s379, %s380
      %p384 = pneg %p378
      %p385 = scmp.eq.s32.totalorder %s28, 1
      %p386 = por %p384, %p385
      %p387 = scmp.ne.s32.totalorder %s379, %s382
      %p388 = scmp.eq.s32.totalorder %s28, 0
      %p389 = por %p387, %p388
      %p390 = scmp.ne.s32.totalorder %s379, %s382
      %p391 = scmp.eq.s32.totalorder %s33, 1
      %p392 = por %p390, %p391
      %p393 = scmp.ne.s32.totalorder %s382, %s383
      %p394 = scmp.eq.s32.totalorder %s33, 0
      %p395 = por %p393, %p394
      %p396 = scmp.ne.s32.totalorder %s382, %s383
      %p397 = scmp.eq.s32.totalorder %s34, 1
      %p398 = por %p396, %p397
      %p400 = scmp.ne.s32.totalorder %s383, %s399
      %p401 = scmp.eq.s32.totalorder %s34, 0
      %p402 = por %p400, %p401
      %p403 = scmp.le.s32.totalorder 1, %s28
      %p404 = scmp.lt.s32.totalorder %s28, 3
      %p405 = pnand %p403, %p404
      %p406 = pneg %p405
      // Predicated region
      $region9: #{trans_layermul.1} parent=5 // pred_check
        _
      $region10: #{trans_layermul.1} parent=5 // pred_check_branch
        %408 = sbr.rel (%p405) target = $region12
      $region11: #{trans_layermul.1} parent=5 // pred_region
        %s409 = ssub.s32 %s28, 1
        // Predicated region
        $region13: #{trans_layermul.1} parent=11 // pred_check
          %p410 = pneg %p75
        $region14: #{trans_layermul.1} parent=11 // pred_check_branch
          %412 = sbr.rel (%p410) target = $region16
        $region15: #{trans_layermul.1} parent=11 // pred_region
          _
        $region16: #{trans_layermul.1} parent=11 // pred_fallthru
          _
        // Predicated region
        $region17: #{trans_layermul.1} parent=11 // pred_check
          %p413 = pneg %p96
        $region18: #{trans_layermul.1} parent=11 // pred_check_branch
          %415 = sbr.rel (%p413) target = $region20
        $region19: #{trans_layermul.1} parent=11 // pred_region
          _
        $region20: #{trans_layermul.1} parent=11 // pred_fallthru
          _
        // Predicated region
        $region21: #{trans_layermul.1} parent=11 // pred_check
          %p416 = pneg %p117
        $region22: #{trans_layermul.1} parent=11 // pred_check_branch
          %418 = sbr.rel (%p416) target = $region24
        $region23: #{trans_layermul.1} parent=11 // pred_region
          _
        $region24: #{trans_layermul.1} parent=11 // pred_fallthru
          _
        // Predicated region
        $region25: #{trans_layermul.1} parent=11 // pred_check
          %p419 = pneg %p138
        $region26: #{trans_layermul.1} parent=11 // pred_check_branch
          %421 = sbr.rel (%p419) target = $region28
        $region27: #{trans_layermul.1} parent=11 // pred_region
          _
        $region28: #{trans_layermul.1} parent=11 // pred_fallthru
          _
        // Predicated region
        $region29: #{trans_layermul.1} parent=11 // pred_check
          %p422 = pneg %p159
        $region30: #{trans_layermul.1} parent=11 // pred_check_branch
          %424 = sbr.rel (%p422) target = $region32
        $region31: #{trans_layermul.1} parent=11 // pred_region
          _
        $region32: #{trans_layermul.1} parent=11 // pred_fallthru
          _
        // Predicated region
        $region33: #{trans_layermul.1} parent=11 // pred_check
          %p425 = pneg %p180
        $region34: #{trans_layermul.1} parent=11 // pred_check_branch
          %427 = sbr.rel (%p425) target = $region36
        $region35: #{trans_layermul.1} parent=11 // pred_region
          _
        $region36: #{trans_layermul.1} parent=11 // pred_fallthru
          _
        // Predicated region
        $region37: #{trans_layermul.1} parent=11 // pred_check
          %p428 = pneg %p201
        $region38: #{trans_layermul.1} parent=11 // pred_check_branch
          %430 = sbr.rel (%p428) target = $region40
        $region39: #{trans_layermul.1} parent=11 // pred_region
          _
        $region40: #{trans_layermul.1} parent=11 // pred_fallthru
          _
        // Predicated region
        $region41: #{trans_layermul.1} parent=11 // pred_check
          %p431 = pneg %p222
        $region42: #{trans_layermul.1} parent=11 // pred_check_branch
          %433 = sbr.rel (%p431) target = $region44
        $region43: #{trans_layermul.1} parent=11 // pred_region
          _
        $region44: #{trans_layermul.1} parent=11 // pred_fallthru
          _
        // Predicated region
        $region45: #{trans_layermul.1} parent=11 // pred_check
          %p434 = pneg %p243
        $region46: #{trans_layermul.1} parent=11 // pred_check_branch
          %436 = sbr.rel (%p434) target = $region48
        $region47: #{trans_layermul.1} parent=11 // pred_region
          _
        $region48: #{trans_layermul.1} parent=11 // pred_fallthru
          _
        // Predicated region
        $region49: #{trans_layermul.1} parent=11 // pred_check
          %p437 = pneg %p264
        $region50: #{trans_layermul.1} parent=11 // pred_check_branch
          %439 = sbr.rel (%p437) target = $region52
        $region51: #{trans_layermul.1} parent=11 // pred_region
          _
        $region52: #{trans_layermul.1} parent=11 // pred_fallthru
          _
        // Predicated region
        $region53: #{trans_layermul.1} parent=11 // pred_check
          %p440 = pneg %p285
        $region54: #{trans_layermul.1} parent=11 // pred_check_branch
          %442 = sbr.rel (%p440) target = $region56
        $region55: #{trans_layermul.1} parent=11 // pred_region
          _
        $region56: #{trans_layermul.1} parent=11 // pred_fallthru
          _
        // Predicated region
        $region57: #{trans_layermul.1} parent=11 // pred_check
          %p443 = pneg %p306
        $region58: #{trans_layermul.1} parent=11 // pred_check_branch
          %445 = sbr.rel (%p443) target = $region60
        $region59: #{trans_layermul.1} parent=11 // pred_region
          _
        $region60: #{trans_layermul.1} parent=11 // pred_fallthru
          _
        // Predicated region
        $region61: #{trans_layermul.1} parent=11 // pred_check
          %p446 = pneg %p327
        $region62: #{trans_layermul.1} parent=11 // pred_check_branch
          %448 = sbr.rel (%p446) target = $region64
        $region63: #{trans_layermul.1} parent=11 // pred_region
          _
        $region64: #{trans_layermul.1} parent=11 // pred_fallthru
          _
        // Predicated region
        $region65: #{trans_layermul.1} parent=11 // pred_check
          %p449 = pneg %p348
        $region66: #{trans_layermul.1} parent=11 // pred_check_branch
          %451 = sbr.rel (%p449) target = $region68
        $region67: #{trans_layermul.1} parent=11 // pred_region
          _
        $region68: #{trans_layermul.1} parent=11 // pred_fallthru
          _
        // Predicated region
        $region69: #{trans_layermul.1} parent=11 // pred_check
          %p452 = pneg %p369
        $region70: #{trans_layermul.1} parent=11 // pred_check_branch
          %454 = sbr.rel (%p452) target = $region72
        $region71: #{trans_layermul.1} parent=11 // pred_region
          _
        $region72: #{trans_layermul.1} parent=11 // pred_fallthru
          _
      $region12: #{trans_layermul.1} parent=5 // pred_fallthru
        _
      %p455 = scmp.lt.s32.totalorder %s28, 2
      // Predicated region
      $region73: #{trans_layermul.1} parent=5 // pred_check
        %p456 = pneg %p455
      $region74: #{trans_layermul.1} parent=5 // pred_check_branch
        %458 = sbr.rel (%p456) target = $region76
      $region75: #{trans_layermul.1} parent=5 // pred_region
        // Predicated region
        $region77: #{trans_layermul.1} parent=75 // pred_check
          %p459 = pneg %p48
        $region78: #{trans_layermul.1} parent=75 // pred_check_branch
          %461 = sbr.rel (%p459) target = $region80
        $region79: #{trans_layermul.1} parent=75 // pred_region
          %s462 = sand.u32 %s38, 1
          %s463 = scalar_lea.sflag [#allocation6], %s462
          %s464 = sand.u32 %s38, 1
          %s465 = smul.addr %s464, 256
          %s466 = scalar_lea.vmem [#allocation5], %s465
          %468 = vsyncadd %s463, 0
          %s469 = smul.addr %s28, 32
          %s470 = smul.addr %s469, 8
          %s471 = scalar_lea.hbm %s0, %s470
          %s472 = sshll.u32 %s471, 4
          %s473 = int_to_ptr.hbm [resolvable:$true] %s472
          %s474 = sshll.u32 %s466, 4
          %s475 = int_to_ptr.vmem [resolvable:$true] %s474
          %480 = dma.hbm_to_vmem [thread:$0]  %s473, 4096, %s475, %s463, 128, 128, 8
        $region80: #{trans_layermul.1} parent=75 // pred_fallthru
          _
      $region76: #{trans_layermul.1} parent=5 // pred_fallthru
        _
      %p481 = scmp.le.s32.totalorder 1, %s28
      %p482 = scmp.lt.s32.totalorder %s28, 3
      %p483 = pnand %p481, %p482
      %p484 = pneg %p483
      // Predicated region
      $region81: #{trans_layermul.1} parent=5 // pred_check
        _
      $region82: #{trans_layermul.1} parent=5 // pred_check_branch
        %486 = sbr.rel (%p483) target = $region84
      $region83: #{trans_layermul.1} parent=5 // pred_region
        %s487 = ssub.s32 %s28, 1
        %s488 = sand.u32 %s41, 1
        %s489 = scalar_lea.sflag [#allocation6], %s488
        %s490 = sand.u32 %s41, 1
        %s491 = smul.addr %s490, 256
        %s492 = scalar_lea.vmem [#allocation5], %s491
        // Predicated region
        $region85: #{trans_layermul.1} parent=83 // pred_check
          %p493 = pneg %p54
        $region86: #{trans_layermul.1} parent=83 // pred_check_branch
          %495 = sbr.rel (%p493) target = $region88
        $region87: #{trans_layermul.1} parent=83 // pred_region
          %497 = dma.done %s489, 4096
        $region88: #{trans_layermul.1} parent=83 // pred_fallthru
          _
        %s498 = sand.u32 %s41, 1
        %s499 = scalar_lea.sflag [#allocation6], %s498
        %s500 = sand.u32 %s41, 1
        %s501 = smul.addr %s500, 256
        %s502 = scalar_lea.vmem [#allocation5], %s501
        %p503 = pneg %p54
        %p504 = pneg %p51
        %p505 = pneg %p75
        %p506 = pneg %p72
        %p507 = pneg %p96
        %p508 = pneg %p93
        %p509 = pneg %p117
        %p510 = pneg %p114
        %p511 = pneg %p138
        %p512 = pneg %p135
        %p513 = pneg %p159
        %p514 = pneg %p156
        %p515 = pneg %p180
        %p516 = pneg %p177
        %p517 = pneg %p201
        %p518 = pneg %p198
        %p519 = pneg %p222
        %p520 = pneg %p219
        %p521 = pneg %p243
        %p522 = pneg %p240
        %p523 = pneg %p264
        %p524 = pneg %p261
        %p525 = pneg %p285
        %p526 = pneg %p282
        %p527 = pneg %p306
        %p528 = pneg %p303
        %p529 = pneg %p327
        %p530 = pneg %p324
        %p531 = pneg %p348
        %p532 = pneg %p345
        %p533 = pneg %p369
        %p534 = pneg %p366
        %p535 = pneg %p395
        %p536 = pneg %p392
        %s537 = sand.u32 %s382, 1
        %s538 = scalar_lea.sflag [#allocation7], %s537
        %s539 = sand.u32 %s382, 1
        %s540 = smul.addr %s539, 256
        %s541 = scalar_lea.vmem [#allocation8], %s540
        %vm542 = vcmask 261120
        %543 = vst.msk [vmem:[#allocation2] sm:$0xff] %vm542, 0.0
        %544 = vst.msk [vmem:[#allocation2 + $0x8] sm:$0xff] %vm542, 0.0
        %545 = vst.msk [vmem:[#allocation2 + $0x10] sm:$0xff] %vm542, 0.0
        %546 = vst.msk [vmem:[#allocation2 + $0x18] sm:$0xff] %vm542, 0.0
        %547 = vst.msk [vmem:[#allocation2 + $0x20] sm:$0xff] %vm542, 0.0
        %548 = vst.msk [vmem:[#allocation2 + $0x28] sm:$0xff] %vm542, 0.0
        %549 = vst.msk [vmem:[#allocation2 + $0x30] sm:$0xff] %vm542, 0.0
        %550 = vst.msk [vmem:[#allocation2 + $0x38] sm:$0xff] %vm542, 0.0
        %551 = vst.msk [vmem:[#allocation2 + $0x40] sm:$0xff] %vm542, 0.0
        %552 = vst.msk [vmem:[#allocation2 + $0x48] sm:$0xff] %vm542, 0.0
        %553 = vst.msk [vmem:[#allocation2 + $0x50] sm:$0xff] %vm542, 0.0
        %554 = vst.msk [vmem:[#allocation2 + $0x58] sm:$0xff] %vm542, 0.0
        %555 = vst.msk [vmem:[#allocation2 + $0x60] sm:$0xff] %vm542, 0.0
        %556 = vst.msk [vmem:[#allocation2 + $0x68] sm:$0xff] %vm542, 0.0
        %557 = vst.msk [vmem:[#allocation2 + $0x70] sm:$0xff] %vm542, 0.0
        %558 = vst.msk [vmem:[#allocation2 + $0x78] sm:$0xff] %vm542, 0.0
        %559 = vst.msk [vmem:[#allocation2 + $0x80] sm:$0xff] %vm542, 0.0
        %560 = vst.msk [vmem:[#allocation2 + $0x88] sm:$0xff] %vm542, 0.0
        %561 = vst.msk [vmem:[#allocation2 + $0x90] sm:$0xff] %vm542, 0.0
        %562 = vst.msk [vmem:[#allocation2 + $0x98] sm:$0xff] %vm542, 0.0
        %563 = vst.msk [vmem:[#allocation2 + $0xa0] sm:$0xff] %vm542, 0.0
        %564 = vst.msk [vmem:[#allocation2 + $0xa8] sm:$0xff] %vm542, 0.0
        %565 = vst.msk [vmem:[#allocation2 + $0xb0] sm:$0xff] %vm542, 0.0
        %566 = vst.msk [vmem:[#allocation2 + $0xb8] sm:$0xff] %vm542, 0.0
        %567 = vst.msk [vmem:[#allocation2 + $0xc0] sm:$0xff] %vm542, 0.0
        %568 = vst.msk [vmem:[#allocation2 + $0xc8] sm:$0xff] %vm542, 0.0
        %569 = vst.msk [vmem:[#allocation2 + $0xd0] sm:$0xff] %vm542, 0.0
        %570 = vst.msk [vmem:[#allocation2 + $0xd8] sm:$0xff] %vm542, 0.0
        %571 = vst.msk [vmem:[#allocation2 + $0xe0] sm:$0xff] %vm542, 0.0
        %572 = vst.msk [vmem:[#allocation2 + $0xe8] sm:$0xff] %vm542, 0.0
        %573 = vst.msk [vmem:[#allocation2 + $0xf0] sm:$0xff] %vm542, 0.0
        %574 = vst.msk [vmem:[#allocation2 + $0xf8] sm:$0xff] %vm542, 0.0
        %575 = vst.msk [vmem:[#allocation2 + $0x100] sm:$0xff] %vm542, 0.0
        %576 = vst.msk [vmem:[#allocation2 + $0x108] sm:$0xff] %vm542, 0.0
        %577 = vst.msk [vmem:[#allocation2 + $0x110] sm:$0xff] %vm542, 0.0
        %578 = vst.msk [vmem:[#allocation2 + $0x118] sm:$0xff] %vm542, 0.0
        %579 = vst.msk [vmem:[#allocation2 + $0x120] sm:$0xff] %vm542, 0.0
        %580 = vst.msk [vmem:[#allocation2 + $0x128] sm:$0xff] %vm542, 0.0
        %581 = vst.msk [vmem:[#allocation2 + $0x130] sm:$0xff] %vm542, 0.0
        %582 = vst.msk [vmem:[#allocation2 + $0x138] sm:$0xff] %vm542, 0.0
        %583 = vst.msk [vmem:[#allocation2 + $0x140] sm:$0xff] %vm542, 0.0
        %584 = vst.msk [vmem:[#allocation2 + $0x148] sm:$0xff] %vm542, 0.0
        %585 = vst.msk [vmem:[#allocation2 + $0x150] sm:$0xff] %vm542, 0.0
        %586 = vst.msk [vmem:[#allocation2 + $0x158] sm:$0xff] %vm542, 0.0
        %587 = vst.msk [vmem:[#allocation2 + $0x160] sm:$0xff] %vm542, 0.0
        %588 = vst.msk [vmem:[#allocation2 + $0x168] sm:$0xff] %vm542, 0.0
        %589 = vst.msk [vmem:[#allocation2 + $0x170] sm:$0xff] %vm542, 0.0
        %590 = vst.msk [vmem:[#allocation2 + $0x178] sm:$0xff] %vm542, 0.0
        %591 = vst.msk [vmem:[#allocation2 + $0x180] sm:$0xff] %vm542, 0.0
        %592 = vst.msk [vmem:[#allocation2 + $0x188] sm:$0xff] %vm542, 0.0
        %593 = vst.msk [vmem:[#allocation2 + $0x190] sm:$0xff] %vm542, 0.0
        %594 = vst.msk [vmem:[#allocation2 + $0x198] sm:$0xff] %vm542, 0.0
        %595 = vst.msk [vmem:[#allocation2 + $0x1a0] sm:$0xff] %vm542, 0.0
        %596 = vst.msk [vmem:[#allocation2 + $0x1a8] sm:$0xff] %vm542, 0.0
        %597 = vst.msk [vmem:[#allocation2 + $0x1b0] sm:$0xff] %vm542, 0.0
        %598 = vst.msk [vmem:[#allocation2 + $0x1b8] sm:$0xff] %vm542, 0.0
        %599 = vst.msk [vmem:[#allocation2 + $0x1c0] sm:$0xff] %vm542, 0.0
        %600 = vst.msk [vmem:[#allocation2 + $0x1c8] sm:$0xff] %vm542, 0.0
        %601 = vst.msk [vmem:[#allocation2 + $0x1d0] sm:$0xff] %vm542, 0.0
        %602 = vst.msk [vmem:[#allocation2 + $0x1d8] sm:$0xff] %vm542, 0.0
        %603 = vst.msk [vmem:[#allocation2 + $0x1e0] sm:$0xff] %vm542, 0.0
        %604 = vst.msk [vmem:[#allocation2 + $0x1e8] sm:$0xff] %vm542, 0.0
        %605 = vst.msk [vmem:[#allocation2 + $0x1f0] sm:$0xff] %vm542, 0.0
        %606 = vst.msk [vmem:[#allocation2 + $0x1f8] sm:$0xff] %vm542, 0.0
        %607 = vst.msk [vmem:[#allocation2 + $0x200] sm:$0xff] %vm542, 0.0
        %608 = vst.msk [vmem:[#allocation2 + $0x208] sm:$0xff] %vm542, 0.0
        %609 = vst.msk [vmem:[#allocation2 + $0x210] sm:$0xff] %vm542, 0.0
        %610 = vst.msk [vmem:[#allocation2 + $0x218] sm:$0xff] %vm542, 0.0
        %611 = vst.msk [vmem:[#allocation2 + $0x220] sm:$0xff] %vm542, 0.0
        %612 = vst.msk [vmem:[#allocation2 + $0x228] sm:$0xff] %vm542, 0.0
        %613 = vst.msk [vmem:[#allocation2 + $0x230] sm:$0xff] %vm542, 0.0
        %614 = vst.msk [vmem:[#allocation2 + $0x238] sm:$0xff] %vm542, 0.0
        %vm615 = vcmask 64512
        %616 = vst.msk [vmem:[#allocation3] sm:$0xff] %vm615, 0.0
        %617 = vst.msk [vmem:[#allocation3 + $0x8] sm:$0xff] %vm615, 0.0
        %618 = vst.msk [vmem:[#allocation3 + $0x10] sm:$0xff] %vm615, 0.0
        %619 = vst.msk [vmem:[#allocation3 + $0x18] sm:$0xff] %vm615, 0.0
        %620 = vst.msk [vmem:[#allocation3 + $0x20] sm:$0xff] %vm615, 0.0
        %621 = vst.msk [vmem:[#allocation3 + $0x28] sm:$0xff] %vm615, 0.0
        %622 = vst.msk [vmem:[#allocation3 + $0x30] sm:$0xff] %vm615, 0.0
        %623 = vst.msk [vmem:[#allocation3 + $0x38] sm:$0xff] %vm615, 0.0
        %624 = vst.msk [vmem:[#allocation3 + $0x40] sm:$0xff] %vm615, 0.0
        %625 = vst.msk [vmem:[#allocation3 + $0x48] sm:$0xff] %vm615, 0.0
        %626 = vst.msk [vmem:[#allocation3 + $0x50] sm:$0xff] %vm615, 0.0
        %627 = vst.msk [vmem:[#allocation3 + $0x58] sm:$0xff] %vm615, 0.0
        %628 = vst.msk [vmem:[#allocation3 + $0x60] sm:$0xff] %vm615, 0.0
        %629 = vst.msk [vmem:[#allocation3 + $0x68] sm:$0xff] %vm615, 0.0
        %630 = vst.msk [vmem:[#allocation3 + $0x70] sm:$0xff] %vm615, 0.0
        %631 = vst.msk [vmem:[#allocation3 + $0x78] sm:$0xff] %vm615, 0.0
        %632 = vst.msk [vmem:[#allocation3 + $0x80] sm:$0xff] %vm615, 0.0
        %633 = vst.msk [vmem:[#allocation3 + $0x88] sm:$0xff] %vm615, 0.0
        %634 = vst.msk [vmem:[#allocation3 + $0x90] sm:$0xff] %vm615, 0.0
        %635 = vst.msk [vmem:[#allocation3 + $0x98] sm:$0xff] %vm615, 0.0
        %636 = vst.msk [vmem:[#allocation3 + $0xa0] sm:$0xff] %vm615, 0.0
        %637 = vst.msk [vmem:[#allocation3 + $0xa8] sm:$0xff] %vm615, 0.0
        %638 = vst.msk [vmem:[#allocation3 + $0xb0] sm:$0xff] %vm615, 0.0
        %639 = vst.msk [vmem:[#allocation3 + $0xb8] sm:$0xff] %vm615, 0.0
        %640 = vst.msk [vmem:[#allocation3 + $0xc0] sm:$0xff] %vm615, 0.0
        %641 = vst.msk [vmem:[#allocation3 + $0xc8] sm:$0xff] %vm615, 0.0
        %642 = vst.msk [vmem:[#allocation3 + $0xd0] sm:$0xff] %vm615, 0.0
        %643 = vst.msk [vmem:[#allocation3 + $0xd8] sm:$0xff] %vm615, 0.0
        %644 = vst.msk [vmem:[#allocation3 + $0xe0] sm:$0xff] %vm615, 0.0
        %645 = vst.msk [vmem:[#allocation3 + $0xe8] sm:$0xff] %vm615, 0.0
        %646 = vst.msk [vmem:[#allocation3 + $0xf0] sm:$0xff] %vm615, 0.0
        %647 = vst.msk [vmem:[#allocation3 + $0xf8] sm:$0xff] %vm615, 0.0
        %648 = vst.msk [vmem:[#allocation3 + $0x100] sm:$0xff] %vm615, 0.0
        %649 = vst.msk [vmem:[#allocation3 + $0x108] sm:$0xff] %vm615, 0.0
        %650 = vst.msk [vmem:[#allocation3 + $0x110] sm:$0xff] %vm615, 0.0
        %651 = vst.msk [vmem:[#allocation3 + $0x118] sm:$0xff] %vm615, 0.0
        %652 = vst.msk [vmem:[#allocation3 + $0x120] sm:$0xff] %vm615, 0.0
        %653 = vst.msk [vmem:[#allocation3 + $0x128] sm:$0xff] %vm615, 0.0
        %654 = vst.msk [vmem:[#allocation3 + $0x130] sm:$0xff] %vm615, 0.0
        %655 = vst.msk [vmem:[#allocation3 + $0x138] sm:$0xff] %vm615, 0.0
        %656 = vst.msk [vmem:[#allocation3 + $0x140] sm:$0xff] %vm615, 0.0
        %657 = vst.msk [vmem:[#allocation3 + $0x148] sm:$0xff] %vm615, 0.0
        %658 = vst.msk [vmem:[#allocation3 + $0x150] sm:$0xff] %vm615, 0.0
        %659 = vst.msk [vmem:[#allocation3 + $0x158] sm:$0xff] %vm615, 0.0
        %660 = vst.msk [vmem:[#allocation3 + $0x160] sm:$0xff] %vm615, 0.0
        %661 = vst.msk [vmem:[#allocation3 + $0x168] sm:$0xff] %vm615, 0.0
        %662 = vst.msk [vmem:[#allocation3 + $0x170] sm:$0xff] %vm615, 0.0
        %663 = vst.msk [vmem:[#allocation3 + $0x178] sm:$0xff] %vm615, 0.0
        %664 = vst.msk [vmem:[#allocation3 + $0x180] sm:$0xff] %vm615, 0.0
        %665 = vst.msk [vmem:[#allocation3 + $0x188] sm:$0xff] %vm615, 0.0
        %666 = vst.msk [vmem:[#allocation3 + $0x190] sm:$0xff] %vm615, 0.0
        %667 = vst.msk [vmem:[#allocation3 + $0x198] sm:$0xff] %vm615, 0.0
        %668 = vst.msk [vmem:[#allocation3 + $0x1a0] sm:$0xff] %vm615, 0.0
        %669 = vst.msk [vmem:[#allocation3 + $0x1a8] sm:$0xff] %vm615, 0.0
        %670 = vst.msk [vmem:[#allocation3 + $0x1b0] sm:$0xff] %vm615, 0.0
        %671 = vst.msk [vmem:[#allocation3 + $0x1b8] sm:$0xff] %vm615, 0.0
        %672 = vst.msk [vmem:[#allocation3 + $0x1c0] sm:$0xff] %vm615, 0.0
        %673 = vst.msk [vmem:[#allocation3 + $0x1c8] sm:$0xff] %vm615, 0.0
        %674 = vst.msk [vmem:[#allocation3 + $0x1d0] sm:$0xff] %vm615, 0.0
        %675 = vst.msk [vmem:[#allocation3 + $0x1d8] sm:$0xff] %vm615, 0.0
        %676 = vst.msk [vmem:[#allocation3 + $0x1e0] sm:$0xff] %vm615, 0.0
        %677 = vst.msk [vmem:[#allocation3 + $0x1e8] sm:$0xff] %vm615, 0.0
        %678 = vst.msk [vmem:[#allocation3 + $0x1f0] sm:$0xff] %vm615, 0.0
        %679 = vst.msk [vmem:[#allocation3 + $0x1f8] sm:$0xff] %vm615, 0.0
        %680 = vst.msk [vmem:[#allocation3 + $0x200] sm:$0xff] %vm615, 0.0
        %681 = vst.msk [vmem:[#allocation3 + $0x208] sm:$0xff] %vm615, 0.0
        %682 = vst.msk [vmem:[#allocation3 + $0x210] sm:$0xff] %vm615, 0.0
        %683 = vst.msk [vmem:[#allocation3 + $0x218] sm:$0xff] %vm615, 0.0
        %684 = vst.msk [vmem:[#allocation3 + $0x220] sm:$0xff] %vm615, 0.0
        %685 = vst.msk [vmem:[#allocation3 + $0x228] sm:$0xff] %vm615, 0.0
        %686 = vst.msk [vmem:[#allocation3 + $0x230] sm:$0xff] %vm615, 0.0
        %687 = vst.msk [vmem:[#allocation3 + $0x238] sm:$0xff] %vm615, 0.0
        %v688 = vld [vmem:[%s492] sm:$0xff]
        %v689 = vld [vmem:[%s492 + $0x8] sm:$0xff]
        %v690 = vld [vmem:[%s492 + $0x10] sm:$0xff]
        %v691 = vld [vmem:[%s492 + $0x18] sm:$0xff]
        %v692 = vld [vmem:[%s492 + $0x20] sm:$0xff]
        %v693 = vld [vmem:[%s492 + $0x28] sm:$0xff]
        %v694 = vld [vmem:[%s492 + $0x30] sm:$0xff]
        %v695 = vld [vmem:[%s492 + $0x38] sm:$0xff]
        %v696 = vld [vmem:[%s492 + $0x40] sm:$0xff]
        %v697 = vld [vmem:[%s492 + $0x48] sm:$0xff]
        %v698 = vld [vmem:[%s492 + $0x50] sm:$0xff]
        %v699 = vld [vmem:[%s492 + $0x58] sm:$0xff]
        %v700 = vld [vmem:[%s492 + $0x60] sm:$0xff]
        %v701 = vld [vmem:[%s492 + $0x68] sm:$0xff]
        %v702 = vld [vmem:[%s492 + $0x70] sm:$0xff]
        %v703 = vld [vmem:[%s492 + $0x78] sm:$0xff]
        %v704 = vld [vmem:[%s492 + $0x80] sm:$0xff]
        %v705 = vld [vmem:[%s492 + $0x88] sm:$0xff]
        %v706 = vld [vmem:[%s492 + $0x90] sm:$0xff]
        %v707 = vld [vmem:[%s492 + $0x98] sm:$0xff]
        %v708 = vld [vmem:[%s492 + $0xa0] sm:$0xff]
        %v709 = vld [vmem:[%s492 + $0xa8] sm:$0xff]
        %v710 = vld [vmem:[%s492 + $0xb0] sm:$0xff]
        %v711 = vld [vmem:[%s492 + $0xb8] sm:$0xff]
        %v712 = vld [vmem:[%s492 + $0xc0] sm:$0xff]
        %v713 = vld [vmem:[%s492 + $0xc8] sm:$0xff]
        %v714 = vld [vmem:[%s492 + $0xd0] sm:$0xff]
        %v715 = vld [vmem:[%s492 + $0xd8] sm:$0xff]
        %v716 = vld [vmem:[%s492 + $0xe0] sm:$0xff]
        %v717 = vld [vmem:[%s492 + $0xe8] sm:$0xff]
        %v718 = vld [vmem:[%s492 + $0xf0] sm:$0xff]
        %v719 = vld [vmem:[%s492 + $0xf8] sm:$0xff]
        %v720 = vlaneseq
        %v721 = vand.u32 %v720, 127
        %vm722 = vcmp.ge.s32.totalorder %v721, 8
        %v723 = vsel %vm542, %v688, 0.0
        %724 = vadd.xlane.f32.xlu0 %v723
        %v725 = vpop.xlane.xlu0 %724
        %v726 = vsel %vm542, %v689, 0.0
        %727 = vadd.xlane.f32.xlu0 %v726
        %v728 = vpop.xlane.xlu0 %727
        %v729 = vsel %vm542, %v690, 0.0
        %730 = vadd.xlane.f32.xlu0 %v729
        %v731 = vpop.xlane.xlu0 %730
        %v732 = vsel %vm542, %v691, 0.0
        %733 = vadd.xlane.f32.xlu0 %v732
        %v734 = vpop.xlane.xlu0 %733
        %v735 = vsel %vm542, %v692, 0.0
        %736 = vadd.xlane.f32.xlu0 %v735
        %v737 = vpop.xlane.xlu0 %736
        %v738 = vsel %vm542, %v693, 0.0
        %739 = vadd.xlane.f32.xlu0 %v738
        %v740 = vpop.xlane.xlu0 %739
        %v741 = vsel %vm542, %v694, 0.0
        %742 = vadd.xlane.f32.xlu0 %v741
        %v743 = vpop.xlane.xlu0 %742
        %v744 = vsel %vm542, %v695, 0.0
        %745 = vadd.xlane.f32.xlu0 %v744
        %v746 = vpop.xlane.xlu0 %745
        %v747 = vsel %vm542, %v696, 0.0
        %748 = vadd.xlane.f32.xlu0 %v747
        %v749 = vpop.xlane.xlu0 %748
        %v750 = vsel %vm542, %v697, 0.0
        %751 = vadd.xlane.f32.xlu0 %v750
        %v752 = vpop.xlane.xlu0 %751
        %v753 = vsel %vm542, %v698, 0.0
        %754 = vadd.xlane.f32.xlu0 %v753
        %v755 = vpop.xlane.xlu0 %754
        %v756 = vsel %vm542, %v699, 0.0
        %757 = vadd.xlane.f32.xlu0 %v756
        %v758 = vpop.xlane.xlu0 %757
        %v759 = vsel %vm542, %v700, 0.0
        %760 = vadd.xlane.f32.xlu0 %v759
        %v761 = vpop.xlane.xlu0 %760
        %v762 = vsel %vm542, %v701, 0.0
        %763 = vadd.xlane.f32.xlu0 %v762
        %v764 = vpop.xlane.xlu0 %763
        %v765 = vsel %vm542, %v702, 0.0
        %766 = vadd.xlane.f32.xlu0 %v765
        %v767 = vpop.xlane.xlu0 %766
        %v768 = vsel %vm542, %v703, 0.0
        %769 = vadd.xlane.f32.xlu0 %v768
        %v770 = vpop.xlane.xlu0 %769
        %v771 = vsel %vm542, %v704, 0.0
        %772 = vadd.xlane.f32.xlu0 %v771
        %v773 = vpop.xlane.xlu0 %772
        %v774 = vsel %vm542, %v705, 0.0
        %775 = vadd.xlane.f32.xlu0 %v774
        %v776 = vpop.xlane.xlu0 %775
        %v777 = vsel %vm542, %v706, 0.0
        %778 = vadd.xlane.f32.xlu0 %v777
        %v779 = vpop.xlane.xlu0 %778
        %v780 = vsel %vm542, %v707, 0.0
        %781 = vadd.xlane.f32.xlu0 %v780
        %v782 = vpop.xlane.xlu0 %781
        %v783 = vsel %vm542, %v708, 0.0
        %784 = vadd.xlane.f32.xlu0 %v783
        %v785 = vpop.xlane.xlu0 %784
        %v786 = vsel %vm542, %v709, 0.0
        %787 = vadd.xlane.f32.xlu0 %v786
        %v788 = vpop.xlane.xlu0 %787
        %v789 = vsel %vm542, %v710, 0.0
        %790 = vadd.xlane.f32.xlu0 %v789
        %v791 = vpop.xlane.xlu0 %790
        %v792 = vsel %vm542, %v711, 0.0
        %793 = vadd.xlane.f32.xlu0 %v792
        %v794 = vpop.xlane.xlu0 %793
        %v795 = vsel %vm542, %v712, 0.0
        %796 = vadd.xlane.f32.xlu0 %v795
        %v797 = vpop.xlane.xlu0 %796
        %v798 = vsel %vm542, %v713, 0.0
        %799 = vadd.xlane.f32.xlu0 %v798
        %v800 = vpop.xlane.xlu0 %799
        %v801 = vsel %vm542, %v714, 0.0
        %802 = vadd.xlane.f32.xlu0 %v801
        %v803 = vpop.xlane.xlu0 %802
        %v804 = vsel %vm542, %v715, 0.0
        %805 = vadd.xlane.f32.xlu0 %v804
        %v806 = vpop.xlane.xlu0 %805
        %v807 = vsel %vm542, %v716, 0.0
        %808 = vadd.xlane.f32.xlu0 %v807
        %v809 = vpop.xlane.xlu0 %808
        %v810 = vsel %vm542, %v717, 0.0
        %811 = vadd.xlane.f32.xlu0 %v810
        %v812 = vpop.xlane.xlu0 %811
        %v813 = vsel %vm542, %v718, 0.0
        %814 = vadd.xlane.f32.xlu0 %v813
        %v815 = vpop.xlane.xlu0 %814
        %v816 = vsel %vm542, %v719, 0.0
        %817 = vadd.xlane.f32.xlu0 %v816
        %v818 = vpop.xlane.xlu0 %817
        %v819 = vrcp.pop 32.0
        %v820 = vmul.f32 32.0, %v819
        %v821 = vsub.f32 1.0, %v820
        %v822 = vmul.f32 %v819, %v821
        %v823 = vadd.f32 %v819, %v822
        %vm824 = vweird.f32 %v819
        %v825 = vsel %vm824, %v819, %v823
        %v826 = vmul.f32 %v725, %v825
        %v827 = vmul.f32 %v728, %v825
        %v828 = vmul.f32 %v731, %v825
        %v829 = vmul.f32 %v734, %v825
        %v830 = vmul.f32 %v737, %v825
        %v831 = vmul.f32 %v740, %v825
        %v832 = vmul.f32 %v743, %v825
        %v833 = vmul.f32 %v746, %v825
        %v834 = vmul.f32 %v749, %v825
        %v835 = vmul.f32 %v752, %v825
        %v836 = vmul.f32 %v755, %v825
        %v837 = vmul.f32 %v758, %v825
        %v838 = vmul.f32 %v761, %v825
        %v839 = vmul.f32 %v764, %v825
        %v840 = vmul.f32 %v767, %v825
        %v841 = vmul.f32 %v770, %v825
        %v842 = vmul.f32 %v773, %v825
        %v843 = vmul.f32 %v776, %v825
        %v844 = vmul.f32 %v779, %v825
        %v845 = vmul.f32 %v782, %v825
        %v846 = vmul.f32 %v785, %v825
        %v847 = vmul.f32 %v788, %v825
        %v848 = vmul.f32 %v791, %v825
        %v849 = vmul.f32 %v794, %v825
        %v850 = vmul.f32 %v797, %v825
        %v851 = vmul.f32 %v800, %v825
        %v852 = vmul.f32 %v803, %v825
        %v853 = vmul.f32 %v806, %v825
        %v854 = vmul.f32 %v809, %v825
        %v855 = vmul.f32 %v812, %v825
        %v856 = vmul.f32 %v815, %v825
        %v857 = vmul.f32 %v818, %v825
        %v858 = vsub.f32 %v688, %v826
        %v859 = vsub.f32 %v689, %v827
        %v860 = vsub.f32 %v690, %v828
        %v861 = vsub.f32 %v691, %v829
        %v862 = vsub.f32 %v692, %v830
        %v863 = vsub.f32 %v693, %v831
        %v864 = vsub.f32 %v694, %v832
        %v865 = vsub.f32 %v695, %v833
        %v866 = vsub.f32 %v696, %v834
        %v867 = vsub.f32 %v697, %v835
        %v868 = vsub.f32 %v698, %v836
        %v869 = vsub.f32 %v699, %v837
        %v870 = vsub.f32 %v700, %v838
        %v871 = vsub.f32 %v701, %v839
        %v872 = vsub.f32 %v702, %v840
        %v873 = vsub.f32 %v703, %v841
        %v874 = vsub.f32 %v704, %v842
        %v875 = vsub.f32 %v705, %v843
        %v876 = vsub.f32 %v706, %v844
        %v877 = vsub.f32 %v707, %v845
        %v878 = vsub.f32 %v708, %v846
        %v879 = vsub.f32 %v709, %v847
        %v880 = vsub.f32 %v710, %v848
        %v881 = vsub.f32 %v711, %v849
        %v882 = vsub.f32 %v712, %v850
        %v883 = vsub.f32 %v713, %v851
        %v884 = vsub.f32 %v714, %v852
        %v885 = vsub.f32 %v715, %v853
        %v886 = vsub.f32 %v716, %v854
        %v887 = vsub.f32 %v717, %v855
        %v888 = vsub.f32 %v718, %v856
        %v889 = vsub.f32 %v719, %v857
        %v890 = vmul.f32 %v858, %v858
        %v891 = vmul.f32 %v859, %v859
        %v892 = vmul.f32 %v860, %v860
        %v893 = vmul.f32 %v861, %v861
        %v894 = vmul.f32 %v862, %v862
        %v895 = vmul.f32 %v863, %v863
        %v896 = vmul.f32 %v864, %v864
        %v897 = vmul.f32 %v865, %v865
        %v898 = vmul.f32 %v866, %v866
        %v899 = vmul.f32 %v867, %v867
        %v900 = vmul.f32 %v868, %v868
        %v901 = vmul.f32 %v869, %v869
        %v902 = vmul.f32 %v870, %v870
        %v903 = vmul.f32 %v871, %v871
        %v904 = vmul.f32 %v872, %v872
        %v905 = vmul.f32 %v873, %v873
        %v906 = vmul.f32 %v874, %v874
        %v907 = vmul.f32 %v875, %v875
        %v908 = vmul.f32 %v876, %v876
        %v909 = vmul.f32 %v877, %v877
        %v910 = vmul.f32 %v878, %v878
        %v911 = vmul.f32 %v879, %v879
        %v912 = vmul.f32 %v880, %v880
        %v913 = vmul.f32 %v881, %v881
        %v914 = vmul.f32 %v882, %v882
        %v915 = vmul.f32 %v883, %v883
        %v916 = vmul.f32 %v884, %v884
        %v917 = vmul.f32 %v885, %v885
        %v918 = vmul.f32 %v886, %v886
        %v919 = vmul.f32 %v887, %v887
        %v920 = vmul.f32 %v888, %v888
        %v921 = vmul.f32 %v889, %v889
        %v922 = vsel %vm542, %v890, 0.0
        %923 = vadd.xlane.f32.xlu0 %v922
        %v924 = vpop.xlane.xlu0 %923
        %v925 = vsel %vm542, %v891, 0.0
        %926 = vadd.xlane.f32.xlu0 %v925
        %v927 = vpop.xlane.xlu0 %926
        %v928 = vsel %vm542, %v892, 0.0
        %929 = vadd.xlane.f32.xlu0 %v928
        %v930 = vpop.xlane.xlu0 %929
        %v931 = vsel %vm542, %v893, 0.0
        %932 = vadd.xlane.f32.xlu0 %v931
        %v933 = vpop.xlane.xlu0 %932
        %v934 = vsel %vm542, %v894, 0.0
        %935 = vadd.xlane.f32.xlu0 %v934
        %v936 = vpop.xlane.xlu0 %935
        %v937 = vsel %vm542, %v895, 0.0
        %938 = vadd.xlane.f32.xlu0 %v937
        %v939 = vpop.xlane.xlu0 %938
        %v940 = vsel %vm542, %v896, 0.0
        %941 = vadd.xlane.f32.xlu0 %v940
        %v942 = vpop.xlane.xlu0 %941
        %v943 = vsel %vm542, %v897, 0.0
        %944 = vadd.xlane.f32.xlu0 %v943
        %v945 = vpop.xlane.xlu0 %944
        %v946 = vsel %vm542, %v898, 0.0
        %947 = vadd.xlane.f32.xlu0 %v946
        %v948 = vpop.xlane.xlu0 %947
        %v949 = vsel %vm542, %v899, 0.0
        %950 = vadd.xlane.f32.xlu0 %v949
        %v951 = vpop.xlane.xlu0 %950
        %v952 = vsel %vm542, %v900, 0.0
        %953 = vadd.xlane.f32.xlu0 %v952
        %v954 = vpop.xlane.xlu0 %953
        %v955 = vsel %vm542, %v901, 0.0
        %956 = vadd.xlane.f32.xlu0 %v955
        %v957 = vpop.xlane.xlu0 %956
        %v958 = vsel %vm542, %v902, 0.0
        %959 = vadd.xlane.f32.xlu0 %v958
        %v960 = vpop.xlane.xlu0 %959
        %v961 = vsel %vm542, %v903, 0.0
        %962 = vadd.xlane.f32.xlu0 %v961
        %v963 = vpop.xlane.xlu0 %962
        %v964 = vsel %vm542, %v904, 0.0
        %965 = vadd.xlane.f32.xlu0 %v964
        %v966 = vpop.xlane.xlu0 %965
        %v967 = vsel %vm542, %v905, 0.0
        %968 = vadd.xlane.f32.xlu0 %v967
        %v969 = vpop.xlane.xlu0 %968
        %v970 = vsel %vm542, %v906, 0.0
        %971 = vadd.xlane.f32.xlu0 %v970
        %v972 = vpop.xlane.xlu0 %971
        %v973 = vsel %vm542, %v907, 0.0
        %974 = vadd.xlane.f32.xlu0 %v973
        %v975 = vpop.xlane.xlu0 %974
        %v976 = vsel %vm542, %v908, 0.0
        %977 = vadd.xlane.f32.xlu0 %v976
        %v978 = vpop.xlane.xlu0 %977
        %v979 = vsel %vm542, %v909, 0.0
        %980 = vadd.xlane.f32.xlu0 %v979
        %v981 = vpop.xlane.xlu0 %980
        %v982 = vsel %vm542, %v910, 0.0
        %983 = vadd.xlane.f32.xlu0 %v982
        %v984 = vpop.xlane.xlu0 %983
        %v985 = vsel %vm542, %v911, 0.0
        %986 = vadd.xlane.f32.xlu0 %v985
        %v987 = vpop.xlane.xlu0 %986
        %v988 = vsel %vm542, %v912, 0.0
        %989 = vadd.xlane.f32.xlu0 %v988
        %v990 = vpop.xlane.xlu0 %989
        %v991 = vsel %vm542, %v913, 0.0
        %992 = vadd.xlane.f32.xlu0 %v991
        %v993 = vpop.xlane.xlu0 %992
        %v994 = vsel %vm542, %v914, 0.0
        %995 = vadd.xlane.f32.xlu0 %v994
        %v996 = vpop.xlane.xlu0 %995
        %v997 = vsel %vm542, %v915, 0.0
        %998 = vadd.xlane.f32.xlu0 %v997
        %v999 = vpop.xlane.xlu0 %998
        %v1000 = vsel %vm542, %v916, 0.0
        %1001 = vadd.xlane.f32.xlu0 %v1000
        %v1002 = vpop.xlane.xlu0 %1001
        %v1003 = vsel %vm542, %v917, 0.0
        %1004 = vadd.xlane.f32.xlu0 %v1003
        %v1005 = vpop.xlane.xlu0 %1004
        %v1006 = vsel %vm542, %v918, 0.0
        %1007 = vadd.xlane.f32.xlu0 %v1006
        %v1008 = vpop.xlane.xlu0 %1007
        %v1009 = vsel %vm542, %v919, 0.0
        %1010 = vadd.xlane.f32.xlu0 %v1009
        %v1011 = vpop.xlane.xlu0 %1010
        %v1012 = vsel %vm542, %v920, 0.0
        %1013 = vadd.xlane.f32.xlu0 %v1012
        %v1014 = vpop.xlane.xlu0 %1013
        %v1015 = vsel %vm542, %v921, 0.0
        %1016 = vadd.xlane.f32.xlu0 %v1015
        %v1017 = vpop.xlane.xlu0 %1016
        %v1018 = vmul.f32 %v924, %v825
        %v1019 = vmul.f32 %v927, %v825
        %v1020 = vmul.f32 %v930, %v825
        %v1021 = vmul.f32 %v933, %v825
        %v1022 = vmul.f32 %v936, %v825
        %v1023 = vmul.f32 %v939, %v825
        %v1024 = vmul.f32 %v942, %v825
        %v1025 = vmul.f32 %v945, %v825
        %v1026 = vmul.f32 %v948, %v825
        %v1027 = vmul.f32 %v951, %v825
        %v1028 = vmul.f32 %v954, %v825
        %v1029 = vmul.f32 %v957, %v825
        %v1030 = vmul.f32 %v960, %v825
        %v1031 = vmul.f32 %v963, %v825
        %v1032 = vmul.f32 %v966, %v825
        %v1033 = vmul.f32 %v969, %v825
        %v1034 = vmul.f32 %v972, %v825
        %v1035 = vmul.f32 %v975, %v825
        %v1036 = vmul.f32 %v978, %v825
        %v1037 = vmul.f32 %v981, %v825
        %v1038 = vmul.f32 %v984, %v825
        %v1039 = vmul.f32 %v987, %v825
        %v1040 = vmul.f32 %v990, %v825
        %v1041 = vmul.f32 %v993, %v825
        %v1042 = vmul.f32 %v996, %v825
        %v1043 = vmul.f32 %v999, %v825
        %v1044 = vmul.f32 %v1002, %v825
        %v1045 = vmul.f32 %v1005, %v825
        %v1046 = vmul.f32 %v1008, %v825
        %v1047 = vmul.f32 %v1011, %v825
        %v1048 = vmul.f32 %v1014, %v825
        %v1049 = vmul.f32 %v1017, %v825
        %v1050 = vadd.f32 %v1018, 1e-05
        %v1051 = vadd.f32 %v1019, 1e-05
        %v1052 = vadd.f32 %v1020, 1e-05
        %v1053 = vadd.f32 %v1021, 1e-05
        %v1054 = vadd.f32 %v1022, 1e-05
        %v1055 = vadd.f32 %v1023, 1e-05
        %v1056 = vadd.f32 %v1024, 1e-05
        %v1057 = vadd.f32 %v1025, 1e-05
        %v1058 = vadd.f32 %v1026, 1e-05
        %v1059 = vadd.f32 %v1027, 1e-05
        %v1060 = vadd.f32 %v1028, 1e-05
        %v1061 = vadd.f32 %v1029, 1e-05
        %v1062 = vadd.f32 %v1030, 1e-05
        %v1063 = vadd.f32 %v1031, 1e-05
        %v1064 = vadd.f32 %v1032, 1e-05
        %v1065 = vadd.f32 %v1033, 1e-05
        %v1066 = vadd.f32 %v1034, 1e-05
        %v1067 = vadd.f32 %v1035, 1e-05
        %v1068 = vadd.f32 %v1036, 1e-05
        %v1069 = vadd.f32 %v1037, 1e-05
        %v1070 = vadd.f32 %v1038, 1e-05
        %v1071 = vadd.f32 %v1039, 1e-05
        %v1072 = vadd.f32 %v1040, 1e-05
        %v1073 = vadd.f32 %v1041, 1e-05
        %v1074 = vadd.f32 %v1042, 1e-05
        %v1075 = vadd.f32 %v1043, 1e-05
        %v1076 = vadd.f32 %v1044, 1e-05
        %v1077 = vadd.f32 %v1045, 1e-05
        %v1078 = vadd.f32 %v1046, 1e-05
        %v1079 = vadd.f32 %v1047, 1e-05
        %v1080 = vadd.f32 %v1048, 1e-05
        %v1081 = vadd.f32 %v1049, 1e-05
        %v1082 = vrsqrt.pop %v1050
        %v1083 = vmul.f32 %v1082, %v1050
        %v1084 = vmul.f32 %v1083, %v1082
        %v1085 = vmul.f32 0.5, %v1084
        %v1086 = vsub.f32 1.5, %v1085
        %v1087 = vmul.f32 %v1082, %v1086
        %vm1088 = vweird.f32 %v1050
        %vm1089 = vweird.f32 %v1082
        %vm1090 = vmor %vm1088, %vm1089
        %v1091 = vsel %vm1090, %v1082, %v1087
        %v1092 = vrsqrt.pop %v1051
        %v1093 = vmul.f32 %v1092, %v1051
        %v1094 = vmul.f32 %v1093, %v1092
        %v1095 = vmul.f32 0.5, %v1094
        %v1096 = vsub.f32 1.5, %v1095
        %v1097 = vmul.f32 %v1092, %v1096
        %vm1098 = vweird.f32 %v1051
        %vm1099 = vweird.f32 %v1092
        %vm1100 = vmor %vm1098, %vm1099
        %v1101 = vsel %vm1100, %v1092, %v1097
        %v1102 = vrsqrt.pop %v1052
        %v1103 = vmul.f32 %v1102, %v1052
        %v1104 = vmul.f32 %v1103, %v1102
        %v1105 = vmul.f32 0.5, %v1104
        %v1106 = vsub.f32 1.5, %v1105
        %v1107 = vmul.f32 %v1102, %v1106
        %vm1108 = vweird.f32 %v1052
        %vm1109 = vweird.f32 %v1102
        %vm1110 = vmor %vm1108, %vm1109
        %v1111 = vsel %vm1110, %v1102, %v1107
        %v1112 = vrsqrt.pop %v1053
        %v1113 = vmul.f32 %v1112, %v1053
        %v1114 = vmul.f32 %v1113, %v1112
        %v1115 = vmul.f32 0.5, %v1114
        %v1116 = vsub.f32 1.5, %v1115
        %v1117 = vmul.f32 %v1112, %v1116
        %vm1118 = vweird.f32 %v1053
        %vm1119 = vweird.f32 %v1112
        %vm1120 = vmor %vm1118, %vm1119
        %v1121 = vsel %vm1120, %v1112, %v1117
        %v1122 = vrsqrt.pop %v1054
        %v1123 = vmul.f32 %v1122, %v1054
        %v1124 = vmul.f32 %v1123, %v1122
        %v1125 = vmul.f32 0.5, %v1124
        %v1126 = vsub.f32 1.5, %v1125
        %v1127 = vmul.f32 %v1122, %v1126
        %vm1128 = vweird.f32 %v1054
        %vm1129 = vweird.f32 %v1122
        %vm1130 = vmor %vm1128, %vm1129
        %v1131 = vsel %vm1130, %v1122, %v1127
        %v1132 = vrsqrt.pop %v1055
        %v1133 = vmul.f32 %v1132, %v1055
        %v1134 = vmul.f32 %v1133, %v1132
        %v1135 = vmul.f32 0.5, %v1134
        %v1136 = vsub.f32 1.5, %v1135
        %v1137 = vmul.f32 %v1132, %v1136
        %vm1138 = vweird.f32 %v1055
        %vm1139 = vweird.f32 %v1132
        %vm1140 = vmor %vm1138, %vm1139
        %v1141 = vsel %vm1140, %v1132, %v1137
        %v1142 = vrsqrt.pop %v1056
        %v1143 = vmul.f32 %v1142, %v1056
        %v1144 = vmul.f32 %v1143, %v1142
        %v1145 = vmul.f32 0.5, %v1144
        %v1146 = vsub.f32 1.5, %v1145
        %v1147 = vmul.f32 %v1142, %v1146
        %vm1148 = vweird.f32 %v1056
        %vm1149 = vweird.f32 %v1142
        %vm1150 = vmor %vm1148, %vm1149
        %v1151 = vsel %vm1150, %v1142, %v1147
        %v1152 = vrsqrt.pop %v1057
        %v1153 = vmul.f32 %v1152, %v1057
        %v1154 = vmul.f32 %v1153, %v1152
        %v1155 = vmul.f32 0.5, %v1154
        %v1156 = vsub.f32 1.5, %v1155
        %v1157 = vmul.f32 %v1152, %v1156
        %vm1158 = vweird.f32 %v1057
        %vm1159 = vweird.f32 %v1152
        %vm1160 = vmor %vm1158, %vm1159
        %v1161 = vsel %vm1160, %v1152, %v1157
        %v1162 = vrsqrt.pop %v1058
        %v1163 = vmul.f32 %v1162, %v1058
        %v1164 = vmul.f32 %v1163, %v1162
        %v1165 = vmul.f32 0.5, %v1164
        %v1166 = vsub.f32 1.5, %v1165
        %v1167 = vmul.f32 %v1162, %v1166
        %vm1168 = vweird.f32 %v1058
        %vm1169 = vweird.f32 %v1162
        %vm1170 = vmor %vm1168, %vm1169
        %v1171 = vsel %vm1170, %v1162, %v1167
        %v1172 = vrsqrt.pop %v1059
        %v1173 = vmul.f32 %v1172, %v1059
        %v1174 = vmul.f32 %v1173, %v1172
        %v1175 = vmul.f32 0.5, %v1174
        %v1176 = vsub.f32 1.5, %v1175
        %v1177 = vmul.f32 %v1172, %v1176
        %vm1178 = vweird.f32 %v1059
        %vm1179 = vweird.f32 %v1172
        %vm1180 = vmor %vm1178, %vm1179
        %v1181 = vsel %vm1180, %v1172, %v1177
        %v1182 = vrsqrt.pop %v1060
        %v1183 = vmul.f32 %v1182, %v1060
        %v1184 = vmul.f32 %v1183, %v1182
        %v1185 = vmul.f32 0.5, %v1184
        %v1186 = vsub.f32 1.5, %v1185
        %v1187 = vmul.f32 %v1182, %v1186
        %vm1188 = vweird.f32 %v1060
        %vm1189 = vweird.f32 %v1182
        %vm1190 = vmor %vm1188, %vm1189
        %v1191 = vsel %vm1190, %v1182, %v1187
        %v1192 = vrsqrt.pop %v1061
        %v1193 = vmul.f32 %v1192, %v1061
        %v1194 = vmul.f32 %v1193, %v1192
        %v1195 = vmul.f32 0.5, %v1194
        %v1196 = vsub.f32 1.5, %v1195
        %v1197 = vmul.f32 %v1192, %v1196
        %vm1198 = vweird.f32 %v1061
        %vm1199 = vweird.f32 %v1192
        %vm1200 = vmor %vm1198, %vm1199
        %v1201 = vsel %vm1200, %v1192, %v1197
        %v1202 = vrsqrt.pop %v1062
        %v1203 = vmul.f32 %v1202, %v1062
        %v1204 = vmul.f32 %v1203, %v1202
        %v1205 = vmul.f32 0.5, %v1204
        %v1206 = vsub.f32 1.5, %v1205
        %v1207 = vmul.f32 %v1202, %v1206
        %vm1208 = vweird.f32 %v1062
        %vm1209 = vweird.f32 %v1202
        %vm1210 = vmor %vm1208, %vm1209
        %v1211 = vsel %vm1210, %v1202, %v1207
        %v1212 = vrsqrt.pop %v1063
        %v1213 = vmul.f32 %v1212, %v1063
        %v1214 = vmul.f32 %v1213, %v1212
        %v1215 = vmul.f32 0.5, %v1214
        %v1216 = vsub.f32 1.5, %v1215
        %v1217 = vmul.f32 %v1212, %v1216
        %vm1218 = vweird.f32 %v1063
        %vm1219 = vweird.f32 %v1212
        %vm1220 = vmor %vm1218, %vm1219
        %v1221 = vsel %vm1220, %v1212, %v1217
        %v1222 = vrsqrt.pop %v1064
        %v1223 = vmul.f32 %v1222, %v1064
        %v1224 = vmul.f32 %v1223, %v1222
        %v1225 = vmul.f32 0.5, %v1224
        %v1226 = vsub.f32 1.5, %v1225
        %v1227 = vmul.f32 %v1222, %v1226
        %vm1228 = vweird.f32 %v1064
        %vm1229 = vweird.f32 %v1222
        %vm1230 = vmor %vm1228, %vm1229
        %v1231 = vsel %vm1230, %v1222, %v1227
        %v1232 = vrsqrt.pop %v1065
        %v1233 = vmul.f32 %v1232, %v1065
        %v1234 = vmul.f32 %v1233, %v1232
        %v1235 = vmul.f32 0.5, %v1234
        %v1236 = vsub.f32 1.5, %v1235
        %v1237 = vmul.f32 %v1232, %v1236
        %vm1238 = vweird.f32 %v1065
        %vm1239 = vweird.f32 %v1232
        %vm1240 = vmor %vm1238, %vm1239
        %v1241 = vsel %vm1240, %v1232, %v1237
        %v1242 = vrsqrt.pop %v1066
        %v1243 = vmul.f32 %v1242, %v1066
        %v1244 = vmul.f32 %v1243, %v1242
        %v1245 = vmul.f32 0.5, %v1244
        %v1246 = vsub.f32 1.5, %v1245
        %v1247 = vmul.f32 %v1242, %v1246
        %vm1248 = vweird.f32 %v1066
        %vm1249 = vweird.f32 %v1242
        %vm1250 = vmor %vm1248, %vm1249
        %v1251 = vsel %vm1250, %v1242, %v1247
        %v1252 = vrsqrt.pop %v1067
        %v1253 = vmul.f32 %v1252, %v1067
        %v1254 = vmul.f32 %v1253, %v1252
        %v1255 = vmul.f32 0.5, %v1254
        %v1256 = vsub.f32 1.5, %v1255
        %v1257 = vmul.f32 %v1252, %v1256
        %vm1258 = vweird.f32 %v1067
        %vm1259 = vweird.f32 %v1252
        %vm1260 = vmor %vm1258, %vm1259
        %v1261 = vsel %vm1260, %v1252, %v1257
        %v1262 = vrsqrt.pop %v1068
        %v1263 = vmul.f32 %v1262, %v1068
        %v1264 = vmul.f32 %v1263, %v1262
        %v1265 = vmul.f32 0.5, %v1264
        %v1266 = vsub.f32 1.5, %v1265
        %v1267 = vmul.f32 %v1262, %v1266
        %vm1268 = vweird.f32 %v1068
        %vm1269 = vweird.f32 %v1262
        %vm1270 = vmor %vm1268, %vm1269
        %v1271 = vsel %vm1270, %v1262, %v1267
        %v1272 = vrsqrt.pop %v1069
        %v1273 = vmul.f32 %v1272, %v1069
        %v1274 = vmul.f32 %v1273, %v1272
        %v1275 = vmul.f32 0.5, %v1274
        %v1276 = vsub.f32 1.5, %v1275
        %v1277 = vmul.f32 %v1272, %v1276
        %vm1278 = vweird.f32 %v1069
        %vm1279 = vweird.f32 %v1272
        %vm1280 = vmor %vm1278, %vm1279
        %v1281 = vsel %vm1280, %v1272, %v1277
        %v1282 = vrsqrt.pop %v1070
        %v1283 = vmul.f32 %v1282, %v1070
        %v1284 = vmul.f32 %v1283, %v1282
        %v1285 = vmul.f32 0.5, %v1284
        %v1286 = vsub.f32 1.5, %v1285
        %v1287 = vmul.f32 %v1282, %v1286
        %vm1288 = vweird.f32 %v1070
        %vm1289 = vweird.f32 %v1282
        %vm1290 = vmor %vm1288, %vm1289
        %v1291 = vsel %vm1290, %v1282, %v1287
        %v1292 = vrsqrt.pop %v1071
        %v1293 = vmul.f32 %v1292, %v1071
        %v1294 = vmul.f32 %v1293, %v1292
        %v1295 = vmul.f32 0.5, %v1294
        %v1296 = vsub.f32 1.5, %v1295
        %v1297 = vmul.f32 %v1292, %v1296
        %vm1298 = vweird.f32 %v1071
        %vm1299 = vweird.f32 %v1292
        %vm1300 = vmor %vm1298, %vm1299
        %v1301 = vsel %vm1300, %v1292, %v1297
        %v1302 = vrsqrt.pop %v1072
        %v1303 = vmul.f32 %v1302, %v1072
        %v1304 = vmul.f32 %v1303, %v1302
        %v1305 = vmul.f32 0.5, %v1304
        %v1306 = vsub.f32 1.5, %v1305
        %v1307 = vmul.f32 %v1302, %v1306
        %vm1308 = vweird.f32 %v1072
        %vm1309 = vweird.f32 %v1302
        %vm1310 = vmor %vm1308, %vm1309
        %v1311 = vsel %vm1310, %v1302, %v1307
        %v1312 = vrsqrt.pop %v1073
        %v1313 = vmul.f32 %v1312, %v1073
        %v1314 = vmul.f32 %v1313, %v1312
        %v1315 = vmul.f32 0.5, %v1314
        %v1316 = vsub.f32 1.5, %v1315
        %v1317 = vmul.f32 %v1312, %v1316
        %vm1318 = vweird.f32 %v1073
        %vm1319 = vweird.f32 %v1312
        %vm1320 = vmor %vm1318, %vm1319
        %v1321 = vsel %vm1320, %v1312, %v1317
        %v1322 = vrsqrt.pop %v1074
        %v1323 = vmul.f32 %v1322, %v1074
        %v1324 = vmul.f32 %v1323, %v1322
        %v1325 = vmul.f32 0.5, %v1324
        %v1326 = vsub.f32 1.5, %v1325
        %v1327 = vmul.f32 %v1322, %v1326
        %vm1328 = vweird.f32 %v1074
        %vm1329 = vweird.f32 %v1322
        %vm1330 = vmor %vm1328, %vm1329
        %v1331 = vsel %vm1330, %v1322, %v1327
        %v1332 = vrsqrt.pop %v1075
        %v1333 = vmul.f32 %v1332, %v1075
        %v1334 = vmul.f32 %v1333, %v1332
        %v1335 = vmul.f32 0.5, %v1334
        %v1336 = vsub.f32 1.5, %v1335
        %v1337 = vmul.f32 %v1332, %v1336
        %vm1338 = vweird.f32 %v1075
        %vm1339 = vweird.f32 %v1332
        %vm1340 = vmor %vm1338, %vm1339
        %v1341 = vsel %vm1340, %v1332, %v1337
        %v1342 = vrsqrt.pop %v1076
        %v1343 = vmul.f32 %v1342, %v1076
        %v1344 = vmul.f32 %v1343, %v1342
        %v1345 = vmul.f32 0.5, %v1344
        %v1346 = vsub.f32 1.5, %v1345
        %v1347 = vmul.f32 %v1342, %v1346
        %vm1348 = vweird.f32 %v1076
        %vm1349 = vweird.f32 %v1342
        %vm1350 = vmor %vm1348, %vm1349
        %v1351 = vsel %vm1350, %v1342, %v1347
        %v1352 = vrsqrt.pop %v1077
        %v1353 = vmul.f32 %v1352, %v1077
        %v1354 = vmul.f32 %v1353, %v1352
        %v1355 = vmul.f32 0.5, %v1354
        %v1356 = vsub.f32 1.5, %v1355
        %v1357 = vmul.f32 %v1352, %v1356
        %vm1358 = vweird.f32 %v1077
        %vm1359 = vweird.f32 %v1352
        %vm1360 = vmor %vm1358, %vm1359
        %v1361 = vsel %vm1360, %v1352, %v1357
        %v1362 = vrsqrt.pop %v1078
        %v1363 = vmul.f32 %v1362, %v1078
        %v1364 = vmul.f32 %v1363, %v1362
        %v1365 = vmul.f32 0.5, %v1364
        %v1366 = vsub.f32 1.5, %v1365
        %v1367 = vmul.f32 %v1362, %v1366
        %vm1368 = vweird.f32 %v1078
        %vm1369 = vweird.f32 %v1362
        %vm1370 = vmor %vm1368, %vm1369
        %v1371 = vsel %vm1370, %v1362, %v1367
        %v1372 = vrsqrt.pop %v1079
        %v1373 = vmul.f32 %v1372, %v1079
        %v1374 = vmul.f32 %v1373, %v1372
        %v1375 = vmul.f32 0.5, %v1374
        %v1376 = vsub.f32 1.5, %v1375
        %v1377 = vmul.f32 %v1372, %v1376
        %vm1378 = vweird.f32 %v1079
        %vm1379 = vweird.f32 %v1372
        %vm1380 = vmor %vm1378, %vm1379
        %v1381 = vsel %vm1380, %v1372, %v1377
        %v1382 = vrsqrt.pop %v1080
        %v1383 = vmul.f32 %v1382, %v1080
        %v1384 = vmul.f32 %v1383, %v1382
        %v1385 = vmul.f32 0.5, %v1384
        %v1386 = vsub.f32 1.5, %v1385
        %v1387 = vmul.f32 %v1382, %v1386
        %vm1388 = vweird.f32 %v1080
        %vm1389 = vweird.f32 %v1382
        %vm1390 = vmor %vm1388, %vm1389
        %v1391 = vsel %vm1390, %v1382, %v1387
        %v1392 = vrsqrt.pop %v1081
        %v1393 = vmul.f32 %v1392, %v1081
        %v1394 = vmul.f32 %v1393, %v1392
        %v1395 = vmul.f32 0.5, %v1394
        %v1396 = vsub.f32 1.5, %v1395
        %v1397 = vmul.f32 %v1392, %v1396
        %vm1398 = vweird.f32 %v1081
        %vm1399 = vweird.f32 %v1392
        %vm1400 = vmor %vm1398, %vm1399
        %v1401 = vsel %vm1400, %v1392, %v1397
        %v1402 = vmul.f32 %v858, %v1091
        %v1403 = vmul.f32 %v859, %v1101
        %v1404 = vmul.f32 %v860, %v1111
        %v1405 = vmul.f32 %v861, %v1121
        %v1406 = vmul.f32 %v862, %v1131
        %v1407 = vmul.f32 %v863, %v1141
        %v1408 = vmul.f32 %v864, %v1151
        %v1409 = vmul.f32 %v865, %v1161
        %v1410 = vmul.f32 %v866, %v1171
        %v1411 = vmul.f32 %v867, %v1181
        %v1412 = vmul.f32 %v868, %v1191
        %v1413 = vmul.f32 %v869, %v1201
        %v1414 = vmul.f32 %v870, %v1211
        %v1415 = vmul.f32 %v871, %v1221
        %v1416 = vmul.f32 %v872, %v1231
        %v1417 = vmul.f32 %v873, %v1241
        %v1418 = vmul.f32 %v874, %v1251
        %v1419 = vmul.f32 %v875, %v1261
        %v1420 = vmul.f32 %v876, %v1271
        %v1421 = vmul.f32 %v877, %v1281
        %v1422 = vmul.f32 %v878, %v1291
        %v1423 = vmul.f32 %v879, %v1301
        %v1424 = vmul.f32 %v880, %v1311
        %v1425 = vmul.f32 %v881, %v1321
        %v1426 = vmul.f32 %v882, %v1331
        %v1427 = vmul.f32 %v883, %v1341
        %v1428 = vmul.f32 %v884, %v1351
        %v1429 = vmul.f32 %v885, %v1361
        %v1430 = vmul.f32 %v886, %v1371
        %v1431 = vmul.f32 %v887, %v1381
        %v1432 = vmul.f32 %v888, %v1391
        %v1433 = vmul.f32 %v889, %v1401
        %v1434 = vld [vmem:[%s1] sm:$0x1]
        %v1436 = vperm.slane %v1434, 0
        %v1438 = vmul.f32 %v1402, %v1436
        %v1439 = vmul.f32 %v1403, %v1436
        %v1440 = vmul.f32 %v1404, %v1436
        %v1441 = vmul.f32 %v1405, %v1436
        %v1442 = vmul.f32 %v1406, %v1436
        %v1443 = vmul.f32 %v1407, %v1436
        %v1444 = vmul.f32 %v1408, %v1436
        %v1445 = vmul.f32 %v1409, %v1436
        %v1446 = vmul.f32 %v1410, %v1436
        %v1447 = vmul.f32 %v1411, %v1436
        %v1448 = vmul.f32 %v1412, %v1436
        %v1449 = vmul.f32 %v1413, %v1436
        %v1450 = vmul.f32 %v1414, %v1436
        %v1451 = vmul.f32 %v1415, %v1436
        %v1452 = vmul.f32 %v1416, %v1436
        %v1453 = vmul.f32 %v1417, %v1436
        %v1454 = vmul.f32 %v1418, %v1436
        %v1455 = vmul.f32 %v1419, %v1436
        %v1456 = vmul.f32 %v1420, %v1436
        %v1457 = vmul.f32 %v1421, %v1436
        %v1458 = vmul.f32 %v1422, %v1436
        %v1459 = vmul.f32 %v1423, %v1436
        %v1460 = vmul.f32 %v1424, %v1436
        %v1461 = vmul.f32 %v1425, %v1436
        %v1462 = vmul.f32 %v1426, %v1436
        %v1463 = vmul.f32 %v1427, %v1436
        %v1464 = vmul.f32 %v1428, %v1436
        %v1465 = vmul.f32 %v1429, %v1436
        %v1466 = vmul.f32 %v1430, %v1436
        %v1467 = vmul.f32 %v1431, %v1436
        %v1468 = vmul.f32 %v1432, %v1436
        %v1469 = vmul.f32 %v1433, %v1436
        %v1470 = vld [vmem:[%s2] sm:$0x1]
        %v1472 = vperm.slane %v1470, 0
        %v1474 = vadd.f32 %v1438, %v1472
        %v1475 = vadd.f32 %v1439, %v1472
        %v1476 = vadd.f32 %v1440, %v1472
        %v1477 = vadd.f32 %v1441, %v1472
        %v1478 = vadd.f32 %v1442, %v1472
        %v1479 = vadd.f32 %v1443, %v1472
        %v1480 = vadd.f32 %v1444, %v1472
        %v1481 = vadd.f32 %v1445, %v1472
        %v1482 = vadd.f32 %v1446, %v1472
        %v1483 = vadd.f32 %v1447, %v1472
        %v1484 = vadd.f32 %v1448, %v1472
        %v1485 = vadd.f32 %v1449, %v1472
        %v1486 = vadd.f32 %v1450, %v1472
        %v1487 = vadd.f32 %v1451, %v1472
        %v1488 = vadd.f32 %v1452, %v1472
        %v1489 = vadd.f32 %v1453, %v1472
        %v1490 = vadd.f32 %v1454, %v1472
        %v1491 = vadd.f32 %v1455, %v1472
        %v1492 = vadd.f32 %v1456, %v1472
        %v1493 = vadd.f32 %v1457, %v1472
        %v1494 = vadd.f32 %v1458, %v1472
        %v1495 = vadd.f32 %v1459, %v1472
        %v1496 = vadd.f32 %v1460, %v1472
        %v1497 = vadd.f32 %v1461, %v1472
        %v1498 = vadd.f32 %v1462, %v1472
        %v1499 = vadd.f32 %v1463, %v1472
        %v1500 = vadd.f32 %v1464, %v1472
        %v1501 = vadd.f32 %v1465, %v1472
        %v1502 = vadd.f32 %v1466, %v1472
        %v1503 = vadd.f32 %v1467, %v1472
        %v1504 = vadd.f32 %v1468, %v1472
        %v1505 = vadd.f32 %v1469, %v1472
        %s1506 = scalar_lea.vmem [#allocation2], 32
        %1507 = vst.msk [vmem:[%s1506 + $0x8] sm:$0xff] %vm542, %v1474
        %1508 = vst.msk [vmem:[%s1506 + $0x10] sm:$0xff] %vm542, %v1475
        %1509 = vst.msk [vmem:[%s1506 + $0x28] sm:$0xff] %vm542, %v1476
        %1510 = vst.msk [vmem:[%s1506 + $0x30] sm:$0xff] %vm542, %v1477
        %1511 = vst.msk [vmem:[%s1506 + $0x48] sm:$0xff] %vm542, %v1478
        %1512 = vst.msk [vmem:[%s1506 + $0x50] sm:$0xff] %vm542, %v1479
        %1513 = vst.msk [vmem:[%s1506 + $0x68] sm:$0xff] %vm542, %v1480
        %1514 = vst.msk [vmem:[%s1506 + $0x70] sm:$0xff] %vm542, %v1481
        %1515 = vst.msk [vmem:[%s1506 + $0x88] sm:$0xff] %vm542, %v1482
        %1516 = vst.msk [vmem:[%s1506 + $0x90] sm:$0xff] %vm542, %v1483
        %1517 = vst.msk [vmem:[%s1506 + $0xa8] sm:$0xff] %vm542, %v1484
        %1518 = vst.msk [vmem:[%s1506 + $0xb0] sm:$0xff] %vm542, %v1485
        %1519 = vst.msk [vmem:[%s1506 + $0xc8] sm:$0xff] %vm542, %v1486
        %1520 = vst.msk [vmem:[%s1506 + $0xd0] sm:$0xff] %vm542, %v1487
        %1521 = vst.msk [vmem:[%s1506 + $0xe8] sm:$0xff] %vm542, %v1488
        %1522 = vst.msk [vmem:[%s1506 + $0xf0] sm:$0xff] %vm542, %v1489
        %1523 = vst.msk [vmem:[%s1506 + $0x108] sm:$0xff] %vm542, %v1490
        %1524 = vst.msk [vmem:[%s1506 + $0x110] sm:$0xff] %vm542, %v1491
        %1525 = vst.msk [vmem:[%s1506 + $0x128] sm:$0xff] %vm542, %v1492
        %1526 = vst.msk [vmem:[%s1506 + $0x130] sm:$0xff] %vm542, %v1493
        %1527 = vst.msk [vmem:[%s1506 + $0x148] sm:$0xff] %vm542, %v1494
        %1528 = vst.msk [vmem:[%s1506 + $0x150] sm:$0xff] %vm542, %v1495
        %1529 = vst.msk [vmem:[%s1506 + $0x168] sm:$0xff] %vm542, %v1496
        %1530 = vst.msk [vmem:[%s1506 + $0x170] sm:$0xff] %vm542, %v1497
        %1531 = vst.msk [vmem:[%s1506 + $0x188] sm:$0xff] %vm542, %v1498
        %1532 = vst.msk [vmem:[%s1506 + $0x190] sm:$0xff] %vm542, %v1499
        %1533 = vst.msk [vmem:[%s1506 + $0x1a8] sm:$0xff] %vm542, %v1500
        %1534 = vst.msk [vmem:[%s1506 + $0x1b0] sm:$0xff] %vm542, %v1501
        %1535 = vst.msk [vmem:[%s1506 + $0x1c8] sm:$0xff] %vm542, %v1502
        %1536 = vst.msk [vmem:[%s1506 + $0x1d0] sm:$0xff] %vm542, %v1503
        %1537 = vst.msk [vmem:[%s1506 + $0x1e8] sm:$0xff] %vm542, %v1504
        %1538 = vst.msk [vmem:[%s1506 + $0x1f0] sm:$0xff] %vm542, %v1505
        %v1539 = vld [vmem:[%s3] sm:$0x7]
        %v1540 = vld [vmem:[%s5] sm:$0x7]
        %v1541 = vld [vmem:[#allocation2 + $0x8] sm:$0xff]
        %v1542 = vld [vmem:[#allocation2 + $0x10] sm:$0xff]
        %v1543 = vld [vmem:[#allocation2 + $0x28] sm:$0xff]
        %v1544 = vld [vmem:[#allocation2 + $0x30] sm:$0xff]
        %v1545 = vld [vmem:[#allocation2 + $0x48] sm:$0xff]
        %v1546 = vld [vmem:[#allocation2 + $0x50] sm:$0xff]
        %v1547 = vld [vmem:[#allocation2 + $0x68] sm:$0xff]
        %v1548 = vld [vmem:[#allocation2 + $0x70] sm:$0xff]
        %v1549 = vld [vmem:[#allocation2 + $0x88] sm:$0xff]
        %v1550 = vld [vmem:[#allocation2 + $0x90] sm:$0xff]
        %v1551 = vld [vmem:[#allocation2 + $0xa8] sm:$0xff]
        %v1552 = vld [vmem:[#allocation2 + $0xb0] sm:$0xff]
        %v1553 = vld [vmem:[#allocation2 + $0xc8] sm:$0xff]
        %v1554 = vld [vmem:[#allocation2 + $0xd0] sm:$0xff]
        %v1555 = vld [vmem:[#allocation2 + $0xe8] sm:$0xff]
        %v1556 = vld [vmem:[#allocation2 + $0xf0] sm:$0xff]
        %v1557 = vld [vmem:[#allocation2 + $0x108] sm:$0xff]
        %v1558 = vld [vmem:[#allocation2 + $0x110] sm:$0xff]
        %v1559 = vld [vmem:[#allocation2 + $0x128] sm:$0xff]
        %v1560 = vld [vmem:[#allocation2 + $0x130] sm:$0xff]
        %v1561 = vld [vmem:[#allocation2 + $0x148] sm:$0xff]
        %v1562 = vld [vmem:[#allocation2 + $0x150] sm:$0xff]
        %v1563 = vld [vmem:[#allocation2 + $0x168] sm:$0xff]
        %v1564 = vld [vmem:[#allocation2 + $0x170] sm:$0xff]
        %v1565 = vld [vmem:[#allocation2 + $0x188] sm:$0xff]
        %v1566 = vld [vmem:[#allocation2 + $0x190] sm:$0xff]
        %v1567 = vld [vmem:[#allocation2 + $0x1a8] sm:$0xff]
        %v1568 = vld [vmem:[#allocation2 + $0x1b0] sm:$0xff]
        %v1569 = vld [vmem:[#allocation2 + $0x1c8] sm:$0xff]
        %v1570 = vld [vmem:[#allocation2 + $0x1d0] sm:$0xff]
        %v1571 = vld [vmem:[#allocation2 + $0x1e8] sm:$0xff]
        %v1572 = vld [vmem:[#allocation2 + $0x1f0] sm:$0xff]
        %v1573 = vperm.slane %v1539, 0
        %v1574 = vmul.f32 %v1541, %v1573
        %v1575 = vmul.f32 %v1542, %v1573
        %v1576 = vmul.f32 %v1543, %v1573
        %v1577 = vmul.f32 %v1544, %v1573
        %v1578 = vmul.f32 %v1545, %v1573
        %v1579 = vmul.f32 %v1546, %v1573
        %v1580 = vmul.f32 %v1547, %v1573
        %v1581 = vmul.f32 %v1548, %v1573
        %v1582 = vmul.f32 %v1549, %v1573
        %v1583 = vmul.f32 %v1550, %v1573
        %v1584 = vmul.f32 %v1551, %v1573
        %v1585 = vmul.f32 %v1552, %v1573
        %v1586 = vmul.f32 %v1553, %v1573
        %v1587 = vmul.f32 %v1554, %v1573
        %v1588 = vmul.f32 %v1555, %v1573
        %v1589 = vmul.f32 %v1556, %v1573
        %v1590 = vmul.f32 %v1557, %v1573
        %v1591 = vmul.f32 %v1558, %v1573
        %v1592 = vmul.f32 %v1559, %v1573
        %v1593 = vmul.f32 %v1560, %v1573
        %v1594 = vmul.f32 %v1561, %v1573
        %v1595 = vmul.f32 %v1562, %v1573
        %v1596 = vmul.f32 %v1563, %v1573
        %v1597 = vmul.f32 %v1564, %v1573
        %v1598 = vmul.f32 %v1565, %v1573
        %v1599 = vmul.f32 %v1566, %v1573
        %v1600 = vmul.f32 %v1567, %v1573
        %v1601 = vmul.f32 %v1568, %v1573
        %v1602 = vmul.f32 %v1569, %v1573
        %v1603 = vmul.f32 %v1570, %v1573
        %v1604 = vmul.f32 %v1571, %v1573
        %v1605 = vmul.f32 %v1572, %v1573
        %v1606 = vadd.f32 %v1574, 0.0
        %v1607 = vadd.f32 %v1575, 0.0
        %v1608 = vadd.f32 %v1576, 0.0
        %v1609 = vadd.f32 %v1577, 0.0
        %v1610 = vadd.f32 %v1578, 0.0
        %v1611 = vadd.f32 %v1579, 0.0
        %v1612 = vadd.f32 %v1580, 0.0
        %v1613 = vadd.f32 %v1581, 0.0
        %v1614 = vadd.f32 %v1582, 0.0
        %v1615 = vadd.f32 %v1583, 0.0
        %v1616 = vadd.f32 %v1584, 0.0
        %v1617 = vadd.f32 %v1585, 0.0
        %v1618 = vadd.f32 %v1586, 0.0
        %v1619 = vadd.f32 %v1587, 0.0
        %v1620 = vadd.f32 %v1588, 0.0
        %v1621 = vadd.f32 %v1589, 0.0
        %v1622 = vadd.f32 %v1590, 0.0
        %v1623 = vadd.f32 %v1591, 0.0
        %v1624 = vadd.f32 %v1592, 0.0
        %v1625 = vadd.f32 %v1593, 0.0
        %v1626 = vadd.f32 %v1594, 0.0
        %v1627 = vadd.f32 %v1595, 0.0
        %v1628 = vadd.f32 %v1596, 0.0
        %v1629 = vadd.f32 %v1597, 0.0
        %v1630 = vadd.f32 %v1598, 0.0
        %v1631 = vadd.f32 %v1599, 0.0
        %v1632 = vadd.f32 %v1600, 0.0
        %v1633 = vadd.f32 %v1601, 0.0
        %v1634 = vadd.f32 %v1602, 0.0
        %v1635 = vadd.f32 %v1603, 0.0
        %v1636 = vadd.f32 %v1604, 0.0
        %v1637 = vadd.f32 %v1605, 0.0
        %v1638 = vld [vmem:[%s1506 + $0x7] sm:$0xff]
        %v1639 = vld [vmem:[%s1506 + $0xf] sm:$0xff]
        %v1640 = vld [vmem:[%s1506 + $0x27] sm:$0xff]
        %v1641 = vld [vmem:[%s1506 + $0x2f] sm:$0xff]
        %v1642 = vld [vmem:[%s1506 + $0x47] sm:$0xff]
        %v1643 = vld [vmem:[%s1506 + $0x4f] sm:$0xff]
        %v1644 = vld [vmem:[%s1506 + $0x67] sm:$0xff]
        %v1645 = vld [vmem:[%s1506 + $0x6f] sm:$0xff]
        %v1646 = vld [vmem:[%s1506 + $0x87] sm:$0xff]
        %v1647 = vld [vmem:[%s1506 + $0x8f] sm:$0xff]
        %v1648 = vld [vmem:[%s1506 + $0xa7] sm:$0xff]
        %v1649 = vld [vmem:[%s1506 + $0xaf] sm:$0xff]
        %v1650 = vld [vmem:[%s1506 + $0xc7] sm:$0xff]
        %v1651 = vld [vmem:[%s1506 + $0xcf] sm:$0xff]
        %v1652 = vld [vmem:[%s1506 + $0xe7] sm:$0xff]
        %v1653 = vld [vmem:[%s1506 + $0xef] sm:$0xff]
        %v1654 = vld [vmem:[%s1506 + $0x107] sm:$0xff]
        %v1655 = vld [vmem:[%s1506 + $0x10f] sm:$0xff]
        %v1656 = vld [vmem:[%s1506 + $0x127] sm:$0xff]
        %v1657 = vld [vmem:[%s1506 + $0x12f] sm:$0xff]
        %v1658 = vld [vmem:[%s1506 + $0x147] sm:$0xff]
        %v1659 = vld [vmem:[%s1506 + $0x14f] sm:$0xff]
        %v1660 = vld [vmem:[%s1506 + $0x167] sm:$0xff]
        %v1661 = vld [vmem:[%s1506 + $0x16f] sm:$0xff]
        %v1662 = vld [vmem:[%s1506 + $0x187] sm:$0xff]
        %v1663 = vld [vmem:[%s1506 + $0x18f] sm:$0xff]
        %v1664 = vld [vmem:[%s1506 + $0x1a7] sm:$0xff]
        %v1665 = vld [vmem:[%s1506 + $0x1af] sm:$0xff]
        %v1666 = vld [vmem:[%s1506 + $0x1c7] sm:$0xff]
        %v1667 = vld [vmem:[%s1506 + $0x1cf] sm:$0xff]
        %v1668 = vld [vmem:[%s1506 + $0x1e7] sm:$0xff]
        %v1669 = vld [vmem:[%s1506 + $0x1ef] sm:$0xff]
        %v1670 = vperm.slane %v1540, 0
        %v1671 = vmul.f32 %v1638, %v1670
        %v1672 = vmul.f32 %v1639, %v1670
        %v1673 = vmul.f32 %v1640, %v1670
        %v1674 = vmul.f32 %v1641, %v1670
        %v1675 = vmul.f32 %v1642, %v1670
        %v1676 = vmul.f32 %v1643, %v1670
        %v1677 = vmul.f32 %v1644, %v1670
        %v1678 = vmul.f32 %v1645, %v1670
        %v1679 = vmul.f32 %v1646, %v1670
        %v1680 = vmul.f32 %v1647, %v1670
        %v1681 = vmul.f32 %v1648, %v1670
        %v1682 = vmul.f32 %v1649, %v1670
        %v1683 = vmul.f32 %v1650, %v1670
        %v1684 = vmul.f32 %v1651, %v1670
        %v1685 = vmul.f32 %v1652, %v1670
        %v1686 = vmul.f32 %v1653, %v1670
        %v1687 = vmul.f32 %v1654, %v1670
        %v1688 = vmul.f32 %v1655, %v1670
        %v1689 = vmul.f32 %v1656, %v1670
        %v1690 = vmul.f32 %v1657, %v1670
        %v1691 = vmul.f32 %v1658, %v1670
        %v1692 = vmul.f32 %v1659, %v1670
        %v1693 = vmul.f32 %v1660, %v1670
        %v1694 = vmul.f32 %v1661, %v1670
        %v1695 = vmul.f32 %v1662, %v1670
        %v1696 = vmul.f32 %v1663, %v1670
        %v1697 = vmul.f32 %v1664, %v1670
        %v1698 = vmul.f32 %v1665, %v1670
        %v1699 = vmul.f32 %v1666, %v1670
        %v1700 = vmul.f32 %v1667, %v1670
        %v1701 = vmul.f32 %v1668, %v1670
        %v1702 = vmul.f32 %v1669, %v1670
        %v1703 = vadd.f32 %v1671, 0.0
        %v1704 = vadd.f32 %v1672, 0.0
        %v1705 = vadd.f32 %v1673, 0.0
        %v1706 = vadd.f32 %v1674, 0.0
        %v1707 = vadd.f32 %v1675, 0.0
        %v1708 = vadd.f32 %v1676, 0.0
        %v1709 = vadd.f32 %v1677, 0.0
        %v1710 = vadd.f32 %v1678, 0.0
        %v1711 = vadd.f32 %v1679, 0.0
        %v1712 = vadd.f32 %v1680, 0.0
        %v1713 = vadd.f32 %v1681, 0.0
        %v1714 = vadd.f32 %v1682, 0.0
        %v1715 = vadd.f32 %v1683, 0.0
        %v1716 = vadd.f32 %v1684, 0.0
        %v1717 = vadd.f32 %v1685, 0.0
        %v1718 = vadd.f32 %v1686, 0.0
        %v1719 = vadd.f32 %v1687, 0.0
        %v1720 = vadd.f32 %v1688, 0.0
        %v1721 = vadd.f32 %v1689, 0.0
        %v1722 = vadd.f32 %v1690, 0.0
        %v1723 = vadd.f32 %v1691, 0.0
        %v1724 = vadd.f32 %v1692, 0.0
        %v1725 = vadd.f32 %v1693, 0.0
        %v1726 = vadd.f32 %v1694, 0.0
        %v1727 = vadd.f32 %v1695, 0.0
        %v1728 = vadd.f32 %v1696, 0.0
        %v1729 = vadd.f32 %v1697, 0.0
        %v1730 = vadd.f32 %v1698, 0.0
        %v1731 = vadd.f32 %v1699, 0.0
        %v1732 = vadd.f32 %v1700, 0.0
        %v1733 = vadd.f32 %v1701, 0.0
        %v1734 = vadd.f32 %v1702, 0.0
        %v1735 = vld [vmem:[%s1506 + $0x8] sm:$0xff]
        %v1736 = vld [vmem:[%s1506 + $0x10] sm:$0xff]
        %v1737 = vld [vmem:[%s1506 + $0x28] sm:$0xff]
        %v1738 = vld [vmem:[%s1506 + $0x30] sm:$0xff]
        %v1739 = vld [vmem:[%s1506 + $0x48] sm:$0xff]
        %v1740 = vld [vmem:[%s1506 + $0x50] sm:$0xff]
        %v1741 = vld [vmem:[%s1506 + $0x68] sm:$0xff]
        %v1742 = vld [vmem:[%s1506 + $0x70] sm:$0xff]
        %v1743 = vld [vmem:[%s1506 + $0x88] sm:$0xff]
        %v1744 = vld [vmem:[%s1506 + $0x90] sm:$0xff]
        %v1745 = vld [vmem:[%s1506 + $0xa8] sm:$0xff]
        %v1746 = vld [vmem:[%s1506 + $0xb0] sm:$0xff]
        %v1747 = vld [vmem:[%s1506 + $0xc8] sm:$0xff]
        %v1748 = vld [vmem:[%s1506 + $0xd0] sm:$0xff]
        %v1749 = vld [vmem:[%s1506 + $0xe8] sm:$0xff]
        %v1750 = vld [vmem:[%s1506 + $0xf0] sm:$0xff]
        %v1751 = vld [vmem:[%s1506 + $0x108] sm:$0xff]
        %v1752 = vld [vmem:[%s1506 + $0x110] sm:$0xff]
        %v1753 = vld [vmem:[%s1506 + $0x128] sm:$0xff]
        %v1754 = vld [vmem:[%s1506 + $0x130] sm:$0xff]
        %v1755 = vld [vmem:[%s1506 + $0x148] sm:$0xff]
        %v1756 = vld [vmem:[%s1506 + $0x150] sm:$0xff]
        %v1757 = vld [vmem:[%s1506 + $0x168] sm:$0xff]
        %v1758 = vld [vmem:[%s1506 + $0x170] sm:$0xff]
        %v1759 = vld [vmem:[%s1506 + $0x188] sm:$0xff]
        %v1760 = vld [vmem:[%s1506 + $0x190] sm:$0xff]
        %v1761 = vld [vmem:[%s1506 + $0x1a8] sm:$0xff]
        %v1762 = vld [vmem:[%s1506 + $0x1b0] sm:$0xff]
        %v1763 = vld [vmem:[%s1506 + $0x1c8] sm:$0xff]
        %v1764 = vld [vmem:[%s1506 + $0x1d0] sm:$0xff]
        %v1765 = vld [vmem:[%s1506 + $0x1e8] sm:$0xff]
        %v1766 = vld [vmem:[%s1506 + $0x1f0] sm:$0xff]
        %v1767 = vperm.slane %v1539, 1
        %v1768 = vmul.f32 %v1735, %v1767
        %v1769 = vmul.f32 %v1736, %v1767
        %v1770 = vmul.f32 %v1737, %v1767
        %v1771 = vmul.f32 %v1738, %v1767
        %v1772 = vmul.f32 %v1739, %v1767
        %v1773 = vmul.f32 %v1740, %v1767
        %v1774 = vmul.f32 %v1741, %v1767
        %v1775 = vmul.f32 %v1742, %v1767
        %v1776 = vmul.f32 %v1743, %v1767
        %v1777 = vmul.f32 %v1744, %v1767
        %v1778 = vmul.f32 %v1745, %v1767
        %v1779 = vmul.f32 %v1746, %v1767
        %v1780 = vmul.f32 %v1747, %v1767
        %v1781 = vmul.f32 %v1748, %v1767
        %v1782 = vmul.f32 %v1749, %v1767
        %v1783 = vmul.f32 %v1750, %v1767
        %v1784 = vmul.f32 %v1751, %v1767
        %v1785 = vmul.f32 %v1752, %v1767
        %v1786 = vmul.f32 %v1753, %v1767
        %v1787 = vmul.f32 %v1754, %v1767
        %v1788 = vmul.f32 %v1755, %v1767
        %v1789 = vmul.f32 %v1756, %v1767
        %v1790 = vmul.f32 %v1757, %v1767
        %v1791 = vmul.f32 %v1758, %v1767
        %v1792 = vmul.f32 %v1759, %v1767
        %v1793 = vmul.f32 %v1760, %v1767
        %v1794 = vmul.f32 %v1761, %v1767
        %v1795 = vmul.f32 %v1762, %v1767
        %v1796 = vmul.f32 %v1763, %v1767
        %v1797 = vmul.f32 %v1764, %v1767
        %v1798 = vmul.f32 %v1765, %v1767
        %v1799 = vmul.f32 %v1766, %v1767
        %v1800 = vadd.f32 %v1606, %v1768
        %v1801 = vadd.f32 %v1607, %v1769
        %v1802 = vadd.f32 %v1608, %v1770
        %v1803 = vadd.f32 %v1609, %v1771
        %v1804 = vadd.f32 %v1610, %v1772
        %v1805 = vadd.f32 %v1611, %v1773
        %v1806 = vadd.f32 %v1612, %v1774
        %v1807 = vadd.f32 %v1613, %v1775
        %v1808 = vadd.f32 %v1614, %v1776
        %v1809 = vadd.f32 %v1615, %v1777
        %v1810 = vadd.f32 %v1616, %v1778
        %v1811 = vadd.f32 %v1617, %v1779
        %v1812 = vadd.f32 %v1618, %v1780
        %v1813 = vadd.f32 %v1619, %v1781
        %v1814 = vadd.f32 %v1620, %v1782
        %v1815 = vadd.f32 %v1621, %v1783
        %v1816 = vadd.f32 %v1622, %v1784
        %v1817 = vadd.f32 %v1623, %v1785
        %v1818 = vadd.f32 %v1624, %v1786
        %v1819 = vadd.f32 %v1625, %v1787
        %v1820 = vadd.f32 %v1626, %v1788
        %v1821 = vadd.f32 %v1627, %v1789
        %v1822 = vadd.f32 %v1628, %v1790
        %v1823 = vadd.f32 %v1629, %v1791
        %v1824 = vadd.f32 %v1630, %v1792
        %v1825 = vadd.f32 %v1631, %v1793
        %v1826 = vadd.f32 %v1632, %v1794
        %v1827 = vadd.f32 %v1633, %v1795
        %v1828 = vadd.f32 %v1634, %v1796
        %v1829 = vadd.f32 %v1635, %v1797
        %v1830 = vadd.f32 %v1636, %v1798
        %v1831 = vadd.f32 %v1637, %v1799
        %v1832 = vperm.slane %v1540, 1
        %v1833 = vmul.f32 %v1735, %v1832
        %v1834 = vmul.f32 %v1736, %v1832
        %v1835 = vmul.f32 %v1737, %v1832
        %v1836 = vmul.f32 %v1738, %v1832
        %v1837 = vmul.f32 %v1739, %v1832
        %v1838 = vmul.f32 %v1740, %v1832
        %v1839 = vmul.f32 %v1741, %v1832
        %v1840 = vmul.f32 %v1742, %v1832
        %v1841 = vmul.f32 %v1743, %v1832
        %v1842 = vmul.f32 %v1744, %v1832
        %v1843 = vmul.f32 %v1745, %v1832
        %v1844 = vmul.f32 %v1746, %v1832
        %v1845 = vmul.f32 %v1747, %v1832
        %v1846 = vmul.f32 %v1748, %v1832
        %v1847 = vmul.f32 %v1749, %v1832
        %v1848 = vmul.f32 %v1750, %v1832
        %v1849 = vmul.f32 %v1751, %v1832
        %v1850 = vmul.f32 %v1752, %v1832
        %v1851 = vmul.f32 %v1753, %v1832
        %v1852 = vmul.f32 %v1754, %v1832
        %v1853 = vmul.f32 %v1755, %v1832
        %v1854 = vmul.f32 %v1756, %v1832
        %v1855 = vmul.f32 %v1757, %v1832
        %v1856 = vmul.f32 %v1758, %v1832
        %v1857 = vmul.f32 %v1759, %v1832
        %v1858 = vmul.f32 %v1760, %v1832
        %v1859 = vmul.f32 %v1761, %v1832
        %v1860 = vmul.f32 %v1762, %v1832
        %v1861 = vmul.f32 %v1763, %v1832
        %v1862 = vmul.f32 %v1764, %v1832
        %v1863 = vmul.f32 %v1765, %v1832
        %v1864 = vmul.f32 %v1766, %v1832
        %v1865 = vadd.f32 %v1703, %v1833
        %v1866 = vadd.f32 %v1704, %v1834
        %v1867 = vadd.f32 %v1705, %v1835
        %v1868 = vadd.f32 %v1706, %v1836
        %v1869 = vadd.f32 %v1707, %v1837
        %v1870 = vadd.f32 %v1708, %v1838
        %v1871 = vadd.f32 %v1709, %v1839
        %v1872 = vadd.f32 %v1710, %v1840
        %v1873 = vadd.f32 %v1711, %v1841
        %v1874 = vadd.f32 %v1712, %v1842
        %v1875 = vadd.f32 %v1713, %v1843
        %v1876 = vadd.f32 %v1714, %v1844
        %v1877 = vadd.f32 %v1715, %v1845
        %v1878 = vadd.f32 %v1716, %v1846
        %v1879 = vadd.f32 %v1717, %v1847
        %v1880 = vadd.f32 %v1718, %v1848
        %v1881 = vadd.f32 %v1719, %v1849
        %v1882 = vadd.f32 %v1720, %v1850
        %v1883 = vadd.f32 %v1721, %v1851
        %v1884 = vadd.f32 %v1722, %v1852
        %v1885 = vadd.f32 %v1723, %v1853
        %v1886 = vadd.f32 %v1724, %v1854
        %v1887 = vadd.f32 %v1725, %v1855
        %v1888 = vadd.f32 %v1726, %v1856
        %v1889 = vadd.f32 %v1727, %v1857
        %v1890 = vadd.f32 %v1728, %v1858
        %v1891 = vadd.f32 %v1729, %v1859
        %v1892 = vadd.f32 %v1730, %v1860
        %v1893 = vadd.f32 %v1731, %v1861
        %v1894 = vadd.f32 %v1732, %v1862
        %v1895 = vadd.f32 %v1733, %v1863
        %v1896 = vadd.f32 %v1734, %v1864
        %s1897 = scalar_lea.vmem [#allocation2], 64
        %v1898 = vld [vmem:[%s1897 + $0x8] sm:$0xff]
        %v1899 = vld [vmem:[%s1897 + $0x10] sm:$0xff]
        %v1900 = vld [vmem:[%s1897 + $0x28] sm:$0xff]
        %v1901 = vld [vmem:[%s1897 + $0x30] sm:$0xff]
        %v1902 = vld [vmem:[%s1897 + $0x48] sm:$0xff]
        %v1903 = vld [vmem:[%s1897 + $0x50] sm:$0xff]
        %v1904 = vld [vmem:[%s1897 + $0x68] sm:$0xff]
        %v1905 = vld [vmem:[%s1897 + $0x70] sm:$0xff]
        %v1906 = vld [vmem:[%s1897 + $0x88] sm:$0xff]
        %v1907 = vld [vmem:[%s1897 + $0x90] sm:$0xff]
        %v1908 = vld [vmem:[%s1897 + $0xa8] sm:$0xff]
        %v1909 = vld [vmem:[%s1897 + $0xb0] sm:$0xff]
        %v1910 = vld [vmem:[%s1897 + $0xc8] sm:$0xff]
        %v1911 = vld [vmem:[%s1897 + $0xd0] sm:$0xff]
        %v1912 = vld [vmem:[%s1897 + $0xe8] sm:$0xff]
        %v1913 = vld [vmem:[%s1897 + $0xf0] sm:$0xff]
        %v1914 = vld [vmem:[%s1897 + $0x108] sm:$0xff]
        %v1915 = vld [vmem:[%s1897 + $0x110] sm:$0xff]
        %v1916 = vld [vmem:[%s1897 + $0x128] sm:$0xff]
        %v1917 = vld [vmem:[%s1897 + $0x130] sm:$0xff]
        %v1918 = vld [vmem:[%s1897 + $0x148] sm:$0xff]
        %v1919 = vld [vmem:[%s1897 + $0x150] sm:$0xff]
        %v1920 = vld [vmem:[%s1897 + $0x168] sm:$0xff]
        %v1921 = vld [vmem:[%s1897 + $0x170] sm:$0xff]
        %v1922 = vld [vmem:[%s1897 + $0x188] sm:$0xff]
        %v1923 = vld [vmem:[%s1897 + $0x190] sm:$0xff]
        %v1924 = vld [vmem:[%s1897 + $0x1a8] sm:$0xff]
        %v1925 = vld [vmem:[%s1897 + $0x1b0] sm:$0xff]
        %v1926 = vld [vmem:[%s1897 + $0x1c8] sm:$0xff]
        %v1927 = vld [vmem:[%s1897 + $0x1d0] sm:$0xff]
        %v1928 = vld [vmem:[%s1897 + $0x1e8] sm:$0xff]
        %v1929 = vld [vmem:[%s1897 + $0x1f0] sm:$0xff]
        %v1930 = vperm.slane %v1539, 2
        %v1931 = vmul.f32 %v1898, %v1930
        %v1932 = vmul.f32 %v1899, %v1930
        %v1933 = vmul.f32 %v1900, %v1930
        %v1934 = vmul.f32 %v1901, %v1930
        %v1935 = vmul.f32 %v1902, %v1930
        %v1936 = vmul.f32 %v1903, %v1930
        %v1937 = vmul.f32 %v1904, %v1930
        %v1938 = vmul.f32 %v1905, %v1930
        %v1939 = vmul.f32 %v1906, %v1930
        %v1940 = vmul.f32 %v1907, %v1930
        %v1941 = vmul.f32 %v1908, %v1930
        %v1942 = vmul.f32 %v1909, %v1930
        %v1943 = vmul.f32 %v1910, %v1930
        %v1944 = vmul.f32 %v1911, %v1930
        %v1945 = vmul.f32 %v1912, %v1930
        %v1946 = vmul.f32 %v1913, %v1930
        %v1947 = vmul.f32 %v1914, %v1930
        %v1948 = vmul.f32 %v1915, %v1930
        %v1949 = vmul.f32 %v1916, %v1930
        %v1950 = vmul.f32 %v1917, %v1930
        %v1951 = vmul.f32 %v1918, %v1930
        %v1952 = vmul.f32 %v1919, %v1930
        %v1953 = vmul.f32 %v1920, %v1930
        %v1954 = vmul.f32 %v1921, %v1930
        %v1955 = vmul.f32 %v1922, %v1930
        %v1956 = vmul.f32 %v1923, %v1930
        %v1957 = vmul.f32 %v1924, %v1930
        %v1958 = vmul.f32 %v1925, %v1930
        %v1959 = vmul.f32 %v1926, %v1930
        %v1960 = vmul.f32 %v1927, %v1930
        %v1961 = vmul.f32 %v1928, %v1930
        %v1962 = vmul.f32 %v1929, %v1930
        %v1963 = vadd.f32 %v1800, %v1931
        %v1964 = vadd.f32 %v1801, %v1932
        %v1965 = vadd.f32 %v1802, %v1933
        %v1966 = vadd.f32 %v1803, %v1934
        %v1967 = vadd.f32 %v1804, %v1935
        %v1968 = vadd.f32 %v1805, %v1936
        %v1969 = vadd.f32 %v1806, %v1937
        %v1970 = vadd.f32 %v1807, %v1938
        %v1971 = vadd.f32 %v1808, %v1939
        %v1972 = vadd.f32 %v1809, %v1940
        %v1973 = vadd.f32 %v1810, %v1941
        %v1974 = vadd.f32 %v1811, %v1942
        %v1975 = vadd.f32 %v1812, %v1943
        %v1976 = vadd.f32 %v1813, %v1944
        %v1977 = vadd.f32 %v1814, %v1945
        %v1978 = vadd.f32 %v1815, %v1946
        %v1979 = vadd.f32 %v1816, %v1947
        %v1980 = vadd.f32 %v1817, %v1948
        %v1981 = vadd.f32 %v1818, %v1949
        %v1982 = vadd.f32 %v1819, %v1950
        %v1983 = vadd.f32 %v1820, %v1951
        %v1984 = vadd.f32 %v1821, %v1952
        %v1985 = vadd.f32 %v1822, %v1953
        %v1986 = vadd.f32 %v1823, %v1954
        %v1987 = vadd.f32 %v1824, %v1955
        %v1988 = vadd.f32 %v1825, %v1956
        %v1989 = vadd.f32 %v1826, %v1957
        %v1990 = vadd.f32 %v1827, %v1958
        %v1991 = vadd.f32 %v1828, %v1959
        %v1992 = vadd.f32 %v1829, %v1960
        %v1993 = vadd.f32 %v1830, %v1961
        %v1994 = vadd.f32 %v1831, %v1962
        %v1995 = vld [vmem:[%s1506 + $0x9] sm:$0xff]
        %v1996 = vld [vmem:[%s1506 + $0x11] sm:$0xff]
        %v1997 = vld [vmem:[%s1506 + $0x29] sm:$0xff]
        %v1998 = vld [vmem:[%s1506 + $0x31] sm:$0xff]
        %v1999 = vld [vmem:[%s1506 + $0x49] sm:$0xff]
        %v2000 = vld [vmem:[%s1506 + $0x51] sm:$0xff]
        %v2001 = vld [vmem:[%s1506 + $0x69] sm:$0xff]
        %v2002 = vld [vmem:[%s1506 + $0x71] sm:$0xff]
        %v2003 = vld [vmem:[%s1506 + $0x89] sm:$0xff]
        %v2004 = vld [vmem:[%s1506 + $0x91] sm:$0xff]
        %v2005 = vld [vmem:[%s1506 + $0xa9] sm:$0xff]
        %v2006 = vld [vmem:[%s1506 + $0xb1] sm:$0xff]
        %v2007 = vld [vmem:[%s1506 + $0xc9] sm:$0xff]
        %v2008 = vld [vmem:[%s1506 + $0xd1] sm:$0xff]
        %v2009 = vld [vmem:[%s1506 + $0xe9] sm:$0xff]
        %v2010 = vld [vmem:[%s1506 + $0xf1] sm:$0xff]
        %v2011 = vld [vmem:[%s1506 + $0x109] sm:$0xff]
        %v2012 = vld [vmem:[%s1506 + $0x111] sm:$0xff]
        %v2013 = vld [vmem:[%s1506 + $0x129] sm:$0xff]
        %v2014 = vld [vmem:[%s1506 + $0x131] sm:$0xff]
        %v2015 = vld [vmem:[%s1506 + $0x149] sm:$0xff]
        %v2016 = vld [vmem:[%s1506 + $0x151] sm:$0xff]
        %v2017 = vld [vmem:[%s1506 + $0x169] sm:$0xff]
        %v2018 = vld [vmem:[%s1506 + $0x171] sm:$0xff]
        %v2019 = vld [vmem:[%s1506 + $0x189] sm:$0xff]
        %v2020 = vld [vmem:[%s1506 + $0x191] sm:$0xff]
        %v2021 = vld [vmem:[%s1506 + $0x1a9] sm:$0xff]
        %v2022 = vld [vmem:[%s1506 + $0x1b1] sm:$0xff]
        %v2023 = vld [vmem:[%s1506 + $0x1c9] sm:$0xff]
        %v2024 = vld [vmem:[%s1506 + $0x1d1] sm:$0xff]
        %v2025 = vld [vmem:[%s1506 + $0x1e9] sm:$0xff]
        %v2026 = vld [vmem:[%s1506 + $0x1f1] sm:$0xff]
        %v2027 = vperm.slane %v1540, 2
        %v2028 = vmul.f32 %v1995, %v2027
        %v2029 = vmul.f32 %v1996, %v2027
        %v2030 = vmul.f32 %v1997, %v2027
        %v2031 = vmul.f32 %v1998, %v2027
        %v2032 = vmul.f32 %v1999, %v2027
        %v2033 = vmul.f32 %v2000, %v2027
        %v2034 = vmul.f32 %v2001, %v2027
        %v2035 = vmul.f32 %v2002, %v2027
        %v2036 = vmul.f32 %v2003, %v2027
        %v2037 = vmul.f32 %v2004, %v2027
        %v2038 = vmul.f32 %v2005, %v2027
        %v2039 = vmul.f32 %v2006, %v2027
        %v2040 = vmul.f32 %v2007, %v2027
        %v2041 = vmul.f32 %v2008, %v2027
        %v2042 = vmul.f32 %v2009, %v2027
        %v2043 = vmul.f32 %v2010, %v2027
        %v2044 = vmul.f32 %v2011, %v2027
        %v2045 = vmul.f32 %v2012, %v2027
        %v2046 = vmul.f32 %v2013, %v2027
        %v2047 = vmul.f32 %v2014, %v2027
        %v2048 = vmul.f32 %v2015, %v2027
        %v2049 = vmul.f32 %v2016, %v2027
        %v2050 = vmul.f32 %v2017, %v2027
        %v2051 = vmul.f32 %v2018, %v2027
        %v2052 = vmul.f32 %v2019, %v2027
        %v2053 = vmul.f32 %v2020, %v2027
        %v2054 = vmul.f32 %v2021, %v2027
        %v2055 = vmul.f32 %v2022, %v2027
        %v2056 = vmul.f32 %v2023, %v2027
        %v2057 = vmul.f32 %v2024, %v2027
        %v2058 = vmul.f32 %v2025, %v2027
        %v2059 = vmul.f32 %v2026, %v2027
        %v2060 = vadd.f32 %v1865, %v2028
        %v2061 = vadd.f32 %v1866, %v2029
        %v2062 = vadd.f32 %v1867, %v2030
        %v2063 = vadd.f32 %v1868, %v2031
        %v2064 = vadd.f32 %v1869, %v2032
        %v2065 = vadd.f32 %v1870, %v2033
        %v2066 = vadd.f32 %v1871, %v2034
        %v2067 = vadd.f32 %v1872, %v2035
        %v2068 = vadd.f32 %v1873, %v2036
        %v2069 = vadd.f32 %v1874, %v2037
        %v2070 = vadd.f32 %v1875, %v2038
        %v2071 = vadd.f32 %v1876, %v2039
        %v2072 = vadd.f32 %v1877, %v2040
        %v2073 = vadd.f32 %v1878, %v2041
        %v2074 = vadd.f32 %v1879, %v2042
        %v2075 = vadd.f32 %v1880, %v2043
        %v2076 = vadd.f32 %v1881, %v2044
        %v2077 = vadd.f32 %v1882, %v2045
        %v2078 = vadd.f32 %v1883, %v2046
        %v2079 = vadd.f32 %v1884, %v2047
        %v2080 = vadd.f32 %v1885, %v2048
        %v2081 = vadd.f32 %v1886, %v2049
        %v2082 = vadd.f32 %v1887, %v2050
        %v2083 = vadd.f32 %v1888, %v2051
        %v2084 = vadd.f32 %v1889, %v2052
        %v2085 = vadd.f32 %v1890, %v2053
        %v2086 = vadd.f32 %v1891, %v2054
        %v2087 = vadd.f32 %v1892, %v2055
        %v2088 = vadd.f32 %v1893, %v2056
        %v2089 = vadd.f32 %v1894, %v2057
        %v2090 = vadd.f32 %v1895, %v2058
        %v2091 = vadd.f32 %v1896, %v2059
        %v2092 = vld [vmem:[%s4] sm:$0x1]
        %v2094 = vperm.slane %v2092, 0
        %v2096 = vadd.f32 %v1963, %v2094
        %v2097 = vadd.f32 %v1964, %v2094
        %v2098 = vadd.f32 %v1965, %v2094
        %v2099 = vadd.f32 %v1966, %v2094
        %v2100 = vadd.f32 %v1967, %v2094
        %v2101 = vadd.f32 %v1968, %v2094
        %v2102 = vadd.f32 %v1969, %v2094
        %v2103 = vadd.f32 %v1970, %v2094
        %v2104 = vadd.f32 %v1971, %v2094
        %v2105 = vadd.f32 %v1972, %v2094
        %v2106 = vadd.f32 %v1973, %v2094
        %v2107 = vadd.f32 %v1974, %v2094
        %v2108 = vadd.f32 %v1975, %v2094
        %v2109 = vadd.f32 %v1976, %v2094
        %v2110 = vadd.f32 %v1977, %v2094
        %v2111 = vadd.f32 %v1978, %v2094
        %v2112 = vadd.f32 %v1979, %v2094
        %v2113 = vadd.f32 %v1980, %v2094
        %v2114 = vadd.f32 %v1981, %v2094
        %v2115 = vadd.f32 %v1982, %v2094
        %v2116 = vadd.f32 %v1983, %v2094
        %v2117 = vadd.f32 %v1984, %v2094
        %v2118 = vadd.f32 %v1985, %v2094
        %v2119 = vadd.f32 %v1986, %v2094
        %v2120 = vadd.f32 %v1987, %v2094
        %v2121 = vadd.f32 %v1988, %v2094
        %v2122 = vadd.f32 %v1989, %v2094
        %v2123 = vadd.f32 %v1990, %v2094
        %v2124 = vadd.f32 %v1991, %v2094
        %v2125 = vadd.f32 %v1992, %v2094
        %v2126 = vadd.f32 %v1993, %v2094
        %v2127 = vadd.f32 %v1994, %v2094
        %v2128 = vld [vmem:[%s6] sm:$0x1]
        %v2130 = vperm.slane %v2128, 0
        %v2132 = vadd.f32 %v2060, %v2130
        %v2133 = vadd.f32 %v2061, %v2130
        %v2134 = vadd.f32 %v2062, %v2130
        %v2135 = vadd.f32 %v2063, %v2130
        %v2136 = vadd.f32 %v2064, %v2130
        %v2137 = vadd.f32 %v2065, %v2130
        %v2138 = vadd.f32 %v2066, %v2130
        %v2139 = vadd.f32 %v2067, %v2130
        %v2140 = vadd.f32 %v2068, %v2130
        %v2141 = vadd.f32 %v2069, %v2130
        %v2142 = vadd.f32 %v2070, %v2130
        %v2143 = vadd.f32 %v2071, %v2130
        %v2144 = vadd.f32 %v2072, %v2130
        %v2145 = vadd.f32 %v2073, %v2130
        %v2146 = vadd.f32 %v2074, %v2130
        %v2147 = vadd.f32 %v2075, %v2130
        %v2148 = vadd.f32 %v2076, %v2130
        %v2149 = vadd.f32 %v2077, %v2130
        %v2150 = vadd.f32 %v2078, %v2130
        %v2151 = vadd.f32 %v2079, %v2130
        %v2152 = vadd.f32 %v2080, %v2130
        %v2153 = vadd.f32 %v2081, %v2130
        %v2154 = vadd.f32 %v2082, %v2130
        %v2155 = vadd.f32 %v2083, %v2130
        %v2156 = vadd.f32 %v2084, %v2130
        %v2157 = vadd.f32 %v2085, %v2130
        %v2158 = vadd.f32 %v2086, %v2130
        %v2159 = vadd.f32 %v2087, %v2130
        %v2160 = vadd.f32 %v2088, %v2130
        %v2161 = vadd.f32 %v2089, %v2130
        %v2162 = vadd.f32 %v2090, %v2130
        %v2163 = vadd.f32 %v2091, %v2130
        %v2164 = vmul.f32 %v2096, %v2132
        %v2165 = vmul.f32 %v2097, %v2133
        %v2166 = vmul.f32 %v2098, %v2134
        %v2167 = vmul.f32 %v2099, %v2135
        %v2168 = vmul.f32 %v2100, %v2136
        %v2169 = vmul.f32 %v2101, %v2137
        %v2170 = vmul.f32 %v2102, %v2138
        %v2171 = vmul.f32 %v2103, %v2139
        %v2172 = vmul.f32 %v2104, %v2140
        %v2173 = vmul.f32 %v2105, %v2141
        %v2174 = vmul.f32 %v2106, %v2142
        %v2175 = vmul.f32 %v2107, %v2143
        %v2176 = vmul.f32 %v2108, %v2144
        %v2177 = vmul.f32 %v2109, %v2145
        %v2178 = vmul.f32 %v2110, %v2146
        %v2179 = vmul.f32 %v2111, %v2147
        %v2180 = vmul.f32 %v2112, %v2148
        %v2181 = vmul.f32 %v2113, %v2149
        %v2182 = vmul.f32 %v2114, %v2150
        %v2183 = vmul.f32 %v2115, %v2151
        %v2184 = vmul.f32 %v2116, %v2152
        %v2185 = vmul.f32 %v2117, %v2153
        %v2186 = vmul.f32 %v2118, %v2154
        %v2187 = vmul.f32 %v2119, %v2155
        %v2188 = vmul.f32 %v2120, %v2156
        %v2189 = vmul.f32 %v2121, %v2157
        %v2190 = vmul.f32 %v2122, %v2158
        %v2191 = vmul.f32 %v2123, %v2159
        %v2192 = vmul.f32 %v2124, %v2160
        %v2193 = vmul.f32 %v2125, %v2161
        %v2194 = vmul.f32 %v2126, %v2162
        %v2195 = vmul.f32 %v2127, %v2163
        %v2196 = vadd.f32 %v1474, %v2164
        %v2197 = vadd.f32 %v1475, %v2165
        %v2198 = vadd.f32 %v1476, %v2166
        %v2199 = vadd.f32 %v1477, %v2167
        %v2200 = vadd.f32 %v1478, %v2168
        %v2201 = vadd.f32 %v1479, %v2169
        %v2202 = vadd.f32 %v1480, %v2170
        %v2203 = vadd.f32 %v1481, %v2171
        %v2204 = vadd.f32 %v1482, %v2172
        %v2205 = vadd.f32 %v1483, %v2173
        %v2206 = vadd.f32 %v1484, %v2174
        %v2207 = vadd.f32 %v1485, %v2175
        %v2208 = vadd.f32 %v1486, %v2176
        %v2209 = vadd.f32 %v1487, %v2177
        %v2210 = vadd.f32 %v1488, %v2178
        %v2211 = vadd.f32 %v1489, %v2179
        %v2212 = vadd.f32 %v1490, %v2180
        %v2213 = vadd.f32 %v1491, %v2181
        %v2214 = vadd.f32 %v1492, %v2182
        %v2215 = vadd.f32 %v1493, %v2183
        %v2216 = vadd.f32 %v1494, %v2184
        %v2217 = vadd.f32 %v1495, %v2185
        %v2218 = vadd.f32 %v1496, %v2186
        %v2219 = vadd.f32 %v1497, %v2187
        %v2220 = vadd.f32 %v1498, %v2188
        %v2221 = vadd.f32 %v1499, %v2189
        %v2222 = vadd.f32 %v1500, %v2190
        %v2223 = vadd.f32 %v1501, %v2191
        %v2224 = vadd.f32 %v1502, %v2192
        %v2225 = vadd.f32 %v1503, %v2193
        %v2226 = vadd.f32 %v1504, %v2194
        %v2227 = vadd.f32 %v1505, %v2195
        %s2228 = scalar_lea.vmem [#allocation3], 32
        %2229 = vst.msk [vmem:[%s2228 + $0x8] sm:$0xff] %vm615, %v2196
        %2230 = vst.msk [vmem:[%s2228 + $0x10] sm:$0xff] %vm615, %v2197
        %2231 = vst.msk [vmem:[%s2228 + $0x28] sm:$0xff] %vm615, %v2198
        %2232 = vst.msk [vmem:[%s2228 + $0x30] sm:$0xff] %vm615, %v2199
        %2233 = vst.msk [vmem:[%s2228 + $0x48] sm:$0xff] %vm615, %v2200
        %2234 = vst.msk [vmem:[%s2228 + $0x50] sm:$0xff] %vm615, %v2201
        %2235 = vst.msk [vmem:[%s2228 + $0x68] sm:$0xff] %vm615, %v2202
        %2236 = vst.msk [vmem:[%s2228 + $0x70] sm:$0xff] %vm615, %v2203
        %2237 = vst.msk [vmem:[%s2228 + $0x88] sm:$0xff] %vm615, %v2204
        %2238 = vst.msk [vmem:[%s2228 + $0x90] sm:$0xff] %vm615, %v2205
        %2239 = vst.msk [vmem:[%s2228 + $0xa8] sm:$0xff] %vm615, %v2206
        %2240 = vst.msk [vmem:[%s2228 + $0xb0] sm:$0xff] %vm615, %v2207
        %2241 = vst.msk [vmem:[%s2228 + $0xc8] sm:$0xff] %vm615, %v2208
        %2242 = vst.msk [vmem:[%s2228 + $0xd0] sm:$0xff] %vm615, %v2209
        %2243 = vst.msk [vmem:[%s2228 + $0xe8] sm:$0xff] %vm615, %v2210
        %2244 = vst.msk [vmem:[%s2228 + $0xf0] sm:$0xff] %vm615, %v2211
        %2245 = vst.msk [vmem:[%s2228 + $0x108] sm:$0xff] %vm615, %v2212
        %2246 = vst.msk [vmem:[%s2228 + $0x110] sm:$0xff] %vm615, %v2213
        %2247 = vst.msk [vmem:[%s2228 + $0x128] sm:$0xff] %vm615, %v2214
        %2248 = vst.msk [vmem:[%s2228 + $0x130] sm:$0xff] %vm615, %v2215
        %2249 = vst.msk [vmem:[%s2228 + $0x148] sm:$0xff] %vm615, %v2216
        %2250 = vst.msk [vmem:[%s2228 + $0x150] sm:$0xff] %vm615, %v2217
        %2251 = vst.msk [vmem:[%s2228 + $0x168] sm:$0xff] %vm615, %v2218
        %2252 = vst.msk [vmem:[%s2228 + $0x170] sm:$0xff] %vm615, %v2219
        %2253 = vst.msk [vmem:[%s2228 + $0x188] sm:$0xff] %vm615, %v2220
        %2254 = vst.msk [vmem:[%s2228 + $0x190] sm:$0xff] %vm615, %v2221
        %2255 = vst.msk [vmem:[%s2228 + $0x1a8] sm:$0xff] %vm615, %v2222
        %2256 = vst.msk [vmem:[%s2228 + $0x1b0] sm:$0xff] %vm615, %v2223
        %2257 = vst.msk [vmem:[%s2228 + $0x1c8] sm:$0xff] %vm615, %v2224
        %2258 = vst.msk [vmem:[%s2228 + $0x1d0] sm:$0xff] %vm615, %v2225
        %2259 = vst.msk [vmem:[%s2228 + $0x1e8] sm:$0xff] %vm615, %v2226
        %2260 = vst.msk [vmem:[%s2228 + $0x1f0] sm:$0xff] %vm615, %v2227
        %v2261 = vld [vmem:[#allocation3 + $0x7] sm:$0xff]
        %v2262 = vld [vmem:[#allocation3 + $0xf] sm:$0xff]
        %v2263 = vld [vmem:[#allocation3 + $0x27] sm:$0xff]
        %v2264 = vld [vmem:[#allocation3 + $0x2f] sm:$0xff]
        %v2265 = vld [vmem:[#allocation3 + $0x47] sm:$0xff]
        %v2266 = vld [vmem:[#allocation3 + $0x4f] sm:$0xff]
        %v2267 = vld [vmem:[#allocation3 + $0x67] sm:$0xff]
        %v2268 = vld [vmem:[#allocation3 + $0x6f] sm:$0xff]
        %v2269 = vld [vmem:[#allocation3 + $0x87] sm:$0xff]
        %v2270 = vld [vmem:[#allocation3 + $0x8f] sm:$0xff]
        %v2271 = vld [vmem:[#allocation3 + $0xa7] sm:$0xff]
        %v2272 = vld [vmem:[#allocation3 + $0xaf] sm:$0xff]
        %v2273 = vld [vmem:[#allocation3 + $0xc7] sm:$0xff]
        %v2274 = vld [vmem:[#allocation3 + $0xcf] sm:$0xff]
        %v2275 = vld [vmem:[#allocation3 + $0xe7] sm:$0xff]
        %v2276 = vld [vmem:[#allocation3 + $0xef] sm:$0xff]
        %v2277 = vld [vmem:[#allocation3 + $0x107] sm:$0xff]
        %v2278 = vld [vmem:[#allocation3 + $0x10f] sm:$0xff]
        %v2279 = vld [vmem:[#allocation3 + $0x127] sm:$0xff]
        %v2280 = vld [vmem:[#allocation3 + $0x12f] sm:$0xff]
        %v2281 = vld [vmem:[#allocation3 + $0x147] sm:$0xff]
        %v2282 = vld [vmem:[#allocation3 + $0x14f] sm:$0xff]
        %v2283 = vld [vmem:[#allocation3 + $0x167] sm:$0xff]
        %v2284 = vld [vmem:[#allocation3 + $0x16f] sm:$0xff]
        %v2285 = vld [vmem:[#allocation3 + $0x187] sm:$0xff]
        %v2286 = vld [vmem:[#allocation3 + $0x18f] sm:$0xff]
        %v2287 = vld [vmem:[#allocation3 + $0x1a7] sm:$0xff]
        %v2288 = vld [vmem:[#allocation3 + $0x1af] sm:$0xff]
        %v2289 = vld [vmem:[#allocation3 + $0x1c7] sm:$0xff]
        %v2290 = vld [vmem:[#allocation3 + $0x1cf] sm:$0xff]
        %v2291 = vld [vmem:[#allocation3 + $0x1e7] sm:$0xff]
        %v2292 = vld [vmem:[#allocation3 + $0x1ef] sm:$0xff]
        %2293 = vst.msk [vmem:[#allocation4] sm:$0xff] %vm615, %v2261
        %2294 = vst.msk [vmem:[#allocation4 + $0x8] sm:$0xff] %vm615, %v2262
        %2295 = vst.msk [vmem:[#allocation4 + $0x10] sm:$0xff] %vm615, %v2263
        %2296 = vst.msk [vmem:[#allocation4 + $0x18] sm:$0xff] %vm615, %v2264
        %2297 = vst.msk [vmem:[#allocation4 + $0x20] sm:$0xff] %vm615, %v2265
        %2298 = vst.msk [vmem:[#allocation4 + $0x28] sm:$0xff] %vm615, %v2266
        %2299 = vst.msk [vmem:[#allocation4 + $0x30] sm:$0xff] %vm615, %v2267
        %2300 = vst.msk [vmem:[#allocation4 + $0x38] sm:$0xff] %vm615, %v2268
        %2301 = vst.msk [vmem:[#allocation4 + $0x40] sm:$0xff] %vm615, %v2269
        %2302 = vst.msk [vmem:[#allocation4 + $0x48] sm:$0xff] %vm615, %v2270
        %2303 = vst.msk [vmem:[#allocation4 + $0x50] sm:$0xff] %vm615, %v2271
        %2304 = vst.msk [vmem:[#allocation4 + $0x58] sm:$0xff] %vm615, %v2272
        %2305 = vst.msk [vmem:[#allocation4 + $0x60] sm:$0xff] %vm615, %v2273
        %2306 = vst.msk [vmem:[#allocation4 + $0x68] sm:$0xff] %vm615, %v2274
        %2307 = vst.msk [vmem:[#allocation4 + $0x70] sm:$0xff] %vm615, %v2275
        %2308 = vst.msk [vmem:[#allocation4 + $0x78] sm:$0xff] %vm615, %v2276
        %2309 = vst.msk [vmem:[#allocation4 + $0x80] sm:$0xff] %vm615, %v2277
        %2310 = vst.msk [vmem:[#allocation4 + $0x88] sm:$0xff] %vm615, %v2278
        %2311 = vst.msk [vmem:[#allocation4 + $0x90] sm:$0xff] %vm615, %v2279
        %2312 = vst.msk [vmem:[#allocation4 + $0x98] sm:$0xff] %vm615, %v2280
        %2313 = vst.msk [vmem:[#allocation4 + $0xa0] sm:$0xff] %vm615, %v2281
        %2314 = vst.msk [vmem:[#allocation4 + $0xa8] sm:$0xff] %vm615, %v2282
        %2315 = vst.msk [vmem:[#allocation4 + $0xb0] sm:$0xff] %vm615, %v2283
        %2316 = vst.msk [vmem:[#allocation4 + $0xb8] sm:$0xff] %vm615, %v2284
        %2317 = vst.msk [vmem:[#allocation4 + $0xc0] sm:$0xff] %vm615, %v2285
        %2318 = vst.msk [vmem:[#allocation4 + $0xc8] sm:$0xff] %vm615, %v2286
        %2319 = vst.msk [vmem:[#allocation4 + $0xd0] sm:$0xff] %vm615, %v2287
        %2320 = vst.msk [vmem:[#allocation4 + $0xd8] sm:$0xff] %vm615, %v2288
        %2321 = vst.msk [vmem:[#allocation4 + $0xe0] sm:$0xff] %vm615, %v2289
        %2322 = vst.msk [vmem:[#allocation4 + $0xe8] sm:$0xff] %vm615, %v2290
        %2323 = vst.msk [vmem:[#allocation4 + $0xf0] sm:$0xff] %vm615, %v2291
        %2324 = vst.msk [vmem:[#allocation4 + $0xf8] sm:$0xff] %vm615, %v2292
        %v2325 = vld [vmem:[#allocation3 + $0x8] sm:$0xff]
        %v2326 = vld [vmem:[#allocation3 + $0x10] sm:$0xff]
        %v2327 = vld [vmem:[#allocation3 + $0x28] sm:$0xff]
        %v2328 = vld [vmem:[#allocation3 + $0x30] sm:$0xff]
        %v2329 = vld [vmem:[#allocation3 + $0x48] sm:$0xff]
        %v2330 = vld [vmem:[#allocation3 + $0x50] sm:$0xff]
        %v2331 = vld [vmem:[#allocation3 + $0x68] sm:$0xff]
        %v2332 = vld [vmem:[#allocation3 + $0x70] sm:$0xff]
        %v2333 = vld [vmem:[#allocation3 + $0x88] sm:$0xff]
        %v2334 = vld [vmem:[#allocation3 + $0x90] sm:$0xff]
        %v2335 = vld [vmem:[#allocation3 + $0xa8] sm:$0xff]
        %v2336 = vld [vmem:[#allocation3 + $0xb0] sm:$0xff]
        %v2337 = vld [vmem:[#allocation3 + $0xc8] sm:$0xff]
        %v2338 = vld [vmem:[#allocation3 + $0xd0] sm:$0xff]
        %v2339 = vld [vmem:[#allocation3 + $0xe8] sm:$0xff]
        %v2340 = vld [vmem:[#allocation3 + $0xf0] sm:$0xff]
        %v2341 = vld [vmem:[#allocation3 + $0x108] sm:$0xff]
        %v2342 = vld [vmem:[#allocation3 + $0x110] sm:$0xff]
        %v2343 = vld [vmem:[#allocation3 + $0x128] sm:$0xff]
        %v2344 = vld [vmem:[#allocation3 + $0x130] sm:$0xff]
        %v2345 = vld [vmem:[#allocation3 + $0x148] sm:$0xff]
        %v2346 = vld [vmem:[#allocation3 + $0x150] sm:$0xff]
        %v2347 = vld [vmem:[#allocation3 + $0x168] sm:$0xff]
        %v2348 = vld [vmem:[#allocation3 + $0x170] sm:$0xff]
        %v2349 = vld [vmem:[#allocation3 + $0x188] sm:$0xff]
        %v2350 = vld [vmem:[#allocation3 + $0x190] sm:$0xff]
        %v2351 = vld [vmem:[#allocation3 + $0x1a8] sm:$0xff]
        %v2352 = vld [vmem:[#allocation3 + $0x1b0] sm:$0xff]
        %v2353 = vld [vmem:[#allocation3 + $0x1c8] sm:$0xff]
        %v2354 = vld [vmem:[#allocation3 + $0x1d0] sm:$0xff]
        %v2355 = vld [vmem:[#allocation3 + $0x1e8] sm:$0xff]
        %v2356 = vld [vmem:[#allocation3 + $0x1f0] sm:$0xff]
        %2389 = vrot.lane.b32.xlu0 %v2325, 8
        %v2390 = vpop.permute.xlu0 %2389
        %2391 = vrot.lane.b32.xlu0 %v2326, 8
        %v2392 = vpop.permute.xlu0 %2391
        %2393 = vrot.lane.b32.xlu0 %v2327, 8
        %v2394 = vpop.permute.xlu0 %2393
        %2395 = vrot.lane.b32.xlu0 %v2328, 8
        %v2396 = vpop.permute.xlu0 %2395
        %2397 = vrot.lane.b32.xlu0 %v2329, 8
        %v2398 = vpop.permute.xlu0 %2397
        %2399 = vrot.lane.b32.xlu0 %v2330, 8
        %v2400 = vpop.permute.xlu0 %2399
        %2401 = vrot.lane.b32.xlu0 %v2331, 8
        %v2402 = vpop.permute.xlu0 %2401
        %2403 = vrot.lane.b32.xlu0 %v2332, 8
        %v2404 = vpop.permute.xlu0 %2403
        %2405 = vrot.lane.b32.xlu0 %v2333, 8
        %v2406 = vpop.permute.xlu0 %2405
        %2407 = vrot.lane.b32.xlu0 %v2334, 8
        %v2408 = vpop.permute.xlu0 %2407
        %2409 = vrot.lane.b32.xlu0 %v2335, 8
        %v2410 = vpop.permute.xlu0 %2409
        %2411 = vrot.lane.b32.xlu0 %v2336, 8
        %v2412 = vpop.permute.xlu0 %2411
        %2413 = vrot.lane.b32.xlu0 %v2337, 8
        %v2414 = vpop.permute.xlu0 %2413
        %2415 = vrot.lane.b32.xlu0 %v2338, 8
        %v2416 = vpop.permute.xlu0 %2415
        %2417 = vrot.lane.b32.xlu0 %v2339, 8
        %v2418 = vpop.permute.xlu0 %2417
        %2419 = vrot.lane.b32.xlu0 %v2340, 8
        %v2420 = vpop.permute.xlu0 %2419
        %2421 = vrot.lane.b32.xlu0 %v2341, 8
        %v2422 = vpop.permute.xlu0 %2421
        %2423 = vrot.lane.b32.xlu0 %v2342, 8
        %v2424 = vpop.permute.xlu0 %2423
        %2425 = vrot.lane.b32.xlu0 %v2343, 8
        %v2426 = vpop.permute.xlu0 %2425
        %2427 = vrot.lane.b32.xlu0 %v2344, 8
        %v2428 = vpop.permute.xlu0 %2427
        %2429 = vrot.lane.b32.xlu0 %v2345, 8
        %v2430 = vpop.permute.xlu0 %2429
        %2431 = vrot.lane.b32.xlu0 %v2346, 8
        %v2432 = vpop.permute.xlu0 %2431
        %2433 = vrot.lane.b32.xlu0 %v2347, 8
        %v2434 = vpop.permute.xlu0 %2433
        %2435 = vrot.lane.b32.xlu0 %v2348, 8
        %v2436 = vpop.permute.xlu0 %2435
        %2437 = vrot.lane.b32.xlu0 %v2349, 8
        %v2438 = vpop.permute.xlu0 %2437
        %2439 = vrot.lane.b32.xlu0 %v2350, 8
        %v2440 = vpop.permute.xlu0 %2439
        %2441 = vrot.lane.b32.xlu0 %v2351, 8
        %v2442 = vpop.permute.xlu0 %2441
        %2443 = vrot.lane.b32.xlu0 %v2352, 8
        %v2444 = vpop.permute.xlu0 %2443
        %2445 = vrot.lane.b32.xlu0 %v2353, 8
        %v2446 = vpop.permute.xlu0 %2445
        %2447 = vrot.lane.b32.xlu0 %v2354, 8
        %v2448 = vpop.permute.xlu0 %2447
        %2449 = vrot.lane.b32.xlu0 %v2355, 8
        %v2450 = vpop.permute.xlu0 %2449
        %2451 = vrot.lane.b32.xlu0 %v2356, 8
        %v2452 = vpop.permute.xlu0 %2451
        %vm2485 = vcmask 130112
        %2486 = vst.msk [vmem:[#allocation4] sm:$0xff] %vm2485, %v2390
        %2487 = vst.msk [vmem:[#allocation4 + $0x8] sm:$0xff] %vm2485, %v2392
        %2488 = vst.msk [vmem:[#allocation4 + $0x10] sm:$0xff] %vm2485, %v2394
        %2489 = vst.msk [vmem:[#allocation4 + $0x18] sm:$0xff] %vm2485, %v2396
        %2490 = vst.msk [vmem:[#allocation4 + $0x20] sm:$0xff] %vm2485, %v2398
        %2491 = vst.msk [vmem:[#allocation4 + $0x28] sm:$0xff] %vm2485, %v2400
        %2492 = vst.msk [vmem:[#allocation4 + $0x30] sm:$0xff] %vm2485, %v2402
        %2493 = vst.msk [vmem:[#allocation4 + $0x38] sm:$0xff] %vm2485, %v2404
        %2494 = vst.msk [vmem:[#allocation4 + $0x40] sm:$0xff] %vm2485, %v2406
        %2495 = vst.msk [vmem:[#allocation4 + $0x48] sm:$0xff] %vm2485, %v2408
        %2496 = vst.msk [vmem:[#allocation4 + $0x50] sm:$0xff] %vm2485, %v2410
        %2497 = vst.msk [vmem:[#allocation4 + $0x58] sm:$0xff] %vm2485, %v2412
        %2498 = vst.msk [vmem:[#allocation4 + $0x60] sm:$0xff] %vm2485, %v2414
        %2499 = vst.msk [vmem:[#allocation4 + $0x68] sm:$0xff] %vm2485, %v2416
        %2500 = vst.msk [vmem:[#allocation4 + $0x70] sm:$0xff] %vm2485, %v2418
        %2501 = vst.msk [vmem:[#allocation4 + $0x78] sm:$0xff] %vm2485, %v2420
        %2502 = vst.msk [vmem:[#allocation4 + $0x80] sm:$0xff] %vm2485, %v2422
        %2503 = vst.msk [vmem:[#allocation4 + $0x88] sm:$0xff] %vm2485, %v2424
        %2504 = vst.msk [vmem:[#allocation4 + $0x90] sm:$0xff] %vm2485, %v2426
        %2505 = vst.msk [vmem:[#allocation4 + $0x98] sm:$0xff] %vm2485, %v2428
        %2506 = vst.msk [vmem:[#allocation4 + $0xa0] sm:$0xff] %vm2485, %v2430
        %2507 = vst.msk [vmem:[#allocation4 + $0xa8] sm:$0xff] %vm2485, %v2432
        %2508 = vst.msk [vmem:[#allocation4 + $0xb0] sm:$0xff] %vm2485, %v2434
        %2509 = vst.msk [vmem:[#allocation4 + $0xb8] sm:$0xff] %vm2485, %v2436
        %2510 = vst.msk [vmem:[#allocation4 + $0xc0] sm:$0xff] %vm2485, %v2438
        %2511 = vst.msk [vmem:[#allocation4 + $0xc8] sm:$0xff] %vm2485, %v2440
        %2512 = vst.msk [vmem:[#allocation4 + $0xd0] sm:$0xff] %vm2485, %v2442
        %2513 = vst.msk [vmem:[#allocation4 + $0xd8] sm:$0xff] %vm2485, %v2444
        %2514 = vst.msk [vmem:[#allocation4 + $0xe0] sm:$0xff] %vm2485, %v2446
        %2515 = vst.msk [vmem:[#allocation4 + $0xe8] sm:$0xff] %vm2485, %v2448
        %2516 = vst.msk [vmem:[#allocation4 + $0xf0] sm:$0xff] %vm2485, %v2450
        %2517 = vst.msk [vmem:[#allocation4 + $0xf8] sm:$0xff] %vm2485, %v2452
        %v2518 = vld [vmem:[#allocation3 + $0x9] sm:$0xff]
        %v2519 = vld [vmem:[#allocation3 + $0x11] sm:$0xff]
        %v2520 = vld [vmem:[#allocation3 + $0x29] sm:$0xff]
        %v2521 = vld [vmem:[#allocation3 + $0x31] sm:$0xff]
        %v2522 = vld [vmem:[#allocation3 + $0x49] sm:$0xff]
        %v2523 = vld [vmem:[#allocation3 + $0x51] sm:$0xff]
        %v2524 = vld [vmem:[#allocation3 + $0x69] sm:$0xff]
        %v2525 = vld [vmem:[#allocation3 + $0x71] sm:$0xff]
        %v2526 = vld [vmem:[#allocation3 + $0x89] sm:$0xff]
        %v2527 = vld [vmem:[#allocation3 + $0x91] sm:$0xff]
        %v2528 = vld [vmem:[#allocation3 + $0xa9] sm:$0xff]
        %v2529 = vld [vmem:[#allocation3 + $0xb1] sm:$0xff]
        %v2530 = vld [vmem:[#allocation3 + $0xc9] sm:$0xff]
        %v2531 = vld [vmem:[#allocation3 + $0xd1] sm:$0xff]
        %v2532 = vld [vmem:[#allocation3 + $0xe9] sm:$0xff]
        %v2533 = vld [vmem:[#allocation3 + $0xf1] sm:$0xff]
        %v2534 = vld [vmem:[#allocation3 + $0x109] sm:$0xff]
        %v2535 = vld [vmem:[#allocation3 + $0x111] sm:$0xff]
        %v2536 = vld [vmem:[#allocation3 + $0x129] sm:$0xff]
        %v2537 = vld [vmem:[#allocation3 + $0x131] sm:$0xff]
        %v2538 = vld [vmem:[#allocation3 + $0x149] sm:$0xff]
        %v2539 = vld [vmem:[#allocation3 + $0x151] sm:$0xff]
        %v2540 = vld [vmem:[#allocation3 + $0x169] sm:$0xff]
        %v2541 = vld [vmem:[#allocation3 + $0x171] sm:$0xff]
        %v2542 = vld [vmem:[#allocation3 + $0x189] sm:$0xff]
        %v2543 = vld [vmem:[#allocation3 + $0x191] sm:$0xff]
        %v2544 = vld [vmem:[#allocation3 + $0x1a9] sm:$0xff]
        %v2545 = vld [vmem:[#allocation3 + $0x1b1] sm:$0xff]
        %v2546 = vld [vmem:[#allocation3 + $0x1c9] sm:$0xff]
        %v2547 = vld [vmem:[#allocation3 + $0x1d1] sm:$0xff]
        %v2548 = vld [vmem:[#allocation3 + $0x1e9] sm:$0xff]
        %v2549 = vld [vmem:[#allocation3 + $0x1f1] sm:$0xff]
        %2582 = vrot.lane.b32.xlu0 %v2518, 16
        %v2583 = vpop.permute.xlu0 %2582
        %2584 = vrot.lane.b32.xlu0 %v2519, 16
        %v2585 = vpop.permute.xlu0 %2584
        %2586 = vrot.lane.b32.xlu0 %v2520, 16
        %v2587 = vpop.permute.xlu0 %2586
        %2588 = vrot.lane.b32.xlu0 %v2521, 16
        %v2589 = vpop.permute.xlu0 %2588
        %2590 = vrot.lane.b32.xlu0 %v2522, 16
        %v2591 = vpop.permute.xlu0 %2590
        %2592 = vrot.lane.b32.xlu0 %v2523, 16
        %v2593 = vpop.permute.xlu0 %2592
        %2594 = vrot.lane.b32.xlu0 %v2524, 16
        %v2595 = vpop.permute.xlu0 %2594
        %2596 = vrot.lane.b32.xlu0 %v2525, 16
        %v2597 = vpop.permute.xlu0 %2596
        %2598 = vrot.lane.b32.xlu0 %v2526, 16
        %v2599 = vpop.permute.xlu0 %2598
        %2600 = vrot.lane.b32.xlu0 %v2527, 16
        %v2601 = vpop.permute.xlu0 %2600
        %2602 = vrot.lane.b32.xlu0 %v2528, 16
        %v2603 = vpop.permute.xlu0 %2602
        %2604 = vrot.lane.b32.xlu0 %v2529, 16
        %v2605 = vpop.permute.xlu0 %2604
        %2606 = vrot.lane.b32.xlu0 %v2530, 16
        %v2607 = vpop.permute.xlu0 %2606
        %2608 = vrot.lane.b32.xlu0 %v2531, 16
        %v2609 = vpop.permute.xlu0 %2608
        %2610 = vrot.lane.b32.xlu0 %v2532, 16
        %v2611 = vpop.permute.xlu0 %2610
        %2612 = vrot.lane.b32.xlu0 %v2533, 16
        %v2613 = vpop.permute.xlu0 %2612
        %2614 = vrot.lane.b32.xlu0 %v2534, 16
        %v2615 = vpop.permute.xlu0 %2614
        %2616 = vrot.lane.b32.xlu0 %v2535, 16
        %v2617 = vpop.permute.xlu0 %2616
        %2618 = vrot.lane.b32.xlu0 %v2536, 16
        %v2619 = vpop.permute.xlu0 %2618
        %2620 = vrot.lane.b32.xlu0 %v2537, 16
        %v2621 = vpop.permute.xlu0 %2620
        %2622 = vrot.lane.b32.xlu0 %v2538, 16
        %v2623 = vpop.permute.xlu0 %2622
        %2624 = vrot.lane.b32.xlu0 %v2539, 16
        %v2625 = vpop.permute.xlu0 %2624
        %2626 = vrot.lane.b32.xlu0 %v2540, 16
        %v2627 = vpop.permute.xlu0 %2626
        %2628 = vrot.lane.b32.xlu0 %v2541, 16
        %v2629 = vpop.permute.xlu0 %2628
        %2630 = vrot.lane.b32.xlu0 %v2542, 16
        %v2631 = vpop.permute.xlu0 %2630
        %2632 = vrot.lane.b32.xlu0 %v2543, 16
        %v2633 = vpop.permute.xlu0 %2632
        %2634 = vrot.lane.b32.xlu0 %v2544, 16
        %v2635 = vpop.permute.xlu0 %2634
        %2636 = vrot.lane.b32.xlu0 %v2545, 16
        %v2637 = vpop.permute.xlu0 %2636
        %2638 = vrot.lane.b32.xlu0 %v2546, 16
        %v2639 = vpop.permute.xlu0 %2638
        %2640 = vrot.lane.b32.xlu0 %v2547, 16
        %v2641 = vpop.permute.xlu0 %2640
        %2642 = vrot.lane.b32.xlu0 %v2548, 16
        %v2643 = vpop.permute.xlu0 %2642
        %2644 = vrot.lane.b32.xlu0 %v2549, 16
        %v2645 = vpop.permute.xlu0 %2644
        %vm2678 = vcmask 195712
        %2679 = vst.msk [vmem:[#allocation4] sm:$0xff] %vm2678, %v2583
        %2680 = vst.msk [vmem:[#allocation4 + $0x8] sm:$0xff] %vm2678, %v2585
        %2681 = vst.msk [vmem:[#allocation4 + $0x10] sm:$0xff] %vm2678, %v2587
        %2682 = vst.msk [vmem:[#allocation4 + $0x18] sm:$0xff] %vm2678, %v2589
        %2683 = vst.msk [vmem:[#allocation4 + $0x20] sm:$0xff] %vm2678, %v2591
        %2684 = vst.msk [vmem:[#allocation4 + $0x28] sm:$0xff] %vm2678, %v2593
        %2685 = vst.msk [vmem:[#allocation4 + $0x30] sm:$0xff] %vm2678, %v2595
        %2686 = vst.msk [vmem:[#allocation4 + $0x38] sm:$0xff] %vm2678, %v2597
        %2687 = vst.msk [vmem:[#allocation4 + $0x40] sm:$0xff] %vm2678, %v2599
        %2688 = vst.msk [vmem:[#allocation4 + $0x48] sm:$0xff] %vm2678, %v2601
        %2689 = vst.msk [vmem:[#allocation4 + $0x50] sm:$0xff] %vm2678, %v2603
        %2690 = vst.msk [vmem:[#allocation4 + $0x58] sm:$0xff] %vm2678, %v2605
        %2691 = vst.msk [vmem:[#allocation4 + $0x60] sm:$0xff] %vm2678, %v2607
        %2692 = vst.msk [vmem:[#allocation4 + $0x68] sm:$0xff] %vm2678, %v2609
        %2693 = vst.msk [vmem:[#allocation4 + $0x70] sm:$0xff] %vm2678, %v2611
        %2694 = vst.msk [vmem:[#allocation4 + $0x78] sm:$0xff] %vm2678, %v2613
        %2695 = vst.msk [vmem:[#allocation4 + $0x80] sm:$0xff] %vm2678, %v2615
        %2696 = vst.msk [vmem:[#allocation4 + $0x88] sm:$0xff] %vm2678, %v2617
        %2697 = vst.msk [vmem:[#allocation4 + $0x90] sm:$0xff] %vm2678, %v2619
        %2698 = vst.msk [vmem:[#allocation4 + $0x98] sm:$0xff] %vm2678, %v2621
        %2699 = vst.msk [vmem:[#allocation4 + $0xa0] sm:$0xff] %vm2678, %v2623
        %2700 = vst.msk [vmem:[#allocation4 + $0xa8] sm:$0xff] %vm2678, %v2625
        %2701 = vst.msk [vmem:[#allocation4 + $0xb0] sm:$0xff] %vm2678, %v2627
        %2702 = vst.msk [vmem:[#allocation4 + $0xb8] sm:$0xff] %vm2678, %v2629
        %2703 = vst.msk [vmem:[#allocation4 + $0xc0] sm:$0xff] %vm2678, %v2631
        %2704 = vst.msk [vmem:[#allocation4 + $0xc8] sm:$0xff] %vm2678, %v2633
        %2705 = vst.msk [vmem:[#allocation4 + $0xd0] sm:$0xff] %vm2678, %v2635
        %2706 = vst.msk [vmem:[#allocation4 + $0xd8] sm:$0xff] %vm2678, %v2637
        %2707 = vst.msk [vmem:[#allocation4 + $0xe0] sm:$0xff] %vm2678, %v2639
        %2708 = vst.msk [vmem:[#allocation4 + $0xe8] sm:$0xff] %vm2678, %v2641
        %2709 = vst.msk [vmem:[#allocation4 + $0xf0] sm:$0xff] %vm2678, %v2643
        %2710 = vst.msk [vmem:[#allocation4 + $0xf8] sm:$0xff] %vm2678, %v2645
        %v2711 = vld [vmem:[%s2228 + $0x7] sm:$0xff]
        %v2712 = vld [vmem:[%s2228 + $0xf] sm:$0xff]
        %v2713 = vld [vmem:[%s2228 + $0x27] sm:$0xff]
        %v2714 = vld [vmem:[%s2228 + $0x2f] sm:$0xff]
        %v2715 = vld [vmem:[%s2228 + $0x47] sm:$0xff]
        %v2716 = vld [vmem:[%s2228 + $0x4f] sm:$0xff]
        %v2717 = vld [vmem:[%s2228 + $0x67] sm:$0xff]
        %v2718 = vld [vmem:[%s2228 + $0x6f] sm:$0xff]
        %v2719 = vld [vmem:[%s2228 + $0x87] sm:$0xff]
        %v2720 = vld [vmem:[%s2228 + $0x8f] sm:$0xff]
        %v2721 = vld [vmem:[%s2228 + $0xa7] sm:$0xff]
        %v2722 = vld [vmem:[%s2228 + $0xaf] sm:$0xff]
        %v2723 = vld [vmem:[%s2228 + $0xc7] sm:$0xff]
        %v2724 = vld [vmem:[%s2228 + $0xcf] sm:$0xff]
        %v2725 = vld [vmem:[%s2228 + $0xe7] sm:$0xff]
        %v2726 = vld [vmem:[%s2228 + $0xef] sm:$0xff]
        %v2727 = vld [vmem:[%s2228 + $0x107] sm:$0xff]
        %v2728 = vld [vmem:[%s2228 + $0x10f] sm:$0xff]
        %v2729 = vld [vmem:[%s2228 + $0x127] sm:$0xff]
        %v2730 = vld [vmem:[%s2228 + $0x12f] sm:$0xff]
        %v2731 = vld [vmem:[%s2228 + $0x147] sm:$0xff]
        %v2732 = vld [vmem:[%s2228 + $0x14f] sm:$0xff]
        %v2733 = vld [vmem:[%s2228 + $0x167] sm:$0xff]
        %v2734 = vld [vmem:[%s2228 + $0x16f] sm:$0xff]
        %v2735 = vld [vmem:[%s2228 + $0x187] sm:$0xff]
        %v2736 = vld [vmem:[%s2228 + $0x18f] sm:$0xff]
        %v2737 = vld [vmem:[%s2228 + $0x1a7] sm:$0xff]
        %v2738 = vld [vmem:[%s2228 + $0x1af] sm:$0xff]
        %v2739 = vld [vmem:[%s2228 + $0x1c7] sm:$0xff]
        %v2740 = vld [vmem:[%s2228 + $0x1cf] sm:$0xff]
        %v2741 = vld [vmem:[%s2228 + $0x1e7] sm:$0xff]
        %v2742 = vld [vmem:[%s2228 + $0x1ef] sm:$0xff]
        %2775 = vrot.lane.b32.xlu0 %v2711, 24
        %v2776 = vpop.permute.xlu0 %2775
        %2777 = vrot.lane.b32.xlu0 %v2712, 24
        %v2778 = vpop.permute.xlu0 %2777
        %2779 = vrot.lane.b32.xlu0 %v2713, 24
        %v2780 = vpop.permute.xlu0 %2779
        %2781 = vrot.lane.b32.xlu0 %v2714, 24
        %v2782 = vpop.permute.xlu0 %2781
        %2783 = vrot.lane.b32.xlu0 %v2715, 24
        %v2784 = vpop.permute.xlu0 %2783
        %2785 = vrot.lane.b32.xlu0 %v2716, 24
        %v2786 = vpop.permute.xlu0 %2785
        %2787 = vrot.lane.b32.xlu0 %v2717, 24
        %v2788 = vpop.permute.xlu0 %2787
        %2789 = vrot.lane.b32.xlu0 %v2718, 24
        %v2790 = vpop.permute.xlu0 %2789
        %2791 = vrot.lane.b32.xlu0 %v2719, 24
        %v2792 = vpop.permute.xlu0 %2791
        %2793 = vrot.lane.b32.xlu0 %v2720, 24
        %v2794 = vpop.permute.xlu0 %2793
        %2795 = vrot.lane.b32.xlu0 %v2721, 24
        %v2796 = vpop.permute.xlu0 %2795
        %2797 = vrot.lane.b32.xlu0 %v2722, 24
        %v2798 = vpop.permute.xlu0 %2797
        %2799 = vrot.lane.b32.xlu0 %v2723, 24
        %v2800 = vpop.permute.xlu0 %2799
        %2801 = vrot.lane.b32.xlu0 %v2724, 24
        %v2802 = vpop.permute.xlu0 %2801
        %2803 = vrot.lane.b32.xlu0 %v2725, 24
        %v2804 = vpop.permute.xlu0 %2803
        %2805 = vrot.lane.b32.xlu0 %v2726, 24
        %v2806 = vpop.permute.xlu0 %2805
        %2807 = vrot.lane.b32.xlu0 %v2727, 24
        %v2808 = vpop.permute.xlu0 %2807
        %2809 = vrot.lane.b32.xlu0 %v2728, 24
        %v2810 = vpop.permute.xlu0 %2809
        %2811 = vrot.lane.b32.xlu0 %v2729, 24
        %v2812 = vpop.permute.xlu0 %2811
        %2813 = vrot.lane.b32.xlu0 %v2730, 24
        %v2814 = vpop.permute.xlu0 %2813
        %2815 = vrot.lane.b32.xlu0 %v2731, 24
        %v2816 = vpop.permute.xlu0 %2815
        %2817 = vrot.lane.b32.xlu0 %v2732, 24
        %v2818 = vpop.permute.xlu0 %2817
        %2819 = vrot.lane.b32.xlu0 %v2733, 24
        %v2820 = vpop.permute.xlu0 %2819
        %2821 = vrot.lane.b32.xlu0 %v2734, 24
        %v2822 = vpop.permute.xlu0 %2821
        %2823 = vrot.lane.b32.xlu0 %v2735, 24
        %v2824 = vpop.permute.xlu0 %2823
        %2825 = vrot.lane.b32.xlu0 %v2736, 24
        %v2826 = vpop.permute.xlu0 %2825
        %2827 = vrot.lane.b32.xlu0 %v2737, 24
        %v2828 = vpop.permute.xlu0 %2827
        %2829 = vrot.lane.b32.xlu0 %v2738, 24
        %v2830 = vpop.permute.xlu0 %2829
        %2831 = vrot.lane.b32.xlu0 %v2739, 24
        %v2832 = vpop.permute.xlu0 %2831
        %2833 = vrot.lane.b32.xlu0 %v2740, 24
        %v2834 = vpop.permute.xlu0 %2833
        %2835 = vrot.lane.b32.xlu0 %v2741, 24
        %v2836 = vpop.permute.xlu0 %2835
        %2837 = vrot.lane.b32.xlu0 %v2742, 24
        %v2838 = vpop.permute.xlu0 %2837
        %vm2871 = vcmask 261312
        %2872 = vst.msk [vmem:[#allocation4] sm:$0xff] %vm2871, %v2776
        %2873 = vst.msk [vmem:[#allocation4 + $0x8] sm:$0xff] %vm2871, %v2778
        %2874 = vst.msk [vmem:[#allocation4 + $0x10] sm:$0xff] %vm2871, %v2780
        %2875 = vst.msk [vmem:[#allocation4 + $0x18] sm:$0xff] %vm2871, %v2782
        %2876 = vst.msk [vmem:[#allocation4 + $0x20] sm:$0xff] %vm2871, %v2784
        %2877 = vst.msk [vmem:[#allocation4 + $0x28] sm:$0xff] %vm2871, %v2786
        %2878 = vst.msk [vmem:[#allocation4 + $0x30] sm:$0xff] %vm2871, %v2788
        %2879 = vst.msk [vmem:[#allocation4 + $0x38] sm:$0xff] %vm2871, %v2790
        %2880 = vst.msk [vmem:[#allocation4 + $0x40] sm:$0xff] %vm2871, %v2792
        %2881 = vst.msk [vmem:[#allocation4 + $0x48] sm:$0xff] %vm2871, %v2794
        %2882 = vst.msk [vmem:[#allocation4 + $0x50] sm:$0xff] %vm2871, %v2796
        %2883 = vst.msk [vmem:[#allocation4 + $0x58] sm:$0xff] %vm2871, %v2798
        %2884 = vst.msk [vmem:[#allocation4 + $0x60] sm:$0xff] %vm2871, %v2800
        %2885 = vst.msk [vmem:[#allocation4 + $0x68] sm:$0xff] %vm2871, %v2802
        %2886 = vst.msk [vmem:[#allocation4 + $0x70] sm:$0xff] %vm2871, %v2804
        %2887 = vst.msk [vmem:[#allocation4 + $0x78] sm:$0xff] %vm2871, %v2806
        %2888 = vst.msk [vmem:[#allocation4 + $0x80] sm:$0xff] %vm2871, %v2808
        %2889 = vst.msk [vmem:[#allocation4 + $0x88] sm:$0xff] %vm2871, %v2810
        %2890 = vst.msk [vmem:[#allocation4 + $0x90] sm:$0xff] %vm2871, %v2812
        %2891 = vst.msk [vmem:[#allocation4 + $0x98] sm:$0xff] %vm2871, %v2814
        %2892 = vst.msk [vmem:[#allocation4 + $0xa0] sm:$0xff] %vm2871, %v2816
        %2893 = vst.msk [vmem:[#allocation4 + $0xa8] sm:$0xff] %vm2871, %v2818
        %2894 = vst.msk [vmem:[#allocation4 + $0xb0] sm:$0xff] %vm2871, %v2820
        %2895 = vst.msk [vmem:[#allocation4 + $0xb8] sm:$0xff] %vm2871, %v2822
        %2896 = vst.msk [vmem:[#allocation4 + $0xc0] sm:$0xff] %vm2871, %v2824
        %2897 = vst.msk [vmem:[#allocation4 + $0xc8] sm:$0xff] %vm2871, %v2826
        %2898 = vst.msk [vmem:[#allocation4 + $0xd0] sm:$0xff] %vm2871, %v2828
        %2899 = vst.msk [vmem:[#allocation4 + $0xd8] sm:$0xff] %vm2871, %v2830
        %2900 = vst.msk [vmem:[#allocation4 + $0xe0] sm:$0xff] %vm2871, %v2832
        %2901 = vst.msk [vmem:[#allocation4 + $0xe8] sm:$0xff] %vm2871, %v2834
        %2902 = vst.msk [vmem:[#allocation4 + $0xf0] sm:$0xff] %vm2871, %v2836
        %2903 = vst.msk [vmem:[#allocation4 + $0xf8] sm:$0xff] %vm2871, %v2838
        %v2904 = vld [vmem:[%s2228 + $0x8] sm:$0xff]
        %v2905 = vld [vmem:[%s2228 + $0x10] sm:$0xff]
        %v2906 = vld [vmem:[%s2228 + $0x28] sm:$0xff]
        %v2907 = vld [vmem:[%s2228 + $0x30] sm:$0xff]
        %v2908 = vld [vmem:[%s2228 + $0x48] sm:$0xff]
        %v2909 = vld [vmem:[%s2228 + $0x50] sm:$0xff]
        %v2910 = vld [vmem:[%s2228 + $0x68] sm:$0xff]
        %v2911 = vld [vmem:[%s2228 + $0x70] sm:$0xff]
        %v2912 = vld [vmem:[%s2228 + $0x88] sm:$0xff]
        %v2913 = vld [vmem:[%s2228 + $0x90] sm:$0xff]
        %v2914 = vld [vmem:[%s2228 + $0xa8] sm:$0xff]
        %v2915 = vld [vmem:[%s2228 + $0xb0] sm:$0xff]
        %v2916 = vld [vmem:[%s2228 + $0xc8] sm:$0xff]
        %v2917 = vld [vmem:[%s2228 + $0xd0] sm:$0xff]
        %v2918 = vld [vmem:[%s2228 + $0xe8] sm:$0xff]
        %v2919 = vld [vmem:[%s2228 + $0xf0] sm:$0xff]
        %v2920 = vld [vmem:[%s2228 + $0x108] sm:$0xff]
        %v2921 = vld [vmem:[%s2228 + $0x110] sm:$0xff]
        %v2922 = vld [vmem:[%s2228 + $0x128] sm:$0xff]
        %v2923 = vld [vmem:[%s2228 + $0x130] sm:$0xff]
        %v2924 = vld [vmem:[%s2228 + $0x148] sm:$0xff]
        %v2925 = vld [vmem:[%s2228 + $0x150] sm:$0xff]
        %v2926 = vld [vmem:[%s2228 + $0x168] sm:$0xff]
        %v2927 = vld [vmem:[%s2228 + $0x170] sm:$0xff]
        %v2928 = vld [vmem:[%s2228 + $0x188] sm:$0xff]
        %v2929 = vld [vmem:[%s2228 + $0x190] sm:$0xff]
        %v2930 = vld [vmem:[%s2228 + $0x1a8] sm:$0xff]
        %v2931 = vld [vmem:[%s2228 + $0x1b0] sm:$0xff]
        %v2932 = vld [vmem:[%s2228 + $0x1c8] sm:$0xff]
        %v2933 = vld [vmem:[%s2228 + $0x1d0] sm:$0xff]
        %v2934 = vld [vmem:[%s2228 + $0x1e8] sm:$0xff]
        %v2935 = vld [vmem:[%s2228 + $0x1f0] sm:$0xff]
        %2968 = vrot.lane.b32.xlu0 %v2904, 32
        %v2969 = vpop.permute.xlu0 %2968
        %2970 = vrot.lane.b32.xlu0 %v2905, 32
        %v2971 = vpop.permute.xlu0 %2970
        %2972 = vrot.lane.b32.xlu0 %v2906, 32
        %v2973 = vpop.permute.xlu0 %2972
        %2974 = vrot.lane.b32.xlu0 %v2907, 32
        %v2975 = vpop.permute.xlu0 %2974
        %2976 = vrot.lane.b32.xlu0 %v2908, 32
        %v2977 = vpop.permute.xlu0 %2976
        %2978 = vrot.lane.b32.xlu0 %v2909, 32
        %v2979 = vpop.permute.xlu0 %2978
        %2980 = vrot.lane.b32.xlu0 %v2910, 32
        %v2981 = vpop.permute.xlu0 %2980
        %2982 = vrot.lane.b32.xlu0 %v2911, 32
        %v2983 = vpop.permute.xlu0 %2982
        %2984 = vrot.lane.b32.xlu0 %v2912, 32
        %v2985 = vpop.permute.xlu0 %2984
        %2986 = vrot.lane.b32.xlu0 %v2913, 32
        %v2987 = vpop.permute.xlu0 %2986
        %2988 = vrot.lane.b32.xlu0 %v2914, 32
        %v2989 = vpop.permute.xlu0 %2988
        %2990 = vrot.lane.b32.xlu0 %v2915, 32
        %v2991 = vpop.permute.xlu0 %2990
        %2992 = vrot.lane.b32.xlu0 %v2916, 32
        %v2993 = vpop.permute.xlu0 %2992
        %2994 = vrot.lane.b32.xlu0 %v2917, 32
        %v2995 = vpop.permute.xlu0 %2994
        %2996 = vrot.lane.b32.xlu0 %v2918, 32
        %v2997 = vpop.permute.xlu0 %2996
        %2998 = vrot.lane.b32.xlu0 %v2919, 32
        %v2999 = vpop.permute.xlu0 %2998
        %3000 = vrot.lane.b32.xlu0 %v2920, 32
        %v3001 = vpop.permute.xlu0 %3000
        %3002 = vrot.lane.b32.xlu0 %v2921, 32
        %v3003 = vpop.permute.xlu0 %3002
        %3004 = vrot.lane.b32.xlu0 %v2922, 32
        %v3005 = vpop.permute.xlu0 %3004
        %3006 = vrot.lane.b32.xlu0 %v2923, 32
        %v3007 = vpop.permute.xlu0 %3006
        %3008 = vrot.lane.b32.xlu0 %v2924, 32
        %v3009 = vpop.permute.xlu0 %3008
        %3010 = vrot.lane.b32.xlu0 %v2925, 32
        %v3011 = vpop.permute.xlu0 %3010
        %3012 = vrot.lane.b32.xlu0 %v2926, 32
        %v3013 = vpop.permute.xlu0 %3012
        %3014 = vrot.lane.b32.xlu0 %v2927, 32
        %v3015 = vpop.permute.xlu0 %3014
        %3016 = vrot.lane.b32.xlu0 %v2928, 32
        %v3017 = vpop.permute.xlu0 %3016
        %3018 = vrot.lane.b32.xlu0 %v2929, 32
        %v3019 = vpop.permute.xlu0 %3018
        %3020 = vrot.lane.b32.xlu0 %v2930, 32
        %v3021 = vpop.permute.xlu0 %3020
        %3022 = vrot.lane.b32.xlu0 %v2931, 32
        %v3023 = vpop.permute.xlu0 %3022
        %3024 = vrot.lane.b32.xlu0 %v2932, 32
        %v3025 = vpop.permute.xlu0 %3024
        %3026 = vrot.lane.b32.xlu0 %v2933, 32
        %v3027 = vpop.permute.xlu0 %3026
        %3028 = vrot.lane.b32.xlu0 %v2934, 32
        %v3029 = vpop.permute.xlu0 %3028
        %3030 = vrot.lane.b32.xlu0 %v2935, 32
        %v3031 = vpop.permute.xlu0 %3030
        %vm3064 = vcmask 326912
        %3065 = vst.msk [vmem:[#allocation4] sm:$0xff] %vm3064, %v2969
        %3066 = vst.msk [vmem:[#allocation4 + $0x8] sm:$0xff] %vm3064, %v2971
        %3067 = vst.msk [vmem:[#allocation4 + $0x10] sm:$0xff] %vm3064, %v2973
        %3068 = vst.msk [vmem:[#allocation4 + $0x18] sm:$0xff] %vm3064, %v2975
        %3069 = vst.msk [vmem:[#allocation4 + $0x20] sm:$0xff] %vm3064, %v2977
        %3070 = vst.msk [vmem:[#allocation4 + $0x28] sm:$0xff] %vm3064, %v2979
        %3071 = vst.msk [vmem:[#allocation4 + $0x30] sm:$0xff] %vm3064, %v2981
        %3072 = vst.msk [vmem:[#allocation4 + $0x38] sm:$0xff] %vm3064, %v2983
        %3073 = vst.msk [vmem:[#allocation4 + $0x40] sm:$0xff] %vm3064, %v2985
        %3074 = vst.msk [vmem:[#allocation4 + $0x48] sm:$0xff] %vm3064, %v2987
        %3075 = vst.msk [vmem:[#allocation4 + $0x50] sm:$0xff] %vm3064, %v2989
        %3076 = vst.msk [vmem:[#allocation4 + $0x58] sm:$0xff] %vm3064, %v2991
        %3077 = vst.msk [vmem:[#allocation4 + $0x60] sm:$0xff] %vm3064, %v2993
        %3078 = vst.msk [vmem:[#allocation4 + $0x68] sm:$0xff] %vm3064, %v2995
        %3079 = vst.msk [vmem:[#allocation4 + $0x70] sm:$0xff] %vm3064, %v2997
        %3080 = vst.msk [vmem:[#allocation4 + $0x78] sm:$0xff] %vm3064, %v2999
        %3081 = vst.msk [vmem:[#allocation4 + $0x80] sm:$0xff] %vm3064, %v3001
        %3082 = vst.msk [vmem:[#allocation4 + $0x88] sm:$0xff] %vm3064, %v3003
        %3083 = vst.msk [vmem:[#allocation4 + $0x90] sm:$0xff] %vm3064, %v3005
        %3084 = vst.msk [vmem:[#allocation4 + $0x98] sm:$0xff] %vm3064, %v3007
        %3085 = vst.msk [vmem:[#allocation4 + $0xa0] sm:$0xff] %vm3064, %v3009
        %3086 = vst.msk [vmem:[#allocation4 + $0xa8] sm:$0xff] %vm3064, %v3011
        %3087 = vst.msk [vmem:[#allocation4 + $0xb0] sm:$0xff] %vm3064, %v3013
        %3088 = vst.msk [vmem:[#allocation4 + $0xb8] sm:$0xff] %vm3064, %v3015
        %3089 = vst.msk [vmem:[#allocation4 + $0xc0] sm:$0xff] %vm3064, %v3017
        %3090 = vst.msk [vmem:[#allocation4 + $0xc8] sm:$0xff] %vm3064, %v3019
        %3091 = vst.msk [vmem:[#allocation4 + $0xd0] sm:$0xff] %vm3064, %v3021
        %3092 = vst.msk [vmem:[#allocation4 + $0xd8] sm:$0xff] %vm3064, %v3023
        %3093 = vst.msk [vmem:[#allocation4 + $0xe0] sm:$0xff] %vm3064, %v3025
        %3094 = vst.msk [vmem:[#allocation4 + $0xe8] sm:$0xff] %vm3064, %v3027
        %3095 = vst.msk [vmem:[#allocation4 + $0xf0] sm:$0xff] %vm3064, %v3029
        %3096 = vst.msk [vmem:[#allocation4 + $0xf8] sm:$0xff] %vm3064, %v3031
        %v3097 = vld [vmem:[%s2228 + $0x9] sm:$0xff]
        %v3098 = vld [vmem:[%s2228 + $0x11] sm:$0xff]
        %v3099 = vld [vmem:[%s2228 + $0x29] sm:$0xff]
        %v3100 = vld [vmem:[%s2228 + $0x31] sm:$0xff]
        %v3101 = vld [vmem:[%s2228 + $0x49] sm:$0xff]
        %v3102 = vld [vmem:[%s2228 + $0x51] sm:$0xff]
        %v3103 = vld [vmem:[%s2228 + $0x69] sm:$0xff]
        %v3104 = vld [vmem:[%s2228 + $0x71] sm:$0xff]
        %v3105 = vld [vmem:[%s2228 + $0x89] sm:$0xff]
        %v3106 = vld [vmem:[%s2228 + $0x91] sm:$0xff]
        %v3107 = vld [vmem:[%s2228 + $0xa9] sm:$0xff]
        %v3108 = vld [vmem:[%s2228 + $0xb1] sm:$0xff]
        %v3109 = vld [vmem:[%s2228 + $0xc9] sm:$0xff]
        %v3110 = vld [vmem:[%s2228 + $0xd1] sm:$0xff]
        %v3111 = vld [vmem:[%s2228 + $0xe9] sm:$0xff]
        %v3112 = vld [vmem:[%s2228 + $0xf1] sm:$0xff]
        %v3113 = vld [vmem:[%s2228 + $0x109] sm:$0xff]
        %v3114 = vld [vmem:[%s2228 + $0x111] sm:$0xff]
        %v3115 = vld [vmem:[%s2228 + $0x129] sm:$0xff]
        %v3116 = vld [vmem:[%s2228 + $0x131] sm:$0xff]
        %v3117 = vld [vmem:[%s2228 + $0x149] sm:$0xff]
        %v3118 = vld [vmem:[%s2228 + $0x151] sm:$0xff]
        %v3119 = vld [vmem:[%s2228 + $0x169] sm:$0xff]
        %v3120 = vld [vmem:[%s2228 + $0x171] sm:$0xff]
        %v3121 = vld [vmem:[%s2228 + $0x189] sm:$0xff]
        %v3122 = vld [vmem:[%s2228 + $0x191] sm:$0xff]
        %v3123 = vld [vmem:[%s2228 + $0x1a9] sm:$0xff]
        %v3124 = vld [vmem:[%s2228 + $0x1b1] sm:$0xff]
        %v3125 = vld [vmem:[%s2228 + $0x1c9] sm:$0xff]
        %v3126 = vld [vmem:[%s2228 + $0x1d1] sm:$0xff]
        %v3127 = vld [vmem:[%s2228 + $0x1e9] sm:$0xff]
        %v3128 = vld [vmem:[%s2228 + $0x1f1] sm:$0xff]
        %3161 = vrot.lane.b32.xlu0 %v3097, 40
        %v3162 = vpop.permute.xlu0 %3161
        %3163 = vrot.lane.b32.xlu0 %v3098, 40
        %v3164 = vpop.permute.xlu0 %3163
        %3165 = vrot.lane.b32.xlu0 %v3099, 40
        %v3166 = vpop.permute.xlu0 %3165
        %3167 = vrot.lane.b32.xlu0 %v3100, 40
        %v3168 = vpop.permute.xlu0 %3167
        %3169 = vrot.lane.b32.xlu0 %v3101, 40
        %v3170 = vpop.permute.xlu0 %3169
        %3171 = vrot.lane.b32.xlu0 %v3102, 40
        %v3172 = vpop.permute.xlu0 %3171
        %3173 = vrot.lane.b32.xlu0 %v3103, 40
        %v3174 = vpop.permute.xlu0 %3173
        %3175 = vrot.lane.b32.xlu0 %v3104, 40
        %v3176 = vpop.permute.xlu0 %3175
        %3177 = vrot.lane.b32.xlu0 %v3105, 40
        %v3178 = vpop.permute.xlu0 %3177
        %3179 = vrot.lane.b32.xlu0 %v3106, 40
        %v3180 = vpop.permute.xlu0 %3179
        %3181 = vrot.lane.b32.xlu0 %v3107, 40
        %v3182 = vpop.permute.xlu0 %3181
        %3183 = vrot.lane.b32.xlu0 %v3108, 40
        %v3184 = vpop.permute.xlu0 %3183
        %3185 = vrot.lane.b32.xlu0 %v3109, 40
        %v3186 = vpop.permute.xlu0 %3185
        %3187 = vrot.lane.b32.xlu0 %v3110, 40
        %v3188 = vpop.permute.xlu0 %3187
        %3189 = vrot.lane.b32.xlu0 %v3111, 40
        %v3190 = vpop.permute.xlu0 %3189
        %3191 = vrot.lane.b32.xlu0 %v3112, 40
        %v3192 = vpop.permute.xlu0 %3191
        %3193 = vrot.lane.b32.xlu0 %v3113, 40
        %v3194 = vpop.permute.xlu0 %3193
        %3195 = vrot.lane.b32.xlu0 %v3114, 40
        %v3196 = vpop.permute.xlu0 %3195
        %3197 = vrot.lane.b32.xlu0 %v3115, 40
        %v3198 = vpop.permute.xlu0 %3197
        %3199 = vrot.lane.b32.xlu0 %v3116, 40
        %v3200 = vpop.permute.xlu0 %3199
        %3201 = vrot.lane.b32.xlu0 %v3117, 40
        %v3202 = vpop.permute.xlu0 %3201
        %3203 = vrot.lane.b32.xlu0 %v3118, 40
        %v3204 = vpop.permute.xlu0 %3203
        %3205 = vrot.lane.b32.xlu0 %v3119, 40
        %v3206 = vpop.permute.xlu0 %3205
        %3207 = vrot.lane.b32.xlu0 %v3120, 40
        %v3208 = vpop.permute.xlu0 %3207
        %3209 = vrot.lane.b32.xlu0 %v3121, 40
        %v3210 = vpop.permute.xlu0 %3209
        %3211 = vrot.lane.b32.xlu0 %v3122, 40
        %v3212 = vpop.permute.xlu0 %3211
        %3213 = vrot.lane.b32.xlu0 %v3123, 40
        %v3214 = vpop.permute.xlu0 %3213
        %3215 = vrot.lane.b32.xlu0 %v3124, 40
        %v3216 = vpop.permute.xlu0 %3215
        %3217 = vrot.lane.b32.xlu0 %v3125, 40
        %v3218 = vpop.permute.xlu0 %3217
        %3219 = vrot.lane.b32.xlu0 %v3126, 40
        %v3220 = vpop.permute.xlu0 %3219
        %3221 = vrot.lane.b32.xlu0 %v3127, 40
        %v3222 = vpop.permute.xlu0 %3221
        %3223 = vrot.lane.b32.xlu0 %v3128, 40
        %v3224 = vpop.permute.xlu0 %3223
        %vm3257 = vcmask 392512
        %3258 = vst.msk [vmem:[#allocation4] sm:$0xff] %vm3257, %v3162
        %3259 = vst.msk [vmem:[#allocation4 + $0x8] sm:$0xff] %vm3257, %v3164
        %3260 = vst.msk [vmem:[#allocation4 + $0x10] sm:$0xff] %vm3257, %v3166
        %3261 = vst.msk [vmem:[#allocation4 + $0x18] sm:$0xff] %vm3257, %v3168
        %3262 = vst.msk [vmem:[#allocation4 + $0x20] sm:$0xff] %vm3257, %v3170
        %3263 = vst.msk [vmem:[#allocation4 + $0x28] sm:$0xff] %vm3257, %v3172
        %3264 = vst.msk [vmem:[#allocation4 + $0x30] sm:$0xff] %vm3257, %v3174
        %3265 = vst.msk [vmem:[#allocation4 + $0x38] sm:$0xff] %vm3257, %v3176
        %3266 = vst.msk [vmem:[#allocation4 + $0x40] sm:$0xff] %vm3257, %v3178
        %3267 = vst.msk [vmem:[#allocation4 + $0x48] sm:$0xff] %vm3257, %v3180
        %3268 = vst.msk [vmem:[#allocation4 + $0x50] sm:$0xff] %vm3257, %v3182
        %3269 = vst.msk [vmem:[#allocation4 + $0x58] sm:$0xff] %vm3257, %v3184
        %3270 = vst.msk [vmem:[#allocation4 + $0x60] sm:$0xff] %vm3257, %v3186
        %3271 = vst.msk [vmem:[#allocation4 + $0x68] sm:$0xff] %vm3257, %v3188
        %3272 = vst.msk [vmem:[#allocation4 + $0x70] sm:$0xff] %vm3257, %v3190
        %3273 = vst.msk [vmem:[#allocation4 + $0x78] sm:$0xff] %vm3257, %v3192
        %3274 = vst.msk [vmem:[#allocation4 + $0x80] sm:$0xff] %vm3257, %v3194
        %3275 = vst.msk [vmem:[#allocation4 + $0x88] sm:$0xff] %vm3257, %v3196
        %3276 = vst.msk [vmem:[#allocation4 + $0x90] sm:$0xff] %vm3257, %v3198
        %3277 = vst.msk [vmem:[#allocation4 + $0x98] sm:$0xff] %vm3257, %v3200
        %3278 = vst.msk [vmem:[#allocation4 + $0xa0] sm:$0xff] %vm3257, %v3202
        %3279 = vst.msk [vmem:[#allocation4 + $0xa8] sm:$0xff] %vm3257, %v3204
        %3280 = vst.msk [vmem:[#allocation4 + $0xb0] sm:$0xff] %vm3257, %v3206
        %3281 = vst.msk [vmem:[#allocation4 + $0xb8] sm:$0xff] %vm3257, %v3208
        %3282 = vst.msk [vmem:[#allocation4 + $0xc0] sm:$0xff] %vm3257, %v3210
        %3283 = vst.msk [vmem:[#allocation4 + $0xc8] sm:$0xff] %vm3257, %v3212
        %3284 = vst.msk [vmem:[#allocation4 + $0xd0] sm:$0xff] %vm3257, %v3214
        %3285 = vst.msk [vmem:[#allocation4 + $0xd8] sm:$0xff] %vm3257, %v3216
        %3286 = vst.msk [vmem:[#allocation4 + $0xe0] sm:$0xff] %vm3257, %v3218
        %3287 = vst.msk [vmem:[#allocation4 + $0xe8] sm:$0xff] %vm3257, %v3220
        %3288 = vst.msk [vmem:[#allocation4 + $0xf0] sm:$0xff] %vm3257, %v3222
        %3289 = vst.msk [vmem:[#allocation4 + $0xf8] sm:$0xff] %vm3257, %v3224
        %s3290 = scalar_lea.vmem [#allocation3], 64
        %v3291 = vld [vmem:[%s3290 + $0x7] sm:$0xff]
        %v3292 = vld [vmem:[%s3290 + $0xf] sm:$0xff]
        %v3293 = vld [vmem:[%s3290 + $0x27] sm:$0xff]
        %v3294 = vld [vmem:[%s3290 + $0x2f] sm:$0xff]
        %v3295 = vld [vmem:[%s3290 + $0x47] sm:$0xff]
        %v3296 = vld [vmem:[%s3290 + $0x4f] sm:$0xff]
        %v3297 = vld [vmem:[%s3290 + $0x67] sm:$0xff]
        %v3298 = vld [vmem:[%s3290 + $0x6f] sm:$0xff]
        %v3299 = vld [vmem:[%s3290 + $0x87] sm:$0xff]
        %v3300 = vld [vmem:[%s3290 + $0x8f] sm:$0xff]
        %v3301 = vld [vmem:[%s3290 + $0xa7] sm:$0xff]
        %v3302 = vld [vmem:[%s3290 + $0xaf] sm:$0xff]
        %v3303 = vld [vmem:[%s3290 + $0xc7] sm:$0xff]
        %v3304 = vld [vmem:[%s3290 + $0xcf] sm:$0xff]
        %v3305 = vld [vmem:[%s3290 + $0xe7] sm:$0xff]
        %v3306 = vld [vmem:[%s3290 + $0xef] sm:$0xff]
        %v3307 = vld [vmem:[%s3290 + $0x107] sm:$0xff]
        %v3308 = vld [vmem:[%s3290 + $0x10f] sm:$0xff]
        %v3309 = vld [vmem:[%s3290 + $0x127] sm:$0xff]
        %v3310 = vld [vmem:[%s3290 + $0x12f] sm:$0xff]
        %v3311 = vld [vmem:[%s3290 + $0x147] sm:$0xff]
        %v3312 = vld [vmem:[%s3290 + $0x14f] sm:$0xff]
        %v3313 = vld [vmem:[%s3290 + $0x167] sm:$0xff]
        %v3314 = vld [vmem:[%s3290 + $0x16f] sm:$0xff]
        %v3315 = vld [vmem:[%s3290 + $0x187] sm:$0xff]
        %v3316 = vld [vmem:[%s3290 + $0x18f] sm:$0xff]
        %v3317 = vld [vmem:[%s3290 + $0x1a7] sm:$0xff]
        %v3318 = vld [vmem:[%s3290 + $0x1af] sm:$0xff]
        %v3319 = vld [vmem:[%s3290 + $0x1c7] sm:$0xff]
        %v3320 = vld [vmem:[%s3290 + $0x1cf] sm:$0xff]
        %v3321 = vld [vmem:[%s3290 + $0x1e7] sm:$0xff]
        %v3322 = vld [vmem:[%s3290 + $0x1ef] sm:$0xff]
        %3355 = vrot.lane.b32.xlu0 %v3291, 48
        %v3356 = vpop.permute.xlu0 %3355
        %3357 = vrot.lane.b32.xlu0 %v3292, 48
        %v3358 = vpop.permute.xlu0 %3357
        %3359 = vrot.lane.b32.xlu0 %v3293, 48
        %v3360 = vpop.permute.xlu0 %3359
        %3361 = vrot.lane.b32.xlu0 %v3294, 48
        %v3362 = vpop.permute.xlu0 %3361
        %3363 = vrot.lane.b32.xlu0 %v3295, 48
        %v3364 = vpop.permute.xlu0 %3363
        %3365 = vrot.lane.b32.xlu0 %v3296, 48
        %v3366 = vpop.permute.xlu0 %3365
        %3367 = vrot.lane.b32.xlu0 %v3297, 48
        %v3368 = vpop.permute.xlu0 %3367
        %3369 = vrot.lane.b32.xlu0 %v3298, 48
        %v3370 = vpop.permute.xlu0 %3369
        %3371 = vrot.lane.b32.xlu0 %v3299, 48
        %v3372 = vpop.permute.xlu0 %3371
        %3373 = vrot.lane.b32.xlu0 %v3300, 48
        %v3374 = vpop.permute.xlu0 %3373
        %3375 = vrot.lane.b32.xlu0 %v3301, 48
        %v3376 = vpop.permute.xlu0 %3375
        %3377 = vrot.lane.b32.xlu0 %v3302, 48
        %v3378 = vpop.permute.xlu0 %3377
        %3379 = vrot.lane.b32.xlu0 %v3303, 48
        %v3380 = vpop.permute.xlu0 %3379
        %3381 = vrot.lane.b32.xlu0 %v3304, 48
        %v3382 = vpop.permute.xlu0 %3381
        %3383 = vrot.lane.b32.xlu0 %v3305, 48
        %v3384 = vpop.permute.xlu0 %3383
        %3385 = vrot.lane.b32.xlu0 %v3306, 48
        %v3386 = vpop.permute.xlu0 %3385
        %3387 = vrot.lane.b32.xlu0 %v3307, 48
        %v3388 = vpop.permute.xlu0 %3387
        %3389 = vrot.lane.b32.xlu0 %v3308, 48
        %v3390 = vpop.permute.xlu0 %3389
        %3391 = vrot.lane.b32.xlu0 %v3309, 48
        %v3392 = vpop.permute.xlu0 %3391
        %3393 = vrot.lane.b32.xlu0 %v3310, 48
        %v3394 = vpop.permute.xlu0 %3393
        %3395 = vrot.lane.b32.xlu0 %v3311, 48
        %v3396 = vpop.permute.xlu0 %3395
        %3397 = vrot.lane.b32.xlu0 %v3312, 48
        %v3398 = vpop.permute.xlu0 %3397
        %3399 = vrot.lane.b32.xlu0 %v3313, 48
        %v3400 = vpop.permute.xlu0 %3399
        %3401 = vrot.lane.b32.xlu0 %v3314, 48
        %v3402 = vpop.permute.xlu0 %3401
        %3403 = vrot.lane.b32.xlu0 %v3315, 48
        %v3404 = vpop.permute.xlu0 %3403
        %3405 = vrot.lane.b32.xlu0 %v3316, 48
        %v3406 = vpop.permute.xlu0 %3405
        %3407 = vrot.lane.b32.xlu0 %v3317, 48
        %v3408 = vpop.permute.xlu0 %3407
        %3409 = vrot.lane.b32.xlu0 %v3318, 48
        %v3410 = vpop.permute.xlu0 %3409
        %3411 = vrot.lane.b32.xlu0 %v3319, 48
        %v3412 = vpop.permute.xlu0 %3411
        %3413 = vrot.lane.b32.xlu0 %v3320, 48
        %v3414 = vpop.permute.xlu0 %3413
        %3415 = vrot.lane.b32.xlu0 %v3321, 48
        %v3416 = vpop.permute.xlu0 %3415
        %3417 = vrot.lane.b32.xlu0 %v3322, 48
        %v3418 = vpop.permute.xlu0 %3417
        %vm3451 = vcmask 458112
        %3452 = vst.msk [vmem:[#allocation4] sm:$0xff] %vm3451, %v3356
        %3453 = vst.msk [vmem:[#allocation4 + $0x8] sm:$0xff] %vm3451, %v3358
        %3454 = vst.msk [vmem:[#allocation4 + $0x10] sm:$0xff] %vm3451, %v3360
        %3455 = vst.msk [vmem:[#allocation4 + $0x18] sm:$0xff] %vm3451, %v3362
        %3456 = vst.msk [vmem:[#allocation4 + $0x20] sm:$0xff] %vm3451, %v3364
        %3457 = vst.msk [vmem:[#allocation4 + $0x28] sm:$0xff] %vm3451, %v3366
        %3458 = vst.msk [vmem:[#allocation4 + $0x30] sm:$0xff] %vm3451, %v3368
        %3459 = vst.msk [vmem:[#allocation4 + $0x38] sm:$0xff] %vm3451, %v3370
        %3460 = vst.msk [vmem:[#allocation4 + $0x40] sm:$0xff] %vm3451, %v3372
        %3461 = vst.msk [vmem:[#allocation4 + $0x48] sm:$0xff] %vm3451, %v3374
        %3462 = vst.msk [vmem:[#allocation4 + $0x50] sm:$0xff] %vm3451, %v3376
        %3463 = vst.msk [vmem:[#allocation4 + $0x58] sm:$0xff] %vm3451, %v3378
        %3464 = vst.msk [vmem:[#allocation4 + $0x60] sm:$0xff] %vm3451, %v3380
        %3465 = vst.msk [vmem:[#allocation4 + $0x68] sm:$0xff] %vm3451, %v3382
        %3466 = vst.msk [vmem:[#allocation4 + $0x70] sm:$0xff] %vm3451, %v3384
        %3467 = vst.msk [vmem:[#allocation4 + $0x78] sm:$0xff] %vm3451, %v3386
        %3468 = vst.msk [vmem:[#allocation4 + $0x80] sm:$0xff] %vm3451, %v3388
        %3469 = vst.msk [vmem:[#allocation4 + $0x88] sm:$0xff] %vm3451, %v3390
        %3470 = vst.msk [vmem:[#allocation4 + $0x90] sm:$0xff] %vm3451, %v3392
        %3471 = vst.msk [vmem:[#allocation4 + $0x98] sm:$0xff] %vm3451, %v3394
        %3472 = vst.msk [vmem:[#allocation4 + $0xa0] sm:$0xff] %vm3451, %v3396
        %3473 = vst.msk [vmem:[#allocation4 + $0xa8] sm:$0xff] %vm3451, %v3398
        %3474 = vst.msk [vmem:[#allocation4 + $0xb0] sm:$0xff] %vm3451, %v3400
        %3475 = vst.msk [vmem:[#allocation4 + $0xb8] sm:$0xff] %vm3451, %v3402
        %3476 = vst.msk [vmem:[#allocation4 + $0xc0] sm:$0xff] %vm3451, %v3404
        %3477 = vst.msk [vmem:[#allocation4 + $0xc8] sm:$0xff] %vm3451, %v3406
        %3478 = vst.msk [vmem:[#allocation4 + $0xd0] sm:$0xff] %vm3451, %v3408
        %3479 = vst.msk [vmem:[#allocation4 + $0xd8] sm:$0xff] %vm3451, %v3410
        %3480 = vst.msk [vmem:[#allocation4 + $0xe0] sm:$0xff] %vm3451, %v3412
        %3481 = vst.msk [vmem:[#allocation4 + $0xe8] sm:$0xff] %vm3451, %v3414
        %3482 = vst.msk [vmem:[#allocation4 + $0xf0] sm:$0xff] %vm3451, %v3416
        %3483 = vst.msk [vmem:[#allocation4 + $0xf8] sm:$0xff] %vm3451, %v3418
        %v3484 = vld [vmem:[%s3290 + $0x8] sm:$0xff]
        %v3485 = vld [vmem:[%s3290 + $0x10] sm:$0xff]
        %v3486 = vld [vmem:[%s3290 + $0x28] sm:$0xff]
        %v3487 = vld [vmem:[%s3290 + $0x30] sm:$0xff]
        %v3488 = vld [vmem:[%s3290 + $0x48] sm:$0xff]
        %v3489 = vld [vmem:[%s3290 + $0x50] sm:$0xff]
        %v3490 = vld [vmem:[%s3290 + $0x68] sm:$0xff]
        %v3491 = vld [vmem:[%s3290 + $0x70] sm:$0xff]
        %v3492 = vld [vmem:[%s3290 + $0x88] sm:$0xff]
        %v3493 = vld [vmem:[%s3290 + $0x90] sm:$0xff]
        %v3494 = vld [vmem:[%s3290 + $0xa8] sm:$0xff]
        %v3495 = vld [vmem:[%s3290 + $0xb0] sm:$0xff]
        %v3496 = vld [vmem:[%s3290 + $0xc8] sm:$0xff]
        %v3497 = vld [vmem:[%s3290 + $0xd0] sm:$0xff]
        %v3498 = vld [vmem:[%s3290 + $0xe8] sm:$0xff]
        %v3499 = vld [vmem:[%s3290 + $0xf0] sm:$0xff]
        %v3500 = vld [vmem:[%s3290 + $0x108] sm:$0xff]
        %v3501 = vld [vmem:[%s3290 + $0x110] sm:$0xff]
        %v3502 = vld [vmem:[%s3290 + $0x128] sm:$0xff]
        %v3503 = vld [vmem:[%s3290 + $0x130] sm:$0xff]
        %v3504 = vld [vmem:[%s3290 + $0x148] sm:$0xff]
        %v3505 = vld [vmem:[%s3290 + $0x150] sm:$0xff]
        %v3506 = vld [vmem:[%s3290 + $0x168] sm:$0xff]
        %v3507 = vld [vmem:[%s3290 + $0x170] sm:$0xff]
        %v3508 = vld [vmem:[%s3290 + $0x188] sm:$0xff]
        %v3509 = vld [vmem:[%s3290 + $0x190] sm:$0xff]
        %v3510 = vld [vmem:[%s3290 + $0x1a8] sm:$0xff]
        %v3511 = vld [vmem:[%s3290 + $0x1b0] sm:$0xff]
        %v3512 = vld [vmem:[%s3290 + $0x1c8] sm:$0xff]
        %v3513 = vld [vmem:[%s3290 + $0x1d0] sm:$0xff]
        %v3514 = vld [vmem:[%s3290 + $0x1e8] sm:$0xff]
        %v3515 = vld [vmem:[%s3290 + $0x1f0] sm:$0xff]
        %3548 = vrot.lane.b32.xlu0 %v3484, 56
        %v3549 = vpop.permute.xlu0 %3548
        %3550 = vrot.lane.b32.xlu0 %v3485, 56
        %v3551 = vpop.permute.xlu0 %3550
        %3552 = vrot.lane.b32.xlu0 %v3486, 56
        %v3553 = vpop.permute.xlu0 %3552
        %3554 = vrot.lane.b32.xlu0 %v3487, 56
        %v3555 = vpop.permute.xlu0 %3554
        %3556 = vrot.lane.b32.xlu0 %v3488, 56
        %v3557 = vpop.permute.xlu0 %3556
        %3558 = vrot.lane.b32.xlu0 %v3489, 56
        %v3559 = vpop.permute.xlu0 %3558
        %3560 = vrot.lane.b32.xlu0 %v3490, 56
        %v3561 = vpop.permute.xlu0 %3560
        %3562 = vrot.lane.b32.xlu0 %v3491, 56
        %v3563 = vpop.permute.xlu0 %3562
        %3564 = vrot.lane.b32.xlu0 %v3492, 56
        %v3565 = vpop.permute.xlu0 %3564
        %3566 = vrot.lane.b32.xlu0 %v3493, 56
        %v3567 = vpop.permute.xlu0 %3566
        %3568 = vrot.lane.b32.xlu0 %v3494, 56
        %v3569 = vpop.permute.xlu0 %3568
        %3570 = vrot.lane.b32.xlu0 %v3495, 56
        %v3571 = vpop.permute.xlu0 %3570
        %3572 = vrot.lane.b32.xlu0 %v3496, 56
        %v3573 = vpop.permute.xlu0 %3572
        %3574 = vrot.lane.b32.xlu0 %v3497, 56
        %v3575 = vpop.permute.xlu0 %3574
        %3576 = vrot.lane.b32.xlu0 %v3498, 56
        %v3577 = vpop.permute.xlu0 %3576
        %3578 = vrot.lane.b32.xlu0 %v3499, 56
        %v3579 = vpop.permute.xlu0 %3578
        %3580 = vrot.lane.b32.xlu0 %v3500, 56
        %v3581 = vpop.permute.xlu0 %3580
        %3582 = vrot.lane.b32.xlu0 %v3501, 56
        %v3583 = vpop.permute.xlu0 %3582
        %3584 = vrot.lane.b32.xlu0 %v3502, 56
        %v3585 = vpop.permute.xlu0 %3584
        %3586 = vrot.lane.b32.xlu0 %v3503, 56
        %v3587 = vpop.permute.xlu0 %3586
        %3588 = vrot.lane.b32.xlu0 %v3504, 56
        %v3589 = vpop.permute.xlu0 %3588
        %3590 = vrot.lane.b32.xlu0 %v3505, 56
        %v3591 = vpop.permute.xlu0 %3590
        %3592 = vrot.lane.b32.xlu0 %v3506, 56
        %v3593 = vpop.permute.xlu0 %3592
        %3594 = vrot.lane.b32.xlu0 %v3507, 56
        %v3595 = vpop.permute.xlu0 %3594
        %3596 = vrot.lane.b32.xlu0 %v3508, 56
        %v3597 = vpop.permute.xlu0 %3596
        %3598 = vrot.lane.b32.xlu0 %v3509, 56
        %v3599 = vpop.permute.xlu0 %3598
        %3600 = vrot.lane.b32.xlu0 %v3510, 56
        %v3601 = vpop.permute.xlu0 %3600
        %3602 = vrot.lane.b32.xlu0 %v3511, 56
        %v3603 = vpop.permute.xlu0 %3602
        %3604 = vrot.lane.b32.xlu0 %v3512, 56
        %v3605 = vpop.permute.xlu0 %3604
        %3606 = vrot.lane.b32.xlu0 %v3513, 56
        %v3607 = vpop.permute.xlu0 %3606
        %3608 = vrot.lane.b32.xlu0 %v3514, 56
        %v3609 = vpop.permute.xlu0 %3608
        %3610 = vrot.lane.b32.xlu0 %v3515, 56
        %v3611 = vpop.permute.xlu0 %3610
        %vm3644 = vcmask 523712
        %3645 = vst.msk [vmem:[#allocation4] sm:$0xff] %vm3644, %v3549
        %3646 = vst.msk [vmem:[#allocation4 + $0x8] sm:$0xff] %vm3644, %v3551
        %3647 = vst.msk [vmem:[#allocation4 + $0x10] sm:$0xff] %vm3644, %v3553
        %3648 = vst.msk [vmem:[#allocation4 + $0x18] sm:$0xff] %vm3644, %v3555
        %3649 = vst.msk [vmem:[#allocation4 + $0x20] sm:$0xff] %vm3644, %v3557
        %3650 = vst.msk [vmem:[#allocation4 + $0x28] sm:$0xff] %vm3644, %v3559
        %3651 = vst.msk [vmem:[#allocation4 + $0x30] sm:$0xff] %vm3644, %v3561
        %3652 = vst.msk [vmem:[#allocation4 + $0x38] sm:$0xff] %vm3644, %v3563
        %3653 = vst.msk [vmem:[#allocation4 + $0x40] sm:$0xff] %vm3644, %v3565
        %3654 = vst.msk [vmem:[#allocation4 + $0x48] sm:$0xff] %vm3644, %v3567
        %3655 = vst.msk [vmem:[#allocation4 + $0x50] sm:$0xff] %vm3644, %v3569
        %3656 = vst.msk [vmem:[#allocation4 + $0x58] sm:$0xff] %vm3644, %v3571
        %3657 = vst.msk [vmem:[#allocation4 + $0x60] sm:$0xff] %vm3644, %v3573
        %3658 = vst.msk [vmem:[#allocation4 + $0x68] sm:$0xff] %vm3644, %v3575
        %3659 = vst.msk [vmem:[#allocation4 + $0x70] sm:$0xff] %vm3644, %v3577
        %3660 = vst.msk [vmem:[#allocation4 + $0x78] sm:$0xff] %vm3644, %v3579
        %3661 = vst.msk [vmem:[#allocation4 + $0x80] sm:$0xff] %vm3644, %v3581
        %3662 = vst.msk [vmem:[#allocation4 + $0x88] sm:$0xff] %vm3644, %v3583
        %3663 = vst.msk [vmem:[#allocation4 + $0x90] sm:$0xff] %vm3644, %v3585
        %3664 = vst.msk [vmem:[#allocation4 + $0x98] sm:$0xff] %vm3644, %v3587
        %3665 = vst.msk [vmem:[#allocation4 + $0xa0] sm:$0xff] %vm3644, %v3589
        %3666 = vst.msk [vmem:[#allocation4 + $0xa8] sm:$0xff] %vm3644, %v3591
        %3667 = vst.msk [vmem:[#allocation4 + $0xb0] sm:$0xff] %vm3644, %v3593
        %3668 = vst.msk [vmem:[#allocation4 + $0xb8] sm:$0xff] %vm3644, %v3595
        %3669 = vst.msk [vmem:[#allocation4 + $0xc0] sm:$0xff] %vm3644, %v3597
        %3670 = vst.msk [vmem:[#allocation4 + $0xc8] sm:$0xff] %vm3644, %v3599
        %3671 = vst.msk [vmem:[#allocation4 + $0xd0] sm:$0xff] %vm3644, %v3601
        %3672 = vst.msk [vmem:[#allocation4 + $0xd8] sm:$0xff] %vm3644, %v3603
        %3673 = vst.msk [vmem:[#allocation4 + $0xe0] sm:$0xff] %vm3644, %v3605
        %3674 = vst.msk [vmem:[#allocation4 + $0xe8] sm:$0xff] %vm3644, %v3607
        %3675 = vst.msk [vmem:[#allocation4 + $0xf0] sm:$0xff] %vm3644, %v3609
        %3676 = vst.msk [vmem:[#allocation4 + $0xf8] sm:$0xff] %vm3644, %v3611
        %v3677 = vld [vmem:[%s3290 + $0x9] sm:$0xff]
        %v3678 = vld [vmem:[%s3290 + $0x11] sm:$0xff]
        %v3679 = vld [vmem:[%s3290 + $0x29] sm:$0xff]
        %v3680 = vld [vmem:[%s3290 + $0x31] sm:$0xff]
        %v3681 = vld [vmem:[%s3290 + $0x49] sm:$0xff]
        %v3682 = vld [vmem:[%s3290 + $0x51] sm:$0xff]
        %v3683 = vld [vmem:[%s3290 + $0x69] sm:$0xff]
        %v3684 = vld [vmem:[%s3290 + $0x71] sm:$0xff]
        %v3685 = vld [vmem:[%s3290 + $0x89] sm:$0xff]
        %v3686 = vld [vmem:[%s3290 + $0x91] sm:$0xff]
        %v3687 = vld [vmem:[%s3290 + $0xa9] sm:$0xff]
        %v3688 = vld [vmem:[%s3290 + $0xb1] sm:$0xff]
        %v3689 = vld [vmem:[%s3290 + $0xc9] sm:$0xff]
        %v3690 = vld [vmem:[%s3290 + $0xd1] sm:$0xff]
        %v3691 = vld [vmem:[%s3290 + $0xe9] sm:$0xff]
        %v3692 = vld [vmem:[%s3290 + $0xf1] sm:$0xff]
        %v3693 = vld [vmem:[%s3290 + $0x109] sm:$0xff]
        %v3694 = vld [vmem:[%s3290 + $0x111] sm:$0xff]
        %v3695 = vld [vmem:[%s3290 + $0x129] sm:$0xff]
        %v3696 = vld [vmem:[%s3290 + $0x131] sm:$0xff]
        %v3697 = vld [vmem:[%s3290 + $0x149] sm:$0xff]
        %v3698 = vld [vmem:[%s3290 + $0x151] sm:$0xff]
        %v3699 = vld [vmem:[%s3290 + $0x169] sm:$0xff]
        %v3700 = vld [vmem:[%s3290 + $0x171] sm:$0xff]
        %v3701 = vld [vmem:[%s3290 + $0x189] sm:$0xff]
        %v3702 = vld [vmem:[%s3290 + $0x191] sm:$0xff]
        %v3703 = vld [vmem:[%s3290 + $0x1a9] sm:$0xff]
        %v3704 = vld [vmem:[%s3290 + $0x1b1] sm:$0xff]
        %v3705 = vld [vmem:[%s3290 + $0x1c9] sm:$0xff]
        %v3706 = vld [vmem:[%s3290 + $0x1d1] sm:$0xff]
        %v3707 = vld [vmem:[%s3290 + $0x1e9] sm:$0xff]
        %v3708 = vld [vmem:[%s3290 + $0x1f1] sm:$0xff]
        %3741 = vrot.lane.b32.xlu0 %v3677, 64
        %v3742 = vpop.permute.xlu0 %3741
        %3743 = vrot.lane.b32.xlu0 %v3678, 64
        %v3744 = vpop.permute.xlu0 %3743
        %3745 = vrot.lane.b32.xlu0 %v3679, 64
        %v3746 = vpop.permute.xlu0 %3745
        %3747 = vrot.lane.b32.xlu0 %v3680, 64
        %v3748 = vpop.permute.xlu0 %3747
        %3749 = vrot.lane.b32.xlu0 %v3681, 64
        %v3750 = vpop.permute.xlu0 %3749
        %3751 = vrot.lane.b32.xlu0 %v3682, 64
        %v3752 = vpop.permute.xlu0 %3751
        %3753 = vrot.lane.b32.xlu0 %v3683, 64
        %v3754 = vpop.permute.xlu0 %3753
        %3755 = vrot.lane.b32.xlu0 %v3684, 64
        %v3756 = vpop.permute.xlu0 %3755
        %3757 = vrot.lane.b32.xlu0 %v3685, 64
        %v3758 = vpop.permute.xlu0 %3757
        %3759 = vrot.lane.b32.xlu0 %v3686, 64
        %v3760 = vpop.permute.xlu0 %3759
        %3761 = vrot.lane.b32.xlu0 %v3687, 64
        %v3762 = vpop.permute.xlu0 %3761
        %3763 = vrot.lane.b32.xlu0 %v3688, 64
        %v3764 = vpop.permute.xlu0 %3763
        %3765 = vrot.lane.b32.xlu0 %v3689, 64
        %v3766 = vpop.permute.xlu0 %3765
        %3767 = vrot.lane.b32.xlu0 %v3690, 64
        %v3768 = vpop.permute.xlu0 %3767
        %3769 = vrot.lane.b32.xlu0 %v3691, 64
        %v3770 = vpop.permute.xlu0 %3769
        %3771 = vrot.lane.b32.xlu0 %v3692, 64
        %v3772 = vpop.permute.xlu0 %3771
        %3773 = vrot.lane.b32.xlu0 %v3693, 64
        %v3774 = vpop.permute.xlu0 %3773
        %3775 = vrot.lane.b32.xlu0 %v3694, 64
        %v3776 = vpop.permute.xlu0 %3775
        %3777 = vrot.lane.b32.xlu0 %v3695, 64
        %v3778 = vpop.permute.xlu0 %3777
        %3779 = vrot.lane.b32.xlu0 %v3696, 64
        %v3780 = vpop.permute.xlu0 %3779
        %3781 = vrot.lane.b32.xlu0 %v3697, 64
        %v3782 = vpop.permute.xlu0 %3781
        %3783 = vrot.lane.b32.xlu0 %v3698, 64
        %v3784 = vpop.permute.xlu0 %3783
        %3785 = vrot.lane.b32.xlu0 %v3699, 64
        %v3786 = vpop.permute.xlu0 %3785
        %3787 = vrot.lane.b32.xlu0 %v3700, 64
        %v3788 = vpop.permute.xlu0 %3787
        %3789 = vrot.lane.b32.xlu0 %v3701, 64
        %v3790 = vpop.permute.xlu0 %3789
        %3791 = vrot.lane.b32.xlu0 %v3702, 64
        %v3792 = vpop.permute.xlu0 %3791
        %3793 = vrot.lane.b32.xlu0 %v3703, 64
        %v3794 = vpop.permute.xlu0 %3793
        %3795 = vrot.lane.b32.xlu0 %v3704, 64
        %v3796 = vpop.permute.xlu0 %3795
        %3797 = vrot.lane.b32.xlu0 %v3705, 64
        %v3798 = vpop.permute.xlu0 %3797
        %3799 = vrot.lane.b32.xlu0 %v3706, 64
        %v3800 = vpop.permute.xlu0 %3799
        %3801 = vrot.lane.b32.xlu0 %v3707, 64
        %v3802 = vpop.permute.xlu0 %3801
        %3803 = vrot.lane.b32.xlu0 %v3708, 64
        %v3804 = vpop.permute.xlu0 %3803
        %vm3837 = vcmask 589312
        %3838 = vst.msk [vmem:[#allocation4] sm:$0xff] %vm3837, %v3742
        %3839 = vst.msk [vmem:[#allocation4 + $0x8] sm:$0xff] %vm3837, %v3744
        %3840 = vst.msk [vmem:[#allocation4 + $0x10] sm:$0xff] %vm3837, %v3746
        %3841 = vst.msk [vmem:[#allocation4 + $0x18] sm:$0xff] %vm3837, %v3748
        %3842 = vst.msk [vmem:[#allocation4 + $0x20] sm:$0xff] %vm3837, %v3750
        %3843 = vst.msk [vmem:[#allocation4 + $0x28] sm:$0xff] %vm3837, %v3752
        %3844 = vst.msk [vmem:[#allocation4 + $0x30] sm:$0xff] %vm3837, %v3754
        %3845 = vst.msk [vmem:[#allocation4 + $0x38] sm:$0xff] %vm3837, %v3756
        %3846 = vst.msk [vmem:[#allocation4 + $0x40] sm:$0xff] %vm3837, %v3758
        %3847 = vst.msk [vmem:[#allocation4 + $0x48] sm:$0xff] %vm3837, %v3760
        %3848 = vst.msk [vmem:[#allocation4 + $0x50] sm:$0xff] %vm3837, %v3762
        %3849 = vst.msk [vmem:[#allocation4 + $0x58] sm:$0xff] %vm3837, %v3764
        %3850 = vst.msk [vmem:[#allocation4 + $0x60] sm:$0xff] %vm3837, %v3766
        %3851 = vst.msk [vmem:[#allocation4 + $0x68] sm:$0xff] %vm3837, %v3768
        %3852 = vst.msk [vmem:[#allocation4 + $0x70] sm:$0xff] %vm3837, %v3770
        %3853 = vst.msk [vmem:[#allocation4 + $0x78] sm:$0xff] %vm3837, %v3772
        %3854 = vst.msk [vmem:[#allocation4 + $0x80] sm:$0xff] %vm3837, %v3774
        %3855 = vst.msk [vmem:[#allocation4 + $0x88] sm:$0xff] %vm3837, %v3776
        %3856 = vst.msk [vmem:[#allocation4 + $0x90] sm:$0xff] %vm3837, %v3778
        %3857 = vst.msk [vmem:[#allocation4 + $0x98] sm:$0xff] %vm3837, %v3780
        %3858 = vst.msk [vmem:[#allocation4 + $0xa0] sm:$0xff] %vm3837, %v3782
        %3859 = vst.msk [vmem:[#allocation4 + $0xa8] sm:$0xff] %vm3837, %v3784
        %3860 = vst.msk [vmem:[#allocation4 + $0xb0] sm:$0xff] %vm3837, %v3786
        %3861 = vst.msk [vmem:[#allocation4 + $0xb8] sm:$0xff] %vm3837, %v3788
        %3862 = vst.msk [vmem:[#allocation4 + $0xc0] sm:$0xff] %vm3837, %v3790
        %3863 = vst.msk [vmem:[#allocation4 + $0xc8] sm:$0xff] %vm3837, %v3792
        %3864 = vst.msk [vmem:[#allocation4 + $0xd0] sm:$0xff] %vm3837, %v3794
        %3865 = vst.msk [vmem:[#allocation4 + $0xd8] sm:$0xff] %vm3837, %v3796
        %3866 = vst.msk [vmem:[#allocation4 + $0xe0] sm:$0xff] %vm3837, %v3798
        %3867 = vst.msk [vmem:[#allocation4 + $0xe8] sm:$0xff] %vm3837, %v3800
        %3868 = vst.msk [vmem:[#allocation4 + $0xf0] sm:$0xff] %vm3837, %v3802
        %3869 = vst.msk [vmem:[#allocation4 + $0xf8] sm:$0xff] %vm3837, %v3804
        %v3870 = vld [vmem:[#allocation4] sm:$0xff]
        %v3871 = vld [vmem:[#allocation4 + $0x8] sm:$0xff]
        %v3872 = vld [vmem:[#allocation4 + $0x10] sm:$0xff]
        %v3873 = vld [vmem:[#allocation4 + $0x18] sm:$0xff]
        %v3874 = vld [vmem:[#allocation4 + $0x20] sm:$0xff]
        %v3875 = vld [vmem:[#allocation4 + $0x28] sm:$0xff]
        %v3876 = vld [vmem:[#allocation4 + $0x30] sm:$0xff]
        %v3877 = vld [vmem:[#allocation4 + $0x38] sm:$0xff]
        %v3878 = vld [vmem:[#allocation4 + $0x40] sm:$0xff]
        %v3879 = vld [vmem:[#allocation4 + $0x48] sm:$0xff]
        %v3880 = vld [vmem:[#allocation4 + $0x50] sm:$0xff]
        %v3881 = vld [vmem:[#allocation4 + $0x58] sm:$0xff]
        %v3882 = vld [vmem:[#allocation4 + $0x60] sm:$0xff]
        %v3883 = vld [vmem:[#allocation4 + $0x68] sm:$0xff]
        %v3884 = vld [vmem:[#allocation4 + $0x70] sm:$0xff]
        %v3885 = vld [vmem:[#allocation4 + $0x78] sm:$0xff]
        %v3886 = vld [vmem:[#allocation4 + $0x80] sm:$0xff]
        %v3887 = vld [vmem:[#allocation4 + $0x88] sm:$0xff]
        %v3888 = vld [vmem:[#allocation4 + $0x90] sm:$0xff]
        %v3889 = vld [vmem:[#allocation4 + $0x98] sm:$0xff]
        %v3890 = vld [vmem:[#allocation4 + $0xa0] sm:$0xff]
        %v3891 = vld [vmem:[#allocation4 + $0xa8] sm:$0xff]
        %v3892 = vld [vmem:[#allocation4 + $0xb0] sm:$0xff]
        %v3893 = vld [vmem:[#allocation4 + $0xb8] sm:$0xff]
        %v3894 = vld [vmem:[#allocation4 + $0xc0] sm:$0xff]
        %v3895 = vld [vmem:[#allocation4 + $0xc8] sm:$0xff]
        %v3896 = vld [vmem:[#allocation4 + $0xd0] sm:$0xff]
        %v3897 = vld [vmem:[#allocation4 + $0xd8] sm:$0xff]
        %v3898 = vld [vmem:[#allocation4 + $0xe0] sm:$0xff]
        %v3899 = vld [vmem:[#allocation4 + $0xe8] sm:$0xff]
        %v3900 = vld [vmem:[#allocation4 + $0xf0] sm:$0xff]
        %v3901 = vld [vmem:[#allocation4 + $0xf8] sm:$0xff]
        %v3902 = vld [vmem:[%s7] sm:$0xff]
        %v3903 = vld [vmem:[%s7 + $0x8] sm:$0xff]
        %v3904 = vld [vmem:[%s7 + $0x10] sm:$0xff]
        %v3905 = vld [vmem:[%s7 + $0x18] sm:$0xff]
        %v3906 = vld [vmem:[%s7 + $0x20] sm:$0xff]
        %v3907 = vld [vmem:[%s7 + $0x28] sm:$0xff]
        %v3908 = vld [vmem:[%s7 + $0x30] sm:$0xff]
        %v3909 = vld [vmem:[%s7 + $0x38] sm:$0xff]
        %v3910 = vld [vmem:[%s7 + $0x40] sm:$0xff]
        %v3911 = vsel %vm722, %v2196, 0.0
        %v3912 = vsel %vm722, %v2197, 0.0
        %v3913 = vsel %vm722, %v2198, 0.0
        %v3914 = vsel %vm722, %v2199, 0.0
        %v3915 = vsel %vm722, %v2200, 0.0
        %v3916 = vsel %vm722, %v2201, 0.0
        %v3917 = vsel %vm722, %v2202, 0.0
        %v3918 = vsel %vm722, %v2203, 0.0
        %v3919 = vsel %vm722, %v2204, 0.0
        %v3920 = vsel %vm722, %v2205, 0.0
        %v3921 = vsel %vm722, %v2206, 0.0
        %v3922 = vsel %vm722, %v2207, 0.0
        %v3923 = vsel %vm722, %v2208, 0.0
        %v3924 = vsel %vm722, %v2209, 0.0
        %v3925 = vsel %vm722, %v2210, 0.0
        %v3926 = vsel %vm722, %v2211, 0.0
        %v3927 = vsel %vm722, %v2212, 0.0
        %v3928 = vsel %vm722, %v2213, 0.0
        %v3929 = vsel %vm722, %v2214, 0.0
        %v3930 = vsel %vm722, %v2215, 0.0
        %v3931 = vsel %vm722, %v2216, 0.0
        %v3932 = vsel %vm722, %v2217, 0.0
        %v3933 = vsel %vm722, %v2218, 0.0
        %v3934 = vsel %vm722, %v2219, 0.0
        %v3935 = vsel %vm722, %v2220, 0.0
        %v3936 = vsel %vm722, %v2221, 0.0
        %v3937 = vsel %vm722, %v2222, 0.0
        %v3938 = vsel %vm722, %v2223, 0.0
        %v3939 = vsel %vm722, %v2224, 0.0
        %v3940 = vsel %vm722, %v2225, 0.0
        %v3941 = vsel %vm722, %v2226, 0.0
        %v3942 = vsel %vm722, %v2227, 0.0
        %vm3943 = vcmask 588800
        %v3945 = vsel %vm3943, %v3870, 0
        %v3948 = vsel %vm3943, %v3871, 0
        %v3951 = vsel %vm3943, %v3872, 0
        %v3954 = vsel %vm3943, %v3873, 0
        %v3957 = vsel %vm3943, %v3874, 0
        %v3960 = vsel %vm3943, %v3875, 0
        %v3963 = vsel %vm3943, %v3876, 0
        %v3966 = vsel %vm3943, %v3877, 0
        %v3969 = vsel %vm3943, %v3878, 0
        %v3972 = vsel %vm3943, %v3879, 0
        %v3975 = vsel %vm3943, %v3880, 0
        %v3978 = vsel %vm3943, %v3881, 0
        %v3981 = vsel %vm3943, %v3882, 0
        %v3984 = vsel %vm3943, %v3883, 0
        %v3987 = vsel %vm3943, %v3884, 0
        %v3990 = vsel %vm3943, %v3885, 0
        %v3993 = vsel %vm3943, %v3886, 0
        %v3996 = vsel %vm3943, %v3887, 0
        %v3999 = vsel %vm3943, %v3888, 0
        %v4002 = vsel %vm3943, %v3889, 0
        %v4005 = vsel %vm3943, %v3890, 0
        %v4008 = vsel %vm3943, %v3891, 0
        %v4011 = vsel %vm3943, %v3892, 0
        %v4014 = vsel %vm3943, %v3893, 0
        %v4017 = vsel %vm3943, %v3894, 0
        %v4020 = vsel %vm3943, %v3895, 0
        %v4023 = vsel %vm3943, %v3896, 0
        %v4026 = vsel %vm3943, %v3897, 0
        %v4029 = vsel %vm3943, %v3898, 0
        %v4032 = vsel %vm3943, %v3899, 0
        %v4035 = vsel %vm3943, %v3900, 0
        %v4038 = vsel %vm3943, %v3901, 0
        %4040 = vmatpush.msra.mxu0 0.0
        %4041 = vmatpush.msra.mxu0 0.0
        %4042 = vmatpush.msra.mxu0 0.0
        %4043 = vmatpush.msra.mxu0 0.0
        %4044 = vmatpush.msra.mxu0 0.0
        %4045 = vmatpush.msra.mxu0 0.0
        %4046 = vmatpush.msra.mxu0 0.0
        %4047 = vmatpush.msra.mxu0 %v3910
        %4048 = vmatpush.msra.mxu0 %v3909
        %4049 = vmatpush.msra.mxu0 %v3908
        %4050 = vmatpush.msra.mxu0 %v3907
        %4051 = vmatpush.msra.mxu0 %v3906
        %4052 = vmatpush.msra.mxu0 %v3905
        %4053 = vmatpush.msra.mxu0 %v3904
        %4054 = vmatpush.msra.mxu0 %v3903
        %4055 = vmatpush.msra.mxu0 %v3902
        %4056 = vmatmul.f32.gmra.mxu0 %v3945
        %v4057 = vpop.f32.mrf.mxu0
        %v4058 = vadd.f32 %v3911, %v4057
        %4059 = vmatmul.f32.gmra.mxu0 %v3948
        %v4060 = vpop.f32.mrf.mxu0
        %v4061 = vadd.f32 %v3912, %v4060
        %4062 = vmatmul.f32.gmra.mxu0 %v3951
        %v4063 = vpop.f32.mrf.mxu0
        %v4064 = vadd.f32 %v3913, %v4063
        %4065 = vmatmul.f32.gmra.mxu0 %v3954
        %v4066 = vpop.f32.mrf.mxu0
        %v4067 = vadd.f32 %v3914, %v4066
        %4068 = vmatmul.f32.gmra.mxu0 %v3957
        %v4069 = vpop.f32.mrf.mxu0
        %v4070 = vadd.f32 %v3915, %v4069
        %4071 = vmatmul.f32.gmra.mxu0 %v3960
        %v4072 = vpop.f32.mrf.mxu0
        %v4073 = vadd.f32 %v3916, %v4072
        %4074 = vmatmul.f32.gmra.mxu0 %v3963
        %v4075 = vpop.f32.mrf.mxu0
        %v4076 = vadd.f32 %v3917, %v4075
        %4077 = vmatmul.f32.gmra.mxu0 %v3966
        %v4078 = vpop.f32.mrf.mxu0
        %v4079 = vadd.f32 %v3918, %v4078
        %4080 = vmatmul.f32.gmra.mxu0 %v3969
        %v4081 = vpop.f32.mrf.mxu0
        %v4082 = vadd.f32 %v3919, %v4081
        %4083 = vmatmul.f32.gmra.mxu0 %v3972
        %v4084 = vpop.f32.mrf.mxu0
        %v4085 = vadd.f32 %v3920, %v4084
        %4086 = vmatmul.f32.gmra.mxu0 %v3975
        %v4087 = vpop.f32.mrf.mxu0
        %v4088 = vadd.f32 %v3921, %v4087
        %4089 = vmatmul.f32.gmra.mxu0 %v3978
        %v4090 = vpop.f32.mrf.mxu0
        %v4091 = vadd.f32 %v3922, %v4090
        %4092 = vmatmul.f32.gmra.mxu0 %v3981
        %v4093 = vpop.f32.mrf.mxu0
        %v4094 = vadd.f32 %v3923, %v4093
        %4095 = vmatmul.f32.gmra.mxu0 %v3984
        %v4096 = vpop.f32.mrf.mxu0
        %v4097 = vadd.f32 %v3924, %v4096
        %4098 = vmatmul.f32.gmra.mxu0 %v3987
        %v4099 = vpop.f32.mrf.mxu0
        %v4100 = vadd.f32 %v3925, %v4099
        %4101 = vmatmul.f32.gmra.mxu0 %v3990
        %v4102 = vpop.f32.mrf.mxu0
        %v4103 = vadd.f32 %v3926, %v4102
        %4104 = vmatmul.f32.gmra.mxu0 %v3993
        %v4105 = vpop.f32.mrf.mxu0
        %v4106 = vadd.f32 %v3927, %v4105
        %4107 = vmatmul.f32.gmra.mxu0 %v3996
        %v4108 = vpop.f32.mrf.mxu0
        %v4109 = vadd.f32 %v3928, %v4108
        %4110 = vmatmul.f32.gmra.mxu0 %v3999
        %v4111 = vpop.f32.mrf.mxu0
        %v4112 = vadd.f32 %v3929, %v4111
        %4113 = vmatmul.f32.gmra.mxu0 %v4002
        %v4114 = vpop.f32.mrf.mxu0
        %v4115 = vadd.f32 %v3930, %v4114
        %4116 = vmatmul.f32.gmra.mxu0 %v4005
        %v4117 = vpop.f32.mrf.mxu0
        %v4118 = vadd.f32 %v3931, %v4117
        %4119 = vmatmul.f32.gmra.mxu0 %v4008
        %v4120 = vpop.f32.mrf.mxu0
        %v4121 = vadd.f32 %v3932, %v4120
        %4122 = vmatmul.f32.gmra.mxu0 %v4011
        %v4123 = vpop.f32.mrf.mxu0
        %v4124 = vadd.f32 %v3933, %v4123
        %4125 = vmatmul.f32.gmra.mxu0 %v4014
        %v4126 = vpop.f32.mrf.mxu0
        %v4127 = vadd.f32 %v3934, %v4126
        %4128 = vmatmul.f32.gmra.mxu0 %v4017
        %v4129 = vpop.f32.mrf.mxu0
        %v4130 = vadd.f32 %v3935, %v4129
        %4131 = vmatmul.f32.gmra.mxu0 %v4020
        %v4132 = vpop.f32.mrf.mxu0
        %v4133 = vadd.f32 %v3936, %v4132
        %4134 = vmatmul.f32.gmra.mxu0 %v4023
        %v4135 = vpop.f32.mrf.mxu0
        %v4136 = vadd.f32 %v3937, %v4135
        %4137 = vmatmul.f32.gmra.mxu0 %v4026
        %v4138 = vpop.f32.mrf.mxu0
        %v4139 = vadd.f32 %v3938, %v4138
        %4140 = vmatmul.f32.gmra.mxu0 %v4029
        %v4141 = vpop.f32.mrf.mxu0
        %v4142 = vadd.f32 %v3939, %v4141
        %4143 = vmatmul.f32.gmra.mxu0 %v4032
        %v4144 = vpop.f32.mrf.mxu0
        %v4145 = vadd.f32 %v3940, %v4144
        %4146 = vmatmul.f32.gmra.mxu0 %v4035
        %v4147 = vpop.f32.mrf.mxu0
        %v4148 = vadd.f32 %v3941, %v4147
        %4149 = vmatmul.f32.gmra.mxu0 %v4038
        %v4150 = vpop.f32.mrf.mxu0
        %v4151 = vadd.f32 %v3942, %v4150
        %4152 = vdwg.mxu0
        %v4153 = vld [vmem:[%s8] sm:$0xff]
        %v4154 = vld [vmem:[%s8 + $0x8] sm:$0xff]
        %v4155 = vld [vmem:[%s8 + $0x10] sm:$0xff]
        %v4156 = vld [vmem:[%s8 + $0x18] sm:$0xff]
        %v4157 = vld [vmem:[%s9] sm:$0x1]
        %v4159 = vperm.slane %v4157, 0
        %v4162 = vsel %vm542, %v4058, 0
        %v4165 = vsel %vm542, %v4061, 0
        %v4168 = vsel %vm542, %v4064, 0
        %v4171 = vsel %vm542, %v4067, 0
        %v4174 = vsel %vm542, %v4070, 0
        %v4177 = vsel %vm542, %v4073, 0
        %v4180 = vsel %vm542, %v4076, 0
        %v4183 = vsel %vm542, %v4079, 0
        %v4186 = vsel %vm542, %v4082, 0
        %v4189 = vsel %vm542, %v4085, 0
        %v4192 = vsel %vm542, %v4088, 0
        %v4195 = vsel %vm542, %v4091, 0
        %v4198 = vsel %vm542, %v4094, 0
        %v4201 = vsel %vm542, %v4097, 0
        %v4204 = vsel %vm542, %v4100, 0
        %v4207 = vsel %vm542, %v4103, 0
        %v4210 = vsel %vm542, %v4106, 0
        %v4213 = vsel %vm542, %v4109, 0
        %v4216 = vsel %vm542, %v4112, 0
        %v4219 = vsel %vm542, %v4115, 0
        %v4222 = vsel %vm542, %v4118, 0
        %v4225 = vsel %vm542, %v4121, 0
        %v4228 = vsel %vm542, %v4124, 0
        %v4231 = vsel %vm542, %v4127, 0
        %v4234 = vsel %vm542, %v4130, 0
        %v4237 = vsel %vm542, %v4133, 0
        %v4240 = vsel %vm542, %v4136, 0
        %v4243 = vsel %vm542, %v4139, 0
        %v4246 = vsel %vm542, %v4142, 0
        %v4249 = vsel %vm542, %v4145, 0
        %v4252 = vsel %vm542, %v4148, 0
        %v4255 = vsel %vm542, %v4151, 0
        %4257 = vmatpush.msra.mxu0 0.0
        %4258 = vmatpush.msra.mxu0 0.0
        %4259 = vmatpush.msra.mxu0 0.0
        %4260 = vmatpush.msra.mxu0 0.0
        %4261 = vmatpush.msra.mxu0 0.0
        %4262 = vmatpush.msra.mxu0 0.0
        %4263 = vmatpush.msra.mxu0 0.0
        %4264 = vmatpush.msra.mxu0 0.0
        %4265 = vmatpush.msra.mxu0 0.0
        %4266 = vmatpush.msra.mxu0 0.0
        %4267 = vmatpush.msra.mxu0 0.0
        %4268 = vmatpush.msra.mxu0 0.0
        %4269 = vmatpush.msra.mxu0 %v4156
        %4270 = vmatpush.msra.mxu0 %v4155
        %4271 = vmatpush.msra.mxu0 %v4154
        %4272 = vmatpush.msra.mxu0 %v4153
        %4273 = vmatmul.f32.gmra.mxu0 %v4162
        %v4274 = vpop.f32.mrf.mxu0
        %v4275 = vadd.f32 %v4159, %v4274
        %4276 = vmatmul.f32.gmra.mxu0 %v4165
        %v4277 = vpop.f32.mrf.mxu0
        %v4278 = vadd.f32 %v4159, %v4277
        %4279 = vmatmul.f32.gmra.mxu0 %v4168
        %v4280 = vpop.f32.mrf.mxu0
        %v4281 = vadd.f32 %v4159, %v4280
        %4282 = vmatmul.f32.gmra.mxu0 %v4171
        %v4283 = vpop.f32.mrf.mxu0
        %v4284 = vadd.f32 %v4159, %v4283
        %4285 = vmatmul.f32.gmra.mxu0 %v4174
        %v4286 = vpop.f32.mrf.mxu0
        %v4287 = vadd.f32 %v4159, %v4286
        %4288 = vmatmul.f32.gmra.mxu0 %v4177
        %v4289 = vpop.f32.mrf.mxu0
        %v4290 = vadd.f32 %v4159, %v4289
        %4291 = vmatmul.f32.gmra.mxu0 %v4180
        %v4292 = vpop.f32.mrf.mxu0
        %v4293 = vadd.f32 %v4159, %v4292
        %4294 = vmatmul.f32.gmra.mxu0 %v4183
        %v4295 = vpop.f32.mrf.mxu0
        %v4296 = vadd.f32 %v4159, %v4295
        %4297 = vmatmul.f32.gmra.mxu0 %v4186
        %v4298 = vpop.f32.mrf.mxu0
        %v4299 = vadd.f32 %v4159, %v4298
        %4300 = vmatmul.f32.gmra.mxu0 %v4189
        %v4301 = vpop.f32.mrf.mxu0
        %v4302 = vadd.f32 %v4159, %v4301
        %4303 = vmatmul.f32.gmra.mxu0 %v4192
        %v4304 = vpop.f32.mrf.mxu0
        %v4305 = vadd.f32 %v4159, %v4304
        %4306 = vmatmul.f32.gmra.mxu0 %v4195
        %v4307 = vpop.f32.mrf.mxu0
        %v4308 = vadd.f32 %v4159, %v4307
        %4309 = vmatmul.f32.gmra.mxu0 %v4198
        %v4310 = vpop.f32.mrf.mxu0
        %v4311 = vadd.f32 %v4159, %v4310
        %4312 = vmatmul.f32.gmra.mxu0 %v4201
        %v4313 = vpop.f32.mrf.mxu0
        %v4314 = vadd.f32 %v4159, %v4313
        %4315 = vmatmul.f32.gmra.mxu0 %v4204
        %v4316 = vpop.f32.mrf.mxu0
        %v4317 = vadd.f32 %v4159, %v4316
        %4318 = vmatmul.f32.gmra.mxu0 %v4207
        %v4319 = vpop.f32.mrf.mxu0
        %v4320 = vadd.f32 %v4159, %v4319
        %4321 = vmatmul.f32.gmra.mxu0 %v4210
        %v4322 = vpop.f32.mrf.mxu0
        %v4323 = vadd.f32 %v4159, %v4322
        %4324 = vmatmul.f32.gmra.mxu0 %v4213
        %v4325 = vpop.f32.mrf.mxu0
        %v4326 = vadd.f32 %v4159, %v4325
        %4327 = vmatmul.f32.gmra.mxu0 %v4216
        %v4328 = vpop.f32.mrf.mxu0
        %v4329 = vadd.f32 %v4159, %v4328
        %4330 = vmatmul.f32.gmra.mxu0 %v4219
        %v4331 = vpop.f32.mrf.mxu0
        %v4332 = vadd.f32 %v4159, %v4331
        %4333 = vmatmul.f32.gmra.mxu0 %v4222
        %v4334 = vpop.f32.mrf.mxu0
        %v4335 = vadd.f32 %v4159, %v4334
        %4336 = vmatmul.f32.gmra.mxu0 %v4225
        %v4337 = vpop.f32.mrf.mxu0
        %v4338 = vadd.f32 %v4159, %v4337
        %4339 = vmatmul.f32.gmra.mxu0 %v4228
        %v4340 = vpop.f32.mrf.mxu0
        %v4341 = vadd.f32 %v4159, %v4340
        %4342 = vmatmul.f32.gmra.mxu0 %v4231
        %v4343 = vpop.f32.mrf.mxu0
        %v4344 = vadd.f32 %v4159, %v4343
        %4345 = vmatmul.f32.gmra.mxu0 %v4234
        %v4346 = vpop.f32.mrf.mxu0
        %v4347 = vadd.f32 %v4159, %v4346
        %4348 = vmatmul.f32.gmra.mxu0 %v4237
        %v4349 = vpop.f32.mrf.mxu0
        %v4350 = vadd.f32 %v4159, %v4349
        %4351 = vmatmul.f32.gmra.mxu0 %v4240
        %v4352 = vpop.f32.mrf.mxu0
        %v4353 = vadd.f32 %v4159, %v4352
        %4354 = vmatmul.f32.gmra.mxu0 %v4243
        %v4355 = vpop.f32.mrf.mxu0
        %v4356 = vadd.f32 %v4159, %v4355
        %4357 = vmatmul.f32.gmra.mxu0 %v4246
        %v4358 = vpop.f32.mrf.mxu0
        %v4359 = vadd.f32 %v4159, %v4358
        %4360 = vmatmul.f32.gmra.mxu0 %v4249
        %v4361 = vpop.f32.mrf.mxu0
        %v4362 = vadd.f32 %v4159, %v4361
        %4363 = vmatmul.f32.gmra.mxu0 %v4252
        %v4364 = vpop.f32.mrf.mxu0
        %v4365 = vadd.f32 %v4159, %v4364
        %4366 = vmatmul.f32.gmra.mxu0 %v4255
        %v4367 = vpop.f32.mrf.mxu0
        %v4368 = vadd.f32 %v4159, %v4367
        %4369 = vdwg.mxu0
        %v4370 = vsel %vm542, %v4058, 0.0
        %v4371 = vsel %vm542, %v4061, 0.0
        %v4372 = vadd.f32 %v4370, %v4371
        %v4373 = vsel %vm542, %v4064, 0.0
        %v4374 = vadd.f32 %v4372, %v4373
        %v4375 = vsel %vm542, %v4067, 0.0
        %v4376 = vadd.f32 %v4374, %v4375
        %v4377 = vsel %vm542, %v4070, 0.0
        %v4378 = vadd.f32 %v4376, %v4377
        %v4379 = vsel %vm542, %v4073, 0.0
        %v4380 = vadd.f32 %v4378, %v4379
        %v4381 = vsel %vm542, %v4076, 0.0
        %v4382 = vadd.f32 %v4380, %v4381
        %v4383 = vsel %vm542, %v4079, 0.0
        %v4384 = vadd.f32 %v4382, %v4383
        %v4385 = vsel %vm542, %v4082, 0.0
        %v4386 = vadd.f32 %v4384, %v4385
        %v4387 = vsel %vm542, %v4085, 0.0
        %v4388 = vadd.f32 %v4386, %v4387
        %v4389 = vsel %vm542, %v4088, 0.0
        %v4390 = vadd.f32 %v4388, %v4389
        %v4391 = vsel %vm542, %v4091, 0.0
        %v4392 = vadd.f32 %v4390, %v4391
        %v4393 = vsel %vm542, %v4094, 0.0
        %v4394 = vadd.f32 %v4392, %v4393
        %v4395 = vsel %vm542, %v4097, 0.0
        %v4396 = vadd.f32 %v4394, %v4395
        %v4397 = vsel %vm542, %v4100, 0.0
        %v4398 = vadd.f32 %v4396, %v4397
        %v4399 = vsel %vm542, %v4103, 0.0
        %v4400 = vadd.f32 %v4398, %v4399
        %v4401 = vsel %vm542, %v4106, 0.0
        %v4402 = vadd.f32 %v4400, %v4401
        %v4403 = vsel %vm542, %v4109, 0.0
        %v4404 = vadd.f32 %v4402, %v4403
        %v4405 = vsel %vm542, %v4112, 0.0
        %v4406 = vadd.f32 %v4404, %v4405
        %v4407 = vsel %vm542, %v4115, 0.0
        %v4408 = vadd.f32 %v4406, %v4407
        %v4409 = vsel %vm542, %v4118, 0.0
        %v4410 = vadd.f32 %v4408, %v4409
        %v4411 = vsel %vm542, %v4121, 0.0
        %v4412 = vadd.f32 %v4410, %v4411
        %v4413 = vsel %vm542, %v4124, 0.0
        %v4414 = vadd.f32 %v4412, %v4413
        %v4415 = vsel %vm542, %v4127, 0.0
        %v4416 = vadd.f32 %v4414, %v4415
        %v4417 = vsel %vm542, %v4130, 0.0
        %v4418 = vadd.f32 %v4416, %v4417
        %v4419 = vsel %vm542, %v4133, 0.0
        %v4420 = vadd.f32 %v4418, %v4419
        %v4421 = vsel %vm542, %v4136, 0.0
        %v4422 = vadd.f32 %v4420, %v4421
        %v4423 = vsel %vm542, %v4139, 0.0
        %v4424 = vadd.f32 %v4422, %v4423
        %v4425 = vsel %vm542, %v4142, 0.0
        %v4426 = vadd.f32 %v4424, %v4425
        %v4427 = vsel %vm542, %v4145, 0.0
        %v4428 = vadd.f32 %v4426, %v4427
        %v4429 = vsel %vm542, %v4148, 0.0
        %v4430 = vadd.f32 %v4428, %v4429
        %v4431 = vsel %vm542, %v4151, 0.0
        %v4432 = vadd.f32 %v4430, %v4431
        %v4433 = vrot.slane %v4432, 4
        %v4434 = vadd.f32 %v4432, %v4433
        %v4435 = vrot.slane %v4434, 2
        %v4436 = vadd.f32 %v4434, %v4435
        %v4437 = vrot.slane %v4436, 1
        %v4438 = vadd.f32 %v4436, %v4437
        %v4439 = vrcp.pop 256.0
        %v4440 = vmul.f32 256.0, %v4439
        %v4441 = vsub.f32 1.0, %v4440
        %v4442 = vmul.f32 %v4439, %v4441
        %v4443 = vadd.f32 %v4439, %v4442
        %vm4444 = vweird.f32 %v4439
        %v4445 = vsel %vm4444, %v4439, %v4443
        %v4446 = vmul.f32 %v4438, %v4445
        %v4447 = vld [vmem:[%s10] sm:$0xff]
        %v4448 = vld [vmem:[%s10 + $0x8] sm:$0xff]
        %v4449 = vld [vmem:[%s10 + $0x10] sm:$0xff]
        %v4450 = vld [vmem:[%s10 + $0x18] sm:$0xff]
        %v4451 = vld [vmem:[%s11] sm:$0x1]
        %v4453 = vsel %vm542, %v4446, 0
        %4455 = vmatpush.msra.mxu0 0.0
        %4456 = vmatpush.msra.mxu0 0.0
        %4457 = vmatpush.msra.mxu0 0.0
        %4458 = vmatpush.msra.mxu0 0.0
        %4459 = vmatpush.msra.mxu0 0.0
        %4460 = vmatpush.msra.mxu0 0.0
        %4461 = vmatpush.msra.mxu0 0.0
        %4462 = vmatpush.msra.mxu0 0.0
        %4463 = vmatpush.msra.mxu0 0.0
        %4464 = vmatpush.msra.mxu0 0.0
        %4465 = vmatpush.msra.mxu0 0.0
        %4466 = vmatpush.msra.mxu0 0.0
        %4467 = vmatpush.msra.mxu0 %v4450
        %4468 = vmatpush.msra.mxu0 %v4449
        %4469 = vmatpush.msra.mxu0 %v4448
        %4470 = vmatpush.msra.mxu0 %v4447
        %4471 = vmatmul.f32.gmra.mxu0 %v4453
        %v4472 = vpop.f32.mrf.mxu0
        %v4473 = vadd.f32 %v4451, %v4472
        %4474 = vdwg.mxu0
        %v4475 = vmax.f32 %v4473, 0.0
        %v4476 = vld [vmem:[%s12] sm:$0x3]
        %v4477 = vld [vmem:[%s13] sm:$0x1]
        %vm4478 = vcmask 15360
        %v4480 = vsel %vm4478, %v4475, 0
        %vm4482 = vcmask 1041408
        %v4484 = vsel %vm4482, %v4476, 0
        %4486 = vmatpush.msra.mxu0 0.0
        %4487 = vmatpush.msra.mxu0 0.0
        %4488 = vmatpush.msra.mxu0 0.0
        %4489 = vmatpush.msra.mxu0 0.0
        %4490 = vmatpush.msra.mxu0 0.0
        %4491 = vmatpush.msra.mxu0 0.0
        %4492 = vmatpush.msra.mxu0 0.0
        %4493 = vmatpush.msra.mxu0 0.0
        %4494 = vmatpush.msra.mxu0 0.0
        %4495 = vmatpush.msra.mxu0 0.0
        %4496 = vmatpush.msra.mxu0 0.0
        %4497 = vmatpush.msra.mxu0 0.0
        %4498 = vmatpush.msra.mxu0 0.0
        %4499 = vmatpush.msra.mxu0 0.0
        %4500 = vmatpush.msra.mxu0 0.0
        %4501 = vmatpush.msra.mxu0 %v4484
        %4502 = vmatmul.f32.gmra.mxu0 %v4480
        %v4503 = vpop.f32.mrf.mxu0
        %v4504 = vadd.f32 %v4477, %v4503
        %4505 = vdwg.mxu0
        %v4506 = vxor.u32 %v4504, 2147483648
        %v4507 = vmul.f32 %v4506, 1.442695
        %v4508 = vpow.pop %v4507
        %v4509 = vadd.f32 %v4508, 1.0
        %v4510 = vrcp.pop %v4509
        %v4511 = vmul.f32 %v4509, %v4510
        %v4512 = vsub.f32 1.0, %v4511
        %v4513 = vmul.f32 %v4510, %v4512
        %v4514 = vadd.f32 %v4510, %v4513
        %vm4515 = vweird.f32 %v4509
        %vm4516 = vweird.f32 %v4510
        %vm4517 = vmor %vm4515, %vm4516
        %v4518 = vsel %vm4517, %v4510, %v4514
        %v4519 = vand.u32 2147483647, %v4509
        %vm4520 = vcmp.eq.f32.partialorder %v4519, 8.507059e+37
        %v4521 = vand.u32 %v4509, 2147483648
        %v4522 = vor.u32 1.1754944e-38, %v4521
        %v4523 = vsel %vm4520, %v4522, %v4518
        %v4524 = vmul.f32 1.0, %v4523
        %v4525 = vperm.slane %v4524, 0
        %v4526 = vmul.f32 %v4058, %v4525
        %v4527 = vmul.f32 %v4061, %v4525
        %v4528 = vmul.f32 %v4064, %v4525
        %v4529 = vmul.f32 %v4067, %v4525
        %v4530 = vmul.f32 %v4070, %v4525
        %v4531 = vmul.f32 %v4073, %v4525
        %v4532 = vmul.f32 %v4076, %v4525
        %v4533 = vmul.f32 %v4079, %v4525
        %v4534 = vmul.f32 %v4082, %v4525
        %v4535 = vmul.f32 %v4085, %v4525
        %v4536 = vmul.f32 %v4088, %v4525
        %v4537 = vmul.f32 %v4091, %v4525
        %v4538 = vmul.f32 %v4094, %v4525
        %v4539 = vmul.f32 %v4097, %v4525
        %v4540 = vmul.f32 %v4100, %v4525
        %v4541 = vmul.f32 %v4103, %v4525
        %v4542 = vmul.f32 %v4106, %v4525
        %v4543 = vmul.f32 %v4109, %v4525
        %v4544 = vmul.f32 %v4112, %v4525
        %v4545 = vmul.f32 %v4115, %v4525
        %v4546 = vmul.f32 %v4118, %v4525
        %v4547 = vmul.f32 %v4121, %v4525
        %v4548 = vmul.f32 %v4124, %v4525
        %v4549 = vmul.f32 %v4127, %v4525
        %v4550 = vmul.f32 %v4130, %v4525
        %v4551 = vmul.f32 %v4133, %v4525
        %v4552 = vmul.f32 %v4136, %v4525
        %v4553 = vmul.f32 %v4139, %v4525
        %v4554 = vmul.f32 %v4142, %v4525
        %v4555 = vmul.f32 %v4145, %v4525
        %v4556 = vmul.f32 %v4148, %v4525
        %v4557 = vmul.f32 %v4151, %v4525
        %v4558 = vmul.f32 %v4275, %v4526
        %v4559 = vmul.f32 %v4278, %v4527
        %v4560 = vmul.f32 %v4281, %v4528
        %v4561 = vmul.f32 %v4284, %v4529
        %v4562 = vmul.f32 %v4287, %v4530
        %v4563 = vmul.f32 %v4290, %v4531
        %v4564 = vmul.f32 %v4293, %v4532
        %v4565 = vmul.f32 %v4296, %v4533
        %v4566 = vmul.f32 %v4299, %v4534
        %v4567 = vmul.f32 %v4302, %v4535
        %v4568 = vmul.f32 %v4305, %v4536
        %v4569 = vmul.f32 %v4308, %v4537
        %v4570 = vmul.f32 %v4311, %v4538
        %v4571 = vmul.f32 %v4314, %v4539
        %v4572 = vmul.f32 %v4317, %v4540
        %v4573 = vmul.f32 %v4320, %v4541
        %v4574 = vmul.f32 %v4323, %v4542
        %v4575 = vmul.f32 %v4326, %v4543
        %v4576 = vmul.f32 %v4329, %v4544
        %v4577 = vmul.f32 %v4332, %v4545
        %v4578 = vmul.f32 %v4335, %v4546
        %v4579 = vmul.f32 %v4338, %v4547
        %v4580 = vmul.f32 %v4341, %v4548
        %v4581 = vmul.f32 %v4344, %v4549
        %v4582 = vmul.f32 %v4347, %v4550
        %v4583 = vmul.f32 %v4350, %v4551
        %v4584 = vmul.f32 %v4353, %v4552
        %v4585 = vmul.f32 %v4356, %v4553
        %v4586 = vmul.f32 %v4359, %v4554
        %v4587 = vmul.f32 %v4362, %v4555
        %v4588 = vmul.f32 %v4365, %v4556
        %v4589 = vmul.f32 %v4368, %v4557
        %v4590 = vadd.f32 %v4058, %v4558
        %v4591 = vadd.f32 %v4061, %v4559
        %v4592 = vadd.f32 %v4064, %v4560
        %v4593 = vadd.f32 %v4067, %v4561
        %v4594 = vadd.f32 %v4070, %v4562
        %v4595 = vadd.f32 %v4073, %v4563
        %v4596 = vadd.f32 %v4076, %v4564
        %v4597 = vadd.f32 %v4079, %v4565
        %v4598 = vadd.f32 %v4082, %v4566
        %v4599 = vadd.f32 %v4085, %v4567
        %v4600 = vadd.f32 %v4088, %v4568
        %v4601 = vadd.f32 %v4091, %v4569
        %v4602 = vadd.f32 %v4094, %v4570
        %v4603 = vadd.f32 %v4097, %v4571
        %v4604 = vadd.f32 %v4100, %v4572
        %v4605 = vadd.f32 %v4103, %v4573
        %v4606 = vadd.f32 %v4106, %v4574
        %v4607 = vadd.f32 %v4109, %v4575
        %v4608 = vadd.f32 %v4112, %v4576
        %v4609 = vadd.f32 %v4115, %v4577
        %v4610 = vadd.f32 %v4118, %v4578
        %v4611 = vadd.f32 %v4121, %v4579
        %v4612 = vadd.f32 %v4124, %v4580
        %v4613 = vadd.f32 %v4127, %v4581
        %v4614 = vadd.f32 %v4130, %v4582
        %v4615 = vadd.f32 %v4133, %v4583
        %v4616 = vadd.f32 %v4136, %v4584
        %v4617 = vadd.f32 %v4139, %v4585
        %v4618 = vadd.f32 %v4142, %v4586
        %v4619 = vadd.f32 %v4145, %v4587
        %v4620 = vadd.f32 %v4148, %v4588
        %v4621 = vadd.f32 %v4151, %v4589
        %v4622 = vld [vmem:[%s14] sm:$0xff]
        %v4623 = vld [vmem:[%s14 + $0x8] sm:$0xff]
        %v4624 = vld [vmem:[%s14 + $0x10] sm:$0xff]
        %v4625 = vld [vmem:[%s14 + $0x18] sm:$0xff]
        %v4626 = vld [vmem:[%s15] sm:$0x1]
        %v4628 = vperm.slane %v4626, 0
        %v4631 = vsel %vm542, %v4590, 0
        %v4634 = vsel %vm542, %v4591, 0
        %v4637 = vsel %vm542, %v4592, 0
        %v4640 = vsel %vm542, %v4593, 0
        %v4643 = vsel %vm542, %v4594, 0
        %v4646 = vsel %vm542, %v4595, 0
        %v4649 = vsel %vm542, %v4596, 0
        %v4652 = vsel %vm542, %v4597, 0
        %v4655 = vsel %vm542, %v4598, 0
        %v4658 = vsel %vm542, %v4599, 0
        %v4661 = vsel %vm542, %v4600, 0
        %v4664 = vsel %vm542, %v4601, 0
        %v4667 = vsel %vm542, %v4602, 0
        %v4670 = vsel %vm542, %v4603, 0
        %v4673 = vsel %vm542, %v4604, 0
        %v4676 = vsel %vm542, %v4605, 0
        %v4679 = vsel %vm542, %v4606, 0
        %v4682 = vsel %vm542, %v4607, 0
        %v4685 = vsel %vm542, %v4608, 0
        %v4688 = vsel %vm542, %v4609, 0
        %v4691 = vsel %vm542, %v4610, 0
        %v4694 = vsel %vm542, %v4611, 0
        %v4697 = vsel %vm542, %v4612, 0
        %v4700 = vsel %vm542, %v4613, 0
        %v4703 = vsel %vm542, %v4614, 0
        %v4706 = vsel %vm542, %v4615, 0
        %v4709 = vsel %vm542, %v4616, 0
        %v4712 = vsel %vm542, %v4617, 0
        %v4715 = vsel %vm542, %v4618, 0
        %v4718 = vsel %vm542, %v4619, 0
        %v4721 = vsel %vm542, %v4620, 0
        %v4724 = vsel %vm542, %v4621, 0
        %4726 = vmatpush.msra.mxu0 0.0
        %4727 = vmatpush.msra.mxu0 0.0
        %4728 = vmatpush.msra.mxu0 0.0
        %4729 = vmatpush.msra.mxu0 0.0
        %4730 = vmatpush.msra.mxu0 0.0
        %4731 = vmatpush.msra.mxu0 0.0
        %4732 = vmatpush.msra.mxu0 0.0
        %4733 = vmatpush.msra.mxu0 0.0
        %4734 = vmatpush.msra.mxu0 0.0
        %4735 = vmatpush.msra.mxu0 0.0
        %4736 = vmatpush.msra.mxu0 0.0
        %4737 = vmatpush.msra.mxu0 0.0
        %4738 = vmatpush.msra.mxu0 %v4625
        %4739 = vmatpush.msra.mxu0 %v4624
        %4740 = vmatpush.msra.mxu0 %v4623
        %4741 = vmatpush.msra.mxu0 %v4622
        %4742 = vmatmul.f32.gmra.mxu0 %v4631
        %v4743 = vpop.f32.mrf.mxu0
        %v4744 = vadd.f32 %v4628, %v4743
        %4745 = vmatmul.f32.gmra.mxu0 %v4634
        %v4746 = vpop.f32.mrf.mxu0
        %v4747 = vadd.f32 %v4628, %v4746
        %4748 = vmatmul.f32.gmra.mxu0 %v4637
        %v4749 = vpop.f32.mrf.mxu0
        %v4750 = vadd.f32 %v4628, %v4749
        %4751 = vmatmul.f32.gmra.mxu0 %v4640
        %v4752 = vpop.f32.mrf.mxu0
        %v4753 = vadd.f32 %v4628, %v4752
        %4754 = vmatmul.f32.gmra.mxu0 %v4643
        %v4755 = vpop.f32.mrf.mxu0
        %v4756 = vadd.f32 %v4628, %v4755
        %4757 = vmatmul.f32.gmra.mxu0 %v4646
        %v4758 = vpop.f32.mrf.mxu0
        %v4759 = vadd.f32 %v4628, %v4758
        %4760 = vmatmul.f32.gmra.mxu0 %v4649
        %v4761 = vpop.f32.mrf.mxu0
        %v4762 = vadd.f32 %v4628, %v4761
        %4763 = vmatmul.f32.gmra.mxu0 %v4652
        %v4764 = vpop.f32.mrf.mxu0
        %v4765 = vadd.f32 %v4628, %v4764
        %4766 = vmatmul.f32.gmra.mxu0 %v4655
        %v4767 = vpop.f32.mrf.mxu0
        %v4768 = vadd.f32 %v4628, %v4767
        %4769 = vmatmul.f32.gmra.mxu0 %v4658
        %v4770 = vpop.f32.mrf.mxu0
        %v4771 = vadd.f32 %v4628, %v4770
        %4772 = vmatmul.f32.gmra.mxu0 %v4661
        %v4773 = vpop.f32.mrf.mxu0
        %v4774 = vadd.f32 %v4628, %v4773
        %4775 = vmatmul.f32.gmra.mxu0 %v4664
        %v4776 = vpop.f32.mrf.mxu0
        %v4777 = vadd.f32 %v4628, %v4776
        %4778 = vmatmul.f32.gmra.mxu0 %v4667
        %v4779 = vpop.f32.mrf.mxu0
        %v4780 = vadd.f32 %v4628, %v4779
        %4781 = vmatmul.f32.gmra.mxu0 %v4670
        %v4782 = vpop.f32.mrf.mxu0
        %v4783 = vadd.f32 %v4628, %v4782
        %4784 = vmatmul.f32.gmra.mxu0 %v4673
        %v4785 = vpop.f32.mrf.mxu0
        %v4786 = vadd.f32 %v4628, %v4785
        %4787 = vmatmul.f32.gmra.mxu0 %v4676
        %v4788 = vpop.f32.mrf.mxu0
        %v4789 = vadd.f32 %v4628, %v4788
        %4790 = vmatmul.f32.gmra.mxu0 %v4679
        %v4791 = vpop.f32.mrf.mxu0
        %v4792 = vadd.f32 %v4628, %v4791
        %4793 = vmatmul.f32.gmra.mxu0 %v4682
        %v4794 = vpop.f32.mrf.mxu0
        %v4795 = vadd.f32 %v4628, %v4794
        %4796 = vmatmul.f32.gmra.mxu0 %v4685
        %v4797 = vpop.f32.mrf.mxu0
        %v4798 = vadd.f32 %v4628, %v4797
        %4799 = vmatmul.f32.gmra.mxu0 %v4688
        %v4800 = vpop.f32.mrf.mxu0
        %v4801 = vadd.f32 %v4628, %v4800
        %4802 = vmatmul.f32.gmra.mxu0 %v4691
        %v4803 = vpop.f32.mrf.mxu0
        %v4804 = vadd.f32 %v4628, %v4803
        %4805 = vmatmul.f32.gmra.mxu0 %v4694
        %v4806 = vpop.f32.mrf.mxu0
        %v4807 = vadd.f32 %v4628, %v4806
        %4808 = vmatmul.f32.gmra.mxu0 %v4697
        %v4809 = vpop.f32.mrf.mxu0
        %v4810 = vadd.f32 %v4628, %v4809
        %4811 = vmatmul.f32.gmra.mxu0 %v4700
        %v4812 = vpop.f32.mrf.mxu0
        %v4813 = vadd.f32 %v4628, %v4812
        %4814 = vmatmul.f32.gmra.mxu0 %v4703
        %v4815 = vpop.f32.mrf.mxu0
        %v4816 = vadd.f32 %v4628, %v4815
        %4817 = vmatmul.f32.gmra.mxu0 %v4706
        %v4818 = vpop.f32.mrf.mxu0
        %v4819 = vadd.f32 %v4628, %v4818
        %4820 = vmatmul.f32.gmra.mxu0 %v4709
        %v4821 = vpop.f32.mrf.mxu0
        %v4822 = vadd.f32 %v4628, %v4821
        %4823 = vmatmul.f32.gmra.mxu0 %v4712
        %v4824 = vpop.f32.mrf.mxu0
        %v4825 = vadd.f32 %v4628, %v4824
        %4826 = vmatmul.f32.gmra.mxu0 %v4715
        %v4827 = vpop.f32.mrf.mxu0
        %v4828 = vadd.f32 %v4628, %v4827
        %4829 = vmatmul.f32.gmra.mxu0 %v4718
        %v4830 = vpop.f32.mrf.mxu0
        %v4831 = vadd.f32 %v4628, %v4830
        %4832 = vmatmul.f32.gmra.mxu0 %v4721
        %v4833 = vpop.f32.mrf.mxu0
        %v4834 = vadd.f32 %v4628, %v4833
        %4835 = vmatmul.f32.gmra.mxu0 %v4724
        %v4836 = vpop.f32.mrf.mxu0
        %v4837 = vadd.f32 %v4628, %v4836
        %4838 = vdwg.mxu0
        %v4839 = vadd.f32 %v688, %v4744
        %v4840 = vadd.f32 %v689, %v4747
        %v4841 = vadd.f32 %v690, %v4750
        %v4842 = vadd.f32 %v691, %v4753
        %v4843 = vadd.f32 %v692, %v4756
        %v4844 = vadd.f32 %v693, %v4759
        %v4845 = vadd.f32 %v694, %v4762
        %v4846 = vadd.f32 %v695, %v4765
        %v4847 = vadd.f32 %v696, %v4768
        %v4848 = vadd.f32 %v697, %v4771
        %v4849 = vadd.f32 %v698, %v4774
        %v4850 = vadd.f32 %v699, %v4777
        %v4851 = vadd.f32 %v700, %v4780
        %v4852 = vadd.f32 %v701, %v4783
        %v4853 = vadd.f32 %v702, %v4786
        %v4854 = vadd.f32 %v703, %v4789
        %v4855 = vadd.f32 %v704, %v4792
        %v4856 = vadd.f32 %v705, %v4795
        %v4857 = vadd.f32 %v706, %v4798
        %v4858 = vadd.f32 %v707, %v4801
        %v4859 = vadd.f32 %v708, %v4804
        %v4860 = vadd.f32 %v709, %v4807
        %v4861 = vadd.f32 %v710, %v4810
        %v4862 = vadd.f32 %v711, %v4813
        %v4863 = vadd.f32 %v712, %v4816
        %v4864 = vadd.f32 %v713, %v4819
        %v4865 = vadd.f32 %v714, %v4822
        %v4866 = vadd.f32 %v715, %v4825
        %v4867 = vadd.f32 %v716, %v4828
        %v4868 = vadd.f32 %v717, %v4831
        %v4869 = vadd.f32 %v718, %v4834
        %v4870 = vadd.f32 %v719, %v4837
        %v4871 = vsel %vm542, %v4839, 0.0
        %4872 = vadd.xlane.f32.xlu0 %v4871
        %v4873 = vpop.xlane.xlu0 %4872
        %v4874 = vsel %vm542, %v4840, 0.0
        %4875 = vadd.xlane.f32.xlu0 %v4874
        %v4876 = vpop.xlane.xlu0 %4875
        %v4877 = vsel %vm542, %v4841, 0.0
        %4878 = vadd.xlane.f32.xlu0 %v4877
        %v4879 = vpop.xlane.xlu0 %4878
        %v4880 = vsel %vm542, %v4842, 0.0
        %4881 = vadd.xlane.f32.xlu0 %v4880
        %v4882 = vpop.xlane.xlu0 %4881
        %v4883 = vsel %vm542, %v4843, 0.0
        %4884 = vadd.xlane.f32.xlu0 %v4883
        %v4885 = vpop.xlane.xlu0 %4884
        %v4886 = vsel %vm542, %v4844, 0.0
        %4887 = vadd.xlane.f32.xlu0 %v4886
        %v4888 = vpop.xlane.xlu0 %4887
        %v4889 = vsel %vm542, %v4845, 0.0
        %4890 = vadd.xlane.f32.xlu0 %v4889
        %v4891 = vpop.xlane.xlu0 %4890
        %v4892 = vsel %vm542, %v4846, 0.0
        %4893 = vadd.xlane.f32.xlu0 %v4892
        %v4894 = vpop.xlane.xlu0 %4893
        %v4895 = vsel %vm542, %v4847, 0.0
        %4896 = vadd.xlane.f32.xlu0 %v4895
        %v4897 = vpop.xlane.xlu0 %4896
        %v4898 = vsel %vm542, %v4848, 0.0
        %4899 = vadd.xlane.f32.xlu0 %v4898
        %v4900 = vpop.xlane.xlu0 %4899
        %v4901 = vsel %vm542, %v4849, 0.0
        %4902 = vadd.xlane.f32.xlu0 %v4901
        %v4903 = vpop.xlane.xlu0 %4902
        %v4904 = vsel %vm542, %v4850, 0.0
        %4905 = vadd.xlane.f32.xlu0 %v4904
        %v4906 = vpop.xlane.xlu0 %4905
        %v4907 = vsel %vm542, %v4851, 0.0
        %4908 = vadd.xlane.f32.xlu0 %v4907
        %v4909 = vpop.xlane.xlu0 %4908
        %v4910 = vsel %vm542, %v4852, 0.0
        %4911 = vadd.xlane.f32.xlu0 %v4910
        %v4912 = vpop.xlane.xlu0 %4911
        %v4913 = vsel %vm542, %v4853, 0.0
        %4914 = vadd.xlane.f32.xlu0 %v4913
        %v4915 = vpop.xlane.xlu0 %4914
        %v4916 = vsel %vm542, %v4854, 0.0
        %4917 = vadd.xlane.f32.xlu0 %v4916
        %v4918 = vpop.xlane.xlu0 %4917
        %v4919 = vsel %vm542, %v4855, 0.0
        %4920 = vadd.xlane.f32.xlu0 %v4919
        %v4921 = vpop.xlane.xlu0 %4920
        %v4922 = vsel %vm542, %v4856, 0.0
        %4923 = vadd.xlane.f32.xlu0 %v4922
        %v4924 = vpop.xlane.xlu0 %4923
        %v4925 = vsel %vm542, %v4857, 0.0
        %4926 = vadd.xlane.f32.xlu0 %v4925
        %v4927 = vpop.xlane.xlu0 %4926
        %v4928 = vsel %vm542, %v4858, 0.0
        %4929 = vadd.xlane.f32.xlu0 %v4928
        %v4930 = vpop.xlane.xlu0 %4929
        %v4931 = vsel %vm542, %v4859, 0.0
        %4932 = vadd.xlane.f32.xlu0 %v4931
        %v4933 = vpop.xlane.xlu0 %4932
        %v4934 = vsel %vm542, %v4860, 0.0
        %4935 = vadd.xlane.f32.xlu0 %v4934
        %v4936 = vpop.xlane.xlu0 %4935
        %v4937 = vsel %vm542, %v4861, 0.0
        %4938 = vadd.xlane.f32.xlu0 %v4937
        %v4939 = vpop.xlane.xlu0 %4938
        %v4940 = vsel %vm542, %v4862, 0.0
        %4941 = vadd.xlane.f32.xlu0 %v4940
        %v4942 = vpop.xlane.xlu0 %4941
        %v4943 = vsel %vm542, %v4863, 0.0
        %4944 = vadd.xlane.f32.xlu0 %v4943
        %v4945 = vpop.xlane.xlu0 %4944
        %v4946 = vsel %vm542, %v4864, 0.0
        %4947 = vadd.xlane.f32.xlu0 %v4946
        %v4948 = vpop.xlane.xlu0 %4947
        %v4949 = vsel %vm542, %v4865, 0.0
        %4950 = vadd.xlane.f32.xlu0 %v4949
        %v4951 = vpop.xlane.xlu0 %4950
        %v4952 = vsel %vm542, %v4866, 0.0
        %4953 = vadd.xlane.f32.xlu0 %v4952
        %v4954 = vpop.xlane.xlu0 %4953
        %v4955 = vsel %vm542, %v4867, 0.0
        %4956 = vadd.xlane.f32.xlu0 %v4955
        %v4957 = vpop.xlane.xlu0 %4956
        %v4958 = vsel %vm542, %v4868, 0.0
        %4959 = vadd.xlane.f32.xlu0 %v4958
        %v4960 = vpop.xlane.xlu0 %4959
        %v4961 = vsel %vm542, %v4869, 0.0
        %4962 = vadd.xlane.f32.xlu0 %v4961
        %v4963 = vpop.xlane.xlu0 %4962
        %v4964 = vsel %vm542, %v4870, 0.0
        %4965 = vadd.xlane.f32.xlu0 %v4964
        %v4966 = vpop.xlane.xlu0 %4965
        %v4967 = vmul.f32 %v4873, %v825
        %v4968 = vmul.f32 %v4876, %v825
        %v4969 = vmul.f32 %v4879, %v825
        %v4970 = vmul.f32 %v4882, %v825
        %v4971 = vmul.f32 %v4885, %v825
        %v4972 = vmul.f32 %v4888, %v825
        %v4973 = vmul.f32 %v4891, %v825
        %v4974 = vmul.f32 %v4894, %v825
        %v4975 = vmul.f32 %v4897, %v825
        %v4976 = vmul.f32 %v4900, %v825
        %v4977 = vmul.f32 %v4903, %v825
        %v4978 = vmul.f32 %v4906, %v825
        %v4979 = vmul.f32 %v4909, %v825
        %v4980 = vmul.f32 %v4912, %v825
        %v4981 = vmul.f32 %v4915, %v825
        %v4982 = vmul.f32 %v4918, %v825
        %v4983 = vmul.f32 %v4921, %v825
        %v4984 = vmul.f32 %v4924, %v825
        %v4985 = vmul.f32 %v4927, %v825
        %v4986 = vmul.f32 %v4930, %v825
        %v4987 = vmul.f32 %v4933, %v825
        %v4988 = vmul.f32 %v4936, %v825
        %v4989 = vmul.f32 %v4939, %v825
        %v4990 = vmul.f32 %v4942, %v825
        %v4991 = vmul.f32 %v4945, %v825
        %v4992 = vmul.f32 %v4948, %v825
        %v4993 = vmul.f32 %v4951, %v825
        %v4994 = vmul.f32 %v4954, %v825
        %v4995 = vmul.f32 %v4957, %v825
        %v4996 = vmul.f32 %v4960, %v825
        %v4997 = vmul.f32 %v4963, %v825
        %v4998 = vmul.f32 %v4966, %v825
        %v4999 = vsub.f32 %v4839, %v4967
        %v5000 = vsub.f32 %v4840, %v4968
        %v5001 = vsub.f32 %v4841, %v4969
        %v5002 = vsub.f32 %v4842, %v4970
        %v5003 = vsub.f32 %v4843, %v4971
        %v5004 = vsub.f32 %v4844, %v4972
        %v5005 = vsub.f32 %v4845, %v4973
        %v5006 = vsub.f32 %v4846, %v4974
        %v5007 = vsub.f32 %v4847, %v4975
        %v5008 = vsub.f32 %v4848, %v4976
        %v5009 = vsub.f32 %v4849, %v4977
        %v5010 = vsub.f32 %v4850, %v4978
        %v5011 = vsub.f32 %v4851, %v4979
        %v5012 = vsub.f32 %v4852, %v4980
        %v5013 = vsub.f32 %v4853, %v4981
        %v5014 = vsub.f32 %v4854, %v4982
        %v5015 = vsub.f32 %v4855, %v4983
        %v5016 = vsub.f32 %v4856, %v4984
        %v5017 = vsub.f32 %v4857, %v4985
        %v5018 = vsub.f32 %v4858, %v4986
        %v5019 = vsub.f32 %v4859, %v4987
        %v5020 = vsub.f32 %v4860, %v4988
        %v5021 = vsub.f32 %v4861, %v4989
        %v5022 = vsub.f32 %v4862, %v4990
        %v5023 = vsub.f32 %v4863, %v4991
        %v5024 = vsub.f32 %v4864, %v4992
        %v5025 = vsub.f32 %v4865, %v4993
        %v5026 = vsub.f32 %v4866, %v4994
        %v5027 = vsub.f32 %v4867, %v4995
        %v5028 = vsub.f32 %v4868, %v4996
        %v5029 = vsub.f32 %v4869, %v4997
        %v5030 = vsub.f32 %v4870, %v4998
        %v5031 = vmul.f32 %v4999, %v4999
        %v5032 = vmul.f32 %v5000, %v5000
        %v5033 = vmul.f32 %v5001, %v5001
        %v5034 = vmul.f32 %v5002, %v5002
        %v5035 = vmul.f32 %v5003, %v5003
        %v5036 = vmul.f32 %v5004, %v5004
        %v5037 = vmul.f32 %v5005, %v5005
        %v5038 = vmul.f32 %v5006, %v5006
        %v5039 = vmul.f32 %v5007, %v5007
        %v5040 = vmul.f32 %v5008, %v5008
        %v5041 = vmul.f32 %v5009, %v5009
        %v5042 = vmul.f32 %v5010, %v5010
        %v5043 = vmul.f32 %v5011, %v5011
        %v5044 = vmul.f32 %v5012, %v5012
        %v5045 = vmul.f32 %v5013, %v5013
        %v5046 = vmul.f32 %v5014, %v5014
        %v5047 = vmul.f32 %v5015, %v5015
        %v5048 = vmul.f32 %v5016, %v5016
        %v5049 = vmul.f32 %v5017, %v5017
        %v5050 = vmul.f32 %v5018, %v5018
        %v5051 = vmul.f32 %v5019, %v5019
        %v5052 = vmul.f32 %v5020, %v5020
        %v5053 = vmul.f32 %v5021, %v5021
        %v5054 = vmul.f32 %v5022, %v5022
        %v5055 = vmul.f32 %v5023, %v5023
        %v5056 = vmul.f32 %v5024, %v5024
        %v5057 = vmul.f32 %v5025, %v5025
        %v5058 = vmul.f32 %v5026, %v5026
        %v5059 = vmul.f32 %v5027, %v5027
        %v5060 = vmul.f32 %v5028, %v5028
        %v5061 = vmul.f32 %v5029, %v5029
        %v5062 = vmul.f32 %v5030, %v5030
        %v5063 = vsel %vm542, %v5031, 0.0
        %5064 = vadd.xlane.f32.xlu0 %v5063
        %v5065 = vpop.xlane.xlu0 %5064
        %v5066 = vsel %vm542, %v5032, 0.0
        %5067 = vadd.xlane.f32.xlu0 %v5066
        %v5068 = vpop.xlane.xlu0 %5067
        %v5069 = vsel %vm542, %v5033, 0.0
        %5070 = vadd.xlane.f32.xlu0 %v5069
        %v5071 = vpop.xlane.xlu0 %5070
        %v5072 = vsel %vm542, %v5034, 0.0
        %5073 = vadd.xlane.f32.xlu0 %v5072
        %v5074 = vpop.xlane.xlu0 %5073
        %v5075 = vsel %vm542, %v5035, 0.0
        %5076 = vadd.xlane.f32.xlu0 %v5075
        %v5077 = vpop.xlane.xlu0 %5076
        %v5078 = vsel %vm542, %v5036, 0.0
        %5079 = vadd.xlane.f32.xlu0 %v5078
        %v5080 = vpop.xlane.xlu0 %5079
        %v5081 = vsel %vm542, %v5037, 0.0
        %5082 = vadd.xlane.f32.xlu0 %v5081
        %v5083 = vpop.xlane.xlu0 %5082
        %v5084 = vsel %vm542, %v5038, 0.0
        %5085 = vadd.xlane.f32.xlu0 %v5084
        %v5086 = vpop.xlane.xlu0 %5085
        %v5087 = vsel %vm542, %v5039, 0.0
        %5088 = vadd.xlane.f32.xlu0 %v5087
        %v5089 = vpop.xlane.xlu0 %5088
        %v5090 = vsel %vm542, %v5040, 0.0
        %5091 = vadd.xlane.f32.xlu0 %v5090
        %v5092 = vpop.xlane.xlu0 %5091
        %v5093 = vsel %vm542, %v5041, 0.0
        %5094 = vadd.xlane.f32.xlu0 %v5093
        %v5095 = vpop.xlane.xlu0 %5094
        %v5096 = vsel %vm542, %v5042, 0.0
        %5097 = vadd.xlane.f32.xlu0 %v5096
        %v5098 = vpop.xlane.xlu0 %5097
        %v5099 = vsel %vm542, %v5043, 0.0
        %5100 = vadd.xlane.f32.xlu0 %v5099
        %v5101 = vpop.xlane.xlu0 %5100
        %v5102 = vsel %vm542, %v5044, 0.0
        %5103 = vadd.xlane.f32.xlu0 %v5102
        %v5104 = vpop.xlane.xlu0 %5103
        %v5105 = vsel %vm542, %v5045, 0.0
        %5106 = vadd.xlane.f32.xlu0 %v5105
        %v5107 = vpop.xlane.xlu0 %5106
        %v5108 = vsel %vm542, %v5046, 0.0
        %5109 = vadd.xlane.f32.xlu0 %v5108
        %v5110 = vpop.xlane.xlu0 %5109
        %v5111 = vsel %vm542, %v5047, 0.0
        %5112 = vadd.xlane.f32.xlu0 %v5111
        %v5113 = vpop.xlane.xlu0 %5112
        %v5114 = vsel %vm542, %v5048, 0.0
        %5115 = vadd.xlane.f32.xlu0 %v5114
        %v5116 = vpop.xlane.xlu0 %5115
        %v5117 = vsel %vm542, %v5049, 0.0
        %5118 = vadd.xlane.f32.xlu0 %v5117
        %v5119 = vpop.xlane.xlu0 %5118
        %v5120 = vsel %vm542, %v5050, 0.0
        %5121 = vadd.xlane.f32.xlu0 %v5120
        %v5122 = vpop.xlane.xlu0 %5121
        %v5123 = vsel %vm542, %v5051, 0.0
        %5124 = vadd.xlane.f32.xlu0 %v5123
        %v5125 = vpop.xlane.xlu0 %5124
        %v5126 = vsel %vm542, %v5052, 0.0
        %5127 = vadd.xlane.f32.xlu0 %v5126
        %v5128 = vpop.xlane.xlu0 %5127
        %v5129 = vsel %vm542, %v5053, 0.0
        %5130 = vadd.xlane.f32.xlu0 %v5129
        %v5131 = vpop.xlane.xlu0 %5130
        %v5132 = vsel %vm542, %v5054, 0.0
        %5133 = vadd.xlane.f32.xlu0 %v5132
        %v5134 = vpop.xlane.xlu0 %5133
        %v5135 = vsel %vm542, %v5055, 0.0
        %5136 = vadd.xlane.f32.xlu0 %v5135
        %v5137 = vpop.xlane.xlu0 %5136
        %v5138 = vsel %vm542, %v5056, 0.0
        %5139 = vadd.xlane.f32.xlu0 %v5138
        %v5140 = vpop.xlane.xlu0 %5139
        %v5141 = vsel %vm542, %v5057, 0.0
        %5142 = vadd.xlane.f32.xlu0 %v5141
        %v5143 = vpop.xlane.xlu0 %5142
        %v5144 = vsel %vm542, %v5058, 0.0
        %5145 = vadd.xlane.f32.xlu0 %v5144
        %v5146 = vpop.xlane.xlu0 %5145
        %v5147 = vsel %vm542, %v5059, 0.0
        %5148 = vadd.xlane.f32.xlu0 %v5147
        %v5149 = vpop.xlane.xlu0 %5148
        %v5150 = vsel %vm542, %v5060, 0.0
        %5151 = vadd.xlane.f32.xlu0 %v5150
        %v5152 = vpop.xlane.xlu0 %5151
        %v5153 = vsel %vm542, %v5061, 0.0
        %5154 = vadd.xlane.f32.xlu0 %v5153
        %v5155 = vpop.xlane.xlu0 %5154
        %v5156 = vsel %vm542, %v5062, 0.0
        %5157 = vadd.xlane.f32.xlu0 %v5156
        %v5158 = vpop.xlane.xlu0 %5157
        %v5159 = vmul.f32 %v5065, %v825
        %v5160 = vmul.f32 %v5068, %v825
        %v5161 = vmul.f32 %v5071, %v825
        %v5162 = vmul.f32 %v5074, %v825
        %v5163 = vmul.f32 %v5077, %v825
        %v5164 = vmul.f32 %v5080, %v825
        %v5165 = vmul.f32 %v5083, %v825
        %v5166 = vmul.f32 %v5086, %v825
        %v5167 = vmul.f32 %v5089, %v825
        %v5168 = vmul.f32 %v5092, %v825
        %v5169 = vmul.f32 %v5095, %v825
        %v5170 = vmul.f32 %v5098, %v825
        %v5171 = vmul.f32 %v5101, %v825
        %v5172 = vmul.f32 %v5104, %v825
        %v5173 = vmul.f32 %v5107, %v825
        %v5174 = vmul.f32 %v5110, %v825
        %v5175 = vmul.f32 %v5113, %v825
        %v5176 = vmul.f32 %v5116, %v825
        %v5177 = vmul.f32 %v5119, %v825
        %v5178 = vmul.f32 %v5122, %v825
        %v5179 = vmul.f32 %v5125, %v825
        %v5180 = vmul.f32 %v5128, %v825
        %v5181 = vmul.f32 %v5131, %v825
        %v5182 = vmul.f32 %v5134, %v825
        %v5183 = vmul.f32 %v5137, %v825
        %v5184 = vmul.f32 %v5140, %v825
        %v5185 = vmul.f32 %v5143, %v825
        %v5186 = vmul.f32 %v5146, %v825
        %v5187 = vmul.f32 %v5149, %v825
        %v5188 = vmul.f32 %v5152, %v825
        %v5189 = vmul.f32 %v5155, %v825
        %v5190 = vmul.f32 %v5158, %v825
        %v5191 = vadd.f32 %v5159, 1e-05
        %v5192 = vadd.f32 %v5160, 1e-05
        %v5193 = vadd.f32 %v5161, 1e-05
        %v5194 = vadd.f32 %v5162, 1e-05
        %v5195 = vadd.f32 %v5163, 1e-05
        %v5196 = vadd.f32 %v5164, 1e-05
        %v5197 = vadd.f32 %v5165, 1e-05
        %v5198 = vadd.f32 %v5166, 1e-05
        %v5199 = vadd.f32 %v5167, 1e-05
        %v5200 = vadd.f32 %v5168, 1e-05
        %v5201 = vadd.f32 %v5169, 1e-05
        %v5202 = vadd.f32 %v5170, 1e-05
        %v5203 = vadd.f32 %v5171, 1e-05
        %v5204 = vadd.f32 %v5172, 1e-05
        %v5205 = vadd.f32 %v5173, 1e-05
        %v5206 = vadd.f32 %v5174, 1e-05
        %v5207 = vadd.f32 %v5175, 1e-05
        %v5208 = vadd.f32 %v5176, 1e-05
        %v5209 = vadd.f32 %v5177, 1e-05
        %v5210 = vadd.f32 %v5178, 1e-05
        %v5211 = vadd.f32 %v5179, 1e-05
        %v5212 = vadd.f32 %v5180, 1e-05
        %v5213 = vadd.f32 %v5181, 1e-05
        %v5214 = vadd.f32 %v5182, 1e-05
        %v5215 = vadd.f32 %v5183, 1e-05
        %v5216 = vadd.f32 %v5184, 1e-05
        %v5217 = vadd.f32 %v5185, 1e-05
        %v5218 = vadd.f32 %v5186, 1e-05
        %v5219 = vadd.f32 %v5187, 1e-05
        %v5220 = vadd.f32 %v5188, 1e-05
        %v5221 = vadd.f32 %v5189, 1e-05
        %v5222 = vadd.f32 %v5190, 1e-05
        %v5223 = vrsqrt.pop %v5191
        %v5224 = vmul.f32 %v5223, %v5191
        %v5225 = vmul.f32 %v5224, %v5223
        %v5226 = vmul.f32 0.5, %v5225
        %v5227 = vsub.f32 1.5, %v5226
        %v5228 = vmul.f32 %v5223, %v5227
        %vm5229 = vweird.f32 %v5191
        %vm5230 = vweird.f32 %v5223
        %vm5231 = vmor %vm5229, %vm5230
        %v5232 = vsel %vm5231, %v5223, %v5228
        %v5233 = vrsqrt.pop %v5192
        %v5234 = vmul.f32 %v5233, %v5192
        %v5235 = vmul.f32 %v5234, %v5233
        %v5236 = vmul.f32 0.5, %v5235
        %v5237 = vsub.f32 1.5, %v5236
        %v5238 = vmul.f32 %v5233, %v5237
        %vm5239 = vweird.f32 %v5192
        %vm5240 = vweird.f32 %v5233
        %vm5241 = vmor %vm5239, %vm5240
        %v5242 = vsel %vm5241, %v5233, %v5238
        %v5243 = vrsqrt.pop %v5193
        %v5244 = vmul.f32 %v5243, %v5193
        %v5245 = vmul.f32 %v5244, %v5243
        %v5246 = vmul.f32 0.5, %v5245
        %v5247 = vsub.f32 1.5, %v5246
        %v5248 = vmul.f32 %v5243, %v5247
        %vm5249 = vweird.f32 %v5193
        %vm5250 = vweird.f32 %v5243
        %vm5251 = vmor %vm5249, %vm5250
        %v5252 = vsel %vm5251, %v5243, %v5248
        %v5253 = vrsqrt.pop %v5194
        %v5254 = vmul.f32 %v5253, %v5194
        %v5255 = vmul.f32 %v5254, %v5253
        %v5256 = vmul.f32 0.5, %v5255
        %v5257 = vsub.f32 1.5, %v5256
        %v5258 = vmul.f32 %v5253, %v5257
        %vm5259 = vweird.f32 %v5194
        %vm5260 = vweird.f32 %v5253
        %vm5261 = vmor %vm5259, %vm5260
        %v5262 = vsel %vm5261, %v5253, %v5258
        %v5263 = vrsqrt.pop %v5195
        %v5264 = vmul.f32 %v5263, %v5195
        %v5265 = vmul.f32 %v5264, %v5263
        %v5266 = vmul.f32 0.5, %v5265
        %v5267 = vsub.f32 1.5, %v5266
        %v5268 = vmul.f32 %v5263, %v5267
        %vm5269 = vweird.f32 %v5195
        %vm5270 = vweird.f32 %v5263
        %vm5271 = vmor %vm5269, %vm5270
        %v5272 = vsel %vm5271, %v5263, %v5268
        %v5273 = vrsqrt.pop %v5196
        %v5274 = vmul.f32 %v5273, %v5196
        %v5275 = vmul.f32 %v5274, %v5273
        %v5276 = vmul.f32 0.5, %v5275
        %v5277 = vsub.f32 1.5, %v5276
        %v5278 = vmul.f32 %v5273, %v5277
        %vm5279 = vweird.f32 %v5196
        %vm5280 = vweird.f32 %v5273
        %vm5281 = vmor %vm5279, %vm5280
        %v5282 = vsel %vm5281, %v5273, %v5278
        %v5283 = vrsqrt.pop %v5197
        %v5284 = vmul.f32 %v5283, %v5197
        %v5285 = vmul.f32 %v5284, %v5283
        %v5286 = vmul.f32 0.5, %v5285
        %v5287 = vsub.f32 1.5, %v5286
        %v5288 = vmul.f32 %v5283, %v5287
        %vm5289 = vweird.f32 %v5197
        %vm5290 = vweird.f32 %v5283
        %vm5291 = vmor %vm5289, %vm5290
        %v5292 = vsel %vm5291, %v5283, %v5288
        %v5293 = vrsqrt.pop %v5198
        %v5294 = vmul.f32 %v5293, %v5198
        %v5295 = vmul.f32 %v5294, %v5293
        %v5296 = vmul.f32 0.5, %v5295
        %v5297 = vsub.f32 1.5, %v5296
        %v5298 = vmul.f32 %v5293, %v5297
        %vm5299 = vweird.f32 %v5198
        %vm5300 = vweird.f32 %v5293
        %vm5301 = vmor %vm5299, %vm5300
        %v5302 = vsel %vm5301, %v5293, %v5298
        %v5303 = vrsqrt.pop %v5199
        %v5304 = vmul.f32 %v5303, %v5199
        %v5305 = vmul.f32 %v5304, %v5303
        %v5306 = vmul.f32 0.5, %v5305
        %v5307 = vsub.f32 1.5, %v5306
        %v5308 = vmul.f32 %v5303, %v5307
        %vm5309 = vweird.f32 %v5199
        %vm5310 = vweird.f32 %v5303
        %vm5311 = vmor %vm5309, %vm5310
        %v5312 = vsel %vm5311, %v5303, %v5308
        %v5313 = vrsqrt.pop %v5200
        %v5314 = vmul.f32 %v5313, %v5200
        %v5315 = vmul.f32 %v5314, %v5313
        %v5316 = vmul.f32 0.5, %v5315
        %v5317 = vsub.f32 1.5, %v5316
        %v5318 = vmul.f32 %v5313, %v5317
        %vm5319 = vweird.f32 %v5200
        %vm5320 = vweird.f32 %v5313
        %vm5321 = vmor %vm5319, %vm5320
        %v5322 = vsel %vm5321, %v5313, %v5318
        %v5323 = vrsqrt.pop %v5201
        %v5324 = vmul.f32 %v5323, %v5201
        %v5325 = vmul.f32 %v5324, %v5323
        %v5326 = vmul.f32 0.5, %v5325
        %v5327 = vsub.f32 1.5, %v5326
        %v5328 = vmul.f32 %v5323, %v5327
        %vm5329 = vweird.f32 %v5201
        %vm5330 = vweird.f32 %v5323
        %vm5331 = vmor %vm5329, %vm5330
        %v5332 = vsel %vm5331, %v5323, %v5328
        %v5333 = vrsqrt.pop %v5202
        %v5334 = vmul.f32 %v5333, %v5202
        %v5335 = vmul.f32 %v5334, %v5333
        %v5336 = vmul.f32 0.5, %v5335
        %v5337 = vsub.f32 1.5, %v5336
        %v5338 = vmul.f32 %v5333, %v5337
        %vm5339 = vweird.f32 %v5202
        %vm5340 = vweird.f32 %v5333
        %vm5341 = vmor %vm5339, %vm5340
        %v5342 = vsel %vm5341, %v5333, %v5338
        %v5343 = vrsqrt.pop %v5203
        %v5344 = vmul.f32 %v5343, %v5203
        %v5345 = vmul.f32 %v5344, %v5343
        %v5346 = vmul.f32 0.5, %v5345
        %v5347 = vsub.f32 1.5, %v5346
        %v5348 = vmul.f32 %v5343, %v5347
        %vm5349 = vweird.f32 %v5203
        %vm5350 = vweird.f32 %v5343
        %vm5351 = vmor %vm5349, %vm5350
        %v5352 = vsel %vm5351, %v5343, %v5348
        %v5353 = vrsqrt.pop %v5204
        %v5354 = vmul.f32 %v5353, %v5204
        %v5355 = vmul.f32 %v5354, %v5353
        %v5356 = vmul.f32 0.5, %v5355
        %v5357 = vsub.f32 1.5, %v5356
        %v5358 = vmul.f32 %v5353, %v5357
        %vm5359 = vweird.f32 %v5204
        %vm5360 = vweird.f32 %v5353
        %vm5361 = vmor %vm5359, %vm5360
        %v5362 = vsel %vm5361, %v5353, %v5358
        %v5363 = vrsqrt.pop %v5205
        %v5364 = vmul.f32 %v5363, %v5205
        %v5365 = vmul.f32 %v5364, %v5363
        %v5366 = vmul.f32 0.5, %v5365
        %v5367 = vsub.f32 1.5, %v5366
        %v5368 = vmul.f32 %v5363, %v5367
        %vm5369 = vweird.f32 %v5205
        %vm5370 = vweird.f32 %v5363
        %vm5371 = vmor %vm5369, %vm5370
        %v5372 = vsel %vm5371, %v5363, %v5368
        %v5373 = vrsqrt.pop %v5206
        %v5374 = vmul.f32 %v5373, %v5206
        %v5375 = vmul.f32 %v5374, %v5373
        %v5376 = vmul.f32 0.5, %v5375
        %v5377 = vsub.f32 1.5, %v5376
        %v5378 = vmul.f32 %v5373, %v5377
        %vm5379 = vweird.f32 %v5206
        %vm5380 = vweird.f32 %v5373
        %vm5381 = vmor %vm5379, %vm5380
        %v5382 = vsel %vm5381, %v5373, %v5378
        %v5383 = vrsqrt.pop %v5207
        %v5384 = vmul.f32 %v5383, %v5207
        %v5385 = vmul.f32 %v5384, %v5383
        %v5386 = vmul.f32 0.5, %v5385
        %v5387 = vsub.f32 1.5, %v5386
        %v5388 = vmul.f32 %v5383, %v5387
        %vm5389 = vweird.f32 %v5207
        %vm5390 = vweird.f32 %v5383
        %vm5391 = vmor %vm5389, %vm5390
        %v5392 = vsel %vm5391, %v5383, %v5388
        %v5393 = vrsqrt.pop %v5208
        %v5394 = vmul.f32 %v5393, %v5208
        %v5395 = vmul.f32 %v5394, %v5393
        %v5396 = vmul.f32 0.5, %v5395
        %v5397 = vsub.f32 1.5, %v5396
        %v5398 = vmul.f32 %v5393, %v5397
        %vm5399 = vweird.f32 %v5208
        %vm5400 = vweird.f32 %v5393
        %vm5401 = vmor %vm5399, %vm5400
        %v5402 = vsel %vm5401, %v5393, %v5398
        %v5403 = vrsqrt.pop %v5209
        %v5404 = vmul.f32 %v5403, %v5209
        %v5405 = vmul.f32 %v5404, %v5403
        %v5406 = vmul.f32 0.5, %v5405
        %v5407 = vsub.f32 1.5, %v5406
        %v5408 = vmul.f32 %v5403, %v5407
        %vm5409 = vweird.f32 %v5209
        %vm5410 = vweird.f32 %v5403
        %vm5411 = vmor %vm5409, %vm5410
        %v5412 = vsel %vm5411, %v5403, %v5408
        %v5413 = vrsqrt.pop %v5210
        %v5414 = vmul.f32 %v5413, %v5210
        %v5415 = vmul.f32 %v5414, %v5413
        %v5416 = vmul.f32 0.5, %v5415
        %v5417 = vsub.f32 1.5, %v5416
        %v5418 = vmul.f32 %v5413, %v5417
        %vm5419 = vweird.f32 %v5210
        %vm5420 = vweird.f32 %v5413
        %vm5421 = vmor %vm5419, %vm5420
        %v5422 = vsel %vm5421, %v5413, %v5418
        %v5423 = vrsqrt.pop %v5211
        %v5424 = vmul.f32 %v5423, %v5211
        %v5425 = vmul.f32 %v5424, %v5423
        %v5426 = vmul.f32 0.5, %v5425
        %v5427 = vsub.f32 1.5, %v5426
        %v5428 = vmul.f32 %v5423, %v5427
        %vm5429 = vweird.f32 %v5211
        %vm5430 = vweird.f32 %v5423
        %vm5431 = vmor %vm5429, %vm5430
        %v5432 = vsel %vm5431, %v5423, %v5428
        %v5433 = vrsqrt.pop %v5212
        %v5434 = vmul.f32 %v5433, %v5212
        %v5435 = vmul.f32 %v5434, %v5433
        %v5436 = vmul.f32 0.5, %v5435
        %v5437 = vsub.f32 1.5, %v5436
        %v5438 = vmul.f32 %v5433, %v5437
        %vm5439 = vweird.f32 %v5212
        %vm5440 = vweird.f32 %v5433
        %vm5441 = vmor %vm5439, %vm5440
        %v5442 = vsel %vm5441, %v5433, %v5438
        %v5443 = vrsqrt.pop %v5213
        %v5444 = vmul.f32 %v5443, %v5213
        %v5445 = vmul.f32 %v5444, %v5443
        %v5446 = vmul.f32 0.5, %v5445
        %v5447 = vsub.f32 1.5, %v5446
        %v5448 = vmul.f32 %v5443, %v5447
        %vm5449 = vweird.f32 %v5213
        %vm5450 = vweird.f32 %v5443
        %vm5451 = vmor %vm5449, %vm5450
        %v5452 = vsel %vm5451, %v5443, %v5448
        %v5453 = vrsqrt.pop %v5214
        %v5454 = vmul.f32 %v5453, %v5214
        %v5455 = vmul.f32 %v5454, %v5453
        %v5456 = vmul.f32 0.5, %v5455
        %v5457 = vsub.f32 1.5, %v5456
        %v5458 = vmul.f32 %v5453, %v5457
        %vm5459 = vweird.f32 %v5214
        %vm5460 = vweird.f32 %v5453
        %vm5461 = vmor %vm5459, %vm5460
        %v5462 = vsel %vm5461, %v5453, %v5458
        %v5463 = vrsqrt.pop %v5215
        %v5464 = vmul.f32 %v5463, %v5215
        %v5465 = vmul.f32 %v5464, %v5463
        %v5466 = vmul.f32 0.5, %v5465
        %v5467 = vsub.f32 1.5, %v5466
        %v5468 = vmul.f32 %v5463, %v5467
        %vm5469 = vweird.f32 %v5215
        %vm5470 = vweird.f32 %v5463
        %vm5471 = vmor %vm5469, %vm5470
        %v5472 = vsel %vm5471, %v5463, %v5468
        %v5473 = vrsqrt.pop %v5216
        %v5474 = vmul.f32 %v5473, %v5216
        %v5475 = vmul.f32 %v5474, %v5473
        %v5476 = vmul.f32 0.5, %v5475
        %v5477 = vsub.f32 1.5, %v5476
        %v5478 = vmul.f32 %v5473, %v5477
        %vm5479 = vweird.f32 %v5216
        %vm5480 = vweird.f32 %v5473
        %vm5481 = vmor %vm5479, %vm5480
        %v5482 = vsel %vm5481, %v5473, %v5478
        %v5483 = vrsqrt.pop %v5217
        %v5484 = vmul.f32 %v5483, %v5217
        %v5485 = vmul.f32 %v5484, %v5483
        %v5486 = vmul.f32 0.5, %v5485
        %v5487 = vsub.f32 1.5, %v5486
        %v5488 = vmul.f32 %v5483, %v5487
        %vm5489 = vweird.f32 %v5217
        %vm5490 = vweird.f32 %v5483
        %vm5491 = vmor %vm5489, %vm5490
        %v5492 = vsel %vm5491, %v5483, %v5488
        %v5493 = vrsqrt.pop %v5218
        %v5494 = vmul.f32 %v5493, %v5218
        %v5495 = vmul.f32 %v5494, %v5493
        %v5496 = vmul.f32 0.5, %v5495
        %v5497 = vsub.f32 1.5, %v5496
        %v5498 = vmul.f32 %v5493, %v5497
        %vm5499 = vweird.f32 %v5218
        %vm5500 = vweird.f32 %v5493
        %vm5501 = vmor %vm5499, %vm5500
        %v5502 = vsel %vm5501, %v5493, %v5498
        %v5503 = vrsqrt.pop %v5219
        %v5504 = vmul.f32 %v5503, %v5219
        %v5505 = vmul.f32 %v5504, %v5503
        %v5506 = vmul.f32 0.5, %v5505
        %v5507 = vsub.f32 1.5, %v5506
        %v5508 = vmul.f32 %v5503, %v5507
        %vm5509 = vweird.f32 %v5219
        %vm5510 = vweird.f32 %v5503
        %vm5511 = vmor %vm5509, %vm5510
        %v5512 = vsel %vm5511, %v5503, %v5508
        %v5513 = vrsqrt.pop %v5220
        %v5514 = vmul.f32 %v5513, %v5220
        %v5515 = vmul.f32 %v5514, %v5513
        %v5516 = vmul.f32 0.5, %v5515
        %v5517 = vsub.f32 1.5, %v5516
        %v5518 = vmul.f32 %v5513, %v5517
        %vm5519 = vweird.f32 %v5220
        %vm5520 = vweird.f32 %v5513
        %vm5521 = vmor %vm5519, %vm5520
        %v5522 = vsel %vm5521, %v5513, %v5518
        %v5523 = vrsqrt.pop %v5221
        %v5524 = vmul.f32 %v5523, %v5221
        %v5525 = vmul.f32 %v5524, %v5523
        %v5526 = vmul.f32 0.5, %v5525
        %v5527 = vsub.f32 1.5, %v5526
        %v5528 = vmul.f32 %v5523, %v5527
        %vm5529 = vweird.f32 %v5221
        %vm5530 = vweird.f32 %v5523
        %vm5531 = vmor %vm5529, %vm5530
        %v5532 = vsel %vm5531, %v5523, %v5528
        %v5533 = vrsqrt.pop %v5222
        %v5534 = vmul.f32 %v5533, %v5222
        %v5535 = vmul.f32 %v5534, %v5533
        %v5536 = vmul.f32 0.5, %v5535
        %v5537 = vsub.f32 1.5, %v5536
        %v5538 = vmul.f32 %v5533, %v5537
        %vm5539 = vweird.f32 %v5222
        %vm5540 = vweird.f32 %v5533
        %vm5541 = vmor %vm5539, %vm5540
        %v5542 = vsel %vm5541, %v5533, %v5538
        %v5543 = vmul.f32 %v4999, %v5232
        %v5544 = vmul.f32 %v5000, %v5242
        %v5545 = vmul.f32 %v5001, %v5252
        %v5546 = vmul.f32 %v5002, %v5262
        %v5547 = vmul.f32 %v5003, %v5272
        %v5548 = vmul.f32 %v5004, %v5282
        %v5549 = vmul.f32 %v5005, %v5292
        %v5550 = vmul.f32 %v5006, %v5302
        %v5551 = vmul.f32 %v5007, %v5312
        %v5552 = vmul.f32 %v5008, %v5322
        %v5553 = vmul.f32 %v5009, %v5332
        %v5554 = vmul.f32 %v5010, %v5342
        %v5555 = vmul.f32 %v5011, %v5352
        %v5556 = vmul.f32 %v5012, %v5362
        %v5557 = vmul.f32 %v5013, %v5372
        %v5558 = vmul.f32 %v5014, %v5382
        %v5559 = vmul.f32 %v5015, %v5392
        %v5560 = vmul.f32 %v5016, %v5402
        %v5561 = vmul.f32 %v5017, %v5412
        %v5562 = vmul.f32 %v5018, %v5422
        %v5563 = vmul.f32 %v5019, %v5432
        %v5564 = vmul.f32 %v5020, %v5442
        %v5565 = vmul.f32 %v5021, %v5452
        %v5566 = vmul.f32 %v5022, %v5462
        %v5567 = vmul.f32 %v5023, %v5472
        %v5568 = vmul.f32 %v5024, %v5482
        %v5569 = vmul.f32 %v5025, %v5492
        %v5570 = vmul.f32 %v5026, %v5502
        %v5571 = vmul.f32 %v5027, %v5512
        %v5572 = vmul.f32 %v5028, %v5522
        %v5573 = vmul.f32 %v5029, %v5532
        %v5574 = vmul.f32 %v5030, %v5542
        %s5575 = scalar_lea.vmem %s1, 1
        %v5576 = vld [vmem:[%s5575] sm:$0x1]
        %v5578 = vperm.slane %v5576, 0
        %v5580 = vmul.f32 %v5543, %v5578
        %v5581 = vmul.f32 %v5544, %v5578
        %v5582 = vmul.f32 %v5545, %v5578
        %v5583 = vmul.f32 %v5546, %v5578
        %v5584 = vmul.f32 %v5547, %v5578
        %v5585 = vmul.f32 %v5548, %v5578
        %v5586 = vmul.f32 %v5549, %v5578
        %v5587 = vmul.f32 %v5550, %v5578
        %v5588 = vmul.f32 %v5551, %v5578
        %v5589 = vmul.f32 %v5552, %v5578
        %v5590 = vmul.f32 %v5553, %v5578
        %v5591 = vmul.f32 %v5554, %v5578
        %v5592 = vmul.f32 %v5555, %v5578
        %v5593 = vmul.f32 %v5556, %v5578
        %v5594 = vmul.f32 %v5557, %v5578
        %v5595 = vmul.f32 %v5558, %v5578
        %v5596 = vmul.f32 %v5559, %v5578
        %v5597 = vmul.f32 %v5560, %v5578
        %v5598 = vmul.f32 %v5561, %v5578
        %v5599 = vmul.f32 %v5562, %v5578
        %v5600 = vmul.f32 %v5563, %v5578
        %v5601 = vmul.f32 %v5564, %v5578
        %v5602 = vmul.f32 %v5565, %v5578
        %v5603 = vmul.f32 %v5566, %v5578
        %v5604 = vmul.f32 %v5567, %v5578
        %v5605 = vmul.f32 %v5568, %v5578
        %v5606 = vmul.f32 %v5569, %v5578
        %v5607 = vmul.f32 %v5570, %v5578
        %v5608 = vmul.f32 %v5571, %v5578
        %v5609 = vmul.f32 %v5572, %v5578
        %v5610 = vmul.f32 %v5573, %v5578
        %v5611 = vmul.f32 %v5574, %v5578
        %s5612 = scalar_lea.vmem %s2, 1
        %v5613 = vld [vmem:[%s5612] sm:$0x1]
        %v5615 = vperm.slane %v5613, 0
        %v5617 = vadd.f32 %v5580, %v5615
        %v5618 = vadd.f32 %v5581, %v5615
        %v5619 = vadd.f32 %v5582, %v5615
        %v5620 = vadd.f32 %v5583, %v5615
        %v5621 = vadd.f32 %v5584, %v5615
        %v5622 = vadd.f32 %v5585, %v5615
        %v5623 = vadd.f32 %v5586, %v5615
        %v5624 = vadd.f32 %v5587, %v5615
        %v5625 = vadd.f32 %v5588, %v5615
        %v5626 = vadd.f32 %v5589, %v5615
        %v5627 = vadd.f32 %v5590, %v5615
        %v5628 = vadd.f32 %v5591, %v5615
        %v5629 = vadd.f32 %v5592, %v5615
        %v5630 = vadd.f32 %v5593, %v5615
        %v5631 = vadd.f32 %v5594, %v5615
        %v5632 = vadd.f32 %v5595, %v5615
        %v5633 = vadd.f32 %v5596, %v5615
        %v5634 = vadd.f32 %v5597, %v5615
        %v5635 = vadd.f32 %v5598, %v5615
        %v5636 = vadd.f32 %v5599, %v5615
        %v5637 = vadd.f32 %v5600, %v5615
        %v5638 = vadd.f32 %v5601, %v5615
        %v5639 = vadd.f32 %v5602, %v5615
        %v5640 = vadd.f32 %v5603, %v5615
        %v5641 = vadd.f32 %v5604, %v5615
        %v5642 = vadd.f32 %v5605, %v5615
        %v5643 = vadd.f32 %v5606, %v5615
        %v5644 = vadd.f32 %v5607, %v5615
        %v5645 = vadd.f32 %v5608, %v5615
        %v5646 = vadd.f32 %v5609, %v5615
        %v5647 = vadd.f32 %v5610, %v5615
        %v5648 = vadd.f32 %v5611, %v5615
        %5649 = vst.msk [vmem:[%s1506 + $0x8] sm:$0xff] %vm542, %v5617
        %5650 = vst.msk [vmem:[%s1506 + $0x10] sm:$0xff] %vm542, %v5618
        %5651 = vst.msk [vmem:[%s1506 + $0x28] sm:$0xff] %vm542, %v5619
        %5652 = vst.msk [vmem:[%s1506 + $0x30] sm:$0xff] %vm542, %v5620
        %5653 = vst.msk [vmem:[%s1506 + $0x48] sm:$0xff] %vm542, %v5621
        %5654 = vst.msk [vmem:[%s1506 + $0x50] sm:$0xff] %vm542, %v5622
        %5655 = vst.msk [vmem:[%s1506 + $0x68] sm:$0xff] %vm542, %v5623
        %5656 = vst.msk [vmem:[%s1506 + $0x70] sm:$0xff] %vm542, %v5624
        %5657 = vst.msk [vmem:[%s1506 + $0x88] sm:$0xff] %vm542, %v5625
        %5658 = vst.msk [vmem:[%s1506 + $0x90] sm:$0xff] %vm542, %v5626
        %5659 = vst.msk [vmem:[%s1506 + $0xa8] sm:$0xff] %vm542, %v5627
        %5660 = vst.msk [vmem:[%s1506 + $0xb0] sm:$0xff] %vm542, %v5628
        %5661 = vst.msk [vmem:[%s1506 + $0xc8] sm:$0xff] %vm542, %v5629
        %5662 = vst.msk [vmem:[%s1506 + $0xd0] sm:$0xff] %vm542, %v5630
        %5663 = vst.msk [vmem:[%s1506 + $0xe8] sm:$0xff] %vm542, %v5631
        %5664 = vst.msk [vmem:[%s1506 + $0xf0] sm:$0xff] %vm542, %v5632
        %5665 = vst.msk [vmem:[%s1506 + $0x108] sm:$0xff] %vm542, %v5633
        %5666 = vst.msk [vmem:[%s1506 + $0x110] sm:$0xff] %vm542, %v5634
        %5667 = vst.msk [vmem:[%s1506 + $0x128] sm:$0xff] %vm542, %v5635
        %5668 = vst.msk [vmem:[%s1506 + $0x130] sm:$0xff] %vm542, %v5636
        %5669 = vst.msk [vmem:[%s1506 + $0x148] sm:$0xff] %vm542, %v5637
        %5670 = vst.msk [vmem:[%s1506 + $0x150] sm:$0xff] %vm542, %v5638
        %5671 = vst.msk [vmem:[%s1506 + $0x168] sm:$0xff] %vm542, %v5639
        %5672 = vst.msk [vmem:[%s1506 + $0x170] sm:$0xff] %vm542, %v5640
        %5673 = vst.msk [vmem:[%s1506 + $0x188] sm:$0xff] %vm542, %v5641
        %5674 = vst.msk [vmem:[%s1506 + $0x190] sm:$0xff] %vm542, %v5642
        %5675 = vst.msk [vmem:[%s1506 + $0x1a8] sm:$0xff] %vm542, %v5643
        %5676 = vst.msk [vmem:[%s1506 + $0x1b0] sm:$0xff] %vm542, %v5644
        %5677 = vst.msk [vmem:[%s1506 + $0x1c8] sm:$0xff] %vm542, %v5645
        %5678 = vst.msk [vmem:[%s1506 + $0x1d0] sm:$0xff] %vm542, %v5646
        %5679 = vst.msk [vmem:[%s1506 + $0x1e8] sm:$0xff] %vm542, %v5647
        %5680 = vst.msk [vmem:[%s1506 + $0x1f0] sm:$0xff] %vm542, %v5648
        %s5681 = scalar_lea.vmem %s3, 4
        %v5682 = vld [vmem:[%s5681] sm:$0x7]
        %s5683 = scalar_lea.vmem %s5, 4
        %v5684 = vld [vmem:[%s5683] sm:$0x7]
        %v5685 = vld [vmem:[#allocation2 + $0x8] sm:$0xff]
        %v5686 = vld [vmem:[#allocation2 + $0x10] sm:$0xff]
        %v5687 = vld [vmem:[#allocation2 + $0x28] sm:$0xff]
        %v5688 = vld [vmem:[#allocation2 + $0x30] sm:$0xff]
        %v5689 = vld [vmem:[#allocation2 + $0x48] sm:$0xff]
        %v5690 = vld [vmem:[#allocation2 + $0x50] sm:$0xff]
        %v5691 = vld [vmem:[#allocation2 + $0x68] sm:$0xff]
        %v5692 = vld [vmem:[#allocation2 + $0x70] sm:$0xff]
        %v5693 = vld [vmem:[#allocation2 + $0x88] sm:$0xff]
        %v5694 = vld [vmem:[#allocation2 + $0x90] sm:$0xff]
        %v5695 = vld [vmem:[#allocation2 + $0xa8] sm:$0xff]
        %v5696 = vld [vmem:[#allocation2 + $0xb0] sm:$0xff]
        %v5697 = vld [vmem:[#allocation2 + $0xc8] sm:$0xff]
        %v5698 = vld [vmem:[#allocation2 + $0xd0] sm:$0xff]
        %v5699 = vld [vmem:[#allocation2 + $0xe8] sm:$0xff]
        %v5700 = vld [vmem:[#allocation2 + $0xf0] sm:$0xff]
        %v5701 = vld [vmem:[#allocation2 + $0x108] sm:$0xff]
        %v5702 = vld [vmem:[#allocation2 + $0x110] sm:$0xff]
        %v5703 = vld [vmem:[#allocation2 + $0x128] sm:$0xff]
        %v5704 = vld [vmem:[#allocation2 + $0x130] sm:$0xff]
        %v5705 = vld [vmem:[#allocation2 + $0x148] sm:$0xff]
        %v5706 = vld [vmem:[#allocation2 + $0x150] sm:$0xff]
        %v5707 = vld [vmem:[#allocation2 + $0x168] sm:$0xff]
        %v5708 = vld [vmem:[#allocation2 + $0x170] sm:$0xff]
        %v5709 = vld [vmem:[#allocation2 + $0x188] sm:$0xff]
        %v5710 = vld [vmem:[#allocation2 + $0x190] sm:$0xff]
        %v5711 = vld [vmem:[#allocation2 + $0x1a8] sm:$0xff]
        %v5712 = vld [vmem:[#allocation2 + $0x1b0] sm:$0xff]
        %v5713 = vld [vmem:[#allocation2 + $0x1c8] sm:$0xff]
        %v5714 = vld [vmem:[#allocation2 + $0x1d0] sm:$0xff]
        %v5715 = vld [vmem:[#allocation2 + $0x1e8] sm:$0xff]
        %v5716 = vld [vmem:[#allocation2 + $0x1f0] sm:$0xff]
        %v5717 = vperm.slane %v5682, 0
        %v5718 = vmul.f32 %v5685, %v5717
        %v5719 = vmul.f32 %v5686, %v5717
        %v5720 = vmul.f32 %v5687, %v5717
        %v5721 = vmul.f32 %v5688, %v5717
        %v5722 = vmul.f32 %v5689, %v5717
        %v5723 = vmul.f32 %v5690, %v5717
        %v5724 = vmul.f32 %v5691, %v5717
        %v5725 = vmul.f32 %v5692, %v5717
        %v5726 = vmul.f32 %v5693, %v5717
        %v5727 = vmul.f32 %v5694, %v5717
        %v5728 = vmul.f32 %v5695, %v5717
        %v5729 = vmul.f32 %v5696, %v5717
        %v5730 = vmul.f32 %v5697, %v5717
        %v5731 = vmul.f32 %v5698, %v5717
        %v5732 = vmul.f32 %v5699, %v5717
        %v5733 = vmul.f32 %v5700, %v5717
        %v5734 = vmul.f32 %v5701, %v5717
        %v5735 = vmul.f32 %v5702, %v5717
        %v5736 = vmul.f32 %v5703, %v5717
        %v5737 = vmul.f32 %v5704, %v5717
        %v5738 = vmul.f32 %v5705, %v5717
        %v5739 = vmul.f32 %v5706, %v5717
        %v5740 = vmul.f32 %v5707, %v5717
        %v5741 = vmul.f32 %v5708, %v5717
        %v5742 = vmul.f32 %v5709, %v5717
        %v5743 = vmul.f32 %v5710, %v5717
        %v5744 = vmul.f32 %v5711, %v5717
        %v5745 = vmul.f32 %v5712, %v5717
        %v5746 = vmul.f32 %v5713, %v5717
        %v5747 = vmul.f32 %v5714, %v5717
        %v5748 = vmul.f32 %v5715, %v5717
        %v5749 = vmul.f32 %v5716, %v5717
        %v5750 = vadd.f32 %v5718, 0.0
        %v5751 = vadd.f32 %v5719, 0.0
        %v5752 = vadd.f32 %v5720, 0.0
        %v5753 = vadd.f32 %v5721, 0.0
        %v5754 = vadd.f32 %v5722, 0.0
        %v5755 = vadd.f32 %v5723, 0.0
        %v5756 = vadd.f32 %v5724, 0.0
        %v5757 = vadd.f32 %v5725, 0.0
        %v5758 = vadd.f32 %v5726, 0.0
        %v5759 = vadd.f32 %v5727, 0.0
        %v5760 = vadd.f32 %v5728, 0.0
        %v5761 = vadd.f32 %v5729, 0.0
        %v5762 = vadd.f32 %v5730, 0.0
        %v5763 = vadd.f32 %v5731, 0.0
        %v5764 = vadd.f32 %v5732, 0.0
        %v5765 = vadd.f32 %v5733, 0.0
        %v5766 = vadd.f32 %v5734, 0.0
        %v5767 = vadd.f32 %v5735, 0.0
        %v5768 = vadd.f32 %v5736, 0.0
        %v5769 = vadd.f32 %v5737, 0.0
        %v5770 = vadd.f32 %v5738, 0.0
        %v5771 = vadd.f32 %v5739, 0.0
        %v5772 = vadd.f32 %v5740, 0.0
        %v5773 = vadd.f32 %v5741, 0.0
        %v5774 = vadd.f32 %v5742, 0.0
        %v5775 = vadd.f32 %v5743, 0.0
        %v5776 = vadd.f32 %v5744, 0.0
        %v5777 = vadd.f32 %v5745, 0.0
        %v5778 = vadd.f32 %v5746, 0.0
        %v5779 = vadd.f32 %v5747, 0.0
        %v5780 = vadd.f32 %v5748, 0.0
        %v5781 = vadd.f32 %v5749, 0.0
        %v5782 = vld [vmem:[%s1506 + $0x7] sm:$0xff]
        %v5783 = vld [vmem:[%s1506 + $0xf] sm:$0xff]
        %v5784 = vld [vmem:[%s1506 + $0x27] sm:$0xff]
        %v5785 = vld [vmem:[%s1506 + $0x2f] sm:$0xff]
        %v5786 = vld [vmem:[%s1506 + $0x47] sm:$0xff]
        %v5787 = vld [vmem:[%s1506 + $0x4f] sm:$0xff]
        %v5788 = vld [vmem:[%s1506 + $0x67] sm:$0xff]
        %v5789 = vld [vmem:[%s1506 + $0x6f] sm:$0xff]
        %v5790 = vld [vmem:[%s1506 + $0x87] sm:$0xff]
        %v5791 = vld [vmem:[%s1506 + $0x8f] sm:$0xff]
        %v5792 = vld [vmem:[%s1506 + $0xa7] sm:$0xff]
        %v5793 = vld [vmem:[%s1506 + $0xaf] sm:$0xff]
        %v5794 = vld [vmem:[%s1506 + $0xc7] sm:$0xff]
        %v5795 = vld [vmem:[%s1506 + $0xcf] sm:$0xff]
        %v5796 = vld [vmem:[%s1506 + $0xe7] sm:$0xff]
        %v5797 = vld [vmem:[%s1506 + $0xef] sm:$0xff]
        %v5798 = vld [vmem:[%s1506 + $0x107] sm:$0xff]
        %v5799 = vld [vmem:[%s1506 + $0x10f] sm:$0xff]
        %v5800 = vld [vmem:[%s1506 + $0x127] sm:$0xff]
        %v5801 = vld [vmem:[%s1506 + $0x12f] sm:$0xff]
        %v5802 = vld [vmem:[%s1506 + $0x147] sm:$0xff]
        %v5803 = vld [vmem:[%s1506 + $0x14f] sm:$0xff]
        %v5804 = vld [vmem:[%s1506 + $0x167] sm:$0xff]
        %v5805 = vld [vmem:[%s1506 + $0x16f] sm:$0xff]
        %v5806 = vld [vmem:[%s1506 + $0x187] sm:$0xff]
        %v5807 = vld [vmem:[%s1506 + $0x18f] sm:$0xff]
        %v5808 = vld [vmem:[%s1506 + $0x1a7] sm:$0xff]
        %v5809 = vld [vmem:[%s1506 + $0x1af] sm:$0xff]
        %v5810 = vld [vmem:[%s1506 + $0x1c7] sm:$0xff]
        %v5811 = vld [vmem:[%s1506 + $0x1cf] sm:$0xff]
        %v5812 = vld [vmem:[%s1506 + $0x1e7] sm:$0xff]
        %v5813 = vld [vmem:[%s1506 + $0x1ef] sm:$0xff]
        %v5814 = vperm.slane %v5684, 0
        %v5815 = vmul.f32 %v5782, %v5814
        %v5816 = vmul.f32 %v5783, %v5814
        %v5817 = vmul.f32 %v5784, %v5814
        %v5818 = vmul.f32 %v5785, %v5814
        %v5819 = vmul.f32 %v5786, %v5814
        %v5820 = vmul.f32 %v5787, %v5814
        %v5821 = vmul.f32 %v5788, %v5814
        %v5822 = vmul.f32 %v5789, %v5814
        %v5823 = vmul.f32 %v5790, %v5814
        %v5824 = vmul.f32 %v5791, %v5814
        %v5825 = vmul.f32 %v5792, %v5814
        %v5826 = vmul.f32 %v5793, %v5814
        %v5827 = vmul.f32 %v5794, %v5814
        %v5828 = vmul.f32 %v5795, %v5814
        %v5829 = vmul.f32 %v5796, %v5814
        %v5830 = vmul.f32 %v5797, %v5814
        %v5831 = vmul.f32 %v5798, %v5814
        %v5832 = vmul.f32 %v5799, %v5814
        %v5833 = vmul.f32 %v5800, %v5814
        %v5834 = vmul.f32 %v5801, %v5814
        %v5835 = vmul.f32 %v5802, %v5814
        %v5836 = vmul.f32 %v5803, %v5814
        %v5837 = vmul.f32 %v5804, %v5814
        %v5838 = vmul.f32 %v5805, %v5814
        %v5839 = vmul.f32 %v5806, %v5814
        %v5840 = vmul.f32 %v5807, %v5814
        %v5841 = vmul.f32 %v5808, %v5814
        %v5842 = vmul.f32 %v5809, %v5814
        %v5843 = vmul.f32 %v5810, %v5814
        %v5844 = vmul.f32 %v5811, %v5814
        %v5845 = vmul.f32 %v5812, %v5814
        %v5846 = vmul.f32 %v5813, %v5814
        %v5847 = vadd.f32 %v5815, 0.0
        %v5848 = vadd.f32 %v5816, 0.0
        %v5849 = vadd.f32 %v5817, 0.0
        %v5850 = vadd.f32 %v5818, 0.0
        %v5851 = vadd.f32 %v5819, 0.0
        %v5852 = vadd.f32 %v5820, 0.0
        %v5853 = vadd.f32 %v5821, 0.0
        %v5854 = vadd.f32 %v5822, 0.0
        %v5855 = vadd.f32 %v5823, 0.0
        %v5856 = vadd.f32 %v5824, 0.0
        %v5857 = vadd.f32 %v5825, 0.0
        %v5858 = vadd.f32 %v5826, 0.0
        %v5859 = vadd.f32 %v5827, 0.0
        %v5860 = vadd.f32 %v5828, 0.0
        %v5861 = vadd.f32 %v5829, 0.0
        %v5862 = vadd.f32 %v5830, 0.0
        %v5863 = vadd.f32 %v5831, 0.0
        %v5864 = vadd.f32 %v5832, 0.0
        %v5865 = vadd.f32 %v5833, 0.0
        %v5866 = vadd.f32 %v5834, 0.0
        %v5867 = vadd.f32 %v5835, 0.0
        %v5868 = vadd.f32 %v5836, 0.0
        %v5869 = vadd.f32 %v5837, 0.0
        %v5870 = vadd.f32 %v5838, 0.0
        %v5871 = vadd.f32 %v5839, 0.0
        %v5872 = vadd.f32 %v5840, 0.0
        %v5873 = vadd.f32 %v5841, 0.0
        %v5874 = vadd.f32 %v5842, 0.0
        %v5875 = vadd.f32 %v5843, 0.0
        %v5876 = vadd.f32 %v5844, 0.0
        %v5877 = vadd.f32 %v5845, 0.0
        %v5878 = vadd.f32 %v5846, 0.0
        %v5879 = vld [vmem:[%s1506 + $0x8] sm:$0xff]
        %v5880 = vld [vmem:[%s1506 + $0x10] sm:$0xff]
        %v5881 = vld [vmem:[%s1506 + $0x28] sm:$0xff]
        %v5882 = vld [vmem:[%s1506 + $0x30] sm:$0xff]
        %v5883 = vld [vmem:[%s1506 + $0x48] sm:$0xff]
        %v5884 = vld [vmem:[%s1506 + $0x50] sm:$0xff]
        %v5885 = vld [vmem:[%s1506 + $0x68] sm:$0xff]
        %v5886 = vld [vmem:[%s1506 + $0x70] sm:$0xff]
        %v5887 = vld [vmem:[%s1506 + $0x88] sm:$0xff]
        %v5888 = vld [vmem:[%s1506 + $0x90] sm:$0xff]
        %v5889 = vld [vmem:[%s1506 + $0xa8] sm:$0xff]
        %v5890 = vld [vmem:[%s1506 + $0xb0] sm:$0xff]
        %v5891 = vld [vmem:[%s1506 + $0xc8] sm:$0xff]
        %v5892 = vld [vmem:[%s1506 + $0xd0] sm:$0xff]
        %v5893 = vld [vmem:[%s1506 + $0xe8] sm:$0xff]
        %v5894 = vld [vmem:[%s1506 + $0xf0] sm:$0xff]
        %v5895 = vld [vmem:[%s1506 + $0x108] sm:$0xff]
        %v5896 = vld [vmem:[%s1506 + $0x110] sm:$0xff]
        %v5897 = vld [vmem:[%s1506 + $0x128] sm:$0xff]
        %v5898 = vld [vmem:[%s1506 + $0x130] sm:$0xff]
        %v5899 = vld [vmem:[%s1506 + $0x148] sm:$0xff]
        %v5900 = vld [vmem:[%s1506 + $0x150] sm:$0xff]
        %v5901 = vld [vmem:[%s1506 + $0x168] sm:$0xff]
        %v5902 = vld [vmem:[%s1506 + $0x170] sm:$0xff]
        %v5903 = vld [vmem:[%s1506 + $0x188] sm:$0xff]
        %v5904 = vld [vmem:[%s1506 + $0x190] sm:$0xff]
        %v5905 = vld [vmem:[%s1506 + $0x1a8] sm:$0xff]
        %v5906 = vld [vmem:[%s1506 + $0x1b0] sm:$0xff]
        %v5907 = vld [vmem:[%s1506 + $0x1c8] sm:$0xff]
        %v5908 = vld [vmem:[%s1506 + $0x1d0] sm:$0xff]
        %v5909 = vld [vmem:[%s1506 + $0x1e8] sm:$0xff]
        %v5910 = vld [vmem:[%s1506 + $0x1f0] sm:$0xff]
        %v5911 = vperm.slane %v5682, 1
        %v5912 = vmul.f32 %v5879, %v5911
        %v5913 = vmul.f32 %v5880, %v5911
        %v5914 = vmul.f32 %v5881, %v5911
        %v5915 = vmul.f32 %v5882, %v5911
        %v5916 = vmul.f32 %v5883, %v5911
        %v5917 = vmul.f32 %v5884, %v5911
        %v5918 = vmul.f32 %v5885, %v5911
        %v5919 = vmul.f32 %v5886, %v5911
        %v5920 = vmul.f32 %v5887, %v5911
        %v5921 = vmul.f32 %v5888, %v5911
        %v5922 = vmul.f32 %v5889, %v5911
        %v5923 = vmul.f32 %v5890, %v5911
        %v5924 = vmul.f32 %v5891, %v5911
        %v5925 = vmul.f32 %v5892, %v5911
        %v5926 = vmul.f32 %v5893, %v5911
        %v5927 = vmul.f32 %v5894, %v5911
        %v5928 = vmul.f32 %v5895, %v5911
        %v5929 = vmul.f32 %v5896, %v5911
        %v5930 = vmul.f32 %v5897, %v5911
        %v5931 = vmul.f32 %v5898, %v5911
        %v5932 = vmul.f32 %v5899, %v5911
        %v5933 = vmul.f32 %v5900, %v5911
        %v5934 = vmul.f32 %v5901, %v5911
        %v5935 = vmul.f32 %v5902, %v5911
        %v5936 = vmul.f32 %v5903, %v5911
        %v5937 = vmul.f32 %v5904, %v5911
        %v5938 = vmul.f32 %v5905, %v5911
        %v5939 = vmul.f32 %v5906, %v5911
        %v5940 = vmul.f32 %v5907, %v5911
        %v5941 = vmul.f32 %v5908, %v5911
        %v5942 = vmul.f32 %v5909, %v5911
        %v5943 = vmul.f32 %v5910, %v5911
        %v5944 = vadd.f32 %v5750, %v5912
        %v5945 = vadd.f32 %v5751, %v5913
        %v5946 = vadd.f32 %v5752, %v5914
        %v5947 = vadd.f32 %v5753, %v5915
        %v5948 = vadd.f32 %v5754, %v5916
        %v5949 = vadd.f32 %v5755, %v5917
        %v5950 = vadd.f32 %v5756, %v5918
        %v5951 = vadd.f32 %v5757, %v5919
        %v5952 = vadd.f32 %v5758, %v5920
        %v5953 = vadd.f32 %v5759, %v5921
        %v5954 = vadd.f32 %v5760, %v5922
        %v5955 = vadd.f32 %v5761, %v5923
        %v5956 = vadd.f32 %v5762, %v5924
        %v5957 = vadd.f32 %v5763, %v5925
        %v5958 = vadd.f32 %v5764, %v5926
        %v5959 = vadd.f32 %v5765, %v5927
        %v5960 = vadd.f32 %v5766, %v5928
        %v5961 = vadd.f32 %v5767, %v5929
        %v5962 = vadd.f32 %v5768, %v5930
        %v5963 = vadd.f32 %v5769, %v5931
        %v5964 = vadd.f32 %v5770, %v5932
        %v5965 = vadd.f32 %v5771, %v5933
        %v5966 = vadd.f32 %v5772, %v5934
        %v5967 = vadd.f32 %v5773, %v5935
        %v5968 = vadd.f32 %v5774, %v5936
        %v5969 = vadd.f32 %v5775, %v5937
        %v5970 = vadd.f32 %v5776, %v5938
        %v5971 = vadd.f32 %v5777, %v5939
        %v5972 = vadd.f32 %v5778, %v5940
        %v5973 = vadd.f32 %v5779, %v5941
        %v5974 = vadd.f32 %v5780, %v5942
        %v5975 = vadd.f32 %v5781, %v5943
        %v5976 = vperm.slane %v5684, 1
        %v5977 = vmul.f32 %v5879, %v5976
        %v5978 = vmul.f32 %v5880, %v5976
        %v5979 = vmul.f32 %v5881, %v5976
        %v5980 = vmul.f32 %v5882, %v5976
        %v5981 = vmul.f32 %v5883, %v5976
        %v5982 = vmul.f32 %v5884, %v5976
        %v5983 = vmul.f32 %v5885, %v5976
        %v5984 = vmul.f32 %v5886, %v5976
        %v5985 = vmul.f32 %v5887, %v5976
        %v5986 = vmul.f32 %v5888, %v5976
        %v5987 = vmul.f32 %v5889, %v5976
        %v5988 = vmul.f32 %v5890, %v5976
        %v5989 = vmul.f32 %v5891, %v5976
        %v5990 = vmul.f32 %v5892, %v5976
        %v5991 = vmul.f32 %v5893, %v5976
        %v5992 = vmul.f32 %v5894, %v5976
        %v5993 = vmul.f32 %v5895, %v5976
        %v5994 = vmul.f32 %v5896, %v5976
        %v5995 = vmul.f32 %v5897, %v5976
        %v5996 = vmul.f32 %v5898, %v5976
        %v5997 = vmul.f32 %v5899, %v5976
        %v5998 = vmul.f32 %v5900, %v5976
        %v5999 = vmul.f32 %v5901, %v5976
        %v6000 = vmul.f32 %v5902, %v5976
        %v6001 = vmul.f32 %v5903, %v5976
        %v6002 = vmul.f32 %v5904, %v5976
        %v6003 = vmul.f32 %v5905, %v5976
        %v6004 = vmul.f32 %v5906, %v5976
        %v6005 = vmul.f32 %v5907, %v5976
        %v6006 = vmul.f32 %v5908, %v5976
        %v6007 = vmul.f32 %v5909, %v5976
        %v6008 = vmul.f32 %v5910, %v5976
        %v6009 = vadd.f32 %v5847, %v5977
        %v6010 = vadd.f32 %v5848, %v5978
        %v6011 = vadd.f32 %v5849, %v5979
        %v6012 = vadd.f32 %v5850, %v5980
        %v6013 = vadd.f32 %v5851, %v5981
        %v6014 = vadd.f32 %v5852, %v5982
        %v6015 = vadd.f32 %v5853, %v5983
        %v6016 = vadd.f32 %v5854, %v5984
        %v6017 = vadd.f32 %v5855, %v5985
        %v6018 = vadd.f32 %v5856, %v5986
        %v6019 = vadd.f32 %v5857, %v5987
        %v6020 = vadd.f32 %v5858, %v5988
        %v6021 = vadd.f32 %v5859, %v5989
        %v6022 = vadd.f32 %v5860, %v5990
        %v6023 = vadd.f32 %v5861, %v5991
        %v6024 = vadd.f32 %v5862, %v5992
        %v6025 = vadd.f32 %v5863, %v5993
        %v6026 = vadd.f32 %v5864, %v5994
        %v6027 = vadd.f32 %v5865, %v5995
        %v6028 = vadd.f32 %v5866, %v5996
        %v6029 = vadd.f32 %v5867, %v5997
        %v6030 = vadd.f32 %v5868, %v5998
        %v6031 = vadd.f32 %v5869, %v5999
        %v6032 = vadd.f32 %v5870, %v6000
        %v6033 = vadd.f32 %v5871, %v6001
        %v6034 = vadd.f32 %v5872, %v6002
        %v6035 = vadd.f32 %v5873, %v6003
        %v6036 = vadd.f32 %v5874, %v6004
        %v6037 = vadd.f32 %v5875, %v6005
        %v6038 = vadd.f32 %v5876, %v6006
        %v6039 = vadd.f32 %v5877, %v6007
        %v6040 = vadd.f32 %v5878, %v6008
        %v6041 = vld [vmem:[%s1897 + $0x8] sm:$0xff]
        %v6042 = vld [vmem:[%s1897 + $0x10] sm:$0xff]
        %v6043 = vld [vmem:[%s1897 + $0x28] sm:$0xff]
        %v6044 = vld [vmem:[%s1897 + $0x30] sm:$0xff]
        %v6045 = vld [vmem:[%s1897 + $0x48] sm:$0xff]
        %v6046 = vld [vmem:[%s1897 + $0x50] sm:$0xff]
        %v6047 = vld [vmem:[%s1897 + $0x68] sm:$0xff]
        %v6048 = vld [vmem:[%s1897 + $0x70] sm:$0xff]
        %v6049 = vld [vmem:[%s1897 + $0x88] sm:$0xff]
        %v6050 = vld [vmem:[%s1897 + $0x90] sm:$0xff]
        %v6051 = vld [vmem:[%s1897 + $0xa8] sm:$0xff]
        %v6052 = vld [vmem:[%s1897 + $0xb0] sm:$0xff]
        %v6053 = vld [vmem:[%s1897 + $0xc8] sm:$0xff]
        %v6054 = vld [vmem:[%s1897 + $0xd0] sm:$0xff]
        %v6055 = vld [vmem:[%s1897 + $0xe8] sm:$0xff]
        %v6056 = vld [vmem:[%s1897 + $0xf0] sm:$0xff]
        %v6057 = vld [vmem:[%s1897 + $0x108] sm:$0xff]
        %v6058 = vld [vmem:[%s1897 + $0x110] sm:$0xff]
        %v6059 = vld [vmem:[%s1897 + $0x128] sm:$0xff]
        %v6060 = vld [vmem:[%s1897 + $0x130] sm:$0xff]
        %v6061 = vld [vmem:[%s1897 + $0x148] sm:$0xff]
        %v6062 = vld [vmem:[%s1897 + $0x150] sm:$0xff]
        %v6063 = vld [vmem:[%s1897 + $0x168] sm:$0xff]
        %v6064 = vld [vmem:[%s1897 + $0x170] sm:$0xff]
        %v6065 = vld [vmem:[%s1897 + $0x188] sm:$0xff]
        %v6066 = vld [vmem:[%s1897 + $0x190] sm:$0xff]
        %v6067 = vld [vmem:[%s1897 + $0x1a8] sm:$0xff]
        %v6068 = vld [vmem:[%s1897 + $0x1b0] sm:$0xff]
        %v6069 = vld [vmem:[%s1897 + $0x1c8] sm:$0xff]
        %v6070 = vld [vmem:[%s1897 + $0x1d0] sm:$0xff]
        %v6071 = vld [vmem:[%s1897 + $0x1e8] sm:$0xff]
        %v6072 = vld [vmem:[%s1897 + $0x1f0] sm:$0xff]
        %v6073 = vperm.slane %v5682, 2
        %v6074 = vmul.f32 %v6041, %v6073
        %v6075 = vmul.f32 %v6042, %v6073
        %v6076 = vmul.f32 %v6043, %v6073
        %v6077 = vmul.f32 %v6044, %v6073
        %v6078 = vmul.f32 %v6045, %v6073
        %v6079 = vmul.f32 %v6046, %v6073
        %v6080 = vmul.f32 %v6047, %v6073
        %v6081 = vmul.f32 %v6048, %v6073
        %v6082 = vmul.f32 %v6049, %v6073
        %v6083 = vmul.f32 %v6050, %v6073
        %v6084 = vmul.f32 %v6051, %v6073
        %v6085 = vmul.f32 %v6052, %v6073
        %v6086 = vmul.f32 %v6053, %v6073
        %v6087 = vmul.f32 %v6054, %v6073
        %v6088 = vmul.f32 %v6055, %v6073
        %v6089 = vmul.f32 %v6056, %v6073
        %v6090 = vmul.f32 %v6057, %v6073
        %v6091 = vmul.f32 %v6058, %v6073
        %v6092 = vmul.f32 %v6059, %v6073
        %v6093 = vmul.f32 %v6060, %v6073
        %v6094 = vmul.f32 %v6061, %v6073
        %v6095 = vmul.f32 %v6062, %v6073
        %v6096 = vmul.f32 %v6063, %v6073
        %v6097 = vmul.f32 %v6064, %v6073
        %v6098 = vmul.f32 %v6065, %v6073
        %v6099 = vmul.f32 %v6066, %v6073
        %v6100 = vmul.f32 %v6067, %v6073
        %v6101 = vmul.f32 %v6068, %v6073
        %v6102 = vmul.f32 %v6069, %v6073
        %v6103 = vmul.f32 %v6070, %v6073
        %v6104 = vmul.f32 %v6071, %v6073
        %v6105 = vmul.f32 %v6072, %v6073
        %v6106 = vadd.f32 %v5944, %v6074
        %v6107 = vadd.f32 %v5945, %v6075
        %v6108 = vadd.f32 %v5946, %v6076
        %v6109 = vadd.f32 %v5947, %v6077
        %v6110 = vadd.f32 %v5948, %v6078
        %v6111 = vadd.f32 %v5949, %v6079
        %v6112 = vadd.f32 %v5950, %v6080
        %v6113 = vadd.f32 %v5951, %v6081
        %v6114 = vadd.f32 %v5952, %v6082
        %v6115 = vadd.f32 %v5953, %v6083
        %v6116 = vadd.f32 %v5954, %v6084
        %v6117 = vadd.f32 %v5955, %v6085
        %v6118 = vadd.f32 %v5956, %v6086
        %v6119 = vadd.f32 %v5957, %v6087
        %v6120 = vadd.f32 %v5958, %v6088
        %v6121 = vadd.f32 %v5959, %v6089
        %v6122 = vadd.f32 %v5960, %v6090
        %v6123 = vadd.f32 %v5961, %v6091
        %v6124 = vadd.f32 %v5962, %v6092
        %v6125 = vadd.f32 %v5963, %v6093
        %v6126 = vadd.f32 %v5964, %v6094
        %v6127 = vadd.f32 %v5965, %v6095
        %v6128 = vadd.f32 %v5966, %v6096
        %v6129 = vadd.f32 %v5967, %v6097
        %v6130 = vadd.f32 %v5968, %v6098
        %v6131 = vadd.f32 %v5969, %v6099
        %v6132 = vadd.f32 %v5970, %v6100
        %v6133 = vadd.f32 %v5971, %v6101
        %v6134 = vadd.f32 %v5972, %v6102
        %v6135 = vadd.f32 %v5973, %v6103
        %v6136 = vadd.f32 %v5974, %v6104
        %v6137 = vadd.f32 %v5975, %v6105
        %v6138 = vld [vmem:[%s1506 + $0x9] sm:$0xff]
        %v6139 = vld [vmem:[%s1506 + $0x11] sm:$0xff]
        %v6140 = vld [vmem:[%s1506 + $0x29] sm:$0xff]
        %v6141 = vld [vmem:[%s1506 + $0x31] sm:$0xff]
        %v6142 = vld [vmem:[%s1506 + $0x49] sm:$0xff]
        %v6143 = vld [vmem:[%s1506 + $0x51] sm:$0xff]
        %v6144 = vld [vmem:[%s1506 + $0x69] sm:$0xff]
        %v6145 = vld [vmem:[%s1506 + $0x71] sm:$0xff]
        %v6146 = vld [vmem:[%s1506 + $0x89] sm:$0xff]
        %v6147 = vld [vmem:[%s1506 + $0x91] sm:$0xff]
        %v6148 = vld [vmem:[%s1506 + $0xa9] sm:$0xff]
        %v6149 = vld [vmem:[%s1506 + $0xb1] sm:$0xff]
        %v6150 = vld [vmem:[%s1506 + $0xc9] sm:$0xff]
        %v6151 = vld [vmem:[%s1506 + $0xd1] sm:$0xff]
        %v6152 = vld [vmem:[%s1506 + $0xe9] sm:$0xff]
        %v6153 = vld [vmem:[%s1506 + $0xf1] sm:$0xff]
        %v6154 = vld [vmem:[%s1506 + $0x109] sm:$0xff]
        %v6155 = vld [vmem:[%s1506 + $0x111] sm:$0xff]
        %v6156 = vld [vmem:[%s1506 + $0x129] sm:$0xff]
        %v6157 = vld [vmem:[%s1506 + $0x131] sm:$0xff]
        %v6158 = vld [vmem:[%s1506 + $0x149] sm:$0xff]
        %v6159 = vld [vmem:[%s1506 + $0x151] sm:$0xff]
        %v6160 = vld [vmem:[%s1506 + $0x169] sm:$0xff]
        %v6161 = vld [vmem:[%s1506 + $0x171] sm:$0xff]
        %v6162 = vld [vmem:[%s1506 + $0x189] sm:$0xff]
        %v6163 = vld [vmem:[%s1506 + $0x191] sm:$0xff]
        %v6164 = vld [vmem:[%s1506 + $0x1a9] sm:$0xff]
        %v6165 = vld [vmem:[%s1506 + $0x1b1] sm:$0xff]
        %v6166 = vld [vmem:[%s1506 + $0x1c9] sm:$0xff]
        %v6167 = vld [vmem:[%s1506 + $0x1d1] sm:$0xff]
        %v6168 = vld [vmem:[%s1506 + $0x1e9] sm:$0xff]
        %v6169 = vld [vmem:[%s1506 + $0x1f1] sm:$0xff]
        %v6170 = vperm.slane %v5684, 2
        %v6171 = vmul.f32 %v6138, %v6170
        %v6172 = vmul.f32 %v6139, %v6170
        %v6173 = vmul.f32 %v6140, %v6170
        %v6174 = vmul.f32 %v6141, %v6170
        %v6175 = vmul.f32 %v6142, %v6170
        %v6176 = vmul.f32 %v6143, %v6170
        %v6177 = vmul.f32 %v6144, %v6170
        %v6178 = vmul.f32 %v6145, %v6170
        %v6179 = vmul.f32 %v6146, %v6170
        %v6180 = vmul.f32 %v6147, %v6170
        %v6181 = vmul.f32 %v6148, %v6170
        %v6182 = vmul.f32 %v6149, %v6170
        %v6183 = vmul.f32 %v6150, %v6170
        %v6184 = vmul.f32 %v6151, %v6170
        %v6185 = vmul.f32 %v6152, %v6170
        %v6186 = vmul.f32 %v6153, %v6170
        %v6187 = vmul.f32 %v6154, %v6170
        %v6188 = vmul.f32 %v6155, %v6170
        %v6189 = vmul.f32 %v6156, %v6170
        %v6190 = vmul.f32 %v6157, %v6170
        %v6191 = vmul.f32 %v6158, %v6170
        %v6192 = vmul.f32 %v6159, %v6170
        %v6193 = vmul.f32 %v6160, %v6170
        %v6194 = vmul.f32 %v6161, %v6170
        %v6195 = vmul.f32 %v6162, %v6170
        %v6196 = vmul.f32 %v6163, %v6170
        %v6197 = vmul.f32 %v6164, %v6170
        %v6198 = vmul.f32 %v6165, %v6170
        %v6199 = vmul.f32 %v6166, %v6170
        %v6200 = vmul.f32 %v6167, %v6170
        %v6201 = vmul.f32 %v6168, %v6170
        %v6202 = vmul.f32 %v6169, %v6170
        %v6203 = vadd.f32 %v6009, %v6171
        %v6204 = vadd.f32 %v6010, %v6172
        %v6205 = vadd.f32 %v6011, %v6173
        %v6206 = vadd.f32 %v6012, %v6174
        %v6207 = vadd.f32 %v6013, %v6175
        %v6208 = vadd.f32 %v6014, %v6176
        %v6209 = vadd.f32 %v6015, %v6177
        %v6210 = vadd.f32 %v6016, %v6178
        %v6211 = vadd.f32 %v6017, %v6179
        %v6212 = vadd.f32 %v6018, %v6180
        %v6213 = vadd.f32 %v6019, %v6181
        %v6214 = vadd.f32 %v6020, %v6182
        %v6215 = vadd.f32 %v6021, %v6183
        %v6216 = vadd.f32 %v6022, %v6184
        %v6217 = vadd.f32 %v6023, %v6185
        %v6218 = vadd.f32 %v6024, %v6186
        %v6219 = vadd.f32 %v6025, %v6187
        %v6220 = vadd.f32 %v6026, %v6188
        %v6221 = vadd.f32 %v6027, %v6189
        %v6222 = vadd.f32 %v6028, %v6190
        %v6223 = vadd.f32 %v6029, %v6191
        %v6224 = vadd.f32 %v6030, %v6192
        %v6225 = vadd.f32 %v6031, %v6193
        %v6226 = vadd.f32 %v6032, %v6194
        %v6227 = vadd.f32 %v6033, %v6195
        %v6228 = vadd.f32 %v6034, %v6196
        %v6229 = vadd.f32 %v6035, %v6197
        %v6230 = vadd.f32 %v6036, %v6198
        %v6231 = vadd.f32 %v6037, %v6199
        %v6232 = vadd.f32 %v6038, %v6200
        %v6233 = vadd.f32 %v6039, %v6201
        %v6234 = vadd.f32 %v6040, %v6202
        %s6235 = scalar_lea.vmem %s4, 1
        %v6236 = vld [vmem:[%s6235] sm:$0x1]
        %v6238 = vperm.slane %v6236, 0
        %v6240 = vadd.f32 %v6106, %v6238
        %v6241 = vadd.f32 %v6107, %v6238
        %v6242 = vadd.f32 %v6108, %v6238
        %v6243 = vadd.f32 %v6109, %v6238
        %v6244 = vadd.f32 %v6110, %v6238
        %v6245 = vadd.f32 %v6111, %v6238
        %v6246 = vadd.f32 %v6112, %v6238
        %v6247 = vadd.f32 %v6113, %v6238
        %v6248 = vadd.f32 %v6114, %v6238
        %v6249 = vadd.f32 %v6115, %v6238
        %v6250 = vadd.f32 %v6116, %v6238
        %v6251 = vadd.f32 %v6117, %v6238
        %v6252 = vadd.f32 %v6118, %v6238
        %v6253 = vadd.f32 %v6119, %v6238
        %v6254 = vadd.f32 %v6120, %v6238
        %v6255 = vadd.f32 %v6121, %v6238
        %v6256 = vadd.f32 %v6122, %v6238
        %v6257 = vadd.f32 %v6123, %v6238
        %v6258 = vadd.f32 %v6124, %v6238
        %v6259 = vadd.f32 %v6125, %v6238
        %v6260 = vadd.f32 %v6126, %v6238
        %v6261 = vadd.f32 %v6127, %v6238
        %v6262 = vadd.f32 %v6128, %v6238
        %v6263 = vadd.f32 %v6129, %v6238
        %v6264 = vadd.f32 %v6130, %v6238
        %v6265 = vadd.f32 %v6131, %v6238
        %v6266 = vadd.f32 %v6132, %v6238
        %v6267 = vadd.f32 %v6133, %v6238
        %v6268 = vadd.f32 %v6134, %v6238
        %v6269 = vadd.f32 %v6135, %v6238
        %v6270 = vadd.f32 %v6136, %v6238
        %v6271 = vadd.f32 %v6137, %v6238
        %s6272 = scalar_lea.vmem %s6, 1
        %v6273 = vld [vmem:[%s6272] sm:$0x1]
        %v6275 = vperm.slane %v6273, 0
        %v6277 = vadd.f32 %v6203, %v6275
        %v6278 = vadd.f32 %v6204, %v6275
        %v6279 = vadd.f32 %v6205, %v6275
        %v6280 = vadd.f32 %v6206, %v6275
        %v6281 = vadd.f32 %v6207, %v6275
        %v6282 = vadd.f32 %v6208, %v6275
        %v6283 = vadd.f32 %v6209, %v6275
        %v6284 = vadd.f32 %v6210, %v6275
        %v6285 = vadd.f32 %v6211, %v6275
        %v6286 = vadd.f32 %v6212, %v6275
        %v6287 = vadd.f32 %v6213, %v6275
        %v6288 = vadd.f32 %v6214, %v6275
        %v6289 = vadd.f32 %v6215, %v6275
        %v6290 = vadd.f32 %v6216, %v6275
        %v6291 = vadd.f32 %v6217, %v6275
        %v6292 = vadd.f32 %v6218, %v6275
        %v6293 = vadd.f32 %v6219, %v6275
        %v6294 = vadd.f32 %v6220, %v6275
        %v6295 = vadd.f32 %v6221, %v6275
        %v6296 = vadd.f32 %v6222, %v6275
        %v6297 = vadd.f32 %v6223, %v6275
        %v6298 = vadd.f32 %v6224, %v6275
        %v6299 = vadd.f32 %v6225, %v6275
        %v6300 = vadd.f32 %v6226, %v6275
        %v6301 = vadd.f32 %v6227, %v6275
        %v6302 = vadd.f32 %v6228, %v6275
        %v6303 = vadd.f32 %v6229, %v6275
        %v6304 = vadd.f32 %v6230, %v6275
        %v6305 = vadd.f32 %v6231, %v6275
        %v6306 = vadd.f32 %v6232, %v6275
        %v6307 = vadd.f32 %v6233, %v6275
        %v6308 = vadd.f32 %v6234, %v6275
        %v6309 = vmul.f32 %v6240, %v6277
        %v6310 = vmul.f32 %v6241, %v6278
        %v6311 = vmul.f32 %v6242, %v6279
        %v6312 = vmul.f32 %v6243, %v6280
        %v6313 = vmul.f32 %v6244, %v6281
        %v6314 = vmul.f32 %v6245, %v6282
        %v6315 = vmul.f32 %v6246, %v6283
        %v6316 = vmul.f32 %v6247, %v6284
        %v6317 = vmul.f32 %v6248, %v6285
        %v6318 = vmul.f32 %v6249, %v6286
        %v6319 = vmul.f32 %v6250, %v6287
        %v6320 = vmul.f32 %v6251, %v6288
        %v6321 = vmul.f32 %v6252, %v6289
        %v6322 = vmul.f32 %v6253, %v6290
        %v6323 = vmul.f32 %v6254, %v6291
        %v6324 = vmul.f32 %v6255, %v6292
        %v6325 = vmul.f32 %v6256, %v6293
        %v6326 = vmul.f32 %v6257, %v6294
        %v6327 = vmul.f32 %v6258, %v6295
        %v6328 = vmul.f32 %v6259, %v6296
        %v6329 = vmul.f32 %v6260, %v6297
        %v6330 = vmul.f32 %v6261, %v6298
        %v6331 = vmul.f32 %v6262, %v6299
        %v6332 = vmul.f32 %v6263, %v6300
        %v6333 = vmul.f32 %v6264, %v6301
        %v6334 = vmul.f32 %v6265, %v6302
        %v6335 = vmul.f32 %v6266, %v6303
        %v6336 = vmul.f32 %v6267, %v6304
        %v6337 = vmul.f32 %v6268, %v6305
        %v6338 = vmul.f32 %v6269, %v6306
        %v6339 = vmul.f32 %v6270, %v6307
        %v6340 = vmul.f32 %v6271, %v6308
        %v6341 = vadd.f32 %v5617, %v6309
        %v6342 = vadd.f32 %v5618, %v6310
        %v6343 = vadd.f32 %v5619, %v6311
        %v6344 = vadd.f32 %v5620, %v6312
        %v6345 = vadd.f32 %v5621, %v6313
        %v6346 = vadd.f32 %v5622, %v6314
        %v6347 = vadd.f32 %v5623, %v6315
        %v6348 = vadd.f32 %v5624, %v6316
        %v6349 = vadd.f32 %v5625, %v6317
        %v6350 = vadd.f32 %v5626, %v6318
        %v6351 = vadd.f32 %v5627, %v6319
        %v6352 = vadd.f32 %v5628, %v6320
        %v6353 = vadd.f32 %v5629, %v6321
        %v6354 = vadd.f32 %v5630, %v6322
        %v6355 = vadd.f32 %v5631, %v6323
        %v6356 = vadd.f32 %v5632, %v6324
        %v6357 = vadd.f32 %v5633, %v6325
        %v6358 = vadd.f32 %v5634, %v6326
        %v6359 = vadd.f32 %v5635, %v6327
        %v6360 = vadd.f32 %v5636, %v6328
        %v6361 = vadd.f32 %v5637, %v6329
        %v6362 = vadd.f32 %v5638, %v6330
        %v6363 = vadd.f32 %v5639, %v6331
        %v6364 = vadd.f32 %v5640, %v6332
        %v6365 = vadd.f32 %v5641, %v6333
        %v6366 = vadd.f32 %v5642, %v6334
        %v6367 = vadd.f32 %v5643, %v6335
        %v6368 = vadd.f32 %v5644, %v6336
        %v6369 = vadd.f32 %v5645, %v6337
        %v6370 = vadd.f32 %v5646, %v6338
        %v6371 = vadd.f32 %v5647, %v6339
        %v6372 = vadd.f32 %v5648, %v6340
        %6373 = vst.msk [vmem:[%s2228 + $0x8] sm:$0xff] %vm615, %v6341
        %6374 = vst.msk [vmem:[%s2228 + $0x10] sm:$0xff] %vm615, %v6342
        %6375 = vst.msk [vmem:[%s2228 + $0x28] sm:$0xff] %vm615, %v6343
        %6376 = vst.msk [vmem:[%s2228 + $0x30] sm:$0xff] %vm615, %v6344
        %6377 = vst.msk [vmem:[%s2228 + $0x48] sm:$0xff] %vm615, %v6345
        %6378 = vst.msk [vmem:[%s2228 + $0x50] sm:$0xff] %vm615, %v6346
        %6379 = vst.msk [vmem:[%s2228 + $0x68] sm:$0xff] %vm615, %v6347
        %6380 = vst.msk [vmem:[%s2228 + $0x70] sm:$0xff] %vm615, %v6348
        %6381 = vst.msk [vmem:[%s2228 + $0x88] sm:$0xff] %vm615, %v6349
        %6382 = vst.msk [vmem:[%s2228 + $0x90] sm:$0xff] %vm615, %v6350
        %6383 = vst.msk [vmem:[%s2228 + $0xa8] sm:$0xff] %vm615, %v6351
        %6384 = vst.msk [vmem:[%s2228 + $0xb0] sm:$0xff] %vm615, %v6352
        %6385 = vst.msk [vmem:[%s2228 + $0xc8] sm:$0xff] %vm615, %v6353
        %6386 = vst.msk [vmem:[%s2228 + $0xd0] sm:$0xff] %vm615, %v6354
        %6387 = vst.msk [vmem:[%s2228 + $0xe8] sm:$0xff] %vm615, %v6355
        %6388 = vst.msk [vmem:[%s2228 + $0xf0] sm:$0xff] %vm615, %v6356
        %6389 = vst.msk [vmem:[%s2228 + $0x108] sm:$0xff] %vm615, %v6357
        %6390 = vst.msk [vmem:[%s2228 + $0x110] sm:$0xff] %vm615, %v6358
        %6391 = vst.msk [vmem:[%s2228 + $0x128] sm:$0xff] %vm615, %v6359
        %6392 = vst.msk [vmem:[%s2228 + $0x130] sm:$0xff] %vm615, %v6360
        %6393 = vst.msk [vmem:[%s2228 + $0x148] sm:$0xff] %vm615, %v6361
        %6394 = vst.msk [vmem:[%s2228 + $0x150] sm:$0xff] %vm615, %v6362
        %6395 = vst.msk [vmem:[%s2228 + $0x168] sm:$0xff] %vm615, %v6363
        %6396 = vst.msk [vmem:[%s2228 + $0x170] sm:$0xff] %vm615, %v6364
        %6397 = vst.msk [vmem:[%s2228 + $0x188] sm:$0xff] %vm615, %v6365
        %6398 = vst.msk [vmem:[%s2228 + $0x190] sm:$0xff] %vm615, %v6366
        %6399 = vst.msk [vmem:[%s2228 + $0x1a8] sm:$0xff] %vm615, %v6367
        %6400 = vst.msk [vmem:[%s2228 + $0x1b0] sm:$0xff] %vm615, %v6368
        %6401 = vst.msk [vmem:[%s2228 + $0x1c8] sm:$0xff] %vm615, %v6369
        %6402 = vst.msk [vmem:[%s2228 + $0x1d0] sm:$0xff] %vm615, %v6370
        %6403 = vst.msk [vmem:[%s2228 + $0x1e8] sm:$0xff] %vm615, %v6371
        %6404 = vst.msk [vmem:[%s2228 + $0x1f0] sm:$0xff] %vm615, %v6372
        %v6405 = vld [vmem:[#allocation3 + $0x7] sm:$0xff]
        %v6406 = vld [vmem:[#allocation3 + $0xf] sm:$0xff]
        %v6407 = vld [vmem:[#allocation3 + $0x27] sm:$0xff]
        %v6408 = vld [vmem:[#allocation3 + $0x2f] sm:$0xff]
        %v6409 = vld [vmem:[#allocation3 + $0x47] sm:$0xff]
        %v6410 = vld [vmem:[#allocation3 + $0x4f] sm:$0xff]
        %v6411 = vld [vmem:[#allocation3 + $0x67] sm:$0xff]
        %v6412 = vld [vmem:[#allocation3 + $0x6f] sm:$0xff]
        %v6413 = vld [vmem:[#allocation3 + $0x87] sm:$0xff]
        %v6414 = vld [vmem:[#allocation3 + $0x8f] sm:$0xff]
        %v6415 = vld [vmem:[#allocation3 + $0xa7] sm:$0xff]
        %v6416 = vld [vmem:[#allocation3 + $0xaf] sm:$0xff]
        %v6417 = vld [vmem:[#allocation3 + $0xc7] sm:$0xff]
        %v6418 = vld [vmem:[#allocation3 + $0xcf] sm:$0xff]
        %v6419 = vld [vmem:[#allocation3 + $0xe7] sm:$0xff]
        %v6420 = vld [vmem:[#allocation3 + $0xef] sm:$0xff]
        %v6421 = vld [vmem:[#allocation3 + $0x107] sm:$0xff]
        %v6422 = vld [vmem:[#allocation3 + $0x10f] sm:$0xff]
        %v6423 = vld [vmem:[#allocation3 + $0x127] sm:$0xff]
        %v6424 = vld [vmem:[#allocation3 + $0x12f] sm:$0xff]
        %v6425 = vld [vmem:[#allocation3 + $0x147] sm:$0xff]
        %v6426 = vld [vmem:[#allocation3 + $0x14f] sm:$0xff]
        %v6427 = vld [vmem:[#allocation3 + $0x167] sm:$0xff]
        %v6428 = vld [vmem:[#allocation3 + $0x16f] sm:$0xff]
        %v6429 = vld [vmem:[#allocation3 + $0x187] sm:$0xff]
        %v6430 = vld [vmem:[#allocation3 + $0x18f] sm:$0xff]
        %v6431 = vld [vmem:[#allocation3 + $0x1a7] sm:$0xff]
        %v6432 = vld [vmem:[#allocation3 + $0x1af] sm:$0xff]
        %v6433 = vld [vmem:[#allocation3 + $0x1c7] sm:$0xff]
        %v6434 = vld [vmem:[#allocation3 + $0x1cf] sm:$0xff]
        %v6435 = vld [vmem:[#allocation3 + $0x1e7] sm:$0xff]
        %v6436 = vld [vmem:[#allocation3 + $0x1ef] sm:$0xff]
        %6437 = vst.msk [vmem:[#allocation4] sm:$0xff] %vm615, %v6405
        %6438 = vst.msk [vmem:[#allocation4 + $0x8] sm:$0xff] %vm615, %v6406
        %6439 = vst.msk [vmem:[#allocation4 + $0x10] sm:$0xff] %vm615, %v6407
        %6440 = vst.msk [vmem:[#allocation4 + $0x18] sm:$0xff] %vm615, %v6408
        %6441 = vst.msk [vmem:[#allocation4 + $0x20] sm:$0xff] %vm615, %v6409
        %6442 = vst.msk [vmem:[#allocation4 + $0x28] sm:$0xff] %vm615, %v6410
        %6443 = vst.msk [vmem:[#allocation4 + $0x30] sm:$0xff] %vm615, %v6411
        %6444 = vst.msk [vmem:[#allocation4 + $0x38] sm:$0xff] %vm615, %v6412
        %6445 = vst.msk [vmem:[#allocation4 + $0x40] sm:$0xff] %vm615, %v6413
        %6446 = vst.msk [vmem:[#allocation4 + $0x48] sm:$0xff] %vm615, %v6414
        %6447 = vst.msk [vmem:[#allocation4 + $0x50] sm:$0xff] %vm615, %v6415
        %6448 = vst.msk [vmem:[#allocation4 + $0x58] sm:$0xff] %vm615, %v6416
        %6449 = vst.msk [vmem:[#allocation4 + $0x60] sm:$0xff] %vm615, %v6417
        %6450 = vst.msk [vmem:[#allocation4 + $0x68] sm:$0xff] %vm615, %v6418
        %6451 = vst.msk [vmem:[#allocation4 + $0x70] sm:$0xff] %vm615, %v6419
        %6452 = vst.msk [vmem:[#allocation4 + $0x78] sm:$0xff] %vm615, %v6420
        %6453 = vst.msk [vmem:[#allocation4 + $0x80] sm:$0xff] %vm615, %v6421
        %6454 = vst.msk [vmem:[#allocation4 + $0x88] sm:$0xff] %vm615, %v6422
        %6455 = vst.msk [vmem:[#allocation4 + $0x90] sm:$0xff] %vm615, %v6423
        %6456 = vst.msk [vmem:[#allocation4 + $0x98] sm:$0xff] %vm615, %v6424
        %6457 = vst.msk [vmem:[#allocation4 + $0xa0] sm:$0xff] %vm615, %v6425
        %6458 = vst.msk [vmem:[#allocation4 + $0xa8] sm:$0xff] %vm615, %v6426
        %6459 = vst.msk [vmem:[#allocation4 + $0xb0] sm:$0xff] %vm615, %v6427
        %6460 = vst.msk [vmem:[#allocation4 + $0xb8] sm:$0xff] %vm615, %v6428
        %6461 = vst.msk [vmem:[#allocation4 + $0xc0] sm:$0xff] %vm615, %v6429
        %6462 = vst.msk [vmem:[#allocation4 + $0xc8] sm:$0xff] %vm615, %v6430
        %6463 = vst.msk [vmem:[#allocation4 + $0xd0] sm:$0xff] %vm615, %v6431
        %6464 = vst.msk [vmem:[#allocation4 + $0xd8] sm:$0xff] %vm615, %v6432
        %6465 = vst.msk [vmem:[#allocation4 + $0xe0] sm:$0xff] %vm615, %v6433
        %6466 = vst.msk [vmem:[#allocation4 + $0xe8] sm:$0xff] %vm615, %v6434
        %6467 = vst.msk [vmem:[#allocation4 + $0xf0] sm:$0xff] %vm615, %v6435
        %6468 = vst.msk [vmem:[#allocation4 + $0xf8] sm:$0xff] %vm615, %v6436
        %v6469 = vld [vmem:[#allocation3 + $0x8] sm:$0xff]
        %v6470 = vld [vmem:[#allocation3 + $0x10] sm:$0xff]
        %v6471 = vld [vmem:[#allocation3 + $0x28] sm:$0xff]
        %v6472 = vld [vmem:[#allocation3 + $0x30] sm:$0xff]
        %v6473 = vld [vmem:[#allocation3 + $0x48] sm:$0xff]
        %v6474 = vld [vmem:[#allocation3 + $0x50] sm:$0xff]
        %v6475 = vld [vmem:[#allocation3 + $0x68] sm:$0xff]
        %v6476 = vld [vmem:[#allocation3 + $0x70] sm:$0xff]
        %v6477 = vld [vmem:[#allocation3 + $0x88] sm:$0xff]
        %v6478 = vld [vmem:[#allocation3 + $0x90] sm:$0xff]
        %v6479 = vld [vmem:[#allocation3 + $0xa8] sm:$0xff]
        %v6480 = vld [vmem:[#allocation3 + $0xb0] sm:$0xff]
        %v6481 = vld [vmem:[#allocation3 + $0xc8] sm:$0xff]
        %v6482 = vld [vmem:[#allocation3 + $0xd0] sm:$0xff]
        %v6483 = vld [vmem:[#allocation3 + $0xe8] sm:$0xff]
        %v6484 = vld [vmem:[#allocation3 + $0xf0] sm:$0xff]
        %v6485 = vld [vmem:[#allocation3 + $0x108] sm:$0xff]
        %v6486 = vld [vmem:[#allocation3 + $0x110] sm:$0xff]
        %v6487 = vld [vmem:[#allocation3 + $0x128] sm:$0xff]
        %v6488 = vld [vmem:[#allocation3 + $0x130] sm:$0xff]
        %v6489 = vld [vmem:[#allocation3 + $0x148] sm:$0xff]
        %v6490 = vld [vmem:[#allocation3 + $0x150] sm:$0xff]
        %v6491 = vld [vmem:[#allocation3 + $0x168] sm:$0xff]
        %v6492 = vld [vmem:[#allocation3 + $0x170] sm:$0xff]
        %v6493 = vld [vmem:[#allocation3 + $0x188] sm:$0xff]
        %v6494 = vld [vmem:[#allocation3 + $0x190] sm:$0xff]
        %v6495 = vld [vmem:[#allocation3 + $0x1a8] sm:$0xff]
        %v6496 = vld [vmem:[#allocation3 + $0x1b0] sm:$0xff]
        %v6497 = vld [vmem:[#allocation3 + $0x1c8] sm:$0xff]
        %v6498 = vld [vmem:[#allocation3 + $0x1d0] sm:$0xff]
        %v6499 = vld [vmem:[#allocation3 + $0x1e8] sm:$0xff]
        %v6500 = vld [vmem:[#allocation3 + $0x1f0] sm:$0xff]
        %6533 = vrot.lane.b32.xlu0 %v6469, 8
        %v6534 = vpop.permute.xlu0 %6533
        %6535 = vrot.lane.b32.xlu0 %v6470, 8
        %v6536 = vpop.permute.xlu0 %6535
        %6537 = vrot.lane.b32.xlu0 %v6471, 8
        %v6538 = vpop.permute.xlu0 %6537
        %6539 = vrot.lane.b32.xlu0 %v6472, 8
        %v6540 = vpop.permute.xlu0 %6539
        %6541 = vrot.lane.b32.xlu0 %v6473, 8
        %v6542 = vpop.permute.xlu0 %6541
        %6543 = vrot.lane.b32.xlu0 %v6474, 8
        %v6544 = vpop.permute.xlu0 %6543
        %6545 = vrot.lane.b32.xlu0 %v6475, 8
        %v6546 = vpop.permute.xlu0 %6545
        %6547 = vrot.lane.b32.xlu0 %v6476, 8
        %v6548 = vpop.permute.xlu0 %6547
        %6549 = vrot.lane.b32.xlu0 %v6477, 8
        %v6550 = vpop.permute.xlu0 %6549
        %6551 = vrot.lane.b32.xlu0 %v6478, 8
        %v6552 = vpop.permute.xlu0 %6551
        %6553 = vrot.lane.b32.xlu0 %v6479, 8
        %v6554 = vpop.permute.xlu0 %6553
        %6555 = vrot.lane.b32.xlu0 %v6480, 8
        %v6556 = vpop.permute.xlu0 %6555
        %6557 = vrot.lane.b32.xlu0 %v6481, 8
        %v6558 = vpop.permute.xlu0 %6557
        %6559 = vrot.lane.b32.xlu0 %v6482, 8
        %v6560 = vpop.permute.xlu0 %6559
        %6561 = vrot.lane.b32.xlu0 %v6483, 8
        %v6562 = vpop.permute.xlu0 %6561
        %6563 = vrot.lane.b32.xlu0 %v6484, 8
        %v6564 = vpop.permute.xlu0 %6563
        %6565 = vrot.lane.b32.xlu0 %v6485, 8
        %v6566 = vpop.permute.xlu0 %6565
        %6567 = vrot.lane.b32.xlu0 %v6486, 8
        %v6568 = vpop.permute.xlu0 %6567
        %6569 = vrot.lane.b32.xlu0 %v6487, 8
        %v6570 = vpop.permute.xlu0 %6569
        %6571 = vrot.lane.b32.xlu0 %v6488, 8
        %v6572 = vpop.permute.xlu0 %6571
        %6573 = vrot.lane.b32.xlu0 %v6489, 8
        %v6574 = vpop.permute.xlu0 %6573
        %6575 = vrot.lane.b32.xlu0 %v6490, 8
        %v6576 = vpop.permute.xlu0 %6575
        %6577 = vrot.lane.b32.xlu0 %v6491, 8
        %v6578 = vpop.permute.xlu0 %6577
        %6579 = vrot.lane.b32.xlu0 %v6492, 8
        %v6580 = vpop.permute.xlu0 %6579
        %6581 = vrot.lane.b32.xlu0 %v6493, 8
        %v6582 = vpop.permute.xlu0 %6581
        %6583 = vrot.lane.b32.xlu0 %v6494, 8
        %v6584 = vpop.permute.xlu0 %6583
        %6585 = vrot.lane.b32.xlu0 %v6495, 8
        %v6586 = vpop.permute.xlu0 %6585
        %6587 = vrot.lane.b32.xlu0 %v6496, 8
        %v6588 = vpop.permute.xlu0 %6587
        %6589 = vrot.lane.b32.xlu0 %v6497, 8
        %v6590 = vpop.permute.xlu0 %6589
        %6591 = vrot.lane.b32.xlu0 %v6498, 8
        %v6592 = vpop.permute.xlu0 %6591
        %6593 = vrot.lane.b32.xlu0 %v6499, 8
        %v6594 = vpop.permute.xlu0 %6593
        %6595 = vrot.lane.b32.xlu0 %v6500, 8
        %v6596 = vpop.permute.xlu0 %6595
        %6629 = vst.msk [vmem:[#allocation4] sm:$0xff] %vm2485, %v6534
        %6630 = vst.msk [vmem:[#allocation4 + $0x8] sm:$0xff] %vm2485, %v6536
        %6631 = vst.msk [vmem:[#allocation4 + $0x10] sm:$0xff] %vm2485, %v6538
        %6632 = vst.msk [vmem:[#allocation4 + $0x18] sm:$0xff] %vm2485, %v6540
        %6633 = vst.msk [vmem:[#allocation4 + $0x20] sm:$0xff] %vm2485, %v6542
        %6634 = vst.msk [vmem:[#allocation4 + $0x28] sm:$0xff] %vm2485, %v6544
        %6635 = vst.msk [vmem:[#allocation4 + $0x30] sm:$0xff] %vm2485, %v6546
        %6636 = vst.msk [vmem:[#allocation4 + $0x38] sm:$0xff] %vm2485, %v6548
        %6637 = vst.msk [vmem:[#allocation4 + $0x40] sm:$0xff] %vm2485, %v6550
        %6638 = vst.msk [vmem:[#allocation4 + $0x48] sm:$0xff] %vm2485, %v6552
        %6639 = vst.msk [vmem:[#allocation4 + $0x50] sm:$0xff] %vm2485, %v6554
        %6640 = vst.msk [vmem:[#allocation4 + $0x58] sm:$0xff] %vm2485, %v6556
        %6641 = vst.msk [vmem:[#allocation4 + $0x60] sm:$0xff] %vm2485, %v6558
        %6642 = vst.msk [vmem:[#allocation4 + $0x68] sm:$0xff] %vm2485, %v6560
        %6643 = vst.msk [vmem:[#allocation4 + $0x70] sm:$0xff] %vm2485, %v6562
        %6644 = vst.msk [vmem:[#allocation4 + $0x78] sm:$0xff] %vm2485, %v6564
        %6645 = vst.msk [vmem:[#allocation4 + $0x80] sm:$0xff] %vm2485, %v6566
        %6646 = vst.msk [vmem:[#allocation4 + $0x88] sm:$0xff] %vm2485, %v6568
        %6647 = vst.msk [vmem:[#allocation4 + $0x90] sm:$0xff] %vm2485, %v6570
        %6648 = vst.msk [vmem:[#allocation4 + $0x98] sm:$0xff] %vm2485, %v6572
        %6649 = vst.msk [vmem:[#allocation4 + $0xa0] sm:$0xff] %vm2485, %v6574
        %6650 = vst.msk [vmem:[#allocation4 + $0xa8] sm:$0xff] %vm2485, %v6576
        %6651 = vst.msk [vmem:[#allocation4 + $0xb0] sm:$0xff] %vm2485, %v6578
        %6652 = vst.msk [vmem:[#allocation4 + $0xb8] sm:$0xff] %vm2485, %v6580
        %6653 = vst.msk [vmem:[#allocation4 + $0xc0] sm:$0xff] %vm2485, %v6582
        %6654 = vst.msk [vmem:[#allocation4 + $0xc8] sm:$0xff] %vm2485, %v6584
        %6655 = vst.msk [vmem:[#allocation4 + $0xd0] sm:$0xff] %vm2485, %v6586
        %6656 = vst.msk [vmem:[#allocation4 + $0xd8] sm:$0xff] %vm2485, %v6588
        %6657 = vst.msk [vmem:[#allocation4 + $0xe0] sm:$0xff] %vm2485, %v6590
        %6658 = vst.msk [vmem:[#allocation4 + $0xe8] sm:$0xff] %vm2485, %v6592
        %6659 = vst.msk [vmem:[#allocation4 + $0xf0] sm:$0xff] %vm2485, %v6594
        %6660 = vst.msk [vmem:[#allocation4 + $0xf8] sm:$0xff] %vm2485, %v6596
        %v6661 = vld [vmem:[#allocation3 + $0x9] sm:$0xff]
        %v6662 = vld [vmem:[#allocation3 + $0x11] sm:$0xff]
        %v6663 = vld [vmem:[#allocation3 + $0x29] sm:$0xff]
        %v6664 = vld [vmem:[#allocation3 + $0x31] sm:$0xff]
        %v6665 = vld [vmem:[#allocation3 + $0x49] sm:$0xff]
        %v6666 = vld [vmem:[#allocation3 + $0x51] sm:$0xff]
        %v6667 = vld [vmem:[#allocation3 + $0x69] sm:$0xff]
        %v6668 = vld [vmem:[#allocation3 + $0x71] sm:$0xff]
        %v6669 = vld [vmem:[#allocation3 + $0x89] sm:$0xff]
        %v6670 = vld [vmem:[#allocation3 + $0x91] sm:$0xff]
        %v6671 = vld [vmem:[#allocation3 + $0xa9] sm:$0xff]
        %v6672 = vld [vmem:[#allocation3 + $0xb1] sm:$0xff]
        %v6673 = vld [vmem:[#allocation3 + $0xc9] sm:$0xff]
        %v6674 = vld [vmem:[#allocation3 + $0xd1] sm:$0xff]
        %v6675 = vld [vmem:[#allocation3 + $0xe9] sm:$0xff]
        %v6676 = vld [vmem:[#allocation3 + $0xf1] sm:$0xff]
        %v6677 = vld [vmem:[#allocation3 + $0x109] sm:$0xff]
        %v6678 = vld [vmem:[#allocation3 + $0x111] sm:$0xff]
        %v6679 = vld [vmem:[#allocation3 + $0x129] sm:$0xff]
        %v6680 = vld [vmem:[#allocation3 + $0x131] sm:$0xff]
        %v6681 = vld [vmem:[#allocation3 + $0x149] sm:$0xff]
        %v6682 = vld [vmem:[#allocation3 + $0x151] sm:$0xff]
        %v6683 = vld [vmem:[#allocation3 + $0x169] sm:$0xff]
        %v6684 = vld [vmem:[#allocation3 + $0x171] sm:$0xff]
        %v6685 = vld [vmem:[#allocation3 + $0x189] sm:$0xff]
        %v6686 = vld [vmem:[#allocation3 + $0x191] sm:$0xff]
        %v6687 = vld [vmem:[#allocation3 + $0x1a9] sm:$0xff]
        %v6688 = vld [vmem:[#allocation3 + $0x1b1] sm:$0xff]
        %v6689 = vld [vmem:[#allocation3 + $0x1c9] sm:$0xff]
        %v6690 = vld [vmem:[#allocation3 + $0x1d1] sm:$0xff]
        %v6691 = vld [vmem:[#allocation3 + $0x1e9] sm:$0xff]
        %v6692 = vld [vmem:[#allocation3 + $0x1f1] sm:$0xff]
        %6725 = vrot.lane.b32.xlu0 %v6661, 16
        %v6726 = vpop.permute.xlu0 %6725
        %6727 = vrot.lane.b32.xlu0 %v6662, 16
        %v6728 = vpop.permute.xlu0 %6727
        %6729 = vrot.lane.b32.xlu0 %v6663, 16
        %v6730 = vpop.permute.xlu0 %6729
        %6731 = vrot.lane.b32.xlu0 %v6664, 16
        %v6732 = vpop.permute.xlu0 %6731
        %6733 = vrot.lane.b32.xlu0 %v6665, 16
        %v6734 = vpop.permute.xlu0 %6733
        %6735 = vrot.lane.b32.xlu0 %v6666, 16
        %v6736 = vpop.permute.xlu0 %6735
        %6737 = vrot.lane.b32.xlu0 %v6667, 16
        %v6738 = vpop.permute.xlu0 %6737
        %6739 = vrot.lane.b32.xlu0 %v6668, 16
        %v6740 = vpop.permute.xlu0 %6739
        %6741 = vrot.lane.b32.xlu0 %v6669, 16
        %v6742 = vpop.permute.xlu0 %6741
        %6743 = vrot.lane.b32.xlu0 %v6670, 16
        %v6744 = vpop.permute.xlu0 %6743
        %6745 = vrot.lane.b32.xlu0 %v6671, 16
        %v6746 = vpop.permute.xlu0 %6745
        %6747 = vrot.lane.b32.xlu0 %v6672, 16
        %v6748 = vpop.permute.xlu0 %6747
        %6749 = vrot.lane.b32.xlu0 %v6673, 16
        %v6750 = vpop.permute.xlu0 %6749
        %6751 = vrot.lane.b32.xlu0 %v6674, 16
        %v6752 = vpop.permute.xlu0 %6751
        %6753 = vrot.lane.b32.xlu0 %v6675, 16
        %v6754 = vpop.permute.xlu0 %6753
        %6755 = vrot.lane.b32.xlu0 %v6676, 16
        %v6756 = vpop.permute.xlu0 %6755
        %6757 = vrot.lane.b32.xlu0 %v6677, 16
        %v6758 = vpop.permute.xlu0 %6757
        %6759 = vrot.lane.b32.xlu0 %v6678, 16
        %v6760 = vpop.permute.xlu0 %6759
        %6761 = vrot.lane.b32.xlu0 %v6679, 16
        %v6762 = vpop.permute.xlu0 %6761
        %6763 = vrot.lane.b32.xlu0 %v6680, 16
        %v6764 = vpop.permute.xlu0 %6763
        %6765 = vrot.lane.b32.xlu0 %v6681, 16
        %v6766 = vpop.permute.xlu0 %6765
        %6767 = vrot.lane.b32.xlu0 %v6682, 16
        %v6768 = vpop.permute.xlu0 %6767
        %6769 = vrot.lane.b32.xlu0 %v6683, 16
        %v6770 = vpop.permute.xlu0 %6769
        %6771 = vrot.lane.b32.xlu0 %v6684, 16
        %v6772 = vpop.permute.xlu0 %6771
        %6773 = vrot.lane.b32.xlu0 %v6685, 16
        %v6774 = vpop.permute.xlu0 %6773
        %6775 = vrot.lane.b32.xlu0 %v6686, 16
        %v6776 = vpop.permute.xlu0 %6775
        %6777 = vrot.lane.b32.xlu0 %v6687, 16
        %v6778 = vpop.permute.xlu0 %6777
        %6779 = vrot.lane.b32.xlu0 %v6688, 16
        %v6780 = vpop.permute.xlu0 %6779
        %6781 = vrot.lane.b32.xlu0 %v6689, 16
        %v6782 = vpop.permute.xlu0 %6781
        %6783 = vrot.lane.b32.xlu0 %v6690, 16
        %v6784 = vpop.permute.xlu0 %6783
        %6785 = vrot.lane.b32.xlu0 %v6691, 16
        %v6786 = vpop.permute.xlu0 %6785
        %6787 = vrot.lane.b32.xlu0 %v6692, 16
        %v6788 = vpop.permute.xlu0 %6787
        %6821 = vst.msk [vmem:[#allocation4] sm:$0xff] %vm2678, %v6726
        %6822 = vst.msk [vmem:[#allocation4 + $0x8] sm:$0xff] %vm2678, %v6728
        %6823 = vst.msk [vmem:[#allocation4 + $0x10] sm:$0xff] %vm2678, %v6730
        %6824 = vst.msk [vmem:[#allocation4 + $0x18] sm:$0xff] %vm2678, %v6732
        %6825 = vst.msk [vmem:[#allocation4 + $0x20] sm:$0xff] %vm2678, %v6734
        %6826 = vst.msk [vmem:[#allocation4 + $0x28] sm:$0xff] %vm2678, %v6736
        %6827 = vst.msk [vmem:[#allocation4 + $0x30] sm:$0xff] %vm2678, %v6738
        %6828 = vst.msk [vmem:[#allocation4 + $0x38] sm:$0xff] %vm2678, %v6740
        %6829 = vst.msk [vmem:[#allocation4 + $0x40] sm:$0xff] %vm2678, %v6742
        %6830 = vst.msk [vmem:[#allocation4 + $0x48] sm:$0xff] %vm2678, %v6744
        %6831 = vst.msk [vmem:[#allocation4 + $0x50] sm:$0xff] %vm2678, %v6746
        %6832 = vst.msk [vmem:[#allocation4 + $0x58] sm:$0xff] %vm2678, %v6748
        %6833 = vst.msk [vmem:[#allocation4 + $0x60] sm:$0xff] %vm2678, %v6750
        %6834 = vst.msk [vmem:[#allocation4 + $0x68] sm:$0xff] %vm2678, %v6752
        %6835 = vst.msk [vmem:[#allocation4 + $0x70] sm:$0xff] %vm2678, %v6754
        %6836 = vst.msk [vmem:[#allocation4 + $0x78] sm:$0xff] %vm2678, %v6756
        %6837 = vst.msk [vmem:[#allocation4 + $0x80] sm:$0xff] %vm2678, %v6758
        %6838 = vst.msk [vmem:[#allocation4 + $0x88] sm:$0xff] %vm2678, %v6760
        %6839 = vst.msk [vmem:[#allocation4 + $0x90] sm:$0xff] %vm2678, %v6762
        %6840 = vst.msk [vmem:[#allocation4 + $0x98] sm:$0xff] %vm2678, %v6764
        %6841 = vst.msk [vmem:[#allocation4 + $0xa0] sm:$0xff] %vm2678, %v6766
        %6842 = vst.msk [vmem:[#allocation4 + $0xa8] sm:$0xff] %vm2678, %v6768
        %6843 = vst.msk [vmem:[#allocation4 + $0xb0] sm:$0xff] %vm2678, %v6770
        %6844 = vst.msk [vmem:[#allocation4 + $0xb8] sm:$0xff] %vm2678, %v6772
        %6845 = vst.msk [vmem:[#allocation4 + $0xc0] sm:$0xff] %vm2678, %v6774
        %6846 = vst.msk [vmem:[#allocation4 + $0xc8] sm:$0xff] %vm2678, %v6776
        %6847 = vst.msk [vmem:[#allocation4 + $0xd0] sm:$0xff] %vm2678, %v6778
        %6848 = vst.msk [vmem:[#allocation4 + $0xd8] sm:$0xff] %vm2678, %v6780
        %6849 = vst.msk [vmem:[#allocation4 + $0xe0] sm:$0xff] %vm2678, %v6782
        %6850 = vst.msk [vmem:[#allocation4 + $0xe8] sm:$0xff] %vm2678, %v6784
        %6851 = vst.msk [vmem:[#allocation4 + $0xf0] sm:$0xff] %vm2678, %v6786
        %6852 = vst.msk [vmem:[#allocation4 + $0xf8] sm:$0xff] %vm2678, %v6788
        %v6853 = vld [vmem:[%s2228 + $0x7] sm:$0xff]
        %v6854 = vld [vmem:[%s2228 + $0xf] sm:$0xff]
        %v6855 = vld [vmem:[%s2228 + $0x27] sm:$0xff]
        %v6856 = vld [vmem:[%s2228 + $0x2f] sm:$0xff]
        %v6857 = vld [vmem:[%s2228 + $0x47] sm:$0xff]
        %v6858 = vld [vmem:[%s2228 + $0x4f] sm:$0xff]
        %v6859 = vld [vmem:[%s2228 + $0x67] sm:$0xff]
        %v6860 = vld [vmem:[%s2228 + $0x6f] sm:$0xff]
        %v6861 = vld [vmem:[%s2228 + $0x87] sm:$0xff]
        %v6862 = vld [vmem:[%s2228 + $0x8f] sm:$0xff]
        %v6863 = vld [vmem:[%s2228 + $0xa7] sm:$0xff]
        %v6864 = vld [vmem:[%s2228 + $0xaf] sm:$0xff]
        %v6865 = vld [vmem:[%s2228 + $0xc7] sm:$0xff]
        %v6866 = vld [vmem:[%s2228 + $0xcf] sm:$0xff]
        %v6867 = vld [vmem:[%s2228 + $0xe7] sm:$0xff]
        %v6868 = vld [vmem:[%s2228 + $0xef] sm:$0xff]
        %v6869 = vld [vmem:[%s2228 + $0x107] sm:$0xff]
        %v6870 = vld [vmem:[%s2228 + $0x10f] sm:$0xff]
        %v6871 = vld [vmem:[%s2228 + $0x127] sm:$0xff]
        %v6872 = vld [vmem:[%s2228 + $0x12f] sm:$0xff]
        %v6873 = vld [vmem:[%s2228 + $0x147] sm:$0xff]
        %v6874 = vld [vmem:[%s2228 + $0x14f] sm:$0xff]
        %v6875 = vld [vmem:[%s2228 + $0x167] sm:$0xff]
        %v6876 = vld [vmem:[%s2228 + $0x16f] sm:$0xff]
        %v6877 = vld [vmem:[%s2228 + $0x187] sm:$0xff]
        %v6878 = vld [vmem:[%s2228 + $0x18f] sm:$0xff]
        %v6879 = vld [vmem:[%s2228 + $0x1a7] sm:$0xff]
        %v6880 = vld [vmem:[%s2228 + $0x1af] sm:$0xff]
        %v6881 = vld [vmem:[%s2228 + $0x1c7] sm:$0xff]
        %v6882 = vld [vmem:[%s2228 + $0x1cf] sm:$0xff]
        %v6883 = vld [vmem:[%s2228 + $0x1e7] sm:$0xff]
        %v6884 = vld [vmem:[%s2228 + $0x1ef] sm:$0xff]
        %6917 = vrot.lane.b32.xlu0 %v6853, 24
        %v6918 = vpop.permute.xlu0 %6917
        %6919 = vrot.lane.b32.xlu0 %v6854, 24
        %v6920 = vpop.permute.xlu0 %6919
        %6921 = vrot.lane.b32.xlu0 %v6855, 24
        %v6922 = vpop.permute.xlu0 %6921
        %6923 = vrot.lane.b32.xlu0 %v6856, 24
        %v6924 = vpop.permute.xlu0 %6923
        %6925 = vrot.lane.b32.xlu0 %v6857, 24
        %v6926 = vpop.permute.xlu0 %6925
        %6927 = vrot.lane.b32.xlu0 %v6858, 24
        %v6928 = vpop.permute.xlu0 %6927
        %6929 = vrot.lane.b32.xlu0 %v6859, 24
        %v6930 = vpop.permute.xlu0 %6929
        %6931 = vrot.lane.b32.xlu0 %v6860, 24
        %v6932 = vpop.permute.xlu0 %6931
        %6933 = vrot.lane.b32.xlu0 %v6861, 24
        %v6934 = vpop.permute.xlu0 %6933
        %6935 = vrot.lane.b32.xlu0 %v6862, 24
        %v6936 = vpop.permute.xlu0 %6935
        %6937 = vrot.lane.b32.xlu0 %v6863, 24
        %v6938 = vpop.permute.xlu0 %6937
        %6939 = vrot.lane.b32.xlu0 %v6864, 24
        %v6940 = vpop.permute.xlu0 %6939
        %6941 = vrot.lane.b32.xlu0 %v6865, 24
        %v6942 = vpop.permute.xlu0 %6941
        %6943 = vrot.lane.b32.xlu0 %v6866, 24
        %v6944 = vpop.permute.xlu0 %6943
        %6945 = vrot.lane.b32.xlu0 %v6867, 24
        %v6946 = vpop.permute.xlu0 %6945
        %6947 = vrot.lane.b32.xlu0 %v6868, 24
        %v6948 = vpop.permute.xlu0 %6947
        %6949 = vrot.lane.b32.xlu0 %v6869, 24
        %v6950 = vpop.permute.xlu0 %6949
        %6951 = vrot.lane.b32.xlu0 %v6870, 24
        %v6952 = vpop.permute.xlu0 %6951
        %6953 = vrot.lane.b32.xlu0 %v6871, 24
        %v6954 = vpop.permute.xlu0 %6953
        %6955 = vrot.lane.b32.xlu0 %v6872, 24
        %v6956 = vpop.permute.xlu0 %6955
        %6957 = vrot.lane.b32.xlu0 %v6873, 24
        %v6958 = vpop.permute.xlu0 %6957
        %6959 = vrot.lane.b32.xlu0 %v6874, 24
        %v6960 = vpop.permute.xlu0 %6959
        %6961 = vrot.lane.b32.xlu0 %v6875, 24
        %v6962 = vpop.permute.xlu0 %6961
        %6963 = vrot.lane.b32.xlu0 %v6876, 24
        %v6964 = vpop.permute.xlu0 %6963
        %6965 = vrot.lane.b32.xlu0 %v6877, 24
        %v6966 = vpop.permute.xlu0 %6965
        %6967 = vrot.lane.b32.xlu0 %v6878, 24
        %v6968 = vpop.permute.xlu0 %6967
        %6969 = vrot.lane.b32.xlu0 %v6879, 24
        %v6970 = vpop.permute.xlu0 %6969
        %6971 = vrot.lane.b32.xlu0 %v6880, 24
        %v6972 = vpop.permute.xlu0 %6971
        %6973 = vrot.lane.b32.xlu0 %v6881, 24
        %v6974 = vpop.permute.xlu0 %6973
        %6975 = vrot.lane.b32.xlu0 %v6882, 24
        %v6976 = vpop.permute.xlu0 %6975
        %6977 = vrot.lane.b32.xlu0 %v6883, 24
        %v6978 = vpop.permute.xlu0 %6977
        %6979 = vrot.lane.b32.xlu0 %v6884, 24
        %v6980 = vpop.permute.xlu0 %6979
        %7013 = vst.msk [vmem:[#allocation4] sm:$0xff] %vm2871, %v6918
        %7014 = vst.msk [vmem:[#allocation4 + $0x8] sm:$0xff] %vm2871, %v6920
        %7015 = vst.msk [vmem:[#allocation4 + $0x10] sm:$0xff] %vm2871, %v6922
        %7016 = vst.msk [vmem:[#allocation4 + $0x18] sm:$0xff] %vm2871, %v6924
        %7017 = vst.msk [vmem:[#allocation4 + $0x20] sm:$0xff] %vm2871, %v6926
        %7018 = vst.msk [vmem:[#allocation4 + $0x28] sm:$0xff] %vm2871, %v6928
        %7019 = vst.msk [vmem:[#allocation4 + $0x30] sm:$0xff] %vm2871, %v6930
        %7020 = vst.msk [vmem:[#allocation4 + $0x38] sm:$0xff] %vm2871, %v6932
        %7021 = vst.msk [vmem:[#allocation4 + $0x40] sm:$0xff] %vm2871, %v6934
        %7022 = vst.msk [vmem:[#allocation4 + $0x48] sm:$0xff] %vm2871, %v6936
        %7023 = vst.msk [vmem:[#allocation4 + $0x50] sm:$0xff] %vm2871, %v6938
        %7024 = vst.msk [vmem:[#allocation4 + $0x58] sm:$0xff] %vm2871, %v6940
        %7025 = vst.msk [vmem:[#allocation4 + $0x60] sm:$0xff] %vm2871, %v6942
        %7026 = vst.msk [vmem:[#allocation4 + $0x68] sm:$0xff] %vm2871, %v6944
        %7027 = vst.msk [vmem:[#allocation4 + $0x70] sm:$0xff] %vm2871, %v6946
        %7028 = vst.msk [vmem:[#allocation4 + $0x78] sm:$0xff] %vm2871, %v6948
        %7029 = vst.msk [vmem:[#allocation4 + $0x80] sm:$0xff] %vm2871, %v6950
        %7030 = vst.msk [vmem:[#allocation4 + $0x88] sm:$0xff] %vm2871, %v6952
        %7031 = vst.msk [vmem:[#allocation4 + $0x90] sm:$0xff] %vm2871, %v6954
        %7032 = vst.msk [vmem:[#allocation4 + $0x98] sm:$0xff] %vm2871, %v6956
        %7033 = vst.msk [vmem:[#allocation4 + $0xa0] sm:$0xff] %vm2871, %v6958
        %7034 = vst.msk [vmem:[#allocation4 + $0xa8] sm:$0xff] %vm2871, %v6960
        %7035 = vst.msk [vmem:[#allocation4 + $0xb0] sm:$0xff] %vm2871, %v6962
        %7036 = vst.msk [vmem:[#allocation4 + $0xb8] sm:$0xff] %vm2871, %v6964
        %7037 = vst.msk [vmem:[#allocation4 + $0xc0] sm:$0xff] %vm2871, %v6966
        %7038 = vst.msk [vmem:[#allocation4 + $0xc8] sm:$0xff] %vm2871, %v6968
        %7039 = vst.msk [vmem:[#allocation4 + $0xd0] sm:$0xff] %vm2871, %v6970
        %7040 = vst.msk [vmem:[#allocation4 + $0xd8] sm:$0xff] %vm2871, %v6972
        %7041 = vst.msk [vmem:[#allocation4 + $0xe0] sm:$0xff] %vm2871, %v6974
        %7042 = vst.msk [vmem:[#allocation4 + $0xe8] sm:$0xff] %vm2871, %v6976
        %7043 = vst.msk [vmem:[#allocation4 + $0xf0] sm:$0xff] %vm2871, %v6978
        %7044 = vst.msk [vmem:[#allocation4 + $0xf8] sm:$0xff] %vm2871, %v6980
        %v7045 = vld [vmem:[%s2228 + $0x8] sm:$0xff]
        %v7046 = vld [vmem:[%s2228 + $0x10] sm:$0xff]
        %v7047 = vld [vmem:[%s2228 + $0x28] sm:$0xff]
        %v7048 = vld [vmem:[%s2228 + $0x30] sm:$0xff]
        %v7049 = vld [vmem:[%s2228 + $0x48] sm:$0xff]
        %v7050 = vld [vmem:[%s2228 + $0x50] sm:$0xff]
        %v7051 = vld [vmem:[%s2228 + $0x68] sm:$0xff]
        %v7052 = vld [vmem:[%s2228 + $0x70] sm:$0xff]
        %v7053 = vld [vmem:[%s2228 + $0x88] sm:$0xff]
        %v7054 = vld [vmem:[%s2228 + $0x90] sm:$0xff]
        %v7055 = vld [vmem:[%s2228 + $0xa8] sm:$0xff]
        %v7056 = vld [vmem:[%s2228 + $0xb0] sm:$0xff]
        %v7057 = vld [vmem:[%s2228 + $0xc8] sm:$0xff]
        %v7058 = vld [vmem:[%s2228 + $0xd0] sm:$0xff]
        %v7059 = vld [vmem:[%s2228 + $0xe8] sm:$0xff]
        %v7060 = vld [vmem:[%s2228 + $0xf0] sm:$0xff]
        %v7061 = vld [vmem:[%s2228 + $0x108] sm:$0xff]
        %v7062 = vld [vmem:[%s2228 + $0x110] sm:$0xff]
        %v7063 = vld [vmem:[%s2228 + $0x128] sm:$0xff]
        %v7064 = vld [vmem:[%s2228 + $0x130] sm:$0xff]
        %v7065 = vld [vmem:[%s2228 + $0x148] sm:$0xff]
        %v7066 = vld [vmem:[%s2228 + $0x150] sm:$0xff]
        %v7067 = vld [vmem:[%s2228 + $0x168] sm:$0xff]
        %v7068 = vld [vmem:[%s2228 + $0x170] sm:$0xff]
        %v7069 = vld [vmem:[%s2228 + $0x188] sm:$0xff]
        %v7070 = vld [vmem:[%s2228 + $0x190] sm:$0xff]
        %v7071 = vld [vmem:[%s2228 + $0x1a8] sm:$0xff]
        %v7072 = vld [vmem:[%s2228 + $0x1b0] sm:$0xff]
        %v7073 = vld [vmem:[%s2228 + $0x1c8] sm:$0xff]
        %v7074 = vld [vmem:[%s2228 + $0x1d0] sm:$0xff]
        %v7075 = vld [vmem:[%s2228 + $0x1e8] sm:$0xff]
        %v7076 = vld [vmem:[%s2228 + $0x1f0] sm:$0xff]
        %7109 = vrot.lane.b32.xlu0 %v7045, 32
        %v7110 = vpop.permute.xlu0 %7109
        %7111 = vrot.lane.b32.xlu0 %v7046, 32
        %v7112 = vpop.permute.xlu0 %7111
        %7113 = vrot.lane.b32.xlu0 %v7047, 32
        %v7114 = vpop.permute.xlu0 %7113
        %7115 = vrot.lane.b32.xlu0 %v7048, 32
        %v7116 = vpop.permute.xlu0 %7115
        %7117 = vrot.lane.b32.xlu0 %v7049, 32
        %v7118 = vpop.permute.xlu0 %7117
        %7119 = vrot.lane.b32.xlu0 %v7050, 32
        %v7120 = vpop.permute.xlu0 %7119
        %7121 = vrot.lane.b32.xlu0 %v7051, 32
        %v7122 = vpop.permute.xlu0 %7121
        %7123 = vrot.lane.b32.xlu0 %v7052, 32
        %v7124 = vpop.permute.xlu0 %7123
        %7125 = vrot.lane.b32.xlu0 %v7053, 32
        %v7126 = vpop.permute.xlu0 %7125
        %7127 = vrot.lane.b32.xlu0 %v7054, 32
        %v7128 = vpop.permute.xlu0 %7127
        %7129 = vrot.lane.b32.xlu0 %v7055, 32
        %v7130 = vpop.permute.xlu0 %7129
        %7131 = vrot.lane.b32.xlu0 %v7056, 32
        %v7132 = vpop.permute.xlu0 %7131
        %7133 = vrot.lane.b32.xlu0 %v7057, 32
        %v7134 = vpop.permute.xlu0 %7133
        %7135 = vrot.lane.b32.xlu0 %v7058, 32
        %v7136 = vpop.permute.xlu0 %7135
        %7137 = vrot.lane.b32.xlu0 %v7059, 32
        %v7138 = vpop.permute.xlu0 %7137
        %7139 = vrot.lane.b32.xlu0 %v7060, 32
        %v7140 = vpop.permute.xlu0 %7139
        %7141 = vrot.lane.b32.xlu0 %v7061, 32
        %v7142 = vpop.permute.xlu0 %7141
        %7143 = vrot.lane.b32.xlu0 %v7062, 32
        %v7144 = vpop.permute.xlu0 %7143
        %7145 = vrot.lane.b32.xlu0 %v7063, 32
        %v7146 = vpop.permute.xlu0 %7145
        %7147 = vrot.lane.b32.xlu0 %v7064, 32
        %v7148 = vpop.permute.xlu0 %7147
        %7149 = vrot.lane.b32.xlu0 %v7065, 32
        %v7150 = vpop.permute.xlu0 %7149
        %7151 = vrot.lane.b32.xlu0 %v7066, 32
        %v7152 = vpop.permute.xlu0 %7151
        %7153 = vrot.lane.b32.xlu0 %v7067, 32
        %v7154 = vpop.permute.xlu0 %7153
        %7155 = vrot.lane.b32.xlu0 %v7068, 32
        %v7156 = vpop.permute.xlu0 %7155
        %7157 = vrot.lane.b32.xlu0 %v7069, 32
        %v7158 = vpop.permute.xlu0 %7157
        %7159 = vrot.lane.b32.xlu0 %v7070, 32
        %v7160 = vpop.permute.xlu0 %7159
        %7161 = vrot.lane.b32.xlu0 %v7071, 32
        %v7162 = vpop.permute.xlu0 %7161
        %7163 = vrot.lane.b32.xlu0 %v7072, 32
        %v7164 = vpop.permute.xlu0 %7163
        %7165 = vrot.lane.b32.xlu0 %v7073, 32
        %v7166 = vpop.permute.xlu0 %7165
        %7167 = vrot.lane.b32.xlu0 %v7074, 32
        %v7168 = vpop.permute.xlu0 %7167
        %7169 = vrot.lane.b32.xlu0 %v7075, 32
        %v7170 = vpop.permute.xlu0 %7169
        %7171 = vrot.lane.b32.xlu0 %v7076, 32
        %v7172 = vpop.permute.xlu0 %7171
        %7205 = vst.msk [vmem:[#allocation4] sm:$0xff] %vm3064, %v7110
        %7206 = vst.msk [vmem:[#allocation4 + $0x8] sm:$0xff] %vm3064, %v7112
        %7207 = vst.msk [vmem:[#allocation4 + $0x10] sm:$0xff] %vm3064, %v7114
        %7208 = vst.msk [vmem:[#allocation4 + $0x18] sm:$0xff] %vm3064, %v7116
        %7209 = vst.msk [vmem:[#allocation4 + $0x20] sm:$0xff] %vm3064, %v7118
        %7210 = vst.msk [vmem:[#allocation4 + $0x28] sm:$0xff] %vm3064, %v7120
        %7211 = vst.msk [vmem:[#allocation4 + $0x30] sm:$0xff] %vm3064, %v7122
        %7212 = vst.msk [vmem:[#allocation4 + $0x38] sm:$0xff] %vm3064, %v7124
        %7213 = vst.msk [vmem:[#allocation4 + $0x40] sm:$0xff] %vm3064, %v7126
        %7214 = vst.msk [vmem:[#allocation4 + $0x48] sm:$0xff] %vm3064, %v7128
        %7215 = vst.msk [vmem:[#allocation4 + $0x50] sm:$0xff] %vm3064, %v7130
        %7216 = vst.msk [vmem:[#allocation4 + $0x58] sm:$0xff] %vm3064, %v7132
        %7217 = vst.msk [vmem:[#allocation4 + $0x60] sm:$0xff] %vm3064, %v7134
        %7218 = vst.msk [vmem:[#allocation4 + $0x68] sm:$0xff] %vm3064, %v7136
        %7219 = vst.msk [vmem:[#allocation4 + $0x70] sm:$0xff] %vm3064, %v7138
        %7220 = vst.msk [vmem:[#allocation4 + $0x78] sm:$0xff] %vm3064, %v7140
        %7221 = vst.msk [vmem:[#allocation4 + $0x80] sm:$0xff] %vm3064, %v7142
        %7222 = vst.msk [vmem:[#allocation4 + $0x88] sm:$0xff] %vm3064, %v7144
        %7223 = vst.msk [vmem:[#allocation4 + $0x90] sm:$0xff] %vm3064, %v7146
        %7224 = vst.msk [vmem:[#allocation4 + $0x98] sm:$0xff] %vm3064, %v7148
        %7225 = vst.msk [vmem:[#allocation4 + $0xa0] sm:$0xff] %vm3064, %v7150
        %7226 = vst.msk [vmem:[#allocation4 + $0xa8] sm:$0xff] %vm3064, %v7152
        %7227 = vst.msk [vmem:[#allocation4 + $0xb0] sm:$0xff] %vm3064, %v7154
        %7228 = vst.msk [vmem:[#allocation4 + $0xb8] sm:$0xff] %vm3064, %v7156
        %7229 = vst.msk [vmem:[#allocation4 + $0xc0] sm:$0xff] %vm3064, %v7158
        %7230 = vst.msk [vmem:[#allocation4 + $0xc8] sm:$0xff] %vm3064, %v7160
        %7231 = vst.msk [vmem:[#allocation4 + $0xd0] sm:$0xff] %vm3064, %v7162
        %7232 = vst.msk [vmem:[#allocation4 + $0xd8] sm:$0xff] %vm3064, %v7164
        %7233 = vst.msk [vmem:[#allocation4 + $0xe0] sm:$0xff] %vm3064, %v7166
        %7234 = vst.msk [vmem:[#allocation4 + $0xe8] sm:$0xff] %vm3064, %v7168
        %7235 = vst.msk [vmem:[#allocation4 + $0xf0] sm:$0xff] %vm3064, %v7170
        %7236 = vst.msk [vmem:[#allocation4 + $0xf8] sm:$0xff] %vm3064, %v7172
        %v7237 = vld [vmem:[%s2228 + $0x9] sm:$0xff]
        %v7238 = vld [vmem:[%s2228 + $0x11] sm:$0xff]
        %v7239 = vld [vmem:[%s2228 + $0x29] sm:$0xff]
        %v7240 = vld [vmem:[%s2228 + $0x31] sm:$0xff]
        %v7241 = vld [vmem:[%s2228 + $0x49] sm:$0xff]
        %v7242 = vld [vmem:[%s2228 + $0x51] sm:$0xff]
        %v7243 = vld [vmem:[%s2228 + $0x69] sm:$0xff]
        %v7244 = vld [vmem:[%s2228 + $0x71] sm:$0xff]
        %v7245 = vld [vmem:[%s2228 + $0x89] sm:$0xff]
        %v7246 = vld [vmem:[%s2228 + $0x91] sm:$0xff]
        %v7247 = vld [vmem:[%s2228 + $0xa9] sm:$0xff]
        %v7248 = vld [vmem:[%s2228 + $0xb1] sm:$0xff]
        %v7249 = vld [vmem:[%s2228 + $0xc9] sm:$0xff]
        %v7250 = vld [vmem:[%s2228 + $0xd1] sm:$0xff]
        %v7251 = vld [vmem:[%s2228 + $0xe9] sm:$0xff]
        %v7252 = vld [vmem:[%s2228 + $0xf1] sm:$0xff]
        %v7253 = vld [vmem:[%s2228 + $0x109] sm:$0xff]
        %v7254 = vld [vmem:[%s2228 + $0x111] sm:$0xff]
        %v7255 = vld [vmem:[%s2228 + $0x129] sm:$0xff]
        %v7256 = vld [vmem:[%s2228 + $0x131] sm:$0xff]
        %v7257 = vld [vmem:[%s2228 + $0x149] sm:$0xff]
        %v7258 = vld [vmem:[%s2228 + $0x151] sm:$0xff]
        %v7259 = vld [vmem:[%s2228 + $0x169] sm:$0xff]
        %v7260 = vld [vmem:[%s2228 + $0x171] sm:$0xff]
        %v7261 = vld [vmem:[%s2228 + $0x189] sm:$0xff]
        %v7262 = vld [vmem:[%s2228 + $0x191] sm:$0xff]
        %v7263 = vld [vmem:[%s2228 + $0x1a9] sm:$0xff]
        %v7264 = vld [vmem:[%s2228 + $0x1b1] sm:$0xff]
        %v7265 = vld [vmem:[%s2228 + $0x1c9] sm:$0xff]
        %v7266 = vld [vmem:[%s2228 + $0x1d1] sm:$0xff]
        %v7267 = vld [vmem:[%s2228 + $0x1e9] sm:$0xff]
        %v7268 = vld [vmem:[%s2228 + $0x1f1] sm:$0xff]
        %7301 = vrot.lane.b32.xlu0 %v7237, 40
        %v7302 = vpop.permute.xlu0 %7301
        %7303 = vrot.lane.b32.xlu0 %v7238, 40
        %v7304 = vpop.permute.xlu0 %7303
        %7305 = vrot.lane.b32.xlu0 %v7239, 40
        %v7306 = vpop.permute.xlu0 %7305
        %7307 = vrot.lane.b32.xlu0 %v7240, 40
        %v7308 = vpop.permute.xlu0 %7307
        %7309 = vrot.lane.b32.xlu0 %v7241, 40
        %v7310 = vpop.permute.xlu0 %7309
        %7311 = vrot.lane.b32.xlu0 %v7242, 40
        %v7312 = vpop.permute.xlu0 %7311
        %7313 = vrot.lane.b32.xlu0 %v7243, 40
        %v7314 = vpop.permute.xlu0 %7313
        %7315 = vrot.lane.b32.xlu0 %v7244, 40
        %v7316 = vpop.permute.xlu0 %7315
        %7317 = vrot.lane.b32.xlu0 %v7245, 40
        %v7318 = vpop.permute.xlu0 %7317
        %7319 = vrot.lane.b32.xlu0 %v7246, 40
        %v7320 = vpop.permute.xlu0 %7319
        %7321 = vrot.lane.b32.xlu0 %v7247, 40
        %v7322 = vpop.permute.xlu0 %7321
        %7323 = vrot.lane.b32.xlu0 %v7248, 40
        %v7324 = vpop.permute.xlu0 %7323
        %7325 = vrot.lane.b32.xlu0 %v7249, 40
        %v7326 = vpop.permute.xlu0 %7325
        %7327 = vrot.lane.b32.xlu0 %v7250, 40
        %v7328 = vpop.permute.xlu0 %7327
        %7329 = vrot.lane.b32.xlu0 %v7251, 40
        %v7330 = vpop.permute.xlu0 %7329
        %7331 = vrot.lane.b32.xlu0 %v7252, 40
        %v7332 = vpop.permute.xlu0 %7331
        %7333 = vrot.lane.b32.xlu0 %v7253, 40
        %v7334 = vpop.permute.xlu0 %7333
        %7335 = vrot.lane.b32.xlu0 %v7254, 40
        %v7336 = vpop.permute.xlu0 %7335
        %7337 = vrot.lane.b32.xlu0 %v7255, 40
        %v7338 = vpop.permute.xlu0 %7337
        %7339 = vrot.lane.b32.xlu0 %v7256, 40
        %v7340 = vpop.permute.xlu0 %7339
        %7341 = vrot.lane.b32.xlu0 %v7257, 40
        %v7342 = vpop.permute.xlu0 %7341
        %7343 = vrot.lane.b32.xlu0 %v7258, 40
        %v7344 = vpop.permute.xlu0 %7343
        %7345 = vrot.lane.b32.xlu0 %v7259, 40
        %v7346 = vpop.permute.xlu0 %7345
        %7347 = vrot.lane.b32.xlu0 %v7260, 40
        %v7348 = vpop.permute.xlu0 %7347
        %7349 = vrot.lane.b32.xlu0 %v7261, 40
        %v7350 = vpop.permute.xlu0 %7349
        %7351 = vrot.lane.b32.xlu0 %v7262, 40
        %v7352 = vpop.permute.xlu0 %7351
        %7353 = vrot.lane.b32.xlu0 %v7263, 40
        %v7354 = vpop.permute.xlu0 %7353
        %7355 = vrot.lane.b32.xlu0 %v7264, 40
        %v7356 = vpop.permute.xlu0 %7355
        %7357 = vrot.lane.b32.xlu0 %v7265, 40
        %v7358 = vpop.permute.xlu0 %7357
        %7359 = vrot.lane.b32.xlu0 %v7266, 40
        %v7360 = vpop.permute.xlu0 %7359
        %7361 = vrot.lane.b32.xlu0 %v7267, 40
        %v7362 = vpop.permute.xlu0 %7361
        %7363 = vrot.lane.b32.xlu0 %v7268, 40
        %v7364 = vpop.permute.xlu0 %7363
        %7397 = vst.msk [vmem:[#allocation4] sm:$0xff] %vm3257, %v7302
        %7398 = vst.msk [vmem:[#allocation4 + $0x8] sm:$0xff] %vm3257, %v7304
        %7399 = vst.msk [vmem:[#allocation4 + $0x10] sm:$0xff] %vm3257, %v7306
        %7400 = vst.msk [vmem:[#allocation4 + $0x18] sm:$0xff] %vm3257, %v7308
        %7401 = vst.msk [vmem:[#allocation4 + $0x20] sm:$0xff] %vm3257, %v7310
        %7402 = vst.msk [vmem:[#allocation4 + $0x28] sm:$0xff] %vm3257, %v7312
        %7403 = vst.msk [vmem:[#allocation4 + $0x30] sm:$0xff] %vm3257, %v7314
        %7404 = vst.msk [vmem:[#allocation4 + $0x38] sm:$0xff] %vm3257, %v7316
        %7405 = vst.msk [vmem:[#allocation4 + $0x40] sm:$0xff] %vm3257, %v7318
        %7406 = vst.msk [vmem:[#allocation4 + $0x48] sm:$0xff] %vm3257, %v7320
        %7407 = vst.msk [vmem:[#allocation4 + $0x50] sm:$0xff] %vm3257, %v7322
        %7408 = vst.msk [vmem:[#allocation4 + $0x58] sm:$0xff] %vm3257, %v7324
        %7409 = vst.msk [vmem:[#allocation4 + $0x60] sm:$0xff] %vm3257, %v7326
        %7410 = vst.msk [vmem:[#allocation4 + $0x68] sm:$0xff] %vm3257, %v7328
        %7411 = vst.msk [vmem:[#allocation4 + $0x70] sm:$0xff] %vm3257, %v7330
        %7412 = vst.msk [vmem:[#allocation4 + $0x78] sm:$0xff] %vm3257, %v7332
        %7413 = vst.msk [vmem:[#allocation4 + $0x80] sm:$0xff] %vm3257, %v7334
        %7414 = vst.msk [vmem:[#allocation4 + $0x88] sm:$0xff] %vm3257, %v7336
        %7415 = vst.msk [vmem:[#allocation4 + $0x90] sm:$0xff] %vm3257, %v7338
        %7416 = vst.msk [vmem:[#allocation4 + $0x98] sm:$0xff] %vm3257, %v7340
        %7417 = vst.msk [vmem:[#allocation4 + $0xa0] sm:$0xff] %vm3257, %v7342
        %7418 = vst.msk [vmem:[#allocation4 + $0xa8] sm:$0xff] %vm3257, %v7344
        %7419 = vst.msk [vmem:[#allocation4 + $0xb0] sm:$0xff] %vm3257, %v7346
        %7420 = vst.msk [vmem:[#allocation4 + $0xb8] sm:$0xff] %vm3257, %v7348
        %7421 = vst.msk [vmem:[#allocation4 + $0xc0] sm:$0xff] %vm3257, %v7350
        %7422 = vst.msk [vmem:[#allocation4 + $0xc8] sm:$0xff] %vm3257, %v7352
        %7423 = vst.msk [vmem:[#allocation4 + $0xd0] sm:$0xff] %vm3257, %v7354
        %7424 = vst.msk [vmem:[#allocation4 + $0xd8] sm:$0xff] %vm3257, %v7356
        %7425 = vst.msk [vmem:[#allocation4 + $0xe0] sm:$0xff] %vm3257, %v7358
        %7426 = vst.msk [vmem:[#allocation4 + $0xe8] sm:$0xff] %vm3257, %v7360
        %7427 = vst.msk [vmem:[#allocation4 + $0xf0] sm:$0xff] %vm3257, %v7362
        %7428 = vst.msk [vmem:[#allocation4 + $0xf8] sm:$0xff] %vm3257, %v7364
        %v7429 = vld [vmem:[%s3290 + $0x7] sm:$0xff]
        %v7430 = vld [vmem:[%s3290 + $0xf] sm:$0xff]
        %v7431 = vld [vmem:[%s3290 + $0x27] sm:$0xff]
        %v7432 = vld [vmem:[%s3290 + $0x2f] sm:$0xff]
        %v7433 = vld [vmem:[%s3290 + $0x47] sm:$0xff]
        %v7434 = vld [vmem:[%s3290 + $0x4f] sm:$0xff]
        %v7435 = vld [vmem:[%s3290 + $0x67] sm:$0xff]
        %v7436 = vld [vmem:[%s3290 + $0x6f] sm:$0xff]
        %v7437 = vld [vmem:[%s3290 + $0x87] sm:$0xff]
        %v7438 = vld [vmem:[%s3290 + $0x8f] sm:$0xff]
        %v7439 = vld [vmem:[%s3290 + $0xa7] sm:$0xff]
        %v7440 = vld [vmem:[%s3290 + $0xaf] sm:$0xff]
        %v7441 = vld [vmem:[%s3290 + $0xc7] sm:$0xff]
        %v7442 = vld [vmem:[%s3290 + $0xcf] sm:$0xff]
        %v7443 = vld [vmem:[%s3290 + $0xe7] sm:$0xff]
        %v7444 = vld [vmem:[%s3290 + $0xef] sm:$0xff]
        %v7445 = vld [vmem:[%s3290 + $0x107] sm:$0xff]
        %v7446 = vld [vmem:[%s3290 + $0x10f] sm:$0xff]
        %v7447 = vld [vmem:[%s3290 + $0x127] sm:$0xff]
        %v7448 = vld [vmem:[%s3290 + $0x12f] sm:$0xff]
        %v7449 = vld [vmem:[%s3290 + $0x147] sm:$0xff]
        %v7450 = vld [vmem:[%s3290 + $0x14f] sm:$0xff]
        %v7451 = vld [vmem:[%s3290 + $0x167] sm:$0xff]
        %v7452 = vld [vmem:[%s3290 + $0x16f] sm:$0xff]
        %v7453 = vld [vmem:[%s3290 + $0x187] sm:$0xff]
        %v7454 = vld [vmem:[%s3290 + $0x18f] sm:$0xff]
        %v7455 = vld [vmem:[%s3290 + $0x1a7] sm:$0xff]
        %v7456 = vld [vmem:[%s3290 + $0x1af] sm:$0xff]
        %v7457 = vld [vmem:[%s3290 + $0x1c7] sm:$0xff]
        %v7458 = vld [vmem:[%s3290 + $0x1cf] sm:$0xff]
        %v7459 = vld [vmem:[%s3290 + $0x1e7] sm:$0xff]
        %v7460 = vld [vmem:[%s3290 + $0x1ef] sm:$0xff]
        %7493 = vrot.lane.b32.xlu0 %v7429, 48
        %v7494 = vpop.permute.xlu0 %7493
        %7495 = vrot.lane.b32.xlu0 %v7430, 48
        %v7496 = vpop.permute.xlu0 %7495
        %7497 = vrot.lane.b32.xlu0 %v7431, 48
        %v7498 = vpop.permute.xlu0 %7497
        %7499 = vrot.lane.b32.xlu0 %v7432, 48
        %v7500 = vpop.permute.xlu0 %7499
        %7501 = vrot.lane.b32.xlu0 %v7433, 48
        %v7502 = vpop.permute.xlu0 %7501
        %7503 = vrot.lane.b32.xlu0 %v7434, 48
        %v7504 = vpop.permute.xlu0 %7503
        %7505 = vrot.lane.b32.xlu0 %v7435, 48
        %v7506 = vpop.permute.xlu0 %7505
        %7507 = vrot.lane.b32.xlu0 %v7436, 48
        %v7508 = vpop.permute.xlu0 %7507
        %7509 = vrot.lane.b32.xlu0 %v7437, 48
        %v7510 = vpop.permute.xlu0 %7509
        %7511 = vrot.lane.b32.xlu0 %v7438, 48
        %v7512 = vpop.permute.xlu0 %7511
        %7513 = vrot.lane.b32.xlu0 %v7439, 48
        %v7514 = vpop.permute.xlu0 %7513
        %7515 = vrot.lane.b32.xlu0 %v7440, 48
        %v7516 = vpop.permute.xlu0 %7515
        %7517 = vrot.lane.b32.xlu0 %v7441, 48
        %v7518 = vpop.permute.xlu0 %7517
        %7519 = vrot.lane.b32.xlu0 %v7442, 48
        %v7520 = vpop.permute.xlu0 %7519
        %7521 = vrot.lane.b32.xlu0 %v7443, 48
        %v7522 = vpop.permute.xlu0 %7521
        %7523 = vrot.lane.b32.xlu0 %v7444, 48
        %v7524 = vpop.permute.xlu0 %7523
        %7525 = vrot.lane.b32.xlu0 %v7445, 48
        %v7526 = vpop.permute.xlu0 %7525
        %7527 = vrot.lane.b32.xlu0 %v7446, 48
        %v7528 = vpop.permute.xlu0 %7527
        %7529 = vrot.lane.b32.xlu0 %v7447, 48
        %v7530 = vpop.permute.xlu0 %7529
        %7531 = vrot.lane.b32.xlu0 %v7448, 48
        %v7532 = vpop.permute.xlu0 %7531
        %7533 = vrot.lane.b32.xlu0 %v7449, 48
        %v7534 = vpop.permute.xlu0 %7533
        %7535 = vrot.lane.b32.xlu0 %v7450, 48
        %v7536 = vpop.permute.xlu0 %7535
        %7537 = vrot.lane.b32.xlu0 %v7451, 48
        %v7538 = vpop.permute.xlu0 %7537
        %7539 = vrot.lane.b32.xlu0 %v7452, 48
        %v7540 = vpop.permute.xlu0 %7539
        %7541 = vrot.lane.b32.xlu0 %v7453, 48
        %v7542 = vpop.permute.xlu0 %7541
        %7543 = vrot.lane.b32.xlu0 %v7454, 48
        %v7544 = vpop.permute.xlu0 %7543
        %7545 = vrot.lane.b32.xlu0 %v7455, 48
        %v7546 = vpop.permute.xlu0 %7545
        %7547 = vrot.lane.b32.xlu0 %v7456, 48
        %v7548 = vpop.permute.xlu0 %7547
        %7549 = vrot.lane.b32.xlu0 %v7457, 48
        %v7550 = vpop.permute.xlu0 %7549
        %7551 = vrot.lane.b32.xlu0 %v7458, 48
        %v7552 = vpop.permute.xlu0 %7551
        %7553 = vrot.lane.b32.xlu0 %v7459, 48
        %v7554 = vpop.permute.xlu0 %7553
        %7555 = vrot.lane.b32.xlu0 %v7460, 48
        %v7556 = vpop.permute.xlu0 %7555
        %7589 = vst.msk [vmem:[#allocation4] sm:$0xff] %vm3451, %v7494
        %7590 = vst.msk [vmem:[#allocation4 + $0x8] sm:$0xff] %vm3451, %v7496
        %7591 = vst.msk [vmem:[#allocation4 + $0x10] sm:$0xff] %vm3451, %v7498
        %7592 = vst.msk [vmem:[#allocation4 + $0x18] sm:$0xff] %vm3451, %v7500
        %7593 = vst.msk [vmem:[#allocation4 + $0x20] sm:$0xff] %vm3451, %v7502
        %7594 = vst.msk [vmem:[#allocation4 + $0x28] sm:$0xff] %vm3451, %v7504
        %7595 = vst.msk [vmem:[#allocation4 + $0x30] sm:$0xff] %vm3451, %v7506
        %7596 = vst.msk [vmem:[#allocation4 + $0x38] sm:$0xff] %vm3451, %v7508
        %7597 = vst.msk [vmem:[#allocation4 + $0x40] sm:$0xff] %vm3451, %v7510
        %7598 = vst.msk [vmem:[#allocation4 + $0x48] sm:$0xff] %vm3451, %v7512
        %7599 = vst.msk [vmem:[#allocation4 + $0x50] sm:$0xff] %vm3451, %v7514
        %7600 = vst.msk [vmem:[#allocation4 + $0x58] sm:$0xff] %vm3451, %v7516
        %7601 = vst.msk [vmem:[#allocation4 + $0x60] sm:$0xff] %vm3451, %v7518
        %7602 = vst.msk [vmem:[#allocation4 + $0x68] sm:$0xff] %vm3451, %v7520
        %7603 = vst.msk [vmem:[#allocation4 + $0x70] sm:$0xff] %vm3451, %v7522
        %7604 = vst.msk [vmem:[#allocation4 + $0x78] sm:$0xff] %vm3451, %v7524
        %7605 = vst.msk [vmem:[#allocation4 + $0x80] sm:$0xff] %vm3451, %v7526
        %7606 = vst.msk [vmem:[#allocation4 + $0x88] sm:$0xff] %vm3451, %v7528
        %7607 = vst.msk [vmem:[#allocation4 + $0x90] sm:$0xff] %vm3451, %v7530
        %7608 = vst.msk [vmem:[#allocation4 + $0x98] sm:$0xff] %vm3451, %v7532
        %7609 = vst.msk [vmem:[#allocation4 + $0xa0] sm:$0xff] %vm3451, %v7534
        %7610 = vst.msk [vmem:[#allocation4 + $0xa8] sm:$0xff] %vm3451, %v7536
        %7611 = vst.msk [vmem:[#allocation4 + $0xb0] sm:$0xff] %vm3451, %v7538
        %7612 = vst.msk [vmem:[#allocation4 + $0xb8] sm:$0xff] %vm3451, %v7540
        %7613 = vst.msk [vmem:[#allocation4 + $0xc0] sm:$0xff] %vm3451, %v7542
        %7614 = vst.msk [vmem:[#allocation4 + $0xc8] sm:$0xff] %vm3451, %v7544
        %7615 = vst.msk [vmem:[#allocation4 + $0xd0] sm:$0xff] %vm3451, %v7546
        %7616 = vst.msk [vmem:[#allocation4 + $0xd8] sm:$0xff] %vm3451, %v7548
        %7617 = vst.msk [vmem:[#allocation4 + $0xe0] sm:$0xff] %vm3451, %v7550
        %7618 = vst.msk [vmem:[#allocation4 + $0xe8] sm:$0xff] %vm3451, %v7552
        %7619 = vst.msk [vmem:[#allocation4 + $0xf0] sm:$0xff] %vm3451, %v7554
        %7620 = vst.msk [vmem:[#allocation4 + $0xf8] sm:$0xff] %vm3451, %v7556
        %v7621 = vld [vmem:[%s3290 + $0x8] sm:$0xff]
        %v7622 = vld [vmem:[%s3290 + $0x10] sm:$0xff]
        %v7623 = vld [vmem:[%s3290 + $0x28] sm:$0xff]
        %v7624 = vld [vmem:[%s3290 + $0x30] sm:$0xff]
        %v7625 = vld [vmem:[%s3290 + $0x48] sm:$0xff]
        %v7626 = vld [vmem:[%s3290 + $0x50] sm:$0xff]
        %v7627 = vld [vmem:[%s3290 + $0x68] sm:$0xff]
        %v7628 = vld [vmem:[%s3290 + $0x70] sm:$0xff]
        %v7629 = vld [vmem:[%s3290 + $0x88] sm:$0xff]
        %v7630 = vld [vmem:[%s3290 + $0x90] sm:$0xff]
        %v7631 = vld [vmem:[%s3290 + $0xa8] sm:$0xff]
        %v7632 = vld [vmem:[%s3290 + $0xb0] sm:$0xff]
        %v7633 = vld [vmem:[%s3290 + $0xc8] sm:$0xff]
        %v7634 = vld [vmem:[%s3290 + $0xd0] sm:$0xff]
        %v7635 = vld [vmem:[%s3290 + $0xe8] sm:$0xff]
        %v7636 = vld [vmem:[%s3290 + $0xf0] sm:$0xff]
        %v7637 = vld [vmem:[%s3290 + $0x108] sm:$0xff]
        %v7638 = vld [vmem:[%s3290 + $0x110] sm:$0xff]
        %v7639 = vld [vmem:[%s3290 + $0x128] sm:$0xff]
        %v7640 = vld [vmem:[%s3290 + $0x130] sm:$0xff]
        %v7641 = vld [vmem:[%s3290 + $0x148] sm:$0xff]
        %v7642 = vld [vmem:[%s3290 + $0x150] sm:$0xff]
        %v7643 = vld [vmem:[%s3290 + $0x168] sm:$0xff]
        %v7644 = vld [vmem:[%s3290 + $0x170] sm:$0xff]
        %v7645 = vld [vmem:[%s3290 + $0x188] sm:$0xff]
        %v7646 = vld [vmem:[%s3290 + $0x190] sm:$0xff]
        %v7647 = vld [vmem:[%s3290 + $0x1a8] sm:$0xff]
        %v7648 = vld [vmem:[%s3290 + $0x1b0] sm:$0xff]
        %v7649 = vld [vmem:[%s3290 + $0x1c8] sm:$0xff]
        %v7650 = vld [vmem:[%s3290 + $0x1d0] sm:$0xff]
        %v7651 = vld [vmem:[%s3290 + $0x1e8] sm:$0xff]
        %v7652 = vld [vmem:[%s3290 + $0x1f0] sm:$0xff]
        %7685 = vrot.lane.b32.xlu0 %v7621, 56
        %v7686 = vpop.permute.xlu0 %7685
        %7687 = vrot.lane.b32.xlu0 %v7622, 56
        %v7688 = vpop.permute.xlu0 %7687
        %7689 = vrot.lane.b32.xlu0 %v7623, 56
        %v7690 = vpop.permute.xlu0 %7689
        %7691 = vrot.lane.b32.xlu0 %v7624, 56
        %v7692 = vpop.permute.xlu0 %7691
        %7693 = vrot.lane.b32.xlu0 %v7625, 56
        %v7694 = vpop.permute.xlu0 %7693
        %7695 = vrot.lane.b32.xlu0 %v7626, 56
        %v7696 = vpop.permute.xlu0 %7695
        %7697 = vrot.lane.b32.xlu0 %v7627, 56
        %v7698 = vpop.permute.xlu0 %7697
        %7699 = vrot.lane.b32.xlu0 %v7628, 56
        %v7700 = vpop.permute.xlu0 %7699
        %7701 = vrot.lane.b32.xlu0 %v7629, 56
        %v7702 = vpop.permute.xlu0 %7701
        %7703 = vrot.lane.b32.xlu0 %v7630, 56
        %v7704 = vpop.permute.xlu0 %7703
        %7705 = vrot.lane.b32.xlu0 %v7631, 56
        %v7706 = vpop.permute.xlu0 %7705
        %7707 = vrot.lane.b32.xlu0 %v7632, 56
        %v7708 = vpop.permute.xlu0 %7707
        %7709 = vrot.lane.b32.xlu0 %v7633, 56
        %v7710 = vpop.permute.xlu0 %7709
        %7711 = vrot.lane.b32.xlu0 %v7634, 56
        %v7712 = vpop.permute.xlu0 %7711
        %7713 = vrot.lane.b32.xlu0 %v7635, 56
        %v7714 = vpop.permute.xlu0 %7713
        %7715 = vrot.lane.b32.xlu0 %v7636, 56
        %v7716 = vpop.permute.xlu0 %7715
        %7717 = vrot.lane.b32.xlu0 %v7637, 56
        %v7718 = vpop.permute.xlu0 %7717
        %7719 = vrot.lane.b32.xlu0 %v7638, 56
        %v7720 = vpop.permute.xlu0 %7719
        %7721 = vrot.lane.b32.xlu0 %v7639, 56
        %v7722 = vpop.permute.xlu0 %7721
        %7723 = vrot.lane.b32.xlu0 %v7640, 56
        %v7724 = vpop.permute.xlu0 %7723
        %7725 = vrot.lane.b32.xlu0 %v7641, 56
        %v7726 = vpop.permute.xlu0 %7725
        %7727 = vrot.lane.b32.xlu0 %v7642, 56
        %v7728 = vpop.permute.xlu0 %7727
        %7729 = vrot.lane.b32.xlu0 %v7643, 56
        %v7730 = vpop.permute.xlu0 %7729
        %7731 = vrot.lane.b32.xlu0 %v7644, 56
        %v7732 = vpop.permute.xlu0 %7731
        %7733 = vrot.lane.b32.xlu0 %v7645, 56
        %v7734 = vpop.permute.xlu0 %7733
        %7735 = vrot.lane.b32.xlu0 %v7646, 56
        %v7736 = vpop.permute.xlu0 %7735
        %7737 = vrot.lane.b32.xlu0 %v7647, 56
        %v7738 = vpop.permute.xlu0 %7737
        %7739 = vrot.lane.b32.xlu0 %v7648, 56
        %v7740 = vpop.permute.xlu0 %7739
        %7741 = vrot.lane.b32.xlu0 %v7649, 56
        %v7742 = vpop.permute.xlu0 %7741
        %7743 = vrot.lane.b32.xlu0 %v7650, 56
        %v7744 = vpop.permute.xlu0 %7743
        %7745 = vrot.lane.b32.xlu0 %v7651, 56
        %v7746 = vpop.permute.xlu0 %7745
        %7747 = vrot.lane.b32.xlu0 %v7652, 56
        %v7748 = vpop.permute.xlu0 %7747
        %7781 = vst.msk [vmem:[#allocation4] sm:$0xff] %vm3644, %v7686
        %7782 = vst.msk [vmem:[#allocation4 + $0x8] sm:$0xff] %vm3644, %v7688
        %7783 = vst.msk [vmem:[#allocation4 + $0x10] sm:$0xff] %vm3644, %v7690
        %7784 = vst.msk [vmem:[#allocation4 + $0x18] sm:$0xff] %vm3644, %v7692
        %7785 = vst.msk [vmem:[#allocation4 + $0x20] sm:$0xff] %vm3644, %v7694
        %7786 = vst.msk [vmem:[#allocation4 + $0x28] sm:$0xff] %vm3644, %v7696
        %7787 = vst.msk [vmem:[#allocation4 + $0x30] sm:$0xff] %vm3644, %v7698
        %7788 = vst.msk [vmem:[#allocation4 + $0x38] sm:$0xff] %vm3644, %v7700
        %7789 = vst.msk [vmem:[#allocation4 + $0x40] sm:$0xff] %vm3644, %v7702
        %7790 = vst.msk [vmem:[#allocation4 + $0x48] sm:$0xff] %vm3644, %v7704
        %7791 = vst.msk [vmem:[#allocation4 + $0x50] sm:$0xff] %vm3644, %v7706
        %7792 = vst.msk [vmem:[#allocation4 + $0x58] sm:$0xff] %vm3644, %v7708
        %7793 = vst.msk [vmem:[#allocation4 + $0x60] sm:$0xff] %vm3644, %v7710
        %7794 = vst.msk [vmem:[#allocation4 + $0x68] sm:$0xff] %vm3644, %v7712
        %7795 = vst.msk [vmem:[#allocation4 + $0x70] sm:$0xff] %vm3644, %v7714
        %7796 = vst.msk [vmem:[#allocation4 + $0x78] sm:$0xff] %vm3644, %v7716
        %7797 = vst.msk [vmem:[#allocation4 + $0x80] sm:$0xff] %vm3644, %v7718
        %7798 = vst.msk [vmem:[#allocation4 + $0x88] sm:$0xff] %vm3644, %v7720
        %7799 = vst.msk [vmem:[#allocation4 + $0x90] sm:$0xff] %vm3644, %v7722
        %7800 = vst.msk [vmem:[#allocation4 + $0x98] sm:$0xff] %vm3644, %v7724
        %7801 = vst.msk [vmem:[#allocation4 + $0xa0] sm:$0xff] %vm3644, %v7726
        %7802 = vst.msk [vmem:[#allocation4 + $0xa8] sm:$0xff] %vm3644, %v7728
        %7803 = vst.msk [vmem:[#allocation4 + $0xb0] sm:$0xff] %vm3644, %v7730
        %7804 = vst.msk [vmem:[#allocation4 + $0xb8] sm:$0xff] %vm3644, %v7732
        %7805 = vst.msk [vmem:[#allocation4 + $0xc0] sm:$0xff] %vm3644, %v7734
        %7806 = vst.msk [vmem:[#allocation4 + $0xc8] sm:$0xff] %vm3644, %v7736
        %7807 = vst.msk [vmem:[#allocation4 + $0xd0] sm:$0xff] %vm3644, %v7738
        %7808 = vst.msk [vmem:[#allocation4 + $0xd8] sm:$0xff] %vm3644, %v7740
        %7809 = vst.msk [vmem:[#allocation4 + $0xe0] sm:$0xff] %vm3644, %v7742
        %7810 = vst.msk [vmem:[#allocation4 + $0xe8] sm:$0xff] %vm3644, %v7744
        %7811 = vst.msk [vmem:[#allocation4 + $0xf0] sm:$0xff] %vm3644, %v7746
        %7812 = vst.msk [vmem:[#allocation4 + $0xf8] sm:$0xff] %vm3644, %v7748
        %v7813 = vld [vmem:[%s3290 + $0x9] sm:$0xff]
        %v7814 = vld [vmem:[%s3290 + $0x11] sm:$0xff]
        %v7815 = vld [vmem:[%s3290 + $0x29] sm:$0xff]
        %v7816 = vld [vmem:[%s3290 + $0x31] sm:$0xff]
        %v7817 = vld [vmem:[%s3290 + $0x49] sm:$0xff]
        %v7818 = vld [vmem:[%s3290 + $0x51] sm:$0xff]
        %v7819 = vld [vmem:[%s3290 + $0x69] sm:$0xff]
        %v7820 = vld [vmem:[%s3290 + $0x71] sm:$0xff]
        %v7821 = vld [vmem:[%s3290 + $0x89] sm:$0xff]
        %v7822 = vld [vmem:[%s3290 + $0x91] sm:$0xff]
        %v7823 = vld [vmem:[%s3290 + $0xa9] sm:$0xff]
        %v7824 = vld [vmem:[%s3290 + $0xb1] sm:$0xff]
        %v7825 = vld [vmem:[%s3290 + $0xc9] sm:$0xff]
        %v7826 = vld [vmem:[%s3290 + $0xd1] sm:$0xff]
        %v7827 = vld [vmem:[%s3290 + $0xe9] sm:$0xff]
        %v7828 = vld [vmem:[%s3290 + $0xf1] sm:$0xff]
        %v7829 = vld [vmem:[%s3290 + $0x109] sm:$0xff]
        %v7830 = vld [vmem:[%s3290 + $0x111] sm:$0xff]
        %v7831 = vld [vmem:[%s3290 + $0x129] sm:$0xff]
        %v7832 = vld [vmem:[%s3290 + $0x131] sm:$0xff]
        %v7833 = vld [vmem:[%s3290 + $0x149] sm:$0xff]
        %v7834 = vld [vmem:[%s3290 + $0x151] sm:$0xff]
        %v7835 = vld [vmem:[%s3290 + $0x169] sm:$0xff]
        %v7836 = vld [vmem:[%s3290 + $0x171] sm:$0xff]
        %v7837 = vld [vmem:[%s3290 + $0x189] sm:$0xff]
        %v7838 = vld [vmem:[%s3290 + $0x191] sm:$0xff]
        %v7839 = vld [vmem:[%s3290 + $0x1a9] sm:$0xff]
        %v7840 = vld [vmem:[%s3290 + $0x1b1] sm:$0xff]
        %v7841 = vld [vmem:[%s3290 + $0x1c9] sm:$0xff]
        %v7842 = vld [vmem:[%s3290 + $0x1d1] sm:$0xff]
        %v7843 = vld [vmem:[%s3290 + $0x1e9] sm:$0xff]
        %v7844 = vld [vmem:[%s3290 + $0x1f1] sm:$0xff]
        %7877 = vrot.lane.b32.xlu0 %v7813, 64
        %v7878 = vpop.permute.xlu0 %7877
        %7879 = vrot.lane.b32.xlu0 %v7814, 64
        %v7880 = vpop.permute.xlu0 %7879
        %7881 = vrot.lane.b32.xlu0 %v7815, 64
        %v7882 = vpop.permute.xlu0 %7881
        %7883 = vrot.lane.b32.xlu0 %v7816, 64
        %v7884 = vpop.permute.xlu0 %7883
        %7885 = vrot.lane.b32.xlu0 %v7817, 64
        %v7886 = vpop.permute.xlu0 %7885
        %7887 = vrot.lane.b32.xlu0 %v7818, 64
        %v7888 = vpop.permute.xlu0 %7887
        %7889 = vrot.lane.b32.xlu0 %v7819, 64
        %v7890 = vpop.permute.xlu0 %7889
        %7891 = vrot.lane.b32.xlu0 %v7820, 64
        %v7892 = vpop.permute.xlu0 %7891
        %7893 = vrot.lane.b32.xlu0 %v7821, 64
        %v7894 = vpop.permute.xlu0 %7893
        %7895 = vrot.lane.b32.xlu0 %v7822, 64
        %v7896 = vpop.permute.xlu0 %7895
        %7897 = vrot.lane.b32.xlu0 %v7823, 64
        %v7898 = vpop.permute.xlu0 %7897
        %7899 = vrot.lane.b32.xlu0 %v7824, 64
        %v7900 = vpop.permute.xlu0 %7899
        %7901 = vrot.lane.b32.xlu0 %v7825, 64
        %v7902 = vpop.permute.xlu0 %7901
        %7903 = vrot.lane.b32.xlu0 %v7826, 64
        %v7904 = vpop.permute.xlu0 %7903
        %7905 = vrot.lane.b32.xlu0 %v7827, 64
        %v7906 = vpop.permute.xlu0 %7905
        %7907 = vrot.lane.b32.xlu0 %v7828, 64
        %v7908 = vpop.permute.xlu0 %7907
        %7909 = vrot.lane.b32.xlu0 %v7829, 64
        %v7910 = vpop.permute.xlu0 %7909
        %7911 = vrot.lane.b32.xlu0 %v7830, 64
        %v7912 = vpop.permute.xlu0 %7911
        %7913 = vrot.lane.b32.xlu0 %v7831, 64
        %v7914 = vpop.permute.xlu0 %7913
        %7915 = vrot.lane.b32.xlu0 %v7832, 64
        %v7916 = vpop.permute.xlu0 %7915
        %7917 = vrot.lane.b32.xlu0 %v7833, 64
        %v7918 = vpop.permute.xlu0 %7917
        %7919 = vrot.lane.b32.xlu0 %v7834, 64
        %v7920 = vpop.permute.xlu0 %7919
        %7921 = vrot.lane.b32.xlu0 %v7835, 64
        %v7922 = vpop.permute.xlu0 %7921
        %7923 = vrot.lane.b32.xlu0 %v7836, 64
        %v7924 = vpop.permute.xlu0 %7923
        %7925 = vrot.lane.b32.xlu0 %v7837, 64
        %v7926 = vpop.permute.xlu0 %7925
        %7927 = vrot.lane.b32.xlu0 %v7838, 64
        %v7928 = vpop.permute.xlu0 %7927
        %7929 = vrot.lane.b32.xlu0 %v7839, 64
        %v7930 = vpop.permute.xlu0 %7929
        %7931 = vrot.lane.b32.xlu0 %v7840, 64
        %v7932 = vpop.permute.xlu0 %7931
        %7933 = vrot.lane.b32.xlu0 %v7841, 64
        %v7934 = vpop.permute.xlu0 %7933
        %7935 = vrot.lane.b32.xlu0 %v7842, 64
        %v7936 = vpop.permute.xlu0 %7935
        %7937 = vrot.lane.b32.xlu0 %v7843, 64
        %v7938 = vpop.permute.xlu0 %7937
        %7939 = vrot.lane.b32.xlu0 %v7844, 64
        %v7940 = vpop.permute.xlu0 %7939
        %7973 = vst.msk [vmem:[#allocation4] sm:$0xff] %vm3837, %v7878
        %7974 = vst.msk [vmem:[#allocation4 + $0x8] sm:$0xff] %vm3837, %v7880
        %7975 = vst.msk [vmem:[#allocation4 + $0x10] sm:$0xff] %vm3837, %v7882
        %7976 = vst.msk [vmem:[#allocation4 + $0x18] sm:$0xff] %vm3837, %v7884
        %7977 = vst.msk [vmem:[#allocation4 + $0x20] sm:$0xff] %vm3837, %v7886
        %7978 = vst.msk [vmem:[#allocation4 + $0x28] sm:$0xff] %vm3837, %v7888
        %7979 = vst.msk [vmem:[#allocation4 + $0x30] sm:$0xff] %vm3837, %v7890
        %7980 = vst.msk [vmem:[#allocation4 + $0x38] sm:$0xff] %vm3837, %v7892
        %7981 = vst.msk [vmem:[#allocation4 + $0x40] sm:$0xff] %vm3837, %v7894
        %7982 = vst.msk [vmem:[#allocation4 + $0x48] sm:$0xff] %vm3837, %v7896
        %7983 = vst.msk [vmem:[#allocation4 + $0x50] sm:$0xff] %vm3837, %v7898
        %7984 = vst.msk [vmem:[#allocation4 + $0x58] sm:$0xff] %vm3837, %v7900
        %7985 = vst.msk [vmem:[#allocation4 + $0x60] sm:$0xff] %vm3837, %v7902
        %7986 = vst.msk [vmem:[#allocation4 + $0x68] sm:$0xff] %vm3837, %v7904
        %7987 = vst.msk [vmem:[#allocation4 + $0x70] sm:$0xff] %vm3837, %v7906
        %7988 = vst.msk [vmem:[#allocation4 + $0x78] sm:$0xff] %vm3837, %v7908
        %7989 = vst.msk [vmem:[#allocation4 + $0x80] sm:$0xff] %vm3837, %v7910
        %7990 = vst.msk [vmem:[#allocation4 + $0x88] sm:$0xff] %vm3837, %v7912
        %7991 = vst.msk [vmem:[#allocation4 + $0x90] sm:$0xff] %vm3837, %v7914
        %7992 = vst.msk [vmem:[#allocation4 + $0x98] sm:$0xff] %vm3837, %v7916
        %7993 = vst.msk [vmem:[#allocation4 + $0xa0] sm:$0xff] %vm3837, %v7918
        %7994 = vst.msk [vmem:[#allocation4 + $0xa8] sm:$0xff] %vm3837, %v7920
        %7995 = vst.msk [vmem:[#allocation4 + $0xb0] sm:$0xff] %vm3837, %v7922
        %7996 = vst.msk [vmem:[#allocation4 + $0xb8] sm:$0xff] %vm3837, %v7924
        %7997 = vst.msk [vmem:[#allocation4 + $0xc0] sm:$0xff] %vm3837, %v7926
        %7998 = vst.msk [vmem:[#allocation4 + $0xc8] sm:$0xff] %vm3837, %v7928
        %7999 = vst.msk [vmem:[#allocation4 + $0xd0] sm:$0xff] %vm3837, %v7930
        %8000 = vst.msk [vmem:[#allocation4 + $0xd8] sm:$0xff] %vm3837, %v7932
        %8001 = vst.msk [vmem:[#allocation4 + $0xe0] sm:$0xff] %vm3837, %v7934
        %8002 = vst.msk [vmem:[#allocation4 + $0xe8] sm:$0xff] %vm3837, %v7936
        %8003 = vst.msk [vmem:[#allocation4 + $0xf0] sm:$0xff] %vm3837, %v7938
        %8004 = vst.msk [vmem:[#allocation4 + $0xf8] sm:$0xff] %vm3837, %v7940
        %v8005 = vld [vmem:[#allocation4] sm:$0xff]
        %v8006 = vld [vmem:[#allocation4 + $0x8] sm:$0xff]
        %v8007 = vld [vmem:[#allocation4 + $0x10] sm:$0xff]
        %v8008 = vld [vmem:[#allocation4 + $0x18] sm:$0xff]
        %v8009 = vld [vmem:[#allocation4 + $0x20] sm:$0xff]
        %v8010 = vld [vmem:[#allocation4 + $0x28] sm:$0xff]
        %v8011 = vld [vmem:[#allocation4 + $0x30] sm:$0xff]
        %v8012 = vld [vmem:[#allocation4 + $0x38] sm:$0xff]
        %v8013 = vld [vmem:[#allocation4 + $0x40] sm:$0xff]
        %v8014 = vld [vmem:[#allocation4 + $0x48] sm:$0xff]
        %v8015 = vld [vmem:[#allocation4 + $0x50] sm:$0xff]
        %v8016 = vld [vmem:[#allocation4 + $0x58] sm:$0xff]
        %v8017 = vld [vmem:[#allocation4 + $0x60] sm:$0xff]
        %v8018 = vld [vmem:[#allocation4 + $0x68] sm:$0xff]
        %v8019 = vld [vmem:[#allocation4 + $0x70] sm:$0xff]
        %v8020 = vld [vmem:[#allocation4 + $0x78] sm:$0xff]
        %v8021 = vld [vmem:[#allocation4 + $0x80] sm:$0xff]
        %v8022 = vld [vmem:[#allocation4 + $0x88] sm:$0xff]
        %v8023 = vld [vmem:[#allocation4 + $0x90] sm:$0xff]
        %v8024 = vld [vmem:[#allocation4 + $0x98] sm:$0xff]
        %v8025 = vld [vmem:[#allocation4 + $0xa0] sm:$0xff]
        %v8026 = vld [vmem:[#allocation4 + $0xa8] sm:$0xff]
        %v8027 = vld [vmem:[#allocation4 + $0xb0] sm:$0xff]
        %v8028 = vld [vmem:[#allocation4 + $0xb8] sm:$0xff]
        %v8029 = vld [vmem:[#allocation4 + $0xc0] sm:$0xff]
        %v8030 = vld [vmem:[#allocation4 + $0xc8] sm:$0xff]
        %v8031 = vld [vmem:[#allocation4 + $0xd0] sm:$0xff]
        %v8032 = vld [vmem:[#allocation4 + $0xd8] sm:$0xff]
        %v8033 = vld [vmem:[#allocation4 + $0xe0] sm:$0xff]
        %v8034 = vld [vmem:[#allocation4 + $0xe8] sm:$0xff]
        %v8035 = vld [vmem:[#allocation4 + $0xf0] sm:$0xff]
        %v8036 = vld [vmem:[#allocation4 + $0xf8] sm:$0xff]
        %s8037 = scalar_lea.vmem %s7, 72
        %v8038 = vld [vmem:[%s8037] sm:$0xff]
        %v8039 = vld [vmem:[%s8037 + $0x8] sm:$0xff]
        %v8040 = vld [vmem:[%s8037 + $0x10] sm:$0xff]
        %v8041 = vld [vmem:[%s8037 + $0x18] sm:$0xff]
        %v8042 = vld [vmem:[%s8037 + $0x20] sm:$0xff]
        %v8043 = vld [vmem:[%s8037 + $0x28] sm:$0xff]
        %v8044 = vld [vmem:[%s8037 + $0x30] sm:$0xff]
        %v8045 = vld [vmem:[%s8037 + $0x38] sm:$0xff]
        %v8046 = vld [vmem:[%s8037 + $0x40] sm:$0xff]
        %v8047 = vsel %vm722, %v6341, 0.0
        %v8048 = vsel %vm722, %v6342, 0.0
        %v8049 = vsel %vm722, %v6343, 0.0
        %v8050 = vsel %vm722, %v6344, 0.0
        %v8051 = vsel %vm722, %v6345, 0.0
        %v8052 = vsel %vm722, %v6346, 0.0
        %v8053 = vsel %vm722, %v6347, 0.0
        %v8054 = vsel %vm722, %v6348, 0.0
        %v8055 = vsel %vm722, %v6349, 0.0
        %v8056 = vsel %vm722, %v6350, 0.0
        %v8057 = vsel %vm722, %v6351, 0.0
        %v8058 = vsel %vm722, %v6352, 0.0
        %v8059 = vsel %vm722, %v6353, 0.0
        %v8060 = vsel %vm722, %v6354, 0.0
        %v8061 = vsel %vm722, %v6355, 0.0
        %v8062 = vsel %vm722, %v6356, 0.0
        %v8063 = vsel %vm722, %v6357, 0.0
        %v8064 = vsel %vm722, %v6358, 0.0
        %v8065 = vsel %vm722, %v6359, 0.0
        %v8066 = vsel %vm722, %v6360, 0.0
        %v8067 = vsel %vm722, %v6361, 0.0
        %v8068 = vsel %vm722, %v6362, 0.0
        %v8069 = vsel %vm722, %v6363, 0.0
        %v8070 = vsel %vm722, %v6364, 0.0
        %v8071 = vsel %vm722, %v6365, 0.0
        %v8072 = vsel %vm722, %v6366, 0.0
        %v8073 = vsel %vm722, %v6367, 0.0
        %v8074 = vsel %vm722, %v6368, 0.0
        %v8075 = vsel %vm722, %v6369, 0.0
        %v8076 = vsel %vm722, %v6370, 0.0
        %v8077 = vsel %vm722, %v6371, 0.0
        %v8078 = vsel %vm722, %v6372, 0.0
        %v8080 = vsel %vm3943, %v8005, 0
        %v8083 = vsel %vm3943, %v8006, 0
        %v8086 = vsel %vm3943, %v8007, 0
        %v8089 = vsel %vm3943, %v8008, 0
        %v8092 = vsel %vm3943, %v8009, 0
        %v8095 = vsel %vm3943, %v8010, 0
        %v8098 = vsel %vm3943, %v8011, 0
        %v8101 = vsel %vm3943, %v8012, 0
        %v8104 = vsel %vm3943, %v8013, 0
        %v8107 = vsel %vm3943, %v8014, 0
        %v8110 = vsel %vm3943, %v8015, 0
        %v8113 = vsel %vm3943, %v8016, 0
        %v8116 = vsel %vm3943, %v8017, 0
        %v8119 = vsel %vm3943, %v8018, 0
        %v8122 = vsel %vm3943, %v8019, 0
        %v8125 = vsel %vm3943, %v8020, 0
        %v8128 = vsel %vm3943, %v8021, 0
        %v8131 = vsel %vm3943, %v8022, 0
        %v8134 = vsel %vm3943, %v8023, 0
        %v8137 = vsel %vm3943, %v8024, 0
        %v8140 = vsel %vm3943, %v8025, 0
        %v8143 = vsel %vm3943, %v8026, 0
        %v8146 = vsel %vm3943, %v8027, 0
        %v8149 = vsel %vm3943, %v8028, 0
        %v8152 = vsel %vm3943, %v8029, 0
        %v8155 = vsel %vm3943, %v8030, 0
        %v8158 = vsel %vm3943, %v8031, 0
        %v8161 = vsel %vm3943, %v8032, 0
        %v8164 = vsel %vm3943, %v8033, 0
        %v8167 = vsel %vm3943, %v8034, 0
        %v8170 = vsel %vm3943, %v8035, 0
        %v8173 = vsel %vm3943, %v8036, 0
        %8175 = vmatpush.msra.mxu0 0.0
        %8176 = vmatpush.msra.mxu0 0.0
        %8177 = vmatpush.msra.mxu0 0.0
        %8178 = vmatpush.msra.mxu0 0.0
        %8179 = vmatpush.msra.mxu0 0.0
        %8180 = vmatpush.msra.mxu0 0.0
        %8181 = vmatpush.msra.mxu0 0.0
        %8182 = vmatpush.msra.mxu0 %v8046
        %8183 = vmatpush.msra.mxu0 %v8045
        %8184 = vmatpush.msra.mxu0 %v8044
        %8185 = vmatpush.msra.mxu0 %v8043
        %8186 = vmatpush.msra.mxu0 %v8042
        %8187 = vmatpush.msra.mxu0 %v8041
        %8188 = vmatpush.msra.mxu0 %v8040
        %8189 = vmatpush.msra.mxu0 %v8039
        %8190 = vmatpush.msra.mxu0 %v8038
        %8191 = vmatmul.f32.gmra.mxu0 %v8080
        %v8192 = vpop.f32.mrf.mxu0
        %v8193 = vadd.f32 %v8047, %v8192
        %8194 = vmatmul.f32.gmra.mxu0 %v8083
        %v8195 = vpop.f32.mrf.mxu0
        %v8196 = vadd.f32 %v8048, %v8195
        %8197 = vmatmul.f32.gmra.mxu0 %v8086
        %v8198 = vpop.f32.mrf.mxu0
        %v8199 = vadd.f32 %v8049, %v8198
        %8200 = vmatmul.f32.gmra.mxu0 %v8089
        %v8201 = vpop.f32.mrf.mxu0
        %v8202 = vadd.f32 %v8050, %v8201
        %8203 = vmatmul.f32.gmra.mxu0 %v8092
        %v8204 = vpop.f32.mrf.mxu0
        %v8205 = vadd.f32 %v8051, %v8204
        %8206 = vmatmul.f32.gmra.mxu0 %v8095
        %v8207 = vpop.f32.mrf.mxu0
        %v8208 = vadd.f32 %v8052, %v8207
        %8209 = vmatmul.f32.gmra.mxu0 %v8098
        %v8210 = vpop.f32.mrf.mxu0
        %v8211 = vadd.f32 %v8053, %v8210
        %8212 = vmatmul.f32.gmra.mxu0 %v8101
        %v8213 = vpop.f32.mrf.mxu0
        %v8214 = vadd.f32 %v8054, %v8213
        %8215 = vmatmul.f32.gmra.mxu0 %v8104
        %v8216 = vpop.f32.mrf.mxu0
        %v8217 = vadd.f32 %v8055, %v8216
        %8218 = vmatmul.f32.gmra.mxu0 %v8107
        %v8219 = vpop.f32.mrf.mxu0
        %v8220 = vadd.f32 %v8056, %v8219
        %8221 = vmatmul.f32.gmra.mxu0 %v8110
        %v8222 = vpop.f32.mrf.mxu0
        %v8223 = vadd.f32 %v8057, %v8222
        %8224 = vmatmul.f32.gmra.mxu0 %v8113
        %v8225 = vpop.f32.mrf.mxu0
        %v8226 = vadd.f32 %v8058, %v8225
        %8227 = vmatmul.f32.gmra.mxu0 %v8116
        %v8228 = vpop.f32.mrf.mxu0
        %v8229 = vadd.f32 %v8059, %v8228
        %8230 = vmatmul.f32.gmra.mxu0 %v8119
        %v8231 = vpop.f32.mrf.mxu0
        %v8232 = vadd.f32 %v8060, %v8231
        %8233 = vmatmul.f32.gmra.mxu0 %v8122
        %v8234 = vpop.f32.mrf.mxu0
        %v8235 = vadd.f32 %v8061, %v8234
        %8236 = vmatmul.f32.gmra.mxu0 %v8125
        %v8237 = vpop.f32.mrf.mxu0
        %v8238 = vadd.f32 %v8062, %v8237
        %8239 = vmatmul.f32.gmra.mxu0 %v8128
        %v8240 = vpop.f32.mrf.mxu0
        %v8241 = vadd.f32 %v8063, %v8240
        %8242 = vmatmul.f32.gmra.mxu0 %v8131
        %v8243 = vpop.f32.mrf.mxu0
        %v8244 = vadd.f32 %v8064, %v8243
        %8245 = vmatmul.f32.gmra.mxu0 %v8134
        %v8246 = vpop.f32.mrf.mxu0
        %v8247 = vadd.f32 %v8065, %v8246
        %8248 = vmatmul.f32.gmra.mxu0 %v8137
        %v8249 = vpop.f32.mrf.mxu0
        %v8250 = vadd.f32 %v8066, %v8249
        %8251 = vmatmul.f32.gmra.mxu0 %v8140
        %v8252 = vpop.f32.mrf.mxu0
        %v8253 = vadd.f32 %v8067, %v8252
        %8254 = vmatmul.f32.gmra.mxu0 %v8143
        %v8255 = vpop.f32.mrf.mxu0
        %v8256 = vadd.f32 %v8068, %v8255
        %8257 = vmatmul.f32.gmra.mxu0 %v8146
        %v8258 = vpop.f32.mrf.mxu0
        %v8259 = vadd.f32 %v8069, %v8258
        %8260 = vmatmul.f32.gmra.mxu0 %v8149
        %v8261 = vpop.f32.mrf.mxu0
        %v8262 = vadd.f32 %v8070, %v8261
        %8263 = vmatmul.f32.gmra.mxu0 %v8152
        %v8264 = vpop.f32.mrf.mxu0
        %v8265 = vadd.f32 %v8071, %v8264
        %8266 = vmatmul.f32.gmra.mxu0 %v8155
        %v8267 = vpop.f32.mrf.mxu0
        %v8268 = vadd.f32 %v8072, %v8267
        %8269 = vmatmul.f32.gmra.mxu0 %v8158
        %v8270 = vpop.f32.mrf.mxu0
        %v8271 = vadd.f32 %v8073, %v8270
        %8272 = vmatmul.f32.gmra.mxu0 %v8161
        %v8273 = vpop.f32.mrf.mxu0
        %v8274 = vadd.f32 %v8074, %v8273
        %8275 = vmatmul.f32.gmra.mxu0 %v8164
        %v8276 = vpop.f32.mrf.mxu0
        %v8277 = vadd.f32 %v8075, %v8276
        %8278 = vmatmul.f32.gmra.mxu0 %v8167
        %v8279 = vpop.f32.mrf.mxu0
        %v8280 = vadd.f32 %v8076, %v8279
        %8281 = vmatmul.f32.gmra.mxu0 %v8170
        %v8282 = vpop.f32.mrf.mxu0
        %v8283 = vadd.f32 %v8077, %v8282
        %8284 = vmatmul.f32.gmra.mxu0 %v8173
        %v8285 = vpop.f32.mrf.mxu0
        %v8286 = vadd.f32 %v8078, %v8285
        %8287 = vdwg.mxu0
        %s8288 = scalar_lea.vmem %s8, 32
        %v8289 = vld [vmem:[%s8288] sm:$0xff]
        %v8290 = vld [vmem:[%s8288 + $0x8] sm:$0xff]
        %v8291 = vld [vmem:[%s8288 + $0x10] sm:$0xff]
        %v8292 = vld [vmem:[%s8288 + $0x18] sm:$0xff]
        %s8293 = scalar_lea.vmem %s9, 1
        %v8294 = vld [vmem:[%s8293] sm:$0x1]
        %v8296 = vperm.slane %v8294, 0
        %v8299 = vsel %vm542, %v8193, 0
        %v8302 = vsel %vm542, %v8196, 0
        %v8305 = vsel %vm542, %v8199, 0
        %v8308 = vsel %vm542, %v8202, 0
        %v8311 = vsel %vm542, %v8205, 0
        %v8314 = vsel %vm542, %v8208, 0
        %v8317 = vsel %vm542, %v8211, 0
        %v8320 = vsel %vm542, %v8214, 0
        %v8323 = vsel %vm542, %v8217, 0
        %v8326 = vsel %vm542, %v8220, 0
        %v8329 = vsel %vm542, %v8223, 0
        %v8332 = vsel %vm542, %v8226, 0
        %v8335 = vsel %vm542, %v8229, 0
        %v8338 = vsel %vm542, %v8232, 0
        %v8341 = vsel %vm542, %v8235, 0
        %v8344 = vsel %vm542, %v8238, 0
        %v8347 = vsel %vm542, %v8241, 0
        %v8350 = vsel %vm542, %v8244, 0
        %v8353 = vsel %vm542, %v8247, 0
        %v8356 = vsel %vm542, %v8250, 0
        %v8359 = vsel %vm542, %v8253, 0
        %v8362 = vsel %vm542, %v8256, 0
        %v8365 = vsel %vm542, %v8259, 0
        %v8368 = vsel %vm542, %v8262, 0
        %v8371 = vsel %vm542, %v8265, 0
        %v8374 = vsel %vm542, %v8268, 0
        %v8377 = vsel %vm542, %v8271, 0
        %v8380 = vsel %vm542, %v8274, 0
        %v8383 = vsel %vm542, %v8277, 0
        %v8386 = vsel %vm542, %v8280, 0
        %v8389 = vsel %vm542, %v8283, 0
        %v8392 = vsel %vm542, %v8286, 0
        %8394 = vmatpush.msra.mxu0 0.0
        %8395 = vmatpush.msra.mxu0 0.0
        %8396 = vmatpush.msra.mxu0 0.0
        %8397 = vmatpush.msra.mxu0 0.0
        %8398 = vmatpush.msra.mxu0 0.0
        %8399 = vmatpush.msra.mxu0 0.0
        %8400 = vmatpush.msra.mxu0 0.0
        %8401 = vmatpush.msra.mxu0 0.0
        %8402 = vmatpush.msra.mxu0 0.0
        %8403 = vmatpush.msra.mxu0 0.0
        %8404 = vmatpush.msra.mxu0 0.0
        %8405 = vmatpush.msra.mxu0 0.0
        %8406 = vmatpush.msra.mxu0 %v8292
        %8407 = vmatpush.msra.mxu0 %v8291
        %8408 = vmatpush.msra.mxu0 %v8290
        %8409 = vmatpush.msra.mxu0 %v8289
        %8410 = vmatmul.f32.gmra.mxu0 %v8299
        %v8411 = vpop.f32.mrf.mxu0
        %v8412 = vadd.f32 %v8296, %v8411
        %8413 = vmatmul.f32.gmra.mxu0 %v8302
        %v8414 = vpop.f32.mrf.mxu0
        %v8415 = vadd.f32 %v8296, %v8414
        %8416 = vmatmul.f32.gmra.mxu0 %v8305
        %v8417 = vpop.f32.mrf.mxu0
        %v8418 = vadd.f32 %v8296, %v8417
        %8419 = vmatmul.f32.gmra.mxu0 %v8308
        %v8420 = vpop.f32.mrf.mxu0
        %v8421 = vadd.f32 %v8296, %v8420
        %8422 = vmatmul.f32.gmra.mxu0 %v8311
        %v8423 = vpop.f32.mrf.mxu0
        %v8424 = vadd.f32 %v8296, %v8423
        %8425 = vmatmul.f32.gmra.mxu0 %v8314
        %v8426 = vpop.f32.mrf.mxu0
        %v8427 = vadd.f32 %v8296, %v8426
        %8428 = vmatmul.f32.gmra.mxu0 %v8317
        %v8429 = vpop.f32.mrf.mxu0
        %v8430 = vadd.f32 %v8296, %v8429
        %8431 = vmatmul.f32.gmra.mxu0 %v8320
        %v8432 = vpop.f32.mrf.mxu0
        %v8433 = vadd.f32 %v8296, %v8432
        %8434 = vmatmul.f32.gmra.mxu0 %v8323
        %v8435 = vpop.f32.mrf.mxu0
        %v8436 = vadd.f32 %v8296, %v8435
        %8437 = vmatmul.f32.gmra.mxu0 %v8326
        %v8438 = vpop.f32.mrf.mxu0
        %v8439 = vadd.f32 %v8296, %v8438
        %8440 = vmatmul.f32.gmra.mxu0 %v8329
        %v8441 = vpop.f32.mrf.mxu0
        %v8442 = vadd.f32 %v8296, %v8441
        %8443 = vmatmul.f32.gmra.mxu0 %v8332
        %v8444 = vpop.f32.mrf.mxu0
        %v8445 = vadd.f32 %v8296, %v8444
        %8446 = vmatmul.f32.gmra.mxu0 %v8335
        %v8447 = vpop.f32.mrf.mxu0
        %v8448 = vadd.f32 %v8296, %v8447
        %8449 = vmatmul.f32.gmra.mxu0 %v8338
        %v8450 = vpop.f32.mrf.mxu0
        %v8451 = vadd.f32 %v8296, %v8450
        %8452 = vmatmul.f32.gmra.mxu0 %v8341
        %v8453 = vpop.f32.mrf.mxu0
        %v8454 = vadd.f32 %v8296, %v8453
        %8455 = vmatmul.f32.gmra.mxu0 %v8344
        %v8456 = vpop.f32.mrf.mxu0
        %v8457 = vadd.f32 %v8296, %v8456
        %8458 = vmatmul.f32.gmra.mxu0 %v8347
        %v8459 = vpop.f32.mrf.mxu0
        %v8460 = vadd.f32 %v8296, %v8459
        %8461 = vmatmul.f32.gmra.mxu0 %v8350
        %v8462 = vpop.f32.mrf.mxu0
        %v8463 = vadd.f32 %v8296, %v8462
        %8464 = vmatmul.f32.gmra.mxu0 %v8353
        %v8465 = vpop.f32.mrf.mxu0
        %v8466 = vadd.f32 %v8296, %v8465
        %8467 = vmatmul.f32.gmra.mxu0 %v8356
        %v8468 = vpop.f32.mrf.mxu0
        %v8469 = vadd.f32 %v8296, %v8468
        %8470 = vmatmul.f32.gmra.mxu0 %v8359
        %v8471 = vpop.f32.mrf.mxu0
        %v8472 = vadd.f32 %v8296, %v8471
        %8473 = vmatmul.f32.gmra.mxu0 %v8362
        %v8474 = vpop.f32.mrf.mxu0
        %v8475 = vadd.f32 %v8296, %v8474
        %8476 = vmatmul.f32.gmra.mxu0 %v8365
        %v8477 = vpop.f32.mrf.mxu0
        %v8478 = vadd.f32 %v8296, %v8477
        %8479 = vmatmul.f32.gmra.mxu0 %v8368
        %v8480 = vpop.f32.mrf.mxu0
        %v8481 = vadd.f32 %v8296, %v8480
        %8482 = vmatmul.f32.gmra.mxu0 %v8371
        %v8483 = vpop.f32.mrf.mxu0
        %v8484 = vadd.f32 %v8296, %v8483
        %8485 = vmatmul.f32.gmra.mxu0 %v8374
        %v8486 = vpop.f32.mrf.mxu0
        %v8487 = vadd.f32 %v8296, %v8486
        %8488 = vmatmul.f32.gmra.mxu0 %v8377
        %v8489 = vpop.f32.mrf.mxu0
        %v8490 = vadd.f32 %v8296, %v8489
        %8491 = vmatmul.f32.gmra.mxu0 %v8380
        %v8492 = vpop.f32.mrf.mxu0
        %v8493 = vadd.f32 %v8296, %v8492
        %8494 = vmatmul.f32.gmra.mxu0 %v8383
        %v8495 = vpop.f32.mrf.mxu0
        %v8496 = vadd.f32 %v8296, %v8495
        %8497 = vmatmul.f32.gmra.mxu0 %v8386
        %v8498 = vpop.f32.mrf.mxu0
        %v8499 = vadd.f32 %v8296, %v8498
        %8500 = vmatmul.f32.gmra.mxu0 %v8389
        %v8501 = vpop.f32.mrf.mxu0
        %v8502 = vadd.f32 %v8296, %v8501
        %8503 = vmatmul.f32.gmra.mxu0 %v8392
        %v8504 = vpop.f32.mrf.mxu0
        %v8505 = vadd.f32 %v8296, %v8504
        %8506 = vdwg.mxu0
        %v8507 = vsel %vm542, %v8193, 0.0
        %v8508 = vsel %vm542, %v8196, 0.0
        %v8509 = vadd.f32 %v8507, %v8508
        %v8510 = vsel %vm542, %v8199, 0.0
        %v8511 = vadd.f32 %v8509, %v8510
        %v8512 = vsel %vm542, %v8202, 0.0
        %v8513 = vadd.f32 %v8511, %v8512
        %v8514 = vsel %vm542, %v8205, 0.0
        %v8515 = vadd.f32 %v8513, %v8514
        %v8516 = vsel %vm542, %v8208, 0.0
        %v8517 = vadd.f32 %v8515, %v8516
        %v8518 = vsel %vm542, %v8211, 0.0
        %v8519 = vadd.f32 %v8517, %v8518
        %v8520 = vsel %vm542, %v8214, 0.0
        %v8521 = vadd.f32 %v8519, %v8520
        %v8522 = vsel %vm542, %v8217, 0.0
        %v8523 = vadd.f32 %v8521, %v8522
        %v8524 = vsel %vm542, %v8220, 0.0
        %v8525 = vadd.f32 %v8523, %v8524
        %v8526 = vsel %vm542, %v8223, 0.0
        %v8527 = vadd.f32 %v8525, %v8526
        %v8528 = vsel %vm542, %v8226, 0.0
        %v8529 = vadd.f32 %v8527, %v8528
        %v8530 = vsel %vm542, %v8229, 0.0
        %v8531 = vadd.f32 %v8529, %v8530
        %v8532 = vsel %vm542, %v8232, 0.0
        %v8533 = vadd.f32 %v8531, %v8532
        %v8534 = vsel %vm542, %v8235, 0.0
        %v8535 = vadd.f32 %v8533, %v8534
        %v8536 = vsel %vm542, %v8238, 0.0
        %v8537 = vadd.f32 %v8535, %v8536
        %v8538 = vsel %vm542, %v8241, 0.0
        %v8539 = vadd.f32 %v8537, %v8538
        %v8540 = vsel %vm542, %v8244, 0.0
        %v8541 = vadd.f32 %v8539, %v8540
        %v8542 = vsel %vm542, %v8247, 0.0
        %v8543 = vadd.f32 %v8541, %v8542
        %v8544 = vsel %vm542, %v8250, 0.0
        %v8545 = vadd.f32 %v8543, %v8544
        %v8546 = vsel %vm542, %v8253, 0.0
        %v8547 = vadd.f32 %v8545, %v8546
        %v8548 = vsel %vm542, %v8256, 0.0
        %v8549 = vadd.f32 %v8547, %v8548
        %v8550 = vsel %vm542, %v8259, 0.0
        %v8551 = vadd.f32 %v8549, %v8550
        %v8552 = vsel %vm542, %v8262, 0.0
        %v8553 = vadd.f32 %v8551, %v8552
        %v8554 = vsel %vm542, %v8265, 0.0
        %v8555 = vadd.f32 %v8553, %v8554
        %v8556 = vsel %vm542, %v8268, 0.0
        %v8557 = vadd.f32 %v8555, %v8556
        %v8558 = vsel %vm542, %v8271, 0.0
        %v8559 = vadd.f32 %v8557, %v8558
        %v8560 = vsel %vm542, %v8274, 0.0
        %v8561 = vadd.f32 %v8559, %v8560
        %v8562 = vsel %vm542, %v8277, 0.0
        %v8563 = vadd.f32 %v8561, %v8562
        %v8564 = vsel %vm542, %v8280, 0.0
        %v8565 = vadd.f32 %v8563, %v8564
        %v8566 = vsel %vm542, %v8283, 0.0
        %v8567 = vadd.f32 %v8565, %v8566
        %v8568 = vsel %vm542, %v8286, 0.0
        %v8569 = vadd.f32 %v8567, %v8568
        %v8570 = vrot.slane %v8569, 4
        %v8571 = vadd.f32 %v8569, %v8570
        %v8572 = vrot.slane %v8571, 2
        %v8573 = vadd.f32 %v8571, %v8572
        %v8574 = vrot.slane %v8573, 1
        %v8575 = vadd.f32 %v8573, %v8574
        %v8576 = vmul.f32 %v8575, %v4445
        %s8577 = scalar_lea.vmem %s10, 32
        %v8578 = vld [vmem:[%s8577] sm:$0xff]
        %v8579 = vld [vmem:[%s8577 + $0x8] sm:$0xff]
        %v8580 = vld [vmem:[%s8577 + $0x10] sm:$0xff]
        %v8581 = vld [vmem:[%s8577 + $0x18] sm:$0xff]
        %s8582 = scalar_lea.vmem %s11, 1
        %v8583 = vld [vmem:[%s8582] sm:$0x1]
        %v8585 = vsel %vm542, %v8576, 0
        %8587 = vmatpush.msra.mxu0 0.0
        %8588 = vmatpush.msra.mxu0 0.0
        %8589 = vmatpush.msra.mxu0 0.0
        %8590 = vmatpush.msra.mxu0 0.0
        %8591 = vmatpush.msra.mxu0 0.0
        %8592 = vmatpush.msra.mxu0 0.0
        %8593 = vmatpush.msra.mxu0 0.0
        %8594 = vmatpush.msra.mxu0 0.0
        %8595 = vmatpush.msra.mxu0 0.0
        %8596 = vmatpush.msra.mxu0 0.0
        %8597 = vmatpush.msra.mxu0 0.0
        %8598 = vmatpush.msra.mxu0 0.0
        %8599 = vmatpush.msra.mxu0 %v8581
        %8600 = vmatpush.msra.mxu0 %v8580
        %8601 = vmatpush.msra.mxu0 %v8579
        %8602 = vmatpush.msra.mxu0 %v8578
        %8603 = vmatmul.f32.gmra.mxu0 %v8585
        %v8604 = vpop.f32.mrf.mxu0
        %v8605 = vadd.f32 %v8583, %v8604
        %8606 = vdwg.mxu0
        %v8607 = vmax.f32 %v8605, 0.0
        %s8608 = scalar_lea.vmem %s12, 2
        %v8609 = vld [vmem:[%s8608] sm:$0x3]
        %s8610 = scalar_lea.vmem %s13, 1
        %v8611 = vld [vmem:[%s8610] sm:$0x1]
        %v8613 = vsel %vm4478, %v8607, 0
        %v8616 = vsel %vm4482, %v8609, 0
        %8618 = vmatpush.msra.mxu0 0.0
        %8619 = vmatpush.msra.mxu0 0.0
        %8620 = vmatpush.msra.mxu0 0.0
        %8621 = vmatpush.msra.mxu0 0.0
        %8622 = vmatpush.msra.mxu0 0.0
        %8623 = vmatpush.msra.mxu0 0.0
        %8624 = vmatpush.msra.mxu0 0.0
        %8625 = vmatpush.msra.mxu0 0.0
        %8626 = vmatpush.msra.mxu0 0.0
        %8627 = vmatpush.msra.mxu0 0.0
        %8628 = vmatpush.msra.mxu0 0.0
        %8629 = vmatpush.msra.mxu0 0.0
        %8630 = vmatpush.msra.mxu0 0.0
        %8631 = vmatpush.msra.mxu0 0.0
        %8632 = vmatpush.msra.mxu0 0.0
        %8633 = vmatpush.msra.mxu0 %v8616
        %8634 = vmatmul.f32.gmra.mxu0 %v8613
        %v8635 = vpop.f32.mrf.mxu0
        %v8636 = vadd.f32 %v8611, %v8635
        %8637 = vdwg.mxu0
        %v8638 = vxor.u32 %v8636, 2147483648
        %v8639 = vmul.f32 %v8638, 1.442695
        %v8640 = vpow.pop %v8639
        %v8641 = vadd.f32 %v8640, 1.0
        %v8642 = vrcp.pop %v8641
        %v8643 = vmul.f32 %v8641, %v8642
        %v8644 = vsub.f32 1.0, %v8643
        %v8645 = vmul.f32 %v8642, %v8644
        %v8646 = vadd.f32 %v8642, %v8645
        %vm8647 = vweird.f32 %v8641
        %vm8648 = vweird.f32 %v8642
        %vm8649 = vmor %vm8647, %vm8648
        %v8650 = vsel %vm8649, %v8642, %v8646
        %v8651 = vand.u32 2147483647, %v8641
        %vm8652 = vcmp.eq.f32.partialorder %v8651, 8.507059e+37
        %v8653 = vand.u32 %v8641, 2147483648
        %v8654 = vor.u32 1.1754944e-38, %v8653
        %v8655 = vsel %vm8652, %v8654, %v8650
        %v8656 = vmul.f32 1.0, %v8655
        %v8657 = vperm.slane %v8656, 0
        %v8658 = vmul.f32 %v8193, %v8657
        %v8659 = vmul.f32 %v8196, %v8657
        %v8660 = vmul.f32 %v8199, %v8657
        %v8661 = vmul.f32 %v8202, %v8657
        %v8662 = vmul.f32 %v8205, %v8657
        %v8663 = vmul.f32 %v8208, %v8657
        %v8664 = vmul.f32 %v8211, %v8657
        %v8665 = vmul.f32 %v8214, %v8657
        %v8666 = vmul.f32 %v8217, %v8657
        %v8667 = vmul.f32 %v8220, %v8657
        %v8668 = vmul.f32 %v8223, %v8657
        %v8669 = vmul.f32 %v8226, %v8657
        %v8670 = vmul.f32 %v8229, %v8657
        %v8671 = vmul.f32 %v8232, %v8657
        %v8672 = vmul.f32 %v8235, %v8657
        %v8673 = vmul.f32 %v8238, %v8657
        %v8674 = vmul.f32 %v8241, %v8657
        %v8675 = vmul.f32 %v8244, %v8657
        %v8676 = vmul.f32 %v8247, %v8657
        %v8677 = vmul.f32 %v8250, %v8657
        %v8678 = vmul.f32 %v8253, %v8657
        %v8679 = vmul.f32 %v8256, %v8657
        %v8680 = vmul.f32 %v8259, %v8657
        %v8681 = vmul.f32 %v8262, %v8657
        %v8682 = vmul.f32 %v8265, %v8657
        %v8683 = vmul.f32 %v8268, %v8657
        %v8684 = vmul.f32 %v8271, %v8657
        %v8685 = vmul.f32 %v8274, %v8657
        %v8686 = vmul.f32 %v8277, %v8657
        %v8687 = vmul.f32 %v8280, %v8657
        %v8688 = vmul.f32 %v8283, %v8657
        %v8689 = vmul.f32 %v8286, %v8657
        %v8690 = vmul.f32 %v8412, %v8658
        %v8691 = vmul.f32 %v8415, %v8659
        %v8692 = vmul.f32 %v8418, %v8660
        %v8693 = vmul.f32 %v8421, %v8661
        %v8694 = vmul.f32 %v8424, %v8662
        %v8695 = vmul.f32 %v8427, %v8663
        %v8696 = vmul.f32 %v8430, %v8664
        %v8697 = vmul.f32 %v8433, %v8665
        %v8698 = vmul.f32 %v8436, %v8666
        %v8699 = vmul.f32 %v8439, %v8667
        %v8700 = vmul.f32 %v8442, %v8668
        %v8701 = vmul.f32 %v8445, %v8669
        %v8702 = vmul.f32 %v8448, %v8670
        %v8703 = vmul.f32 %v8451, %v8671
        %v8704 = vmul.f32 %v8454, %v8672
        %v8705 = vmul.f32 %v8457, %v8673
        %v8706 = vmul.f32 %v8460, %v8674
        %v8707 = vmul.f32 %v8463, %v8675
        %v8708 = vmul.f32 %v8466, %v8676
        %v8709 = vmul.f32 %v8469, %v8677
        %v8710 = vmul.f32 %v8472, %v8678
        %v8711 = vmul.f32 %v8475, %v8679
        %v8712 = vmul.f32 %v8478, %v8680
        %v8713 = vmul.f32 %v8481, %v8681
        %v8714 = vmul.f32 %v8484, %v8682
        %v8715 = vmul.f32 %v8487, %v8683
        %v8716 = vmul.f32 %v8490, %v8684
        %v8717 = vmul.f32 %v8493, %v8685
        %v8718 = vmul.f32 %v8496, %v8686
        %v8719 = vmul.f32 %v8499, %v8687
        %v8720 = vmul.f32 %v8502, %v8688
        %v8721 = vmul.f32 %v8505, %v8689
        %v8722 = vadd.f32 %v8193, %v8690
        %v8723 = vadd.f32 %v8196, %v8691
        %v8724 = vadd.f32 %v8199, %v8692
        %v8725 = vadd.f32 %v8202, %v8693
        %v8726 = vadd.f32 %v8205, %v8694
        %v8727 = vadd.f32 %v8208, %v8695
        %v8728 = vadd.f32 %v8211, %v8696
        %v8729 = vadd.f32 %v8214, %v8697
        %v8730 = vadd.f32 %v8217, %v8698
        %v8731 = vadd.f32 %v8220, %v8699
        %v8732 = vadd.f32 %v8223, %v8700
        %v8733 = vadd.f32 %v8226, %v8701
        %v8734 = vadd.f32 %v8229, %v8702
        %v8735 = vadd.f32 %v8232, %v8703
        %v8736 = vadd.f32 %v8235, %v8704
        %v8737 = vadd.f32 %v8238, %v8705
        %v8738 = vadd.f32 %v8241, %v8706
        %v8739 = vadd.f32 %v8244, %v8707
        %v8740 = vadd.f32 %v8247, %v8708
        %v8741 = vadd.f32 %v8250, %v8709
        %v8742 = vadd.f32 %v8253, %v8710
        %v8743 = vadd.f32 %v8256, %v8711
        %v8744 = vadd.f32 %v8259, %v8712
        %v8745 = vadd.f32 %v8262, %v8713
        %v8746 = vadd.f32 %v8265, %v8714
        %v8747 = vadd.f32 %v8268, %v8715
        %v8748 = vadd.f32 %v8271, %v8716
        %v8749 = vadd.f32 %v8274, %v8717
        %v8750 = vadd.f32 %v8277, %v8718
        %v8751 = vadd.f32 %v8280, %v8719
        %v8752 = vadd.f32 %v8283, %v8720
        %v8753 = vadd.f32 %v8286, %v8721
        %s8754 = scalar_lea.vmem %s14, 32
        %v8755 = vld [vmem:[%s8754] sm:$0xff]
        %v8756 = vld [vmem:[%s8754 + $0x8] sm:$0xff]
        %v8757 = vld [vmem:[%s8754 + $0x10] sm:$0xff]
        %v8758 = vld [vmem:[%s8754 + $0x18] sm:$0xff]
        %s8759 = scalar_lea.vmem %s15, 1
        %v8760 = vld [vmem:[%s8759] sm:$0x1]
        %v8762 = vperm.slane %v8760, 0
        %v8765 = vsel %vm542, %v8722, 0
        %v8768 = vsel %vm542, %v8723, 0
        %v8771 = vsel %vm542, %v8724, 0
        %v8774 = vsel %vm542, %v8725, 0
        %v8777 = vsel %vm542, %v8726, 0
        %v8780 = vsel %vm542, %v8727, 0
        %v8783 = vsel %vm542, %v8728, 0
        %v8786 = vsel %vm542, %v8729, 0
        %v8789 = vsel %vm542, %v8730, 0
        %v8792 = vsel %vm542, %v8731, 0
        %v8795 = vsel %vm542, %v8732, 0
        %v8798 = vsel %vm542, %v8733, 0
        %v8801 = vsel %vm542, %v8734, 0
        %v8804 = vsel %vm542, %v8735, 0
        %v8807 = vsel %vm542, %v8736, 0
        %v8810 = vsel %vm542, %v8737, 0
        %v8813 = vsel %vm542, %v8738, 0
        %v8816 = vsel %vm542, %v8739, 0
        %v8819 = vsel %vm542, %v8740, 0
        %v8822 = vsel %vm542, %v8741, 0
        %v8825 = vsel %vm542, %v8742, 0
        %v8828 = vsel %vm542, %v8743, 0
        %v8831 = vsel %vm542, %v8744, 0
        %v8834 = vsel %vm542, %v8745, 0
        %v8837 = vsel %vm542, %v8746, 0
        %v8840 = vsel %vm542, %v8747, 0
        %v8843 = vsel %vm542, %v8748, 0
        %v8846 = vsel %vm542, %v8749, 0
        %v8849 = vsel %vm542, %v8750, 0
        %v8852 = vsel %vm542, %v8751, 0
        %v8855 = vsel %vm542, %v8752, 0
        %v8858 = vsel %vm542, %v8753, 0
        %8860 = vmatpush.msra.mxu0 0.0
        %8861 = vmatpush.msra.mxu0 0.0
        %8862 = vmatpush.msra.mxu0 0.0
        %8863 = vmatpush.msra.mxu0 0.0
        %8864 = vmatpush.msra.mxu0 0.0
        %8865 = vmatpush.msra.mxu0 0.0
        %8866 = vmatpush.msra.mxu0 0.0
        %8867 = vmatpush.msra.mxu0 0.0
        %8868 = vmatpush.msra.mxu0 0.0
        %8869 = vmatpush.msra.mxu0 0.0
        %8870 = vmatpush.msra.mxu0 0.0
        %8871 = vmatpush.msra.mxu0 0.0
        %8872 = vmatpush.msra.mxu0 %v8758
        %8873 = vmatpush.msra.mxu0 %v8757
        %8874 = vmatpush.msra.mxu0 %v8756
        %8875 = vmatpush.msra.mxu0 %v8755
        %8876 = vmatmul.f32.gmra.mxu0 %v8765
        %v8877 = vpop.f32.mrf.mxu0
        %v8878 = vadd.f32 %v8762, %v8877
        %8879 = vmatmul.f32.gmra.mxu0 %v8768
        %v8880 = vpop.f32.mrf.mxu0
        %v8881 = vadd.f32 %v8762, %v8880
        %8882 = vmatmul.f32.gmra.mxu0 %v8771
        %v8883 = vpop.f32.mrf.mxu0
        %v8884 = vadd.f32 %v8762, %v8883
        %8885 = vmatmul.f32.gmra.mxu0 %v8774
        %v8886 = vpop.f32.mrf.mxu0
        %v8887 = vadd.f32 %v8762, %v8886
        %8888 = vmatmul.f32.gmra.mxu0 %v8777
        %v8889 = vpop.f32.mrf.mxu0
        %v8890 = vadd.f32 %v8762, %v8889
        %8891 = vmatmul.f32.gmra.mxu0 %v8780
        %v8892 = vpop.f32.mrf.mxu0
        %v8893 = vadd.f32 %v8762, %v8892
        %8894 = vmatmul.f32.gmra.mxu0 %v8783
        %v8895 = vpop.f32.mrf.mxu0
        %v8896 = vadd.f32 %v8762, %v8895
        %8897 = vmatmul.f32.gmra.mxu0 %v8786
        %v8898 = vpop.f32.mrf.mxu0
        %v8899 = vadd.f32 %v8762, %v8898
        %8900 = vmatmul.f32.gmra.mxu0 %v8789
        %v8901 = vpop.f32.mrf.mxu0
        %v8902 = vadd.f32 %v8762, %v8901
        %8903 = vmatmul.f32.gmra.mxu0 %v8792
        %v8904 = vpop.f32.mrf.mxu0
        %v8905 = vadd.f32 %v8762, %v8904
        %8906 = vmatmul.f32.gmra.mxu0 %v8795
        %v8907 = vpop.f32.mrf.mxu0
        %v8908 = vadd.f32 %v8762, %v8907
        %8909 = vmatmul.f32.gmra.mxu0 %v8798
        %v8910 = vpop.f32.mrf.mxu0
        %v8911 = vadd.f32 %v8762, %v8910
        %8912 = vmatmul.f32.gmra.mxu0 %v8801
        %v8913 = vpop.f32.mrf.mxu0
        %v8914 = vadd.f32 %v8762, %v8913
        %8915 = vmatmul.f32.gmra.mxu0 %v8804
        %v8916 = vpop.f32.mrf.mxu0
        %v8917 = vadd.f32 %v8762, %v8916
        %8918 = vmatmul.f32.gmra.mxu0 %v8807
        %v8919 = vpop.f32.mrf.mxu0
        %v8920 = vadd.f32 %v8762, %v8919
        %8921 = vmatmul.f32.gmra.mxu0 %v8810
        %v8922 = vpop.f32.mrf.mxu0
        %v8923 = vadd.f32 %v8762, %v8922
        %8924 = vmatmul.f32.gmra.mxu0 %v8813
        %v8925 = vpop.f32.mrf.mxu0
        %v8926 = vadd.f32 %v8762, %v8925
        %8927 = vmatmul.f32.gmra.mxu0 %v8816
        %v8928 = vpop.f32.mrf.mxu0
        %v8929 = vadd.f32 %v8762, %v8928
        %8930 = vmatmul.f32.gmra.mxu0 %v8819
        %v8931 = vpop.f32.mrf.mxu0
        %v8932 = vadd.f32 %v8762, %v8931
        %8933 = vmatmul.f32.gmra.mxu0 %v8822
        %v8934 = vpop.f32.mrf.mxu0
        %v8935 = vadd.f32 %v8762, %v8934
        %8936 = vmatmul.f32.gmra.mxu0 %v8825
        %v8937 = vpop.f32.mrf.mxu0
        %v8938 = vadd.f32 %v8762, %v8937
        %8939 = vmatmul.f32.gmra.mxu0 %v8828
        %v8940 = vpop.f32.mrf.mxu0
        %v8941 = vadd.f32 %v8762, %v8940
        %8942 = vmatmul.f32.gmra.mxu0 %v8831
        %v8943 = vpop.f32.mrf.mxu0
        %v8944 = vadd.f32 %v8762, %v8943
        %8945 = vmatmul.f32.gmra.mxu0 %v8834
        %v8946 = vpop.f32.mrf.mxu0
        %v8947 = vadd.f32 %v8762, %v8946
        %8948 = vmatmul.f32.gmra.mxu0 %v8837
        %v8949 = vpop.f32.mrf.mxu0
        %v8950 = vadd.f32 %v8762, %v8949
        %8951 = vmatmul.f32.gmra.mxu0 %v8840
        %v8952 = vpop.f32.mrf.mxu0
        %v8953 = vadd.f32 %v8762, %v8952
        %8954 = vmatmul.f32.gmra.mxu0 %v8843
        %v8955 = vpop.f32.mrf.mxu0
        %v8956 = vadd.f32 %v8762, %v8955
        %8957 = vmatmul.f32.gmra.mxu0 %v8846
        %v8958 = vpop.f32.mrf.mxu0
        %v8959 = vadd.f32 %v8762, %v8958
        %8960 = vmatmul.f32.gmra.mxu0 %v8849
        %v8961 = vpop.f32.mrf.mxu0
        %v8962 = vadd.f32 %v8762, %v8961
        %8963 = vmatmul.f32.gmra.mxu0 %v8852
        %v8964 = vpop.f32.mrf.mxu0
        %v8965 = vadd.f32 %v8762, %v8964
        %8966 = vmatmul.f32.gmra.mxu0 %v8855
        %v8967 = vpop.f32.mrf.mxu0
        %v8968 = vadd.f32 %v8762, %v8967
        %8969 = vmatmul.f32.gmra.mxu0 %v8858
        %v8970 = vpop.f32.mrf.mxu0
        %v8971 = vadd.f32 %v8762, %v8970
        %8972 = vdwg.mxu0
        %v8973 = vadd.f32 %v4839, %v8878
        %v8974 = vadd.f32 %v4840, %v8881
        %v8975 = vadd.f32 %v4841, %v8884
        %v8976 = vadd.f32 %v4842, %v8887
        %v8977 = vadd.f32 %v4843, %v8890
        %v8978 = vadd.f32 %v4844, %v8893
        %v8979 = vadd.f32 %v4845, %v8896
        %v8980 = vadd.f32 %v4846, %v8899
        %v8981 = vadd.f32 %v4847, %v8902
        %v8982 = vadd.f32 %v4848, %v8905
        %v8983 = vadd.f32 %v4849, %v8908
        %v8984 = vadd.f32 %v4850, %v8911
        %v8985 = vadd.f32 %v4851, %v8914
        %v8986 = vadd.f32 %v4852, %v8917
        %v8987 = vadd.f32 %v4853, %v8920
        %v8988 = vadd.f32 %v4854, %v8923
        %v8989 = vadd.f32 %v4855, %v8926
        %v8990 = vadd.f32 %v4856, %v8929
        %v8991 = vadd.f32 %v4857, %v8932
        %v8992 = vadd.f32 %v4858, %v8935
        %v8993 = vadd.f32 %v4859, %v8938
        %v8994 = vadd.f32 %v4860, %v8941
        %v8995 = vadd.f32 %v4861, %v8944
        %v8996 = vadd.f32 %v4862, %v8947
        %v8997 = vadd.f32 %v4863, %v8950
        %v8998 = vadd.f32 %v4864, %v8953
        %v8999 = vadd.f32 %v4865, %v8956
        %v9000 = vadd.f32 %v4866, %v8959
        %v9001 = vadd.f32 %v4867, %v8962
        %v9002 = vadd.f32 %v4868, %v8965
        %v9003 = vadd.f32 %v4869, %v8968
        %v9004 = vadd.f32 %v4870, %v8971
        %v9005 = vadd.f32 %v8973, %v688
        %v9006 = vadd.f32 %v8974, %v689
        %v9007 = vadd.f32 %v8975, %v690
        %v9008 = vadd.f32 %v8976, %v691
        %v9009 = vadd.f32 %v8977, %v692
        %v9010 = vadd.f32 %v8978, %v693
        %v9011 = vadd.f32 %v8979, %v694
        %v9012 = vadd.f32 %v8980, %v695
        %v9013 = vadd.f32 %v8981, %v696
        %v9014 = vadd.f32 %v8982, %v697
        %v9015 = vadd.f32 %v8983, %v698
        %v9016 = vadd.f32 %v8984, %v699
        %v9017 = vadd.f32 %v8985, %v700
        %v9018 = vadd.f32 %v8986, %v701
        %v9019 = vadd.f32 %v8987, %v702
        %v9020 = vadd.f32 %v8988, %v703
        %v9021 = vadd.f32 %v8989, %v704
        %v9022 = vadd.f32 %v8990, %v705
        %v9023 = vadd.f32 %v8991, %v706
        %v9024 = vadd.f32 %v8992, %v707
        %v9025 = vadd.f32 %v8993, %v708
        %v9026 = vadd.f32 %v8994, %v709
        %v9027 = vadd.f32 %v8995, %v710
        %v9028 = vadd.f32 %v8996, %v711
        %v9029 = vadd.f32 %v8997, %v712
        %v9030 = vadd.f32 %v8998, %v713
        %v9031 = vadd.f32 %v8999, %v714
        %v9032 = vadd.f32 %v9000, %v715
        %v9033 = vadd.f32 %v9001, %v716
        %v9034 = vadd.f32 %v9002, %v717
        %v9035 = vadd.f32 %v9003, %v718
        %v9036 = vadd.f32 %v9004, %v719
        %9037 = vst.msk [vmem:[%s541] sm:$0xff] %vm542, %v9005
        %9038 = vst.msk [vmem:[%s541 + $0x8] sm:$0xff] %vm542, %v9006
        %9039 = vst.msk [vmem:[%s541 + $0x10] sm:$0xff] %vm542, %v9007
        %9040 = vst.msk [vmem:[%s541 + $0x18] sm:$0xff] %vm542, %v9008
        %9041 = vst.msk [vmem:[%s541 + $0x20] sm:$0xff] %vm542, %v9009
        %9042 = vst.msk [vmem:[%s541 + $0x28] sm:$0xff] %vm542, %v9010
        %9043 = vst.msk [vmem:[%s541 + $0x30] sm:$0xff] %vm542, %v9011
        %9044 = vst.msk [vmem:[%s541 + $0x38] sm:$0xff] %vm542, %v9012
        %9045 = vst.msk [vmem:[%s541 + $0x40] sm:$0xff] %vm542, %v9013
        %9046 = vst.msk [vmem:[%s541 + $0x48] sm:$0xff] %vm542, %v9014
        %9047 = vst.msk [vmem:[%s541 + $0x50] sm:$0xff] %vm542, %v9015
        %9048 = vst.msk [vmem:[%s541 + $0x58] sm:$0xff] %vm542, %v9016
        %9049 = vst.msk [vmem:[%s541 + $0x60] sm:$0xff] %vm542, %v9017
        %9050 = vst.msk [vmem:[%s541 + $0x68] sm:$0xff] %vm542, %v9018
        %9051 = vst.msk [vmem:[%s541 + $0x70] sm:$0xff] %vm542, %v9019
        %9052 = vst.msk [vmem:[%s541 + $0x78] sm:$0xff] %vm542, %v9020
        %9053 = vst.msk [vmem:[%s541 + $0x80] sm:$0xff] %vm542, %v9021
        %9054 = vst.msk [vmem:[%s541 + $0x88] sm:$0xff] %vm542, %v9022
        %9055 = vst.msk [vmem:[%s541 + $0x90] sm:$0xff] %vm542, %v9023
        %9056 = vst.msk [vmem:[%s541 + $0x98] sm:$0xff] %vm542, %v9024
        %9057 = vst.msk [vmem:[%s541 + $0xa0] sm:$0xff] %vm542, %v9025
        %9058 = vst.msk [vmem:[%s541 + $0xa8] sm:$0xff] %vm542, %v9026
        %9059 = vst.msk [vmem:[%s541 + $0xb0] sm:$0xff] %vm542, %v9027
        %9060 = vst.msk [vmem:[%s541 + $0xb8] sm:$0xff] %vm542, %v9028
        %9061 = vst.msk [vmem:[%s541 + $0xc0] sm:$0xff] %vm542, %v9029
        %9062 = vst.msk [vmem:[%s541 + $0xc8] sm:$0xff] %vm542, %v9030
        %9063 = vst.msk [vmem:[%s541 + $0xd0] sm:$0xff] %vm542, %v9031
        %9064 = vst.msk [vmem:[%s541 + $0xd8] sm:$0xff] %vm542, %v9032
        %9065 = vst.msk [vmem:[%s541 + $0xe0] sm:$0xff] %vm542, %v9033
        %9066 = vst.msk [vmem:[%s541 + $0xe8] sm:$0xff] %vm542, %v9034
        %9067 = vst.msk [vmem:[%s541 + $0xf0] sm:$0xff] %vm542, %v9035
        %9068 = vst.msk [vmem:[%s541 + $0xf8] sm:$0xff] %vm542, %v9036
        %s9069 = sand.u32 %s382, 1
        %s9070 = scalar_lea.sflag [#allocation7], %s9069
        %s9071 = sand.u32 %s382, 1
        %s9072 = smul.addr %s9071, 256
        %s9073 = scalar_lea.vmem [#allocation8], %s9072
        // Predicated region
        $region89: #{trans_layermul.1} parent=83 // pred_check
          %p9074 = pneg %p392
        $region90: #{trans_layermul.1} parent=83 // pred_check_branch
          %9076 = sbr.rel (%p9074) target = $region92
        $region91: #{trans_layermul.1} parent=83 // pred_region
          %9078 = vsyncadd %s9070, 0
          %s9079 = smul.addr %s33, 32
          %s9080 = smul.addr %s9079, 8
          %s9081 = scalar_lea.hbm %s16, %s9080
          %s9082 = sshll.u32 %s9073, 4
          %s9083 = int_to_ptr.vmem [resolvable:$true] %s9082
          %s9084 = sshll.u32 %s9081, 4
          %s9085 = int_to_ptr.hbm [resolvable:$true] %s9084
          %9090 = dma.vmem_to_hbm [thread:$0]  %s9083, 4096, %s9085, %s9070, 128, 128, 8
        $region92: #{trans_layermul.1} parent=83 // pred_fallthru
          _
      $region84: #{trans_layermul.1} parent=5 // pred_fallthru
        _
      %p9091 = scmp.le.s32.totalorder 2, %s28
      // Predicated region
      $region93: #{trans_layermul.1} parent=5 // pred_check
        %p9092 = pneg %p9091
      $region94: #{trans_layermul.1} parent=5 // pred_check_branch
        %9094 = sbr.rel (%p9092) target = $region96
      $region95: #{trans_layermul.1} parent=5 // pred_region
        %s9095 = ssub.s32 %s28, 2
        // Predicated region
        $region97: #{trans_layermul.1} parent=95 // pred_check
          %p9096 = pneg %p398
        $region98: #{trans_layermul.1} parent=95 // pred_check_branch
          %9098 = sbr.rel (%p9096) target = $region100
        $region99: #{trans_layermul.1} parent=95 // pred_region
          %s9099 = sand.u32 %s383, 1
          %s9100 = scalar_lea.sflag [#allocation7], %s9099
          %s9101 = sand.u32 %s383, 1
          %s9102 = smul.addr %s9101, 256
          %s9103 = scalar_lea.vmem [#allocation8], %s9102
          %9105 = dma.done %s9100, 4096
        $region100: #{trans_layermul.1} parent=95 // pred_fallthru
          _
      $region96: #{trans_layermul.1} parent=5 // pred_fallthru
        _
    $region6: #{trans_layermul.1} parent=1 // loop_footer
      %s32 = sadd.s32 1, %s28
    $region7: #{trans_layermul.1} parent=1 // loop_footer_branch
      %27 = sbr.rel target = $region3
    $region8: #{trans_layermul.1} parent=1 // loop_exit
      _
    %9106 = vsyncpa [#allocation6], 1
    %s9107 = scalar_lea.sflag [#allocation6], 1
    %9108 = vsyncpa %s9107, 1
    %9109 = vsyncpa [#allocation7], 1
    %s9110 = scalar_lea.sflag [#allocation7], 1
    %9111 = vsyncpa %s9110, 1

</llo_original>
